<compile_context>
chip_gen: v7x
topology: tpu7x:2x2x1
jax: 0.10.0
libtpu: 0.0.40
codegen_flags: <defaults>
</compile_context>

<pallas_src>
import numpy as np
import jax
import jax.numpy as jnp
from jax import lax
from jax.experimental import pallas as pl
from jax.experimental.pallas import tpu as pltpu

HIDDEN = 128
NUM_LAYERS = 2
INPUT_SIZE = 1


def _rnn_kernel(x_ref, h0_ref,
                wih0_ref, b0_all_ref, b0_hn_ref,
                wA_ref, whh1_ref,
                b_rz1_ref, b_in1_ref, b_hn1_ref,
                wfc_ref, bfc_ref,
                y_ref, hout_ref,
                gi0_sc, h1all_sc):
    _, B, H = hout_ref.shape          # (num_layers, B_pad, H)
    T = x_ref.shape[0] // B           # x is time-major, flattened to (T*B, 1)

    def sig(v):
        # Exact: sigmoid(x) = 0.5*tanh(0.5*x) + 0.5  -> single EUP push + VPU fma.
        return 0.5 * jnp.tanh(0.5 * v) + 0.5

    # (1) Bulk layer-0 input projection for ALL timesteps at once (input_size == 1 -> VPU fma).
    #     r/z columns already contain bih0+bhh0; n columns contain bih0 only.
    gi0_sc[...] = x_ref[...] * wih0_ref[...] + b0_all_ref[...]          # (T*B, 3H)

    # (2) Hoist bias broadcasts out of the time loop (broadcast_in_dim is not CSE'd by JAX).
    b0_hn_b = jnp.broadcast_to(b0_hn_ref[...], (B, H))
    b_rz1_b = jnp.broadcast_to(b_rz1_ref[...], (B, 2 * H))
    b_in1_b = jnp.broadcast_to(b_in1_ref[...], (B, H))
    b_hn1_b = jnp.broadcast_to(b_hn1_ref[...], (B, H))

    # Prime gh0(0) = h0_init(layer0) @ whh0 (left half of the fused [whh0 | wih1] weight).
    gh0_init = jnp.dot(h0_ref[0], wA_ref[:, :3 * H],
                       preferred_element_type=jnp.float32)

    def step(t, carry):
        h0p, h1p, gh0 = carry                                           # vreg-resident
        row = pl.multiple_of(t * B, 8)
        gi0 = gi0_sc[pl.ds(row, B), :]                                  # (B, 3H)

        # ---- layer 0: gate math only on the serial chain (gh0 was produced last step) ----
        r0 = sig(gi0[:, :H] + gh0[:, :H])
        z0 = sig(gi0[:, H:2 * H] + gh0[:, H:2 * H])
        n0 = jnp.tanh(gi0[:, 2 * H:] + r0 * (gh0[:, 2 * H:] + b0_hn_b))
        h0n = (1.0 - z0) * n0 + z0 * h0p

        # ---- one fused matmul on h0n: [ gh0(t+1) | gi1(t) ] = h0n @ [whh0 | wih1] ----
        fused = jnp.dot(h0n, wA_ref[...], preferred_element_type=jnp.float32)   # (B, 6H)
        gh0_next = fused[:, :3 * H]
        gi1 = fused[:, 3 * H:]

        # ---- layer 1 (its recurrence chain overlaps with layer-0(t+1) under full unroll) ----
        gh1 = jnp.dot(h1p, whh1_ref[...], preferred_element_type=jnp.float32)
        rz1 = sig(gi1[:, :2 * H] + gh1[:, :2 * H] + b_rz1_b)
        r1 = rz1[:, :H]
        z1 = rz1[:, H:]
        n1 = jnp.tanh(gi1[:, 2 * H:] + b_in1_b + r1 * (gh1[:, 2 * H:] + b_hn1_b))
        h1n = (1.0 - z1) * n1 + z1 * h1p

        # Lane-dense stash of the top-layer hidden state for the deferred fc.
        h1all_sc[pl.ds(row, B), :] = h1n
        return (h0n, h1n, gh0_next)

    h0f, h1f, _ = lax.fori_loop(0, T, step, (h0_ref[0], h0_ref[1], gh0_init),
                                unroll=True)

    hout_ref[0] = h0f
    hout_ref[1] = h1f

    # (3) Deferred fc + sigmoid: one bulk (T*B, H) @ (H, 1) matmul instead of T tiny ones.
    logits = jnp.dot(h1all_sc[...], wfc_ref[...],
                     preferred_element_type=jnp.float32) + bfc_ref[...]
    y_ref[...] = sig(logits)


def _round_up(x, m):
    return -(-x // m) * m


def _f32_vmem_bytes(rows, cols):
    # f32 VMEM footprint of a (rows, cols) array, padded to (8, 128) tiles.
    return _round_up(rows, 8) * _round_up(cols, 128) * 4


@jax.jit
def rnn_forward(x_btc, h0, params):
    """x_btc: (B, T, 1) batch_first, h0: (num_layers, B, H). Returns (out (B,T,1), h1 (L,B,H))."""
    B, T, I = x_btc.shape
    L, _, H = h0.shape
    B_pad = max(8, _round_up(B, 8))   # full sublane groups

    (wih0, whh0, bih0, bhh0, wih1, whh1, bih1, bhh1, wfc, bfc) = params

    # Layer-0 biases: r/z parts folded into the bulk input projection; bhh0's n-part kept
    # separate (needed inside r0 * (gh0_n + b_hn0)).
    b0_all = jnp.concatenate([bih0[:, :2 * H] + bhh0[:, :2 * H], bih0[:, 2 * H:]], axis=1)
    b0_hn = bhh0[:, 2 * H:]
    # Layer-1 biases, same treatment.
    b_rz1 = bih1[:, :2 * H] + bhh1[:, :2 * H]     # (1, 2H)
    b_in1 = bih1[:, 2 * H:]                       # (1, H)
    b_hn1 = bhh1[:, 2 * H:]                       # (1, H)
    # Fused [whh0 | wih1]: one per-step matmul yields gh0(t+1) and gi1(t) from h0n(t).
    wA = jnp.concatenate([whh0, wih1], axis=1)    # (H, 6H)

    x_pad = jnp.pad(x_btc, ((0, B_pad - B), (0, 0), (0, 0)))
    h0_pad = jnp.pad(h0, ((0, 0), (0, B_pad - B), (0, 0)))
    # time-major, flattened: row t*B_pad + b  <->  (t, b)
    x_flat = jnp.transpose(x_pad, (1, 0, 2)).reshape(T * B_pad, I)

    # Explicit VMEM budget (whole-sequence slabs scale with T): lift v5e's 16 MiB scoped
    # default when needed, stay under v7x's 64 MiB physical VMEM.
    est = (_f32_vmem_bytes(T * B_pad, 3 * H) + _f32_vmem_bytes(T * B_pad, H)
           + _f32_vmem_bytes(T * B_pad, I) + _f32_vmem_bytes(T * B_pad, 1)
           + 2 * _f32_vmem_bytes(L * B_pad, H)
           + _f32_vmem_bytes(H, 6 * H) + _f32_vmem_bytes(H, 3 * H)
           + 8 * _f32_vmem_bytes(8, 3 * H))
    vmem_limit = int(min(48 * 2 ** 20, max(16 * 2 ** 20, 2 * est)))

    y_flat, h1_pad = pl.pallas_call(
        _rnn_kernel,
        out_shape=(
            jax.ShapeDtypeStruct((T * B_pad, 1), jnp.float32),      # sigmoid(fc(h_top)) per (t,b)
            jax.ShapeDtypeStruct((L, B_pad, H), jnp.float32),       # final hidden states
        ),
        scratch_shapes=[
            pltpu.VMEM((T * B_pad, 3 * H), jnp.float32),            # bulk layer-0 input projection
            pltpu.VMEM((T * B_pad, H), jnp.float32),                # top-layer hidden-state slab
        ],
        compiler_params=pltpu.CompilerParams(vmem_limit_bytes=vmem_limit),
    )(x_flat, h0_pad,
      wih0, b0_all, b0_hn,
      wA, whh1,
      b_rz1, b_in1, b_hn1,
      wfc, bfc)

    out = y_flat.reshape(T, B_pad, 1)[:, :B, :].transpose(1, 0, 2)  # back to batch_first (B,T,1)
    return out, h1_pad[:, :B, :]


def init_params(key, input_size=INPUT_SIZE, hidden=HIDDEN):
    """Deterministic init matching PyTorch GRU/Linear parameter shapes (weights stored transposed)."""
    ks = jax.random.split(key, 10)
    s = 1.0 / np.sqrt(hidden)
    u = lambda k, shape: jax.random.uniform(k, shape, jnp.float32, -s, s)
    wih0 = u(ks[0], (input_size, 3 * hidden))   # torch weight_ih_l0 (3H, I) transposed
    whh0 = u(ks[1], (hidden, 3 * hidden))       # torch weight_hh_l0 (3H, H) transposed
    bih0 = u(ks[2], (1, 3 * hidden))
    bhh0 = u(ks[3], (1, 3 * hidden))
    wih1 = u(ks[4], (hidden, 3 * hidden))       # torch weight_ih_l1 (3H, H) transposed
    whh1 = u(ks[5], (hidden, 3 * hidden))
    bih1 = u(ks[6], (1, 3 * hidden))
    bhh1 = u(ks[7], (1, 3 * hidden))
    wfc = u(ks[8], (hidden, 1))                 # torch fc.weight (1, H) transposed
    bfc = u(ks[9], (1, 1))
    return (wih0, whh0, bih0, bhh0, wih1, whh1, bih1, bhh1, wfc, bfc)


def rnn_reference(x_btc, h0, params):
    """Pure-JAX reference (lax.scan) of the same PyTorch GRU+fc+sigmoid forward."""
    (wih0, whh0, bih0, bhh0, wih1, whh1, bih1, bhh1, wfc, bfc) = params
    H = HIDDEN
    x_tbc = jnp.transpose(x_btc, (1, 0, 2))

    def cell(x, h, wih, whh, bih, bhh):
        gi = x @ wih + bih
        gh = h @ whh + bhh
        r = jax.nn.sigmoid(gi[:, :H] + gh[:, :H])
        z = jax.nn.sigmoid(gi[:, H:2 * H] + gh[:, H:2 * H])
        n = jnp.tanh(gi[:, 2 * H:] + r * gh[:, 2 * H:])
        return (1 - z) * n + z * h

    def step(carry, x_t):
        h0_, h1_ = carry
        h0n = cell(x_t, h0_, wih0, whh0, bih0, bhh0)
        h1n = cell(h0n, h1_, wih1, whh1, bih1, bhh1)
        y = jax.nn.sigmoid(h1n @ wfc + bfc)
        return (h0n, h1n), y

    (hf0, hf1), ys = lax.scan(step, (h0[0], h0[1]), x_tbc)
    return jnp.transpose(ys, (1, 0, 2)), jnp.stack([hf0, hf1], axis=0)


if __name__ == "__main__":
    key = jax.random.PRNGKey(0)
    k_x, k_p = jax.random.split(key)

    B, T = 5, 8   # batch=5 matches the module's test tensor; small sequence length
    x = jax.random.normal(k_x, (B, T, INPUT_SIZE), dtype=jnp.float32)
    h0 = jnp.zeros((NUM_LAYERS, B, HIDDEN), dtype=jnp.float32)
    params = init_params(k_p)

    out, h1 = rnn_forward(x, h0, params)
    out, h1 = jax.block_until_ready((out, h1))

    out_ref, h1_ref = rnn_reference(x, h0, params)
    assert out.shape == (B, T, 1) and h1.shape == (NUM_LAYERS, B, HIDDEN)
    np.testing.assert_allclose(np.asarray(out), np.asarray(out_ref), rtol=1e-5, atol=1e-5)
    np.testing.assert_allclose(np.asarray(h1), np.asarray(h1_ref), rtol=1e-5, atol=1e-5)

    print("KERNEL_OK")
</pallas_src>

<mosaic_0001>
module attributes {stable_mosaic.version = 11 : i64} {
  func.func @_rnn_kernel(%arg0: memref<64x1xf32, #tpu.memory_space<vmem>>, %arg1: memref<2x8x128xf32, #tpu.memory_space<vmem>>, %arg2: memref<1x384xf32, #tpu.memory_space<vmem>>, %arg3: memref<1x384xf32, #tpu.memory_space<vmem>>, %arg4: memref<1x128xf32, #tpu.memory_space<vmem>>, %arg5: memref<128x768xf32, #tpu.memory_space<vmem>>, %arg6: memref<128x384xf32, #tpu.memory_space<vmem>>, %arg7: memref<1x256xf32, #tpu.memory_space<vmem>>, %arg8: memref<1x128xf32, #tpu.memory_space<vmem>>, %arg9: memref<1x128xf32, #tpu.memory_space<vmem>>, %arg10: memref<128x1xf32, #tpu.memory_space<vmem>>, %arg11: memref<1x1xf32, #tpu.memory_space<vmem>>, %arg12: memref<64x1xf32, #tpu.memory_space<vmem>>, %arg13: memref<2x8x128xf32, #tpu.memory_space<vmem>>, %arg14: memref<64x384xf32, #tpu.memory_space<vmem>>, %arg15: memref<64x128xf32, #tpu.memory_space<vmem>>) attributes {dimension_semantics = [], scalar_prefetch = 0 : i64, scratch_operands = 2 : i64, tpu.core_type = #tpu.core_type<tc>} {
    %c0 = arith.constant 0 : index
    %c0_0 = arith.constant 0 : index
    %0 = vector.load %arg0[%c0, %c0_0] : memref<64x1xf32, #tpu.memory_space<vmem>>, vector<64x1xf32>
    %c0_1 = arith.constant 0 : index
    %c0_2 = arith.constant 0 : index
    %1 = vector.load %arg2[%c0_1, %c0_2] : memref<1x384xf32, #tpu.memory_space<vmem>>, vector<1x384xf32>
    %2 = vector.broadcast %0 : vector<64x1xf32> to vector<64x384xf32>
    %3 = vector.broadcast %1 : vector<1x384xf32> to vector<64x384xf32>
    %4 = arith.mulf %2, %3 : vector<64x384xf32>
    %c0_3 = arith.constant 0 : index
    %c0_4 = arith.constant 0 : index
    %5 = vector.load %arg3[%c0_3, %c0_4] : memref<1x384xf32, #tpu.memory_space<vmem>>, vector<1x384xf32>
    %6 = vector.broadcast %5 : vector<1x384xf32> to vector<64x384xf32>
    %7 = arith.addf %4, %6 : vector<64x384xf32>
    %c0_5 = arith.constant 0 : index
    %c0_6 = arith.constant 0 : index
    %8 = vector.load %arg14[%c0_5, %c0_6] : memref<64x384xf32, #tpu.memory_space<vmem>>, vector<64x384xf32>
    tpu.vector_store %arg14[%c0_5, %c0_6], %7 {strides = array<i32>} : memref<64x384xf32, #tpu.memory_space<vmem>>, vector<64x384xf32>,
    %c0_7 = arith.constant 0 : index
    %c0_8 = arith.constant 0 : index
    %9 = vector.load %arg4[%c0_7, %c0_8] : memref<1x128xf32, #tpu.memory_space<vmem>>, vector<1x128xf32>
    %10 = vector.shape_cast %9 : vector<1x128xf32> to vector<1x128xf32>
    %11 = vector.broadcast %10 : vector<1x128xf32> to vector<8x128xf32>
    %c0_9 = arith.constant 0 : index
    %c0_10 = arith.constant 0 : index
    %12 = vector.load %arg7[%c0_9, %c0_10] : memref<1x256xf32, #tpu.memory_space<vmem>>, vector<1x256xf32>
    %13 = vector.shape_cast %12 : vector<1x256xf32> to vector<1x256xf32>
    %14 = vector.broadcast %13 : vector<1x256xf32> to vector<8x256xf32>
    %c0_11 = arith.constant 0 : index
    %c0_12 = arith.constant 0 : index
    %15 = vector.load %arg8[%c0_11, %c0_12] : memref<1x128xf32, #tpu.memory_space<vmem>>, vector<1x128xf32>
    %16 = vector.shape_cast %15 : vector<1x128xf32> to vector<1x128xf32>
    %17 = vector.broadcast %16 : vector<1x128xf32> to vector<8x128xf32>
    %c0_13 = arith.constant 0 : index
    %c0_14 = arith.constant 0 : index
    %18 = vector.load %arg9[%c0_13, %c0_14] : memref<1x128xf32, #tpu.memory_space<vmem>>, vector<1x128xf32>
    %19 = vector.shape_cast %18 : vector<1x128xf32> to vector<1x128xf32>
    %20 = vector.broadcast %19 : vector<1x128xf32> to vector<8x128xf32>
    %c0_15 = arith.constant 0 : index
    %c0_16 = arith.constant 0 : index
    %c0_17 = arith.constant 0 : index
    %21 = vector.load %arg1[%c0_15, %c0_16, %c0_17] : memref<2x8x128xf32, #tpu.memory_space<vmem>>, vector<1x8x128xf32>
    %22 = vector.shape_cast %21 : vector<1x8x128xf32> to vector<8x128xf32>
    %c0_18 = arith.constant 0 : index
    %c0_19 = arith.constant 0 : index
    %23 = vector.load %arg5[%c0_18, %c0_19] : memref<128x768xf32, #tpu.memory_space<vmem>>, vector<128x384xf32>
    %cst = arith.constant dense<0.000000e+00> : vector<8x384xf32>
    %24 = tpu.matmul %22, %23, %cst {dimension_numbers = #tpu.dot_dimension_numbers<[1], [0], [0], [1], [0, 0, 1, 1], [], []>} : vector<8x128xf32>, vector<128x384xf32>, vector<8x384xf32> -> vector<8x384xf32>
    %c0_20 = arith.constant 0 : index
    %c0_21 = arith.constant 0 : index
    %c0_22 = arith.constant 0 : index
    %25 = vector.load %arg1[%c0_20, %c0_21, %c0_22] : memref<2x8x128xf32, #tpu.memory_space<vmem>>, vector<1x8x128xf32>
    %26 = vector.shape_cast %25 : vector<1x8x128xf32> to vector<8x128xf32>
    %c1 = arith.constant 1 : index
    %c0_23 = arith.constant 0 : index
    %c0_24 = arith.constant 0 : index
    %27 = vector.load %arg1[%c1, %c0_23, %c0_24] : memref<2x8x128xf32, #tpu.memory_space<vmem>>, vector<1x8x128xf32>
    %28 = vector.shape_cast %27 : vector<1x8x128xf32> to vector<8x128xf32>
    %c0_i32 = arith.constant 0 : i32
    %c8_i32 = arith.constant 8 : i32
    %29 = arith.muli %c0_i32, %c8_i32 : i32
    %30 = tpu.assume_multiple %29, 8 : i32
    %31 = arith.index_cast %30 : i32 to index
    %c0_25 = arith.constant 0 : index
    %32 = vector.load %arg14[%31, %c0_25] : memref<64x384xf32, #tpu.memory_space<vmem>>, vector<8x384xf32>
    %33 = vector.extract_strided_slice %32 {offsets = [0, 0], sizes = [8, 128], strides = [1, 1]} : vector<8x384xf32> to vector<8x128xf32>
    %34 = vector.extract_strided_slice %24 {offsets = [0, 0], sizes = [8, 128], strides = [1, 1]} : vector<8x384xf32> to vector<8x128xf32>
    %35 = arith.addf %33, %34 : vector<8x128xf32>
    %cst_26 = arith.constant 5.000000e-01 : f32
    %36 = vector.broadcast %cst_26 : f32 to vector<8x128xf32>
    %37 = arith.mulf %36, %35 : vector<8x128xf32>
    %38 = math.tanh %37 : vector<8x128xf32>
    %cst_27 = arith.constant 5.000000e-01 : f32
    %39 = vector.broadcast %cst_27 : f32 to vector<8x128xf32>
    %40 = arith.mulf %39, %38 : vector<8x128xf32>
    %cst_28 = arith.constant 5.000000e-01 : f32
    %41 = vector.broadcast %cst_28 : f32 to vector<8x128xf32>
    %42 = arith.addf %40, %41 : vector<8x128xf32>
    %43 = vector.extract_strided_slice %32 {offsets = [0, 128], sizes = [8, 128], strides = [1, 1]} : vector<8x384xf32> to vector<8x128xf32>
    %44 = vector.extract_strided_slice %24 {offsets = [0, 128], sizes = [8, 128], strides = [1, 1]} : vector<8x384xf32> to vector<8x128xf32>
    %45 = arith.addf %43, %44 : vector<8x128xf32>
    %cst_29 = arith.constant 5.000000e-01 : f32
    %46 = vector.broadcast %cst_29 : f32 to vector<8x128xf32>
    %47 = arith.mulf %46, %45 : vector<8x128xf32>
    %48 = math.tanh %47 : vector<8x128xf32>
    %cst_30 = arith.constant 5.000000e-01 : f32
    %49 = vector.broadcast %cst_30 : f32 to vector<8x128xf32>
    %50 = arith.mulf %49, %48 : vector<8x128xf32>
    %cst_31 = arith.constant 5.000000e-01 : f32
    %51 = vector.broadcast %cst_31 : f32 to vector<8x128xf32>
    %52 = arith.addf %50, %51 : vector<8x128xf32>
    %53 = vector.extract_strided_slice %32 {offsets = [0, 256], sizes = [8, 128], strides = [1, 1]} : vector<8x384xf32> to vector<8x128xf32>
    %54 = vector.extract_strided_slice %24 {offsets = [0, 256], sizes = [8, 128], strides = [1, 1]} : vector<8x384xf32> to vector<8x128xf32>
    %55 = arith.addf %54, %11 : vector<8x128xf32>
    %56 = arith.mulf %42, %55 : vector<8x128xf32>
    %57 = arith.addf %53, %56 : vector<8x128xf32>
    %58 = math.tanh %57 : vector<8x128xf32>
    %cst_32 = arith.constant 1.000000e+00 : f32
    %59 = vector.broadcast %cst_32 : f32 to vector<8x128xf32>
    %60 = arith.subf %59, %52 : vector<8x128xf32>
    %61 = arith.mulf %60, %58 : vector<8x128xf32>
    %62 = arith.mulf %52, %26 : vector<8x128xf32>
    %63 = arith.addf %61, %62 : vector<8x128xf32>
    %c0_33 = arith.constant 0 : index
    %c0_34 = arith.constant 0 : index
    %64 = vector.load %arg5[%c0_33, %c0_34] : memref<128x768xf32, #tpu.memory_space<vmem>>, vector<128x768xf32>
    %cst_35 = arith.constant dense<0.000000e+00> : vector<8x768xf32>
    %65 = tpu.matmul %63, %64, %cst_35 {dimension_numbers = #tpu.dot_dimension_numbers<[1], [0], [0], [1], [0, 0, 1, 1], [], []>} : vector<8x128xf32>, vector<128x768xf32>, vector<8x768xf32> -> vector<8x768xf32>
    %66 = vector.extract_strided_slice %65 {offsets = [0, 0], sizes = [8, 384], strides = [1, 1]} : vector<8x768xf32> to vector<8x384xf32>
    %67 = vector.extract_strided_slice %65 {offsets = [0, 384], sizes = [8, 384], strides = [1, 1]} : vector<8x768xf32> to vector<8x384xf32>
    %c0_36 = arith.constant 0 : index
    %c0_37 = arith.constant 0 : index
    %68 = vector.load %arg6[%c0_36, %c0_37] : memref<128x384xf32, #tpu.memory_space<vmem>>, vector<128x384xf32>
    %cst_38 = arith.constant dense<0.000000e+00> : vector<8x384xf32>
    %69 = tpu.matmul %28, %68, %cst_38 {dimension_numbers = #tpu.dot_dimension_numbers<[1], [0], [0], [1], [0, 0, 1, 1], [], []>} : vector<8x128xf32>, vector<128x384xf32>, vector<8x384xf32> -> vector<8x384xf32>
    %70 = vector.extract_strided_slice %67 {offsets = [0, 0], sizes = [8, 256], strides = [1, 1]} : vector<8x384xf32> to vector<8x256xf32>
    %71 = vector.extract_strided_slice %69 {offsets = [0, 0], sizes = [8, 256], strides = [1, 1]} : vector<8x384xf32> to vector<8x256xf32>
    %72 = arith.addf %70, %71 : vector<8x256xf32>
    %73 = arith.addf %72, %14 : vector<8x256xf32>
    %cst_39 = arith.constant 5.000000e-01 : f32
    %74 = vector.broadcast %cst_39 : f32 to vector<8x256xf32>
    %75 = arith.mulf %74, %73 : vector<8x256xf32>
    %76 = math.tanh %75 : vector<8x256xf32>
    %cst_40 = arith.constant 5.000000e-01 : f32
    %77 = vector.broadcast %cst_40 : f32 to vector<8x256xf32>
    %78 = arith.mulf %77, %76 : vector<8x256xf32>
    %cst_41 = arith.constant 5.000000e-01 : f32
    %79 = vector.broadcast %cst_41 : f32 to vector<8x256xf32>
    %80 = arith.addf %78, %79 : vector<8x256xf32>
    %81 = vector.extract_strided_slice %80 {offsets = [0, 0], sizes = [8, 128], strides = [1, 1]} : vector<8x256xf32> to vector<8x128xf32>
    %82 = vector.extract_strided_slice %80 {offsets = [0, 128], sizes = [8, 128], strides = [1, 1]} : vector<8x256xf32> to vector<8x128xf32>
    %83 = vector.extract_strided_slice %67 {offsets = [0, 256], sizes = [8, 128], strides = [1, 1]} : vector<8x384xf32> to vector<8x128xf32>
    %84 = arith.addf %83, %17 : vector<8x128xf32>
    %85 = vector.extract_strided_slice %69 {offsets = [0, 256], sizes = [8, 128], strides = [1, 1]} : vector<8x384xf32> to vector<8x128xf32>
    %86 = arith.addf %85, %20 : vector<8x128xf32>
    %87 = arith.mulf %81, %86 : vector<8x128xf32>
    %88 = arith.addf %84, %87 : vector<8x128xf32>
    %89 = math.tanh %88 : vector<8x128xf32>
    %cst_42 = arith.constant 1.000000e+00 : f32
    %90 = vector.broadcast %cst_42 : f32 to vector<8x128xf32>
    %91 = arith.subf %90, %82 : vector<8x128xf32>
    %92 = arith.mulf %91, %89 : vector<8x128xf32>
    %93 = arith.mulf %82, %28 : vector<8x128xf32>
    %94 = arith.addf %92, %93 : vector<8x128xf32>
    %95 = arith.index_cast %30 : i32 to index
    %c0_43 = arith.constant 0 : index
    %96 = vector.load %arg15[%95, %c0_43] : memref<64x128xf32, #tpu.memory_space<vmem>>, vector<8x128xf32>
    tpu.vector_store %arg15[%95, %c0_43], %94 {strides = array<i32>} : memref<64x128xf32, #tpu.memory_space<vmem>>, vector<8x128xf32>,
    %c1_i32 = arith.constant 1 : i32
    %c8_i32_44 = arith.constant 8 : i32
    %97 = arith.muli %c1_i32, %c8_i32_44 : i32
    %98 = tpu.assume_multiple %97, 8 : i32
    %99 = arith.index_cast %98 : i32 to index
    %c0_45 = arith.constant 0 : index
    %100 = vector.load %arg14[%99, %c0_45] : memref<64x384xf32, #tpu.memory_space<vmem>>, vector<8x384xf32>
    %101 = vector.extract_strided_slice %100 {offsets = [0, 0], sizes = [8, 128], strides = [1, 1]} : vector<8x384xf32> to vector<8x128xf32>
    %102 = vector.extract_strided_slice %66 {offsets = [0, 0], sizes = [8, 128], strides = [1, 1]} : vector<8x384xf32> to vector<8x128xf32>
    %103 = arith.addf %101, %102 : vector<8x128xf32>
    %cst_46 = arith.constant 5.000000e-01 : f32
    %104 = vector.broadcast %cst_46 : f32 to vector<8x128xf32>
    %105 = arith.mulf %104, %103 : vector<8x128xf32>
    %106 = math.tanh %105 : vector<8x128xf32>
    %cst_47 = arith.constant 5.000000e-01 : f32
    %107 = vector.broadcast %cst_47 : f32 to vector<8x128xf32>
    %108 = arith.mulf %107, %106 : vector<8x128xf32>
    %cst_48 = arith.constant 5.000000e-01 : f32
    %109 = vector.broadcast %cst_48 : f32 to vector<8x128xf32>
    %110 = arith.addf %108, %109 : vector<8x128xf32>
    %111 = vector.extract_strided_slice %100 {offsets = [0, 128], sizes = [8, 128], strides = [1, 1]} : vector<8x384xf32> to vector<8x128xf32>
    %112 = vector.extract_strided_slice %66 {offsets = [0, 128], sizes = [8, 128], strides = [1, 1]} : vector<8x384xf32> to vector<8x128xf32>
    %113 = arith.addf %111, %112 : vector<8x128xf32>
    %cst_49 = arith.constant 5.000000e-01 : f32
    %114 = vector.broadcast %cst_49 : f32 to vector<8x128xf32>
    %115 = arith.mulf %114, %113 : vector<8x128xf32>
    %116 = math.tanh %115 : vector<8x128xf32>
    %cst_50 = arith.constant 5.000000e-01 : f32
    %117 = vector.broadcast %cst_50 : f32 to vector<8x128xf32>
    %118 = arith.mulf %117, %116 : vector<8x128xf32>
    %cst_51 = arith.constant 5.000000e-01 : f32
    %119 = vector.broadcast %cst_51 : f32 to vector<8x128xf32>
    %120 = arith.addf %118, %119 : vector<8x128xf32>
    %121 = vector.extract_strided_slice %100 {offsets = [0, 256], sizes = [8, 128], strides = [1, 1]} : vector<8x384xf32> to vector<8x128xf32>
    %122 = vector.extract_strided_slice %66 {offsets = [0, 256], sizes = [8, 128], strides = [1, 1]} : vector<8x384xf32> to vector<8x128xf32>
    %123 = arith.addf %122, %11 : vector<8x128xf32>
    %124 = arith.mulf %110, %123 : vector<8x128xf32>
    %125 = arith.addf %121, %124 : vector<8x128xf32>
    %126 = math.tanh %125 : vector<8x128xf32>
    %cst_52 = arith.constant 1.000000e+00 : f32
    %127 = vector.broadcast %cst_52 : f32 to vector<8x128xf32>
    %128 = arith.subf %127, %120 : vector<8x128xf32>
    %129 = arith.mulf %128, %126 : vector<8x128xf32>
    %130 = arith.mulf %120, %63 : vector<8x128xf32>
    %131 = arith.addf %129, %130 : vector<8x128xf32>
    %c0_53 = arith.constant 0 : index
    %c0_54 = arith.constant 0 : index
    %132 = vector.load %arg5[%c0_53, %c0_54] : memref<128x768xf32, #tpu.memory_space<vmem>>, vector<128x768xf32>
    %cst_55 = arith.constant dense<0.000000e+00> : vector<8x768xf32>
    %133 = tpu.matmul %131, %132, %cst_55 {dimension_numbers = #tpu.dot_dimension_numbers<[1], [0], [0], [1], [0, 0, 1, 1], [], []>} : vector<8x128xf32>, vector<128x768xf32>, vector<8x768xf32> -> vector<8x768xf32>
    %134 = vector.extract_strided_slice %133 {offsets = [0, 0], sizes = [8, 384], strides = [1, 1]} : vector<8x768xf32> to vector<8x384xf32>
    %135 = vector.extract_strided_slice %133 {offsets = [0, 384], sizes = [8, 384], strides = [1, 1]} : vector<8x768xf32> to vector<8x384xf32>
    %c0_56 = arith.constant 0 : index
    %c0_57 = arith.constant 0 : index
    %136 = vector.load %arg6[%c0_56, %c0_57] : memref<128x384xf32, #tpu.memory_space<vmem>>, vector<128x384xf32>
    %cst_58 = arith.constant dense<0.000000e+00> : vector<8x384xf32>
    %137 = tpu.matmul %94, %136, %cst_58 {dimension_numbers = #tpu.dot_dimension_numbers<[1], [0], [0], [1], [0, 0, 1, 1], [], []>} : vector<8x128xf32>, vector<128x384xf32>, vector<8x384xf32> -> vector<8x384xf32>
    %138 = vector.extract_strided_slice %135 {offsets = [0, 0], sizes = [8, 256], strides = [1, 1]} : vector<8x384xf32> to vector<8x256xf32>
    %139 = vector.extract_strided_slice %137 {offsets = [0, 0], sizes = [8, 256], strides = [1, 1]} : vector<8x384xf32> to vector<8x256xf32>
    %140 = arith.addf %138, %139 : vector<8x256xf32>
    %141 = arith.addf %140, %14 : vector<8x256xf32>
    %cst_59 = arith.constant 5.000000e-01 : f32
    %142 = vector.broadcast %cst_59 : f32 to vector<8x256xf32>
    %143 = arith.mulf %142, %141 : vector<8x256xf32>
    %144 = math.tanh %143 : vector<8x256xf32>
    %cst_60 = arith.constant 5.000000e-01 : f32
    %145 = vector.broadcast %cst_60 : f32 to vector<8x256xf32>
    %146 = arith.mulf %145, %144 : vector<8x256xf32>
    %cst_61 = arith.constant 5.000000e-01 : f32
    %147 = vector.broadcast %cst_61 : f32 to vector<8x256xf32>
    %148 = arith.addf %146, %147 : vector<8x256xf32>
    %149 = vector.extract_strided_slice %148 {offsets = [0, 0], sizes = [8, 128], strides = [1, 1]} : vector<8x256xf32> to vector<8x128xf32>
    %150 = vector.extract_strided_slice %148 {offsets = [0, 128], sizes = [8, 128], strides = [1, 1]} : vector<8x256xf32> to vector<8x128xf32>
    %151 = vector.extract_strided_slice %135 {offsets = [0, 256], sizes = [8, 128], strides = [1, 1]} : vector<8x384xf32> to vector<8x128xf32>
    %152 = arith.addf %151, %17 : vector<8x128xf32>
    %153 = vector.extract_strided_slice %137 {offsets = [0, 256], sizes = [8, 128], strides = [1, 1]} : vector<8x384xf32> to vector<8x128xf32>
    %154 = arith.addf %153, %20 : vector<8x128xf32>
    %155 = arith.mulf %149, %154 : vector<8x128xf32>
    %156 = arith.addf %152, %155 : vector<8x128xf32>
    %157 = math.tanh %156 : vector<8x128xf32>
    %cst_62 = arith.constant 1.000000e+00 : f32
    %158 = vector.broadcast %cst_62 : f32 to vector<8x128xf32>
    %159 = arith.subf %158, %150 : vector<8x128xf32>
    %160 = arith.mulf %159, %157 : vector<8x128xf32>
    %161 = arith.mulf %150, %94 : vector<8x128xf32>
    %162 = arith.addf %160, %161 : vector<8x128xf32>
    %163 = arith.index_cast %98 : i32 to index
    %c0_63 = arith.constant 0 : index
    %164 = vector.load %arg15[%163, %c0_63] : memref<64x128xf32, #tpu.memory_space<vmem>>, vector<8x128xf32>
    tpu.vector_store %arg15[%163, %c0_63], %162 {strides = array<i32>} : memref<64x128xf32, #tpu.memory_space<vmem>>, vector<8x128xf32>,
    %c2_i32 = arith.constant 2 : i32
    %c8_i32_64 = arith.constant 8 : i32
    %165 = arith.muli %c2_i32, %c8_i32_64 : i32
    %166 = tpu.assume_multiple %165, 8 : i32
    %167 = arith.index_cast %166 : i32 to index
    %c0_65 = arith.constant 0 : index
    %168 = vector.load %arg14[%167, %c0_65] : memref<64x384xf32, #tpu.memory_space<vmem>>, vector<8x384xf32>
    %169 = vector.extract_strided_slice %168 {offsets = [0, 0], sizes = [8, 128], strides = [1, 1]} : vector<8x384xf32> to vector<8x128xf32>
    %170 = vector.extract_strided_slice %134 {offsets = [0, 0], sizes = [8, 128], strides = [1, 1]} : vector<8x384xf32> to vector<8x128xf32>
    %171 = arith.addf %169, %170 : vector<8x128xf32>
    %cst_66 = arith.constant 5.000000e-01 : f32
    %172 = vector.broadcast %cst_66 : f32 to vector<8x128xf32>
    %173 = arith.mulf %172, %171 : vector<8x128xf32>
    %174 = math.tanh %173 : vector<8x128xf32>
    %cst_67 = arith.constant 5.000000e-01 : f32
    %175 = vector.broadcast %cst_67 : f32 to vector<8x128xf32>
    %176 = arith.mulf %175, %174 : vector<8x128xf32>
    %cst_68 = arith.constant 5.000000e-01 : f32
    %177 = vector.broadcast %cst_68 : f32 to vector<8x128xf32>
    %178 = arith.addf %176, %177 : vector<8x128xf32>
    %179 = vector.extract_strided_slice %168 {offsets = [0, 128], sizes = [8, 128], strides = [1, 1]} : vector<8x384xf32> to vector<8x128xf32>
    %180 = vector.extract_strided_slice %134 {offsets = [0, 128], sizes = [8, 128], strides = [1, 1]} : vector<8x384xf32> to vector<8x128xf32>
    %181 = arith.addf %179, %180 : vector<8x128xf32>
    %cst_69 = arith.constant 5.000000e-01 : f32
    %182 = vector.broadcast %cst_69 : f32 to vector<8x128xf32>
    %183 = arith.mulf %182, %181 : vector<8x128xf32>
    %184 = math.tanh %183 : vector<8x128xf32>
    %cst_70 = arith.constant 5.000000e-01 : f32
    %185 = vector.broadcast %cst_70 : f32 to vector<8x128xf32>
    %186 = arith.mulf %185, %184 : vector<8x128xf32>
    %cst_71 = arith.constant 5.000000e-01 : f32
    %187 = vector.broadcast %cst_71 : f32 to vector<8x128xf32>
    %188 = arith.addf %186, %187 : vector<8x128xf32>
    %189 = vector.extract_strided_slice %168 {offsets = [0, 256], sizes = [8, 128], strides = [1, 1]} : vector<8x384xf32> to vector<8x128xf32>
    %190 = vector.extract_strided_slice %134 {offsets = [0, 256], sizes = [8, 128], strides = [1, 1]} : vector<8x384xf32> to vector<8x128xf32>
    %191 = arith.addf %190, %11 : vector<8x128xf32>
    %192 = arith.mulf %178, %191 : vector<8x128xf32>
    %193 = arith.addf %189, %192 : vector<8x128xf32>
    %194 = math.tanh %193 : vector<8x128xf32>
    %cst_72 = arith.constant 1.000000e+00 : f32
    %195 = vector.broadcast %cst_72 : f32 to vector<8x128xf32>
    %196 = arith.subf %195, %188 : vector<8x128xf32>
    %197 = arith.mulf %196, %194 : vector<8x128xf32>
    %198 = arith.mulf %188, %131 : vector<8x128xf32>
    %199 = arith.addf %197, %198 : vector<8x128xf32>
    %c0_73 = arith.constant 0 : index
    %c0_74 = arith.constant 0 : index
    %200 = vector.load %arg5[%c0_73, %c0_74] : memref<128x768xf32, #tpu.memory_space<vmem>>, vector<128x768xf32>
    %cst_75 = arith.constant dense<0.000000e+00> : vector<8x768xf32>
    %201 = tpu.matmul %199, %200, %cst_75 {dimension_numbers = #tpu.dot_dimension_numbers<[1], [0], [0], [1], [0, 0, 1, 1], [], []>} : vector<8x128xf32>, vector<128x768xf32>, vector<8x768xf32> -> vector<8x768xf32>
    %202 = vector.extract_strided_slice %201 {offsets = [0, 0], sizes = [8, 384], strides = [1, 1]} : vector<8x768xf32> to vector<8x384xf32>
    %203 = vector.extract_strided_slice %201 {offsets = [0, 384], sizes = [8, 384], strides = [1, 1]} : vector<8x768xf32> to vector<8x384xf32>
    %c0_76 = arith.constant 0 : index
    %c0_77 = arith.constant 0 : index
    %204 = vector.load %arg6[%c0_76, %c0_77] : memref<128x384xf32, #tpu.memory_space<vmem>>, vector<128x384xf32>
    %cst_78 = arith.constant dense<0.000000e+00> : vector<8x384xf32>
    %205 = tpu.matmul %162, %204, %cst_78 {dimension_numbers = #tpu.dot_dimension_numbers<[1], [0], [0], [1], [0, 0, 1, 1], [], []>} : vector<8x128xf32>, vector<128x384xf32>, vector<8x384xf32> -> vector<8x384xf32>
    %206 = vector.extract_strided_slice %203 {offsets = [0, 0], sizes = [8, 256], strides = [1, 1]} : vector<8x384xf32> to vector<8x256xf32>
    %207 = vector.extract_strided_slice %205 {offsets = [0, 0], sizes = [8, 256], strides = [1, 1]} : vector<8x384xf32> to vector<8x256xf32>
    %208 = arith.addf %206, %207 : vector<8x256xf32>
    %209 = arith.addf %208, %14 : vector<8x256xf32>
    %cst_79 = arith.constant 5.000000e-01 : f32
    %210 = vector.broadcast %cst_79 : f32 to vector<8x256xf32>
    %211 = arith.mulf %210, %209 : vector<8x256xf32>
    %212 = math.tanh %211 : vector<8x256xf32>
    %cst_80 = arith.constant 5.000000e-01 : f32
    %213 = vector.broadcast %cst_80 : f32 to vector<8x256xf32>
    %214 = arith.mulf %213, %212 : vector<8x256xf32>
    %cst_81 = arith.constant 5.000000e-01 : f32
    %215 = vector.broadcast %cst_81 : f32 to vector<8x256xf32>
    %216 = arith.addf %214, %215 : vector<8x256xf32>
    %217 = vector.extract_strided_slice %216 {offsets = [0, 0], sizes = [8, 128], strides = [1, 1]} : vector<8x256xf32> to vector<8x128xf32>
    %218 = vector.extract_strided_slice %216 {offsets = [0, 128], sizes = [8, 128], strides = [1, 1]} : vector<8x256xf32> to vector<8x128xf32>
    %219 = vector.extract_strided_slice %203 {offsets = [0, 256], sizes = [8, 128], strides = [1, 1]} : vector<8x384xf32> to vector<8x128xf32>
    %220 = arith.addf %219, %17 : vector<8x128xf32>
    %221 = vector.extract_strided_slice %205 {offsets = [0, 256], sizes = [8, 128], strides = [1, 1]} : vector<8x384xf32> to vector<8x128xf32>
    %222 = arith.addf %221, %20 : vector<8x128xf32>
    %223 = arith.mulf %217, %222 : vector<8x128xf32>
    %224 = arith.addf %220, %223 : vector<8x128xf32>
    %225 = math.tanh %224 : vector<8x128xf32>
    %cst_82 = arith.constant 1.000000e+00 : f32
    %226 = vector.broadcast %cst_82 : f32 to vector<8x128xf32>
    %227 = arith.subf %226, %218 : vector<8x128xf32>
    %228 = arith.mulf %227, %225 : vector<8x128xf32>
    %229 = arith.mulf %218, %162 : vector<8x128xf32>
    %230 = arith.addf %228, %229 : vector<8x128xf32>
    %231 = arith.index_cast %166 : i32 to index
    %c0_83 = arith.constant 0 : index
    %232 = vector.load %arg15[%231, %c0_83] : memref<64x128xf32, #tpu.memory_space<vmem>>, vector<8x128xf32>
    tpu.vector_store %arg15[%231, %c0_83], %230 {strides = array<i32>} : memref<64x128xf32, #tpu.memory_space<vmem>>, vector<8x128xf32>,
    %c3_i32 = arith.constant 3 : i32
    %c8_i32_84 = arith.constant 8 : i32
    %233 = arith.muli %c3_i32, %c8_i32_84 : i32
    %234 = tpu.assume_multiple %233, 8 : i32
    %235 = arith.index_cast %234 : i32 to index
    %c0_85 = arith.constant 0 : index
    %236 = vector.load %arg14[%235, %c0_85] : memref<64x384xf32, #tpu.memory_space<vmem>>, vector<8x384xf32>
    %237 = vector.extract_strided_slice %236 {offsets = [0, 0], sizes = [8, 128], strides = [1, 1]} : vector<8x384xf32> to vector<8x128xf32>
    %238 = vector.extract_strided_slice %202 {offsets = [0, 0], sizes = [8, 128], strides = [1, 1]} : vector<8x384xf32> to vector<8x128xf32>
    %239 = arith.addf %237, %238 : vector<8x128xf32>
    %cst_86 = arith.constant 5.000000e-01 : f32
    %240 = vector.broadcast %cst_86 : f32 to vector<8x128xf32>
    %241 = arith.mulf %240, %239 : vector<8x128xf32>
    %242 = math.tanh %241 : vector<8x128xf32>
    %cst_87 = arith.constant 5.000000e-01 : f32
    %243 = vector.broadcast %cst_87 : f32 to vector<8x128xf32>
    %244 = arith.mulf %243, %242 : vector<8x128xf32>
    %cst_88 = arith.constant 5.000000e-01 : f32
    %245 = vector.broadcast %cst_88 : f32 to vector<8x128xf32>
    %246 = arith.addf %244, %245 : vector<8x128xf32>
    %247 = vector.extract_strided_slice %236 {offsets = [0, 128], sizes = [8, 128], strides = [1, 1]} : vector<8x384xf32> to vector<8x128xf32>
    %248 = vector.extract_strided_slice %202 {offsets = [0, 128], sizes = [8, 128], strides = [1, 1]} : vector<8x384xf32> to vector<8x128xf32>
    %249 = arith.addf %247, %248 : vector<8x128xf32>
    %cst_89 = arith.constant 5.000000e-01 : f32
    %250 = vector.broadcast %cst_89 : f32 to vector<8x128xf32>
    %251 = arith.mulf %250, %249 : vector<8x128xf32>
    %252 = math.tanh %251 : vector<8x128xf32>
    %cst_90 = arith.constant 5.000000e-01 : f32
    %253 = vector.broadcast %cst_90 : f32 to vector<8x128xf32>
    %254 = arith.mulf %253, %252 : vector<8x128xf32>
    %cst_91 = arith.constant 5.000000e-01 : f32
    %255 = vector.broadcast %cst_91 : f32 to vector<8x128xf32>
    %256 = arith.addf %254, %255 : vector<8x128xf32>
    %257 = vector.extract_strided_slice %236 {offsets = [0, 256], sizes = [8, 128], strides = [1, 1]} : vector<8x384xf32> to vector<8x128xf32>
    %258 = vector.extract_strided_slice %202 {offsets = [0, 256], sizes = [8, 128], strides = [1, 1]} : vector<8x384xf32> to vector<8x128xf32>
    %259 = arith.addf %258, %11 : vector<8x128xf32>
    %260 = arith.mulf %246, %259 : vector<8x128xf32>
    %261 = arith.addf %257, %260 : vector<8x128xf32>
    %262 = math.tanh %261 : vector<8x128xf32>
    %cst_92 = arith.constant 1.000000e+00 : f32
    %263 = vector.broadcast %cst_92 : f32 to vector<8x128xf32>
    %264 = arith.subf %263, %256 : vector<8x128xf32>
    %265 = arith.mulf %264, %262 : vector<8x128xf32>
    %266 = arith.mulf %256, %199 : vector<8x128xf32>
    %267 = arith.addf %265, %266 : vector<8x128xf32>
    %c0_93 = arith.constant 0 : index
    %c0_94 = arith.constant 0 : index
    %268 = vector.load %arg5[%c0_93, %c0_94] : memref<128x768xf32, #tpu.memory_space<vmem>>, vector<128x768xf32>
    %cst_95 = arith.constant dense<0.000000e+00> : vector<8x768xf32>
    %269 = tpu.matmul %267, %268, %cst_95 {dimension_numbers = #tpu.dot_dimension_numbers<[1], [0], [0], [1], [0, 0, 1, 1], [], []>} : vector<8x128xf32>, vector<128x768xf32>, vector<8x768xf32> -> vector<8x768xf32>
    %270 = vector.extract_strided_slice %269 {offsets = [0, 0], sizes = [8, 384], strides = [1, 1]} : vector<8x768xf32> to vector<8x384xf32>
    %271 = vector.extract_strided_slice %269 {offsets = [0, 384], sizes = [8, 384], strides = [1, 1]} : vector<8x768xf32> to vector<8x384xf32>
    %c0_96 = arith.constant 0 : index
    %c0_97 = arith.constant 0 : index
    %272 = vector.load %arg6[%c0_96, %c0_97] : memref<128x384xf32, #tpu.memory_space<vmem>>, vector<128x384xf32>
    %cst_98 = arith.constant dense<0.000000e+00> : vector<8x384xf32>
    %273 = tpu.matmul %230, %272, %cst_98 {dimension_numbers = #tpu.dot_dimension_numbers<[1], [0], [0], [1], [0, 0, 1, 1], [], []>} : vector<8x128xf32>, vector<128x384xf32>, vector<8x384xf32> -> vector<8x384xf32>
    %274 = vector.extract_strided_slice %271 {offsets = [0, 0], sizes = [8, 256], strides = [1, 1]} : vector<8x384xf32> to vector<8x256xf32>
    %275 = vector.extract_strided_slice %273 {offsets = [0, 0], sizes = [8, 256], strides = [1, 1]} : vector<8x384xf32> to vector<8x256xf32>
    %276 = arith.addf %274, %275 : vector<8x256xf32>
    %277 = arith.addf %276, %14 : vector<8x256xf32>
    %cst_99 = arith.constant 5.000000e-01 : f32
    %278 = vector.broadcast %cst_99 : f32 to vector<8x256xf32>
    %279 = arith.mulf %278, %277 : vector<8x256xf32>
    %280 = math.tanh %279 : vector<8x256xf32>
    %cst_100 = arith.constant 5.000000e-01 : f32
    %281 = vector.broadcast %cst_100 : f32 to vector<8x256xf32>
    %282 = arith.mulf %281, %280 : vector<8x256xf32>
    %cst_101 = arith.constant 5.000000e-01 : f32
    %283 = vector.broadcast %cst_101 : f32 to vector<8x256xf32>
    %284 = arith.addf %282, %283 : vector<8x256xf32>
    %285 = vector.extract_strided_slice %284 {offsets = [0, 0], sizes = [8, 128], strides = [1, 1]} : vector<8x256xf32> to vector<8x128xf32>
    %286 = vector.extract_strided_slice %284 {offsets = [0, 128], sizes = [8, 128], strides = [1, 1]} : vector<8x256xf32> to vector<8x128xf32>
    %287 = vector.extract_strided_slice %271 {offsets = [0, 256], sizes = [8, 128], strides = [1, 1]} : vector<8x384xf32> to vector<8x128xf32>
    %288 = arith.addf %287, %17 : vector<8x128xf32>
    %289 = vector.extract_strided_slice %273 {offsets = [0, 256], sizes = [8, 128], strides = [1, 1]} : vector<8x384xf32> to vector<8x128xf32>
    %290 = arith.addf %289, %20 : vector<8x128xf32>
    %291 = arith.mulf %285, %290 : vector<8x128xf32>
    %292 = arith.addf %288, %291 : vector<8x128xf32>
    %293 = math.tanh %292 : vector<8x128xf32>
    %cst_102 = arith.constant 1.000000e+00 : f32
    %294 = vector.broadcast %cst_102 : f32 to vector<8x128xf32>
    %295 = arith.subf %294, %286 : vector<8x128xf32>
    %296 = arith.mulf %295, %293 : vector<8x128xf32>
    %297 = arith.mulf %286, %230 : vector<8x128xf32>
    %298 = arith.addf %296, %297 : vector<8x128xf32>
    %299 = arith.index_cast %234 : i32 to index
    %c0_103 = arith.constant 0 : index
    %300 = vector.load %arg15[%299, %c0_103] : memref<64x128xf32, #tpu.memory_space<vmem>>, vector<8x128xf32>
    tpu.vector_store %arg15[%299, %c0_103], %298 {strides = array<i32>} : memref<64x128xf32, #tpu.memory_space<vmem>>, vector<8x128xf32>,
    %c4_i32 = arith.constant 4 : i32
    %c8_i32_104 = arith.constant 8 : i32
    %301 = arith.muli %c4_i32, %c8_i32_104 : i32
    %302 = tpu.assume_multiple %301, 8 : i32
    %303 = arith.index_cast %302 : i32 to index
    %c0_105 = arith.constant 0 : index
    %304 = vector.load %arg14[%303, %c0_105] : memref<64x384xf32, #tpu.memory_space<vmem>>, vector<8x384xf32>
    %305 = vector.extract_strided_slice %304 {offsets = [0, 0], sizes = [8, 128], strides = [1, 1]} : vector<8x384xf32> to vector<8x128xf32>
    %306 = vector.extract_strided_slice %270 {offsets = [0, 0], sizes = [8, 128], strides = [1, 1]} : vector<8x384xf32> to vector<8x128xf32>
    %307 = arith.addf %305, %306 : vector<8x128xf32>
    %cst_106 = arith.constant 5.000000e-01 : f32
    %308 = vector.broadcast %cst_106 : f32 to vector<8x128xf32>
    %309 = arith.mulf %308, %307 : vector<8x128xf32>
    %310 = math.tanh %309 : vector<8x128xf32>
    %cst_107 = arith.constant 5.000000e-01 : f32
    %311 = vector.broadcast %cst_107 : f32 to vector<8x128xf32>
    %312 = arith.mulf %311, %310 : vector<8x128xf32>
    %cst_108 = arith.constant 5.000000e-01 : f32
    %313 = vector.broadcast %cst_108 : f32 to vector<8x128xf32>
    %314 = arith.addf %312, %313 : vector<8x128xf32>
    %315 = vector.extract_strided_slice %304 {offsets = [0, 128], sizes = [8, 128], strides = [1, 1]} : vector<8x384xf32> to vector<8x128xf32>
    %316 = vector.extract_strided_slice %270 {offsets = [0, 128], sizes = [8, 128], strides = [1, 1]} : vector<8x384xf32> to vector<8x128xf32>
    %317 = arith.addf %315, %316 : vector<8x128xf32>
    %cst_109 = arith.constant 5.000000e-01 : f32
    %318 = vector.broadcast %cst_109 : f32 to vector<8x128xf32>
    %319 = arith.mulf %318, %317 : vector<8x128xf32>
    %320 = math.tanh %319 : vector<8x128xf32>
    %cst_110 = arith.constant 5.000000e-01 : f32
    %321 = vector.broadcast %cst_110 : f32 to vector<8x128xf32>
    %322 = arith.mulf %321, %320 : vector<8x128xf32>
    %cst_111 = arith.constant 5.000000e-01 : f32
    %323 = vector.broadcast %cst_111 : f32 to vector<8x128xf32>
    %324 = arith.addf %322, %323 : vector<8x128xf32>
    %325 = vector.extract_strided_slice %304 {offsets = [0, 256], sizes = [8, 128], strides = [1, 1]} : vector<8x384xf32> to vector<8x128xf32>
    %326 = vector.extract_strided_slice %270 {offsets = [0, 256], sizes = [8, 128], strides = [1, 1]} : vector<8x384xf32> to vector<8x128xf32>
    %327 = arith.addf %326, %11 : vector<8x128xf32>
    %328 = arith.mulf %314, %327 : vector<8x128xf32>
    %329 = arith.addf %325, %328 : vector<8x128xf32>
    %330 = math.tanh %329 : vector<8x128xf32>
    %cst_112 = arith.constant 1.000000e+00 : f32
    %331 = vector.broadcast %cst_112 : f32 to vector<8x128xf32>
    %332 = arith.subf %331, %324 : vector<8x128xf32>
    %333 = arith.mulf %332, %330 : vector<8x128xf32>
    %334 = arith.mulf %324, %267 : vector<8x128xf32>
    %335 = arith.addf %333, %334 : vector<8x128xf32>
    %c0_113 = arith.constant 0 : index
    %c0_114 = arith.constant 0 : index
    %336 = vector.load %arg5[%c0_113, %c0_114] : memref<128x768xf32, #tpu.memory_space<vmem>>, vector<128x768xf32>
    %cst_115 = arith.constant dense<0.000000e+00> : vector<8x768xf32>
    %337 = tpu.matmul %335, %336, %cst_115 {dimension_numbers = #tpu.dot_dimension_numbers<[1], [0], [0], [1], [0, 0, 1, 1], [], []>} : vector<8x128xf32>, vector<128x768xf32>, vector<8x768xf32> -> vector<8x768xf32>
    %338 = vector.extract_strided_slice %337 {offsets = [0, 0], sizes = [8, 384], strides = [1, 1]} : vector<8x768xf32> to vector<8x384xf32>
    %339 = vector.extract_strided_slice %337 {offsets = [0, 384], sizes = [8, 384], strides = [1, 1]} : vector<8x768xf32> to vector<8x384xf32>
    %c0_116 = arith.constant 0 : index
    %c0_117 = arith.constant 0 : index
    %340 = vector.load %arg6[%c0_116, %c0_117] : memref<128x384xf32, #tpu.memory_space<vmem>>, vector<128x384xf32>
    %cst_118 = arith.constant dense<0.000000e+00> : vector<8x384xf32>
    %341 = tpu.matmul %298, %340, %cst_118 {dimension_numbers = #tpu.dot_dimension_numbers<[1], [0], [0], [1], [0, 0, 1, 1], [], []>} : vector<8x128xf32>, vector<128x384xf32>, vector<8x384xf32> -> vector<8x384xf32>
    %342 = vector.extract_strided_slice %339 {offsets = [0, 0], sizes = [8, 256], strides = [1, 1]} : vector<8x384xf32> to vector<8x256xf32>
    %343 = vector.extract_strided_slice %341 {offsets = [0, 0], sizes = [8, 256], strides = [1, 1]} : vector<8x384xf32> to vector<8x256xf32>
    %344 = arith.addf %342, %343 : vector<8x256xf32>
    %345 = arith.addf %344, %14 : vector<8x256xf32>
    %cst_119 = arith.constant 5.000000e-01 : f32
    %346 = vector.broadcast %cst_119 : f32 to vector<8x256xf32>
    %347 = arith.mulf %346, %345 : vector<8x256xf32>
    %348 = math.tanh %347 : vector<8x256xf32>
    %cst_120 = arith.constant 5.000000e-01 : f32
    %349 = vector.broadcast %cst_120 : f32 to vector<8x256xf32>
    %350 = arith.mulf %349, %348 : vector<8x256xf32>
    %cst_121 = arith.constant 5.000000e-01 : f32
    %351 = vector.broadcast %cst_121 : f32 to vector<8x256xf32>
    %352 = arith.addf %350, %351 : vector<8x256xf32>
    %353 = vector.extract_strided_slice %352 {offsets = [0, 0], sizes = [8, 128], strides = [1, 1]} : vector<8x256xf32> to vector<8x128xf32>
    %354 = vector.extract_strided_slice %352 {offsets = [0, 128], sizes = [8, 128], strides = [1, 1]} : vector<8x256xf32> to vector<8x128xf32>
    %355 = vector.extract_strided_slice %339 {offsets = [0, 256], sizes = [8, 128], strides = [1, 1]} : vector<8x384xf32> to vector<8x128xf32>
    %356 = arith.addf %355, %17 : vector<8x128xf32>
    %357 = vector.extract_strided_slice %341 {offsets = [0, 256], sizes = [8, 128], strides = [1, 1]} : vector<8x384xf32> to vector<8x128xf32>
    %358 = arith.addf %357, %20 : vector<8x128xf32>
    %359 = arith.mulf %353, %358 : vector<8x128xf32>
    %360 = arith.addf %356, %359 : vector<8x128xf32>
    %361 = math.tanh %360 : vector<8x128xf32>
    %cst_122 = arith.constant 1.000000e+00 : f32
    %362 = vector.broadcast %cst_122 : f32 to vector<8x128xf32>
    %363 = arith.subf %362, %354 : vector<8x128xf32>
    %364 = arith.mulf %363, %361 : vector<8x128xf32>
    %365 = arith.mulf %354, %298 : vector<8x128xf32>
    %366 = arith.addf %364, %365 : vector<8x128xf32>
    %367 = arith.index_cast %302 : i32 to index
    %c0_123 = arith.constant 0 : index
    %368 = vector.load %arg15[%367, %c0_123] : memref<64x128xf32, #tpu.memory_space<vmem>>, vector<8x128xf32>
    tpu.vector_store %arg15[%367, %c0_123], %366 {strides = array<i32>} : memref<64x128xf32, #tpu.memory_space<vmem>>, vector<8x128xf32>,
    %c5_i32 = arith.constant 5 : i32
    %c8_i32_124 = arith.constant 8 : i32
    %369 = arith.muli %c5_i32, %c8_i32_124 : i32
    %370 = tpu.assume_multiple %369, 8 : i32
    %371 = arith.index_cast %370 : i32 to index
    %c0_125 = arith.constant 0 : index
    %372 = vector.load %arg14[%371, %c0_125] : memref<64x384xf32, #tpu.memory_space<vmem>>, vector<8x384xf32>
    %373 = vector.extract_strided_slice %372 {offsets = [0, 0], sizes = [8, 128], strides = [1, 1]} : vector<8x384xf32> to vector<8x128xf32>
    %374 = vector.extract_strided_slice %338 {offsets = [0, 0], sizes = [8, 128], strides = [1, 1]} : vector<8x384xf32> to vector<8x128xf32>
    %375 = arith.addf %373, %374 : vector<8x128xf32>
    %cst_126 = arith.constant 5.000000e-01 : f32
    %376 = vector.broadcast %cst_126 : f32 to vector<8x128xf32>
    %377 = arith.mulf %376, %375 : vector<8x128xf32>
    %378 = math.tanh %377 : vector<8x128xf32>
    %cst_127 = arith.constant 5.000000e-01 : f32
    %379 = vector.broadcast %cst_127 : f32 to vector<8x128xf32>
    %380 = arith.mulf %379, %378 : vector<8x128xf32>
    %cst_128 = arith.constant 5.000000e-01 : f32
    %381 = vector.broadcast %cst_128 : f32 to vector<8x128xf32>
    %382 = arith.addf %380, %381 : vector<8x128xf32>
    %383 = vector.extract_strided_slice %372 {offsets = [0, 128], sizes = [8, 128], strides = [1, 1]} : vector<8x384xf32> to vector<8x128xf32>
    %384 = vector.extract_strided_slice %338 {offsets = [0, 128], sizes = [8, 128], strides = [1, 1]} : vector<8x384xf32> to vector<8x128xf32>
    %385 = arith.addf %383, %384 : vector<8x128xf32>
    %cst_129 = arith.constant 5.000000e-01 : f32
    %386 = vector.broadcast %cst_129 : f32 to vector<8x128xf32>
    %387 = arith.mulf %386, %385 : vector<8x128xf32>
    %388 = math.tanh %387 : vector<8x128xf32>
    %cst_130 = arith.constant 5.000000e-01 : f32
    %389 = vector.broadcast %cst_130 : f32 to vector<8x128xf32>
    %390 = arith.mulf %389, %388 : vector<8x128xf32>
    %cst_131 = arith.constant 5.000000e-01 : f32
    %391 = vector.broadcast %cst_131 : f32 to vector<8x128xf32>
    %392 = arith.addf %390, %391 : vector<8x128xf32>
    %393 = vector.extract_strided_slice %372 {offsets = [0, 256], sizes = [8, 128], strides = [1, 1]} : vector<8x384xf32> to vector<8x128xf32>
    %394 = vector.extract_strided_slice %338 {offsets = [0, 256], sizes = [8, 128], strides = [1, 1]} : vector<8x384xf32> to vector<8x128xf32>
    %395 = arith.addf %394, %11 : vector<8x128xf32>
    %396 = arith.mulf %382, %395 : vector<8x128xf32>
    %397 = arith.addf %393, %396 : vector<8x128xf32>
    %398 = math.tanh %397 : vector<8x128xf32>
    %cst_132 = arith.constant 1.000000e+00 : f32
    %399 = vector.broadcast %cst_132 : f32 to vector<8x128xf32>
    %400 = arith.subf %399, %392 : vector<8x128xf32>
    %401 = arith.mulf %400, %398 : vector<8x128xf32>
    %402 = arith.mulf %392, %335 : vector<8x128xf32>
    %403 = arith.addf %401, %402 : vector<8x128xf32>
    %c0_133 = arith.constant 0 : index
    %c0_134 = arith.constant 0 : index
    %404 = vector.load %arg5[%c0_133, %c0_134] : memref<128x768xf32, #tpu.memory_space<vmem>>, vector<128x768xf32>
    %cst_135 = arith.constant dense<0.000000e+00> : vector<8x768xf32>
    %405 = tpu.matmul %403, %404, %cst_135 {dimension_numbers = #tpu.dot_dimension_numbers<[1], [0], [0], [1], [0, 0, 1, 1], [], []>} : vector<8x128xf32>, vector<128x768xf32>, vector<8x768xf32> -> vector<8x768xf32>
    %406 = vector.extract_strided_slice %405 {offsets = [0, 0], sizes = [8, 384], strides = [1, 1]} : vector<8x768xf32> to vector<8x384xf32>
    %407 = vector.extract_strided_slice %405 {offsets = [0, 384], sizes = [8, 384], strides = [1, 1]} : vector<8x768xf32> to vector<8x384xf32>
    %c0_136 = arith.constant 0 : index
    %c0_137 = arith.constant 0 : index
    %408 = vector.load %arg6[%c0_136, %c0_137] : memref<128x384xf32, #tpu.memory_space<vmem>>, vector<128x384xf32>
    %cst_138 = arith.constant dense<0.000000e+00> : vector<8x384xf32>
    %409 = tpu.matmul %366, %408, %cst_138 {dimension_numbers = #tpu.dot_dimension_numbers<[1], [0], [0], [1], [0, 0, 1, 1], [], []>} : vector<8x128xf32>, vector<128x384xf32>, vector<8x384xf32> -> vector<8x384xf32>
    %410 = vector.extract_strided_slice %407 {offsets = [0, 0], sizes = [8, 256], strides = [1, 1]} : vector<8x384xf32> to vector<8x256xf32>
    %411 = vector.extract_strided_slice %409 {offsets = [0, 0], sizes = [8, 256], strides = [1, 1]} : vector<8x384xf32> to vector<8x256xf32>
    %412 = arith.addf %410, %411 : vector<8x256xf32>
    %413 = arith.addf %412, %14 : vector<8x256xf32>
    %cst_139 = arith.constant 5.000000e-01 : f32
    %414 = vector.broadcast %cst_139 : f32 to vector<8x256xf32>
    %415 = arith.mulf %414, %413 : vector<8x256xf32>
    %416 = math.tanh %415 : vector<8x256xf32>
    %cst_140 = arith.constant 5.000000e-01 : f32
    %417 = vector.broadcast %cst_140 : f32 to vector<8x256xf32>
    %418 = arith.mulf %417, %416 : vector<8x256xf32>
    %cst_141 = arith.constant 5.000000e-01 : f32
    %419 = vector.broadcast %cst_141 : f32 to vector<8x256xf32>
    %420 = arith.addf %418, %419 : vector<8x256xf32>
    %421 = vector.extract_strided_slice %420 {offsets = [0, 0], sizes = [8, 128], strides = [1, 1]} : vector<8x256xf32> to vector<8x128xf32>
    %422 = vector.extract_strided_slice %420 {offsets = [0, 128], sizes = [8, 128], strides = [1, 1]} : vector<8x256xf32> to vector<8x128xf32>
    %423 = vector.extract_strided_slice %407 {offsets = [0, 256], sizes = [8, 128], strides = [1, 1]} : vector<8x384xf32> to vector<8x128xf32>
    %424 = arith.addf %423, %17 : vector<8x128xf32>
    %425 = vector.extract_strided_slice %409 {offsets = [0, 256], sizes = [8, 128], strides = [1, 1]} : vector<8x384xf32> to vector<8x128xf32>
    %426 = arith.addf %425, %20 : vector<8x128xf32>
    %427 = arith.mulf %421, %426 : vector<8x128xf32>
    %428 = arith.addf %424, %427 : vector<8x128xf32>
    %429 = math.tanh %428 : vector<8x128xf32>
    %cst_142 = arith.constant 1.000000e+00 : f32
    %430 = vector.broadcast %cst_142 : f32 to vector<8x128xf32>
    %431 = arith.subf %430, %422 : vector<8x128xf32>
    %432 = arith.mulf %431, %429 : vector<8x128xf32>
    %433 = arith.mulf %422, %366 : vector<8x128xf32>
    %434 = arith.addf %432, %433 : vector<8x128xf32>
    %435 = arith.index_cast %370 : i32 to index
    %c0_143 = arith.constant 0 : index
    %436 = vector.load %arg15[%435, %c0_143] : memref<64x128xf32, #tpu.memory_space<vmem>>, vector<8x128xf32>
    tpu.vector_store %arg15[%435, %c0_143], %434 {strides = array<i32>} : memref<64x128xf32, #tpu.memory_space<vmem>>, vector<8x128xf32>,
    %c6_i32 = arith.constant 6 : i32
    %c8_i32_144 = arith.constant 8 : i32
    %437 = arith.muli %c6_i32, %c8_i32_144 : i32
    %438 = tpu.assume_multiple %437, 8 : i32
    %439 = arith.index_cast %438 : i32 to index
    %c0_145 = arith.constant 0 : index
    %440 = vector.load %arg14[%439, %c0_145] : memref<64x384xf32, #tpu.memory_space<vmem>>, vector<8x384xf32>
    %441 = vector.extract_strided_slice %440 {offsets = [0, 0], sizes = [8, 128], strides = [1, 1]} : vector<8x384xf32> to vector<8x128xf32>
    %442 = vector.extract_strided_slice %406 {offsets = [0, 0], sizes = [8, 128], strides = [1, 1]} : vector<8x384xf32> to vector<8x128xf32>
    %443 = arith.addf %441, %442 : vector<8x128xf32>
    %cst_146 = arith.constant 5.000000e-01 : f32
    %444 = vector.broadcast %cst_146 : f32 to vector<8x128xf32>
    %445 = arith.mulf %444, %443 : vector<8x128xf32>
    %446 = math.tanh %445 : vector<8x128xf32>
    %cst_147 = arith.constant 5.000000e-01 : f32
    %447 = vector.broadcast %cst_147 : f32 to vector<8x128xf32>
    %448 = arith.mulf %447, %446 : vector<8x128xf32>
    %cst_148 = arith.constant 5.000000e-01 : f32
    %449 = vector.broadcast %cst_148 : f32 to vector<8x128xf32>
    %450 = arith.addf %448, %449 : vector<8x128xf32>
    %451 = vector.extract_strided_slice %440 {offsets = [0, 128], sizes = [8, 128], strides = [1, 1]} : vector<8x384xf32> to vector<8x128xf32>
    %452 = vector.extract_strided_slice %406 {offsets = [0, 128], sizes = [8, 128], strides = [1, 1]} : vector<8x384xf32> to vector<8x128xf32>
    %453 = arith.addf %451, %452 : vector<8x128xf32>
    %cst_149 = arith.constant 5.000000e-01 : f32
    %454 = vector.broadcast %cst_149 : f32 to vector<8x128xf32>
    %455 = arith.mulf %454, %453 : vector<8x128xf32>
    %456 = math.tanh %455 : vector<8x128xf32>
    %cst_150 = arith.constant 5.000000e-01 : f32
    %457 = vector.broadcast %cst_150 : f32 to vector<8x128xf32>
    %458 = arith.mulf %457, %456 : vector<8x128xf32>
    %cst_151 = arith.constant 5.000000e-01 : f32
    %459 = vector.broadcast %cst_151 : f32 to vector<8x128xf32>
    %460 = arith.addf %458, %459 : vector<8x128xf32>
    %461 = vector.extract_strided_slice %440 {offsets = [0, 256], sizes = [8, 128], strides = [1, 1]} : vector<8x384xf32> to vector<8x128xf32>
    %462 = vector.extract_strided_slice %406 {offsets = [0, 256], sizes = [8, 128], strides = [1, 1]} : vector<8x384xf32> to vector<8x128xf32>
    %463 = arith.addf %462, %11 : vector<8x128xf32>
    %464 = arith.mulf %450, %463 : vector<8x128xf32>
    %465 = arith.addf %461, %464 : vector<8x128xf32>
    %466 = math.tanh %465 : vector<8x128xf32>
    %cst_152 = arith.constant 1.000000e+00 : f32
    %467 = vector.broadcast %cst_152 : f32 to vector<8x128xf32>
    %468 = arith.subf %467, %460 : vector<8x128xf32>
    %469 = arith.mulf %468, %466 : vector<8x128xf32>
    %470 = arith.mulf %460, %403 : vector<8x128xf32>
    %471 = arith.addf %469, %470 : vector<8x128xf32>
    %c0_153 = arith.constant 0 : index
    %c0_154 = arith.constant 0 : index
    %472 = vector.load %arg5[%c0_153, %c0_154] : memref<128x768xf32, #tpu.memory_space<vmem>>, vector<128x768xf32>
    %cst_155 = arith.constant dense<0.000000e+00> : vector<8x768xf32>
    %473 = tpu.matmul %471, %472, %cst_155 {dimension_numbers = #tpu.dot_dimension_numbers<[1], [0], [0], [1], [0, 0, 1, 1], [], []>} : vector<8x128xf32>, vector<128x768xf32>, vector<8x768xf32> -> vector<8x768xf32>
    %474 = vector.extract_strided_slice %473 {offsets = [0, 0], sizes = [8, 384], strides = [1, 1]} : vector<8x768xf32> to vector<8x384xf32>
    %475 = vector.extract_strided_slice %473 {offsets = [0, 384], sizes = [8, 384], strides = [1, 1]} : vector<8x768xf32> to vector<8x384xf32>
    %c0_156 = arith.constant 0 : index
    %c0_157 = arith.constant 0 : index
    %476 = vector.load %arg6[%c0_156, %c0_157] : memref<128x384xf32, #tpu.memory_space<vmem>>, vector<128x384xf32>
    %cst_158 = arith.constant dense<0.000000e+00> : vector<8x384xf32>
    %477 = tpu.matmul %434, %476, %cst_158 {dimension_numbers = #tpu.dot_dimension_numbers<[1], [0], [0], [1], [0, 0, 1, 1], [], []>} : vector<8x128xf32>, vector<128x384xf32>, vector<8x384xf32> -> vector<8x384xf32>
    %478 = vector.extract_strided_slice %475 {offsets = [0, 0], sizes = [8, 256], strides = [1, 1]} : vector<8x384xf32> to vector<8x256xf32>
    %479 = vector.extract_strided_slice %477 {offsets = [0, 0], sizes = [8, 256], strides = [1, 1]} : vector<8x384xf32> to vector<8x256xf32>
    %480 = arith.addf %478, %479 : vector<8x256xf32>
    %481 = arith.addf %480, %14 : vector<8x256xf32>
    %cst_159 = arith.constant 5.000000e-01 : f32
    %482 = vector.broadcast %cst_159 : f32 to vector<8x256xf32>
    %483 = arith.mulf %482, %481 : vector<8x256xf32>
    %484 = math.tanh %483 : vector<8x256xf32>
    %cst_160 = arith.constant 5.000000e-01 : f32
    %485 = vector.broadcast %cst_160 : f32 to vector<8x256xf32>
    %486 = arith.mulf %485, %484 : vector<8x256xf32>
    %cst_161 = arith.constant 5.000000e-01 : f32
    %487 = vector.broadcast %cst_161 : f32 to vector<8x256xf32>
    %488 = arith.addf %486, %487 : vector<8x256xf32>
    %489 = vector.extract_strided_slice %488 {offsets = [0, 0], sizes = [8, 128], strides = [1, 1]} : vector<8x256xf32> to vector<8x128xf32>
    %490 = vector.extract_strided_slice %488 {offsets = [0, 128], sizes = [8, 128], strides = [1, 1]} : vector<8x256xf32> to vector<8x128xf32>
    %491 = vector.extract_strided_slice %475 {offsets = [0, 256], sizes = [8, 128], strides = [1, 1]} : vector<8x384xf32> to vector<8x128xf32>
    %492 = arith.addf %491, %17 : vector<8x128xf32>
    %493 = vector.extract_strided_slice %477 {offsets = [0, 256], sizes = [8, 128], strides = [1, 1]} : vector<8x384xf32> to vector<8x128xf32>
    %494 = arith.addf %493, %20 : vector<8x128xf32>
    %495 = arith.mulf %489, %494 : vector<8x128xf32>
    %496 = arith.addf %492, %495 : vector<8x128xf32>
    %497 = math.tanh %496 : vector<8x128xf32>
    %cst_162 = arith.constant 1.000000e+00 : f32
    %498 = vector.broadcast %cst_162 : f32 to vector<8x128xf32>
    %499 = arith.subf %498, %490 : vector<8x128xf32>
    %500 = arith.mulf %499, %497 : vector<8x128xf32>
    %501 = arith.mulf %490, %434 : vector<8x128xf32>
    %502 = arith.addf %500, %501 : vector<8x128xf32>
    %503 = arith.index_cast %438 : i32 to index
    %c0_163 = arith.constant 0 : index
    %504 = vector.load %arg15[%503, %c0_163] : memref<64x128xf32, #tpu.memory_space<vmem>>, vector<8x128xf32>
    tpu.vector_store %arg15[%503, %c0_163], %502 {strides = array<i32>} : memref<64x128xf32, #tpu.memory_space<vmem>>, vector<8x128xf32>,
    %c7_i32 = arith.constant 7 : i32
    %c8_i32_164 = arith.constant 8 : i32
    %505 = arith.muli %c7_i32, %c8_i32_164 : i32
    %506 = tpu.assume_multiple %505, 8 : i32
    %507 = arith.index_cast %506 : i32 to index
    %c0_165 = arith.constant 0 : index
    %508 = vector.load %arg14[%507, %c0_165] : memref<64x384xf32, #tpu.memory_space<vmem>>, vector<8x384xf32>
    %509 = vector.extract_strided_slice %508 {offsets = [0, 0], sizes = [8, 128], strides = [1, 1]} : vector<8x384xf32> to vector<8x128xf32>
    %510 = vector.extract_strided_slice %474 {offsets = [0, 0], sizes = [8, 128], strides = [1, 1]} : vector<8x384xf32> to vector<8x128xf32>
    %511 = arith.addf %509, %510 : vector<8x128xf32>
    %cst_166 = arith.constant 5.000000e-01 : f32
    %512 = vector.broadcast %cst_166 : f32 to vector<8x128xf32>
    %513 = arith.mulf %512, %511 : vector<8x128xf32>
    %514 = math.tanh %513 : vector<8x128xf32>
    %cst_167 = arith.constant 5.000000e-01 : f32
    %515 = vector.broadcast %cst_167 : f32 to vector<8x128xf32>
    %516 = arith.mulf %515, %514 : vector<8x128xf32>
    %cst_168 = arith.constant 5.000000e-01 : f32
    %517 = vector.broadcast %cst_168 : f32 to vector<8x128xf32>
    %518 = arith.addf %516, %517 : vector<8x128xf32>
    %519 = vector.extract_strided_slice %508 {offsets = [0, 128], sizes = [8, 128], strides = [1, 1]} : vector<8x384xf32> to vector<8x128xf32>
    %520 = vector.extract_strided_slice %474 {offsets = [0, 128], sizes = [8, 128], strides = [1, 1]} : vector<8x384xf32> to vector<8x128xf32>
    %521 = arith.addf %519, %520 : vector<8x128xf32>
    %cst_169 = arith.constant 5.000000e-01 : f32
    %522 = vector.broadcast %cst_169 : f32 to vector<8x128xf32>
    %523 = arith.mulf %522, %521 : vector<8x128xf32>
    %524 = math.tanh %523 : vector<8x128xf32>
    %cst_170 = arith.constant 5.000000e-01 : f32
    %525 = vector.broadcast %cst_170 : f32 to vector<8x128xf32>
    %526 = arith.mulf %525, %524 : vector<8x128xf32>
    %cst_171 = arith.constant 5.000000e-01 : f32
    %527 = vector.broadcast %cst_171 : f32 to vector<8x128xf32>
    %528 = arith.addf %526, %527 : vector<8x128xf32>
    %529 = vector.extract_strided_slice %508 {offsets = [0, 256], sizes = [8, 128], strides = [1, 1]} : vector<8x384xf32> to vector<8x128xf32>
    %530 = vector.extract_strided_slice %474 {offsets = [0, 256], sizes = [8, 128], strides = [1, 1]} : vector<8x384xf32> to vector<8x128xf32>
    %531 = arith.addf %530, %11 : vector<8x128xf32>
    %532 = arith.mulf %518, %531 : vector<8x128xf32>
    %533 = arith.addf %529, %532 : vector<8x128xf32>
    %534 = math.tanh %533 : vector<8x128xf32>
    %cst_172 = arith.constant 1.000000e+00 : f32
    %535 = vector.broadcast %cst_172 : f32 to vector<8x128xf32>
    %536 = arith.subf %535, %528 : vector<8x128xf32>
    %537 = arith.mulf %536, %534 : vector<8x128xf32>
    %538 = arith.mulf %528, %471 : vector<8x128xf32>
    %539 = arith.addf %537, %538 : vector<8x128xf32>
    %c0_173 = arith.constant 0 : index
    %c0_174 = arith.constant 0 : index
    %540 = vector.load %arg5[%c0_173, %c0_174] : memref<128x768xf32, #tpu.memory_space<vmem>>, vector<128x768xf32>
    %cst_175 = arith.constant dense<0.000000e+00> : vector<8x768xf32>
    %541 = tpu.matmul %539, %540, %cst_175 {dimension_numbers = #tpu.dot_dimension_numbers<[1], [0], [0], [1], [0, 0, 1, 1], [], []>} : vector<8x128xf32>, vector<128x768xf32>, vector<8x768xf32> -> vector<8x768xf32>
    %542 = vector.extract_strided_slice %541 {offsets = [0, 0], sizes = [8, 384], strides = [1, 1]} : vector<8x768xf32> to vector<8x384xf32>
    %543 = vector.extract_strided_slice %541 {offsets = [0, 384], sizes = [8, 384], strides = [1, 1]} : vector<8x768xf32> to vector<8x384xf32>
    %c0_176 = arith.constant 0 : index
    %c0_177 = arith.constant 0 : index
    %544 = vector.load %arg6[%c0_176, %c0_177] : memref<128x384xf32, #tpu.memory_space<vmem>>, vector<128x384xf32>
    %cst_178 = arith.constant dense<0.000000e+00> : vector<8x384xf32>
    %545 = tpu.matmul %502, %544, %cst_178 {dimension_numbers = #tpu.dot_dimension_numbers<[1], [0], [0], [1], [0, 0, 1, 1], [], []>} : vector<8x128xf32>, vector<128x384xf32>, vector<8x384xf32> -> vector<8x384xf32>
    %546 = vector.extract_strided_slice %543 {offsets = [0, 0], sizes = [8, 256], strides = [1, 1]} : vector<8x384xf32> to vector<8x256xf32>
    %547 = vector.extract_strided_slice %545 {offsets = [0, 0], sizes = [8, 256], strides = [1, 1]} : vector<8x384xf32> to vector<8x256xf32>
    %548 = arith.addf %546, %547 : vector<8x256xf32>
    %549 = arith.addf %548, %14 : vector<8x256xf32>
    %cst_179 = arith.constant 5.000000e-01 : f32
    %550 = vector.broadcast %cst_179 : f32 to vector<8x256xf32>
    %551 = arith.mulf %550, %549 : vector<8x256xf32>
    %552 = math.tanh %551 : vector<8x256xf32>
    %cst_180 = arith.constant 5.000000e-01 : f32
    %553 = vector.broadcast %cst_180 : f32 to vector<8x256xf32>
    %554 = arith.mulf %553, %552 : vector<8x256xf32>
    %cst_181 = arith.constant 5.000000e-01 : f32
    %555 = vector.broadcast %cst_181 : f32 to vector<8x256xf32>
    %556 = arith.addf %554, %555 : vector<8x256xf32>
    %557 = vector.extract_strided_slice %556 {offsets = [0, 0], sizes = [8, 128], strides = [1, 1]} : vector<8x256xf32> to vector<8x128xf32>
    %558 = vector.extract_strided_slice %556 {offsets = [0, 128], sizes = [8, 128], strides = [1, 1]} : vector<8x256xf32> to vector<8x128xf32>
    %559 = vector.extract_strided_slice %543 {offsets = [0, 256], sizes = [8, 128], strides = [1, 1]} : vector<8x384xf32> to vector<8x128xf32>
    %560 = arith.addf %559, %17 : vector<8x128xf32>
    %561 = vector.extract_strided_slice %545 {offsets = [0, 256], sizes = [8, 128], strides = [1, 1]} : vector<8x384xf32> to vector<8x128xf32>
    %562 = arith.addf %561, %20 : vector<8x128xf32>
    %563 = arith.mulf %557, %562 : vector<8x128xf32>
    %564 = arith.addf %560, %563 : vector<8x128xf32>
    %565 = math.tanh %564 : vector<8x128xf32>
    %cst_182 = arith.constant 1.000000e+00 : f32
    %566 = vector.broadcast %cst_182 : f32 to vector<8x128xf32>
    %567 = arith.subf %566, %558 : vector<8x128xf32>
    %568 = arith.mulf %567, %565 : vector<8x128xf32>
    %569 = arith.mulf %558, %502 : vector<8x128xf32>
    %570 = arith.addf %568, %569 : vector<8x128xf32>
    %571 = arith.index_cast %506 : i32 to index
    %c0_183 = arith.constant 0 : index
    %572 = vector.load %arg15[%571, %c0_183] : memref<64x128xf32, #tpu.memory_space<vmem>>, vector<8x128xf32>
    tpu.vector_store %arg15[%571, %c0_183], %570 {strides = array<i32>} : memref<64x128xf32, #tpu.memory_space<vmem>>, vector<8x128xf32>,
    %c8_i32_184 = arith.constant 8 : i32
    %c0_185 = arith.constant 0 : index
    %c0_186 = arith.constant 0 : index
    %c0_187 = arith.constant 0 : index
    %573 = vector.load %arg13[%c0_185, %c0_186, %c0_187] : memref<2x8x128xf32, #tpu.memory_space<vmem>>, vector<1x8x128xf32>
    %574 = vector.shape_cast %573 : vector<1x8x128xf32> to vector<8x128xf32>
    %575 = vector.shape_cast %539 : vector<8x128xf32> to vector<1x8x128xf32>
    tpu.vector_store %arg13[%c0_185, %c0_186, %c0_187], %575 {strides = array<i32>} : memref<2x8x128xf32, #tpu.memory_space<vmem>>, vector<1x8x128xf32>,
    %c1_188 = arith.constant 1 : index
    %c0_189 = arith.constant 0 : index
    %c0_190 = arith.constant 0 : index
    %576 = vector.load %arg13[%c1_188, %c0_189, %c0_190] : memref<2x8x128xf32, #tpu.memory_space<vmem>>, vector<1x8x128xf32>
    %577 = vector.shape_cast %576 : vector<1x8x128xf32> to vector<8x128xf32>
    %578 = vector.shape_cast %570 : vector<8x128xf32> to vector<1x8x128xf32>
    tpu.vector_store %arg13[%c1_188, %c0_189, %c0_190], %578 {strides = array<i32>} : memref<2x8x128xf32, #tpu.memory_space<vmem>>, vector<1x8x128xf32>,
    %c0_191 = arith.constant 0 : index
    %c0_192 = arith.constant 0 : index
    %579 = vector.load %arg15[%c0_191, %c0_192] : memref<64x128xf32, #tpu.memory_space<vmem>>, vector<64x128xf32>
    %c0_193 = arith.constant 0 : index
    %c0_194 = arith.constant 0 : index
    %580 = vector.load %arg10[%c0_193, %c0_194] : memref<128x1xf32, #tpu.memory_space<vmem>>, vector<128x1xf32>
    %cst_195 = arith.constant dense<0.000000e+00> : vector<64x1xf32>
    %581 = tpu.matmul %579, %580, %cst_195 {dimension_numbers = #tpu.dot_dimension_numbers<[1], [0], [0], [1], [0, 0, 1, 1], [], []>} : vector<64x128xf32>, vector<128x1xf32>, vector<64x1xf32> -> vector<64x1xf32>
    %c0_196 = arith.constant 0 : index
    %c0_197 = arith.constant 0 : index
    %582 = vector.load %arg11[%c0_196, %c0_197] : memref<1x1xf32, #tpu.memory_space<vmem>>, vector<1x1xf32>
    %583 = vector.broadcast %582 : vector<1x1xf32> to vector<64x1xf32>
    %584 = arith.addf %581, %583 : vector<64x1xf32>
    %cst_198 = arith.constant 5.000000e-01 : f32
    %585 = vector.broadcast %cst_198 : f32 to vector<64x1xf32>
    %586 = arith.mulf %585, %584 : vector<64x1xf32>
    %587 = math.tanh %586 : vector<64x1xf32>
    %cst_199 = arith.constant 5.000000e-01 : f32
    %588 = vector.broadcast %cst_199 : f32 to vector<64x1xf32>
    %589 = arith.mulf %588, %587 : vector<64x1xf32>
    %cst_200 = arith.constant 5.000000e-01 : f32
    %590 = vector.broadcast %cst_200 : f32 to vector<64x1xf32>
    %591 = arith.addf %589, %590 : vector<64x1xf32>
    %c0_201 = arith.constant 0 : index
    %c0_202 = arith.constant 0 : index
    %592 = vector.load %arg12[%c0_201, %c0_202] : memref<64x1xf32, #tpu.memory_space<vmem>>, vector<64x1xf32>
    tpu.vector_store %arg12[%c0_201, %c0_202], %591 {strides = array<i32>} : memref<64x1xf32, #tpu.memory_space<vmem>>, vector<64x1xf32>,
    return
  }
}

</mosaic_0001>

<llo_original>
// kernel: rnn_forward.1
$region0: #{rnn_forward.1}
  #allocation0 [shape = 'u32[]', space=smem, size = 0x4, offset = 0x4, fixed_abs, tag = 'smem constant byte address 0x4 - core index']
  #allocation1 [shape = 'u32[144,128]{1,0:T(1,128)}', space=vmem, size = 0x12000, scoped, tag = 'internal scratch']
  #allocation2 [shape = 'f32[64,384]{1,0:T(8,128)}', space=vmem, size = 0x18000, scoped, tag = 'scratch operand']
  #allocation3 [shape = 'f32[64,128]{1,0:T(8,128)}', space=vmem, size = 0x8000, scoped, tag = 'scratch operand']
  #allocation4 [shape = 'f32[1,1]{1,0:T(1,128)S(1)}', space=vmem, size = 0x200, scoped, tag = 'scoped memory for rnn_forward.1']
  %s0 = inlined_call_operand.vmem [shape: f32[64,1], index: 0, kind: input, shape index: {}]
  %s1 = inlined_call_operand.vmem [shape: f32[2,8,128], index: 1, kind: input, shape index: {}]
  %s2 = inlined_call_operand.vmem [shape: f32[1,384], index: 2, kind: input, shape index: {}]
  %s3 = inlined_call_operand.vmem [shape: f32[1,384], index: 3, kind: input, shape index: {}]
  %s4 = inlined_call_operand.vmem [shape: f32[1,128], index: 4, kind: input, shape index: {}]
  %s5 = inlined_call_operand.vmem [shape: f32[128,768], index: 5, kind: input, shape index: {}]
  %s6 = inlined_call_operand.vmem [shape: f32[128,384], index: 6, kind: input, shape index: {}]
  %s7 = inlined_call_operand.vmem [shape: f32[1,256], index: 7, kind: input, shape index: {}]
  %s8 = inlined_call_operand.vmem [shape: f32[1,128], index: 8, kind: input, shape index: {}]
  %s9 = inlined_call_operand.vmem [shape: f32[1,128], index: 9, kind: input, shape index: {}]
  %s10 = inlined_call_operand.vmem [shape: f32[128,1], index: 10, kind: input, shape index: {}]
  %s11 = inlined_call_operand.<no memory space> [shape: f32[1,1], index: 11, kind: input, shape index: {}]
  %s12 = inlined_call_operand.vmem [shape: f32[64,1], index: 12, kind: output, shape index: {0}]
  %s13 = inlined_call_operand.vmem [shape: f32[2,8,128], index: 13, kind: output, shape index: {1}]
  %14 = xla_tuple %s12, %s13
  %s15 = sld [smem:[#allocation0]]
  $region66: #{rnn_forward.1} parent=0
    _
  %s17 = ssub.s32 1, %s15
  %s18 = scalar_select 0, %s17, %s15
  %v19 = vstv %s11
  %20 = vst [vmem:[#allocation4] sm:$0x1] %v19
  // Predicated region
  $region2: #{rnn_forward.1} parent=0 // pred_check
    _
  $region3: #{rnn_forward.1} parent=0 // pred_check_branch
    %22 = sbr.rel (0) target = $region5
  $region4: #{rnn_forward.1} parent=0 // pred_region
    _
  $region5: #{rnn_forward.1} parent=0 // pred_fallthru
    _
  // Predicated region
  $region6: #{rnn_forward.1} parent=0 // pred_check
    _
  $region7: #{rnn_forward.1} parent=0 // pred_check_branch
    %24 = sbr.rel (0) target = $region9
  $region8: #{rnn_forward.1} parent=0 // pred_region
    _
  $region9: #{rnn_forward.1} parent=0 // pred_fallthru
    _
  // Predicated region
  $region10: #{rnn_forward.1} parent=0 // pred_check
    _
  $region11: #{rnn_forward.1} parent=0 // pred_check_branch
    %26 = sbr.rel (0) target = $region13
  $region12: #{rnn_forward.1} parent=0 // pred_region
    _
  $region13: #{rnn_forward.1} parent=0 // pred_fallthru
    _
  // Predicated region
  $region14: #{rnn_forward.1} parent=0 // pred_check
    _
  $region15: #{rnn_forward.1} parent=0 // pred_check_branch
    %28 = sbr.rel (0) target = $region17
  $region16: #{rnn_forward.1} parent=0 // pred_region
    _
  $region17: #{rnn_forward.1} parent=0 // pred_fallthru
    _
  // Predicated region
  $region18: #{rnn_forward.1} parent=0 // pred_check
    _
  $region19: #{rnn_forward.1} parent=0 // pred_check_branch
    %30 = sbr.rel (0) target = $region21
  $region20: #{rnn_forward.1} parent=0 // pred_region
    _
  $region21: #{rnn_forward.1} parent=0 // pred_fallthru
    _
  // Predicated region
  $region22: #{rnn_forward.1} parent=0 // pred_check
    _
  $region23: #{rnn_forward.1} parent=0 // pred_check_branch
    %32 = sbr.rel (0) target = $region25
  $region24: #{rnn_forward.1} parent=0 // pred_region
    _
  $region25: #{rnn_forward.1} parent=0 // pred_fallthru
    _
  // Predicated region
  $region26: #{rnn_forward.1} parent=0 // pred_check
    _
  $region27: #{rnn_forward.1} parent=0 // pred_check_branch
    %34 = sbr.rel (0) target = $region29
  $region28: #{rnn_forward.1} parent=0 // pred_region
    _
  $region29: #{rnn_forward.1} parent=0 // pred_fallthru
    _
  // Predicated region
  $region30: #{rnn_forward.1} parent=0 // pred_check
    _
  $region31: #{rnn_forward.1} parent=0 // pred_check_branch
    %36 = sbr.rel (0) target = $region33
  $region32: #{rnn_forward.1} parent=0 // pred_region
    _
  $region33: #{rnn_forward.1} parent=0 // pred_fallthru
    _
  // Predicated region
  $region34: #{rnn_forward.1} parent=0 // pred_check
    _
  $region35: #{rnn_forward.1} parent=0 // pred_check_branch
    %38 = sbr.rel (0) target = $region37
  $region36: #{rnn_forward.1} parent=0 // pred_region
    _
  $region37: #{rnn_forward.1} parent=0 // pred_fallthru
    _
  // Predicated region
  $region38: #{rnn_forward.1} parent=0 // pred_check
    _
  $region39: #{rnn_forward.1} parent=0 // pred_check_branch
    %40 = sbr.rel (0) target = $region41
  $region40: #{rnn_forward.1} parent=0 // pred_region
    _
  $region41: #{rnn_forward.1} parent=0 // pred_fallthru
    _
  // Predicated region
  $region42: #{rnn_forward.1} parent=0 // pred_check
    _
  $region43: #{rnn_forward.1} parent=0 // pred_check_branch
    %42 = sbr.rel (0) target = $region45
  $region44: #{rnn_forward.1} parent=0 // pred_region
    _
  $region45: #{rnn_forward.1} parent=0 // pred_fallthru
    _
  // Predicated region
  $region46: #{rnn_forward.1} parent=0 // pred_check
    _
  $region47: #{rnn_forward.1} parent=0 // pred_check_branch
    %44 = sbr.rel (0) target = $region49
  $region48: #{rnn_forward.1} parent=0 // pred_region
    _
  $region49: #{rnn_forward.1} parent=0 // pred_fallthru
    _
  %v45 = vld [vmem:[%s0] sm:$0xff]
  %v46 = vld [vmem:[%s0 + $0x8] sm:$0xff]
  %v47 = vld [vmem:[%s0 + $0x10] sm:$0xff]
  %v48 = vld [vmem:[%s0 + $0x18] sm:$0xff]
  %v49 = vld [vmem:[%s0 + $0x20] sm:$0xff]
  %v50 = vld [vmem:[%s0 + $0x28] sm:$0xff]
  %v51 = vld [vmem:[%s0 + $0x30] sm:$0xff]
  %v52 = vld [vmem:[%s0 + $0x38] sm:$0xff]
  %v53 = vld [vmem:[%s2] sm:$0x7]
  %55 = vset.pattern.permute.xlu0 0
  %56 = vperm.xlu0 %55, %v45
  %v57 = vpop.permute.xlu0 %56
  %60 = vset.pattern.permute.xlu0 0
  %61 = vperm.xlu0 %60, %v46
  %v62 = vpop.permute.xlu0 %61
  %65 = vset.pattern.permute.xlu0 0
  %66 = vperm.xlu0 %65, %v47
  %v67 = vpop.permute.xlu0 %66
  %70 = vset.pattern.permute.xlu0 0
  %71 = vperm.xlu0 %70, %v48
  %v72 = vpop.permute.xlu0 %71
  %75 = vset.pattern.permute.xlu0 0
  %76 = vperm.xlu0 %75, %v49
  %v77 = vpop.permute.xlu0 %76
  %80 = vset.pattern.permute.xlu0 0
  %81 = vperm.xlu0 %80, %v50
  %v82 = vpop.permute.xlu0 %81
  %85 = vset.pattern.permute.xlu0 0
  %86 = vperm.xlu0 %85, %v51
  %v87 = vpop.permute.xlu0 %86
  %90 = vset.pattern.permute.xlu0 0
  %91 = vperm.xlu0 %90, %v52
  %v92 = vpop.permute.xlu0 %91
  %v95 = vlaneseq
  %v96 = vshrl.u32 %v95, 7
  %v97 = vsub.s32 0, %v96
  %v98 = vrot.slane %v53, %v97
  %v99 = vlaneseq
  %v100 = vshrl.u32 %v99, 7
  %v101 = vsub.s32 1, %v100
  %v102 = vrot.slane %v53, %v101
  %v103 = vlaneseq
  %v104 = vshrl.u32 %v103, 7
  %v105 = vsub.s32 2, %v104
  %v106 = vrot.slane %v53, %v105
  %v110 = vmul.f32 %v57, %v98
  %v111 = vmul.f32 %v57, %v102
  %v112 = vmul.f32 %v57, %v106
  %v113 = vmul.f32 %v62, %v98
  %v114 = vmul.f32 %v62, %v102
  %v115 = vmul.f32 %v62, %v106
  %v116 = vmul.f32 %v67, %v98
  %v117 = vmul.f32 %v67, %v102
  %v118 = vmul.f32 %v67, %v106
  %v119 = vmul.f32 %v72, %v98
  %v120 = vmul.f32 %v72, %v102
  %v121 = vmul.f32 %v72, %v106
  %v122 = vmul.f32 %v77, %v98
  %v123 = vmul.f32 %v77, %v102
  %v124 = vmul.f32 %v77, %v106
  %v125 = vmul.f32 %v82, %v98
  %v126 = vmul.f32 %v82, %v102
  %v127 = vmul.f32 %v82, %v106
  %v128 = vmul.f32 %v87, %v98
  %v129 = vmul.f32 %v87, %v102
  %v130 = vmul.f32 %v87, %v106
  %v131 = vmul.f32 %v92, %v98
  %v132 = vmul.f32 %v92, %v102
  %v133 = vmul.f32 %v92, %v106
  %v134 = vld [vmem:[%s3] sm:$0x7]
  %v136 = vlaneseq
  %v137 = vshrl.u32 %v136, 7
  %v138 = vsub.s32 0, %v137
  %v139 = vrot.slane %v134, %v138
  %v140 = vlaneseq
  %v141 = vshrl.u32 %v140, 7
  %v142 = vsub.s32 1, %v141
  %v143 = vrot.slane %v134, %v142
  %v144 = vlaneseq
  %v145 = vshrl.u32 %v144, 7
  %v146 = vsub.s32 2, %v145
  %v147 = vrot.slane %v134, %v146
  %v151 = vadd.f32 %v110, %v139
  %v152 = vadd.f32 %v111, %v143
  %v153 = vadd.f32 %v112, %v147
  %v154 = vadd.f32 %v113, %v139
  %v155 = vadd.f32 %v114, %v143
  %v156 = vadd.f32 %v115, %v147
  %v157 = vadd.f32 %v116, %v139
  %v158 = vadd.f32 %v117, %v143
  %v159 = vadd.f32 %v118, %v147
  %v160 = vadd.f32 %v119, %v139
  %v161 = vadd.f32 %v120, %v143
  %v162 = vadd.f32 %v121, %v147
  %v163 = vadd.f32 %v122, %v139
  %v164 = vadd.f32 %v123, %v143
  %v165 = vadd.f32 %v124, %v147
  %v166 = vadd.f32 %v125, %v139
  %v167 = vadd.f32 %v126, %v143
  %v168 = vadd.f32 %v127, %v147
  %v169 = vadd.f32 %v128, %v139
  %v170 = vadd.f32 %v129, %v143
  %v171 = vadd.f32 %v130, %v147
  %v172 = vadd.f32 %v131, %v139
  %v173 = vadd.f32 %v132, %v143
  %v174 = vadd.f32 %v133, %v147
  %175 = vst [vmem:[#allocation2] sm:$0xff] %v151
  %176 = vst [vmem:[#allocation2 + $0x8] sm:$0xff] %v152
  %177 = vst [vmem:[#allocation2 + $0x10] sm:$0xff] %v153
  %178 = vst [vmem:[#allocation2 + $0x18] sm:$0xff] %v154
  %179 = vst [vmem:[#allocation2 + $0x20] sm:$0xff] %v155
  %180 = vst [vmem:[#allocation2 + $0x28] sm:$0xff] %v156
  %181 = vst [vmem:[#allocation2 + $0x30] sm:$0xff] %v157
  %182 = vst [vmem:[#allocation2 + $0x38] sm:$0xff] %v158
  %183 = vst [vmem:[#allocation2 + $0x40] sm:$0xff] %v159
  %184 = vst [vmem:[#allocation2 + $0x48] sm:$0xff] %v160
  %185 = vst [vmem:[#allocation2 + $0x50] sm:$0xff] %v161
  %186 = vst [vmem:[#allocation2 + $0x58] sm:$0xff] %v162
  %187 = vst [vmem:[#allocation2 + $0x60] sm:$0xff] %v163
  %188 = vst [vmem:[#allocation2 + $0x68] sm:$0xff] %v164
  %189 = vst [vmem:[#allocation2 + $0x70] sm:$0xff] %v165
  %190 = vst [vmem:[#allocation2 + $0x78] sm:$0xff] %v166
  %191 = vst [vmem:[#allocation2 + $0x80] sm:$0xff] %v167
  %192 = vst [vmem:[#allocation2 + $0x88] sm:$0xff] %v168
  %193 = vst [vmem:[#allocation2 + $0x90] sm:$0xff] %v169
  %194 = vst [vmem:[#allocation2 + $0x98] sm:$0xff] %v170
  %195 = vst [vmem:[#allocation2 + $0xa0] sm:$0xff] %v171
  %196 = vst [vmem:[#allocation2 + $0xa8] sm:$0xff] %v172
  %197 = vst [vmem:[#allocation2 + $0xb0] sm:$0xff] %v173
  %198 = vst [vmem:[#allocation2 + $0xb8] sm:$0xff] %v174
  %v199 = vld [vmem:[%s4] sm:$0x1]
  %v201 = vlaneseq
  %v202 = vshrl.u32 %v201, 7
  %v203 = vsub.s32 0, %v202
  %v204 = vrot.slane %v199, %v203
  %v206 = vld [vmem:[%s7] sm:$0x3]
  %v208 = vlaneseq
  %v209 = vshrl.u32 %v208, 7
  %v210 = vsub.s32 0, %v209
  %v211 = vrot.slane %v206, %v210
  %v212 = vlaneseq
  %v213 = vshrl.u32 %v212, 7
  %v214 = vsub.s32 1, %v213
  %v215 = vrot.slane %v206, %v214
  %v218 = vld [vmem:[%s8] sm:$0x1]
  %v220 = vlaneseq
  %v221 = vshrl.u32 %v220, 7
  %v222 = vsub.s32 0, %v221
  %v223 = vrot.slane %v218, %v222
  %v225 = vld [vmem:[%s9] sm:$0x1]
  %v227 = vlaneseq
  %v228 = vshrl.u32 %v227, 7
  %v229 = vsub.s32 0, %v228
  %v230 = vrot.slane %v225, %v229
  %v232 = vld [vmem:[%s1] sm:$0xff]
  %v233 = vld [vmem:[%s5] sm:$0xff]
  %v234 = vld [vmem:[%s5 + $0x8] sm:$0xff]
  %v235 = vld [vmem:[%s5 + $0x10] sm:$0xff]
  %v236 = vld [vmem:[%s5 + $0x30] sm:$0xff]
  %v237 = vld [vmem:[%s5 + $0x38] sm:$0xff]
  %v238 = vld [vmem:[%s5 + $0x40] sm:$0xff]
  %v239 = vld [vmem:[%s5 + $0x60] sm:$0xff]
  %v240 = vld [vmem:[%s5 + $0x68] sm:$0xff]
  %v241 = vld [vmem:[%s5 + $0x70] sm:$0xff]
  %v242 = vld [vmem:[%s5 + $0x90] sm:$0xff]
  %v243 = vld [vmem:[%s5 + $0x98] sm:$0xff]
  %v244 = vld [vmem:[%s5 + $0xa0] sm:$0xff]
  %v245 = vld [vmem:[%s5 + $0xc0] sm:$0xff]
  %v246 = vld [vmem:[%s5 + $0xc8] sm:$0xff]
  %v247 = vld [vmem:[%s5 + $0xd0] sm:$0xff]
  %v248 = vld [vmem:[%s5 + $0xf0] sm:$0xff]
  %v249 = vld [vmem:[%s5 + $0xf8] sm:$0xff]
  %v250 = vld [vmem:[%s5 + $0x100] sm:$0xff]
  %v251 = vld [vmem:[%s5 + $0x120] sm:$0xff]
  %v252 = vld [vmem:[%s5 + $0x128] sm:$0xff]
  %v253 = vld [vmem:[%s5 + $0x130] sm:$0xff]
  %v254 = vld [vmem:[%s5 + $0x150] sm:$0xff]
  %v255 = vld [vmem:[%s5 + $0x158] sm:$0xff]
  %v256 = vld [vmem:[%s5 + $0x160] sm:$0xff]
  %v257 = vld [vmem:[%s5 + $0x180] sm:$0xff]
  %v258 = vld [vmem:[%s5 + $0x188] sm:$0xff]
  %v259 = vld [vmem:[%s5 + $0x190] sm:$0xff]
  %v260 = vld [vmem:[%s5 + $0x1b0] sm:$0xff]
  %v261 = vld [vmem:[%s5 + $0x1b8] sm:$0xff]
  %v262 = vld [vmem:[%s5 + $0x1c0] sm:$0xff]
  %v263 = vld [vmem:[%s5 + $0x1e0] sm:$0xff]
  %v264 = vld [vmem:[%s5 + $0x1e8] sm:$0xff]
  %v265 = vld [vmem:[%s5 + $0x1f0] sm:$0xff]
  %v266 = vld [vmem:[%s5 + $0x210] sm:$0xff]
  %v267 = vld [vmem:[%s5 + $0x218] sm:$0xff]
  %v268 = vld [vmem:[%s5 + $0x220] sm:$0xff]
  %v269 = vld [vmem:[%s5 + $0x240] sm:$0xff]
  %v270 = vld [vmem:[%s5 + $0x248] sm:$0xff]
  %v271 = vld [vmem:[%s5 + $0x250] sm:$0xff]
  %v272 = vld [vmem:[%s5 + $0x270] sm:$0xff]
  %v273 = vld [vmem:[%s5 + $0x278] sm:$0xff]
  %v274 = vld [vmem:[%s5 + $0x280] sm:$0xff]
  %v275 = vld [vmem:[%s5 + $0x2a0] sm:$0xff]
  %v276 = vld [vmem:[%s5 + $0x2a8] sm:$0xff]
  %v277 = vld [vmem:[%s5 + $0x2b0] sm:$0xff]
  %v278 = vld [vmem:[%s5 + $0x2d0] sm:$0xff]
  %v279 = vld [vmem:[%s5 + $0x2d8] sm:$0xff]
  %v280 = vld [vmem:[%s5 + $0x2e0] sm:$0xff]
  %281 = vmatprep.subr.mxu0 %v234
  %282 = vmatpush1.msra.mxu0 %v233
  %283 = vmatprep.subr.mxu0 %v237
  %284 = vmatpush1.msra.mxu0 %v236
  %285 = vmatprep.subr.mxu0 %v240
  %286 = vmatpush1.msra.mxu0 %v239
  %287 = vmatprep.subr.mxu0 %v243
  %288 = vmatpush1.msra.mxu0 %v242
  %289 = vmatprep.subr.mxu0 %v246
  %290 = vmatpush1.msra.mxu0 %v245
  %291 = vmatprep.subr.mxu0 %v249
  %292 = vmatpush1.msra.mxu0 %v248
  %293 = vmatprep.subr.mxu0 %v252
  %294 = vmatpush1.msra.mxu0 %v251
  %295 = vmatprep.subr.mxu0 %v255
  %296 = vmatpush1.msra.mxu0 %v254
  %297 = vmatprep.subr.mxu0 %v258
  %298 = vmatpush1.msra.mxu0 %v257
  %299 = vmatprep.subr.mxu0 %v261
  %300 = vmatpush1.msra.mxu0 %v260
  %301 = vmatprep.subr.mxu0 %v264
  %302 = vmatpush1.msra.mxu0 %v263
  %303 = vmatprep.subr.mxu0 %v267
  %304 = vmatpush1.msra.mxu0 %v266
  %305 = vmatprep.subr.mxu0 %v270
  %306 = vmatpush1.msra.mxu0 %v269
  %307 = vmatprep.subr.mxu0 %v273
  %308 = vmatpush1.msra.mxu0 %v272
  %309 = vmatprep.subr.mxu0 %v276
  %310 = vmatpush1.msra.mxu0 %v275
  %311 = vmatprep.subr.mxu0 %v279
  %312 = vmatpush1.msra.mxu0 %v278
  %313 = vmatprep.subr.mxu0 0.0
  %314 = vmatpush1.msra.mxu0 0.0
  %315 = vmatprep.subr.mxu0 0.0
  %316 = vmatpush1.msra.mxu0 0.0
  %317 = vmatprep.subr.mxu0 0.0
  %318 = vmatpush1.msra.mxu0 0.0
  %319 = vmatprep.subr.mxu0 0.0
  %320 = vmatpush1.msra.mxu0 0.0
  %321 = vmatprep.subr.mxu0 0.0
  %322 = vmatpush1.msra.mxu0 0.0
  %323 = vmatprep.subr.mxu0 0.0
  %324 = vmatpush1.msra.mxu0 0.0
  %325 = vmatprep.subr.mxu0 0.0
  %326 = vmatpush1.msra.mxu0 0.0
  %327 = vmatprep.subr.mxu0 0.0
  %328 = vmatpush1.msra.mxu0 0.0
  %329 = vmatprep.subr.mxu0 0.0
  %330 = vmatpush1.msra.mxu0 0.0
  %331 = vmatprep.subr.mxu0 0.0
  %332 = vmatpush1.msra.mxu0 0.0
  %333 = vmatprep.subr.mxu0 0.0
  %334 = vmatpush1.msra.mxu0 0.0
  %335 = vmatprep.subr.mxu0 0.0
  %336 = vmatpush1.msra.mxu0 0.0
  %337 = vmatprep.subr.mxu0 0.0
  %338 = vmatpush1.msra.mxu0 0.0
  %339 = vmatprep.subr.mxu0 0.0
  %340 = vmatpush1.msra.mxu0 0.0
  %341 = vmatprep.subr.mxu0 0.0
  %342 = vmatpush1.msra.mxu0 0.0
  %343 = vmatprep.subr.mxu0 0.0
  %344 = vmatpush1.msra.mxu0 0.0
  %345 = vmatprep.mubr.f32.mxu0 0.0
  %346 = vmatmul.mubr.f32.gmra.mrb[0].mxu0 %v232
  %v347 = vpop.f32.mrb[0].mxu0
  %v348 = vadd.f32 0.0, %v347
  %v349 = vpop.f32.mrb[0].mxu0
  %v350 = vadd.f32 0.0, %v349
  %351 = vdwg.mxu0
  %352 = vmatprep.subr.mxu0 0.0
  %353 = vmatpush1.msra.mxu0 %v235
  %354 = vmatprep.subr.mxu0 0.0
  %355 = vmatpush1.msra.mxu0 %v238
  %356 = vmatprep.subr.mxu0 0.0
  %357 = vmatpush1.msra.mxu0 %v241
  %358 = vmatprep.subr.mxu0 0.0
  %359 = vmatpush1.msra.mxu0 %v244
  %360 = vmatprep.subr.mxu0 0.0
  %361 = vmatpush1.msra.mxu0 %v247
  %362 = vmatprep.subr.mxu0 0.0
  %363 = vmatpush1.msra.mxu0 %v250
  %364 = vmatprep.subr.mxu0 0.0
  %365 = vmatpush1.msra.mxu0 %v253
  %366 = vmatprep.subr.mxu0 0.0
  %367 = vmatpush1.msra.mxu0 %v256
  %368 = vmatprep.subr.mxu0 0.0
  %369 = vmatpush1.msra.mxu0 %v259
  %370 = vmatprep.subr.mxu0 0.0
  %371 = vmatpush1.msra.mxu0 %v262
  %372 = vmatprep.subr.mxu0 0.0
  %373 = vmatpush1.msra.mxu0 %v265
  %374 = vmatprep.subr.mxu0 0.0
  %375 = vmatpush1.msra.mxu0 %v268
  %376 = vmatprep.subr.mxu0 0.0
  %377 = vmatpush1.msra.mxu0 %v271
  %378 = vmatprep.subr.mxu0 0.0
  %379 = vmatpush1.msra.mxu0 %v274
  %380 = vmatprep.subr.mxu0 0.0
  %381 = vmatpush1.msra.mxu0 %v277
  %382 = vmatprep.subr.mxu0 0.0
  %383 = vmatpush1.msra.mxu0 %v280
  %384 = vmatprep.subr.mxu0 0.0
  %385 = vmatpush1.msra.mxu0 0.0
  %386 = vmatprep.subr.mxu0 0.0
  %387 = vmatpush1.msra.mxu0 0.0
  %388 = vmatprep.subr.mxu0 0.0
  %389 = vmatpush1.msra.mxu0 0.0
  %390 = vmatprep.subr.mxu0 0.0
  %391 = vmatpush1.msra.mxu0 0.0
  %392 = vmatprep.subr.mxu0 0.0
  %393 = vmatpush1.msra.mxu0 0.0
  %394 = vmatprep.subr.mxu0 0.0
  %395 = vmatpush1.msra.mxu0 0.0
  %396 = vmatprep.subr.mxu0 0.0
  %397 = vmatpush1.msra.mxu0 0.0
  %398 = vmatprep.subr.mxu0 0.0
  %399 = vmatpush1.msra.mxu0 0.0
  %400 = vmatprep.subr.mxu0 0.0
  %401 = vmatpush1.msra.mxu0 0.0
  %402 = vmatprep.subr.mxu0 0.0
  %403 = vmatpush1.msra.mxu0 0.0
  %404 = vmatprep.subr.mxu0 0.0
  %405 = vmatpush1.msra.mxu0 0.0
  %406 = vmatprep.subr.mxu0 0.0
  %407 = vmatpush1.msra.mxu0 0.0
  %408 = vmatprep.subr.mxu0 0.0
  %409 = vmatpush1.msra.mxu0 0.0
  %410 = vmatprep.subr.mxu0 0.0
  %411 = vmatpush1.msra.mxu0 0.0
  %412 = vmatprep.subr.mxu0 0.0
  %413 = vmatpush1.msra.mxu0 0.0
  %414 = vmatprep.subr.mxu0 0.0
  %415 = vmatpush1.msra.mxu0 0.0
  %416 = vmatprep.mubr.f32.mxu0 0.0
  %417 = vmatmul.mubr.f32.gmra.mrb[0].mxu0 %v232
  %v418 = vpop.f32.mrb[0].mxu0
  %v419 = vadd.f32 0.0, %v418
  %v420 = vpop.f32.mrb[0].mxu0
  %421 = vdwg.mxu0
  %s422 = scalar_lea.vmem %s1, 8
  %v423 = vld [vmem:[%s422] sm:$0xff]
  %s424 = smul.u32 0, 3
  %s425 = smul.addr %s424, 8
  %s426 = scalar_lea.vmem [#allocation2], %s425
  %v427 = vld [vmem:[%s426] sm:$0xff]
  %v428 = vld [vmem:[%s426 + $0x8] sm:$0xff]
  %v429 = vld [vmem:[%s426 + $0x10] sm:$0xff]
  %v430 = vadd.f32 %v427, %v348
  %v431 = vmul.f32 %v430, 0.5
  %v432 = vtanh.pop %v431
  %v433 = vmul.f32 %v432, 0.5
  %v434 = vadd.f32 %v433, 0.5
  %v435 = vadd.f32 %v428, %v350
  %v436 = vmul.f32 %v435, 0.5
  %v437 = vtanh.pop %v436
  %v438 = vmul.f32 %v437, 0.5
  %v439 = vadd.f32 %v438, 0.5
  %v440 = vadd.f32 %v419, %v204
  %v441 = vmul.f32 %v434, %v440
  %v442 = vadd.f32 %v429, %v441
  %v443 = vtanh.pop %v442
  %v444 = vsub.f32 1.0, %v439
  %v445 = vmul.f32 %v444, %v443
  %v446 = vmul.f32 %v439, %v232
  %v447 = vadd.f32 %v445, %v446
  %v448 = vld [vmem:[%s5] sm:$0xff]
  %v449 = vld [vmem:[%s5 + $0x8] sm:$0xff]
  %v450 = vld [vmem:[%s5 + $0x10] sm:$0xff]
  %v451 = vld [vmem:[%s5 + $0x18] sm:$0xff]
  %v452 = vld [vmem:[%s5 + $0x20] sm:$0xff]
  %v453 = vld [vmem:[%s5 + $0x28] sm:$0xff]
  %v454 = vld [vmem:[%s5 + $0x30] sm:$0xff]
  %v455 = vld [vmem:[%s5 + $0x38] sm:$0xff]
  %v456 = vld [vmem:[%s5 + $0x40] sm:$0xff]
  %v457 = vld [vmem:[%s5 + $0x48] sm:$0xff]
  %v458 = vld [vmem:[%s5 + $0x50] sm:$0xff]
  %v459 = vld [vmem:[%s5 + $0x58] sm:$0xff]
  %v460 = vld [vmem:[%s5 + $0x60] sm:$0xff]
  %v461 = vld [vmem:[%s5 + $0x68] sm:$0xff]
  %v462 = vld [vmem:[%s5 + $0x70] sm:$0xff]
  %v463 = vld [vmem:[%s5 + $0x78] sm:$0xff]
  %v464 = vld [vmem:[%s5 + $0x80] sm:$0xff]
  %v465 = vld [vmem:[%s5 + $0x88] sm:$0xff]
  %v466 = vld [vmem:[%s5 + $0x90] sm:$0xff]
  %v467 = vld [vmem:[%s5 + $0x98] sm:$0xff]
  %v468 = vld [vmem:[%s5 + $0xa0] sm:$0xff]
  %v469 = vld [vmem:[%s5 + $0xa8] sm:$0xff]
  %v470 = vld [vmem:[%s5 + $0xb0] sm:$0xff]
  %v471 = vld [vmem:[%s5 + $0xb8] sm:$0xff]
  %v472 = vld [vmem:[%s5 + $0xc0] sm:$0xff]
  %v473 = vld [vmem:[%s5 + $0xc8] sm:$0xff]
  %v474 = vld [vmem:[%s5 + $0xd0] sm:$0xff]
  %v475 = vld [vmem:[%s5 + $0xd8] sm:$0xff]
  %v476 = vld [vmem:[%s5 + $0xe0] sm:$0xff]
  %v477 = vld [vmem:[%s5 + $0xe8] sm:$0xff]
  %v478 = vld [vmem:[%s5 + $0xf0] sm:$0xff]
  %v479 = vld [vmem:[%s5 + $0xf8] sm:$0xff]
  %v480 = vld [vmem:[%s5 + $0x100] sm:$0xff]
  %v481 = vld [vmem:[%s5 + $0x108] sm:$0xff]
  %v482 = vld [vmem:[%s5 + $0x110] sm:$0xff]
  %v483 = vld [vmem:[%s5 + $0x118] sm:$0xff]
  %v484 = vld [vmem:[%s5 + $0x120] sm:$0xff]
  %v485 = vld [vmem:[%s5 + $0x128] sm:$0xff]
  %v486 = vld [vmem:[%s5 + $0x130] sm:$0xff]
  %v487 = vld [vmem:[%s5 + $0x138] sm:$0xff]
  %v488 = vld [vmem:[%s5 + $0x140] sm:$0xff]
  %v489 = vld [vmem:[%s5 + $0x148] sm:$0xff]
  %v490 = vld [vmem:[%s5 + $0x150] sm:$0xff]
  %v491 = vld [vmem:[%s5 + $0x158] sm:$0xff]
  %v492 = vld [vmem:[%s5 + $0x160] sm:$0xff]
  %v493 = vld [vmem:[%s5 + $0x168] sm:$0xff]
  %v494 = vld [vmem:[%s5 + $0x170] sm:$0xff]
  %v495 = vld [vmem:[%s5 + $0x178] sm:$0xff]
  %v496 = vld [vmem:[%s5 + $0x180] sm:$0xff]
  %v497 = vld [vmem:[%s5 + $0x188] sm:$0xff]
  %v498 = vld [vmem:[%s5 + $0x190] sm:$0xff]
  %v499 = vld [vmem:[%s5 + $0x198] sm:$0xff]
  %v500 = vld [vmem:[%s5 + $0x1a0] sm:$0xff]
  %v501 = vld [vmem:[%s5 + $0x1a8] sm:$0xff]
  %v502 = vld [vmem:[%s5 + $0x1b0] sm:$0xff]
  %v503 = vld [vmem:[%s5 + $0x1b8] sm:$0xff]
  %v504 = vld [vmem:[%s5 + $0x1c0] sm:$0xff]
  %v505 = vld [vmem:[%s5 + $0x1c8] sm:$0xff]
  %v506 = vld [vmem:[%s5 + $0x1d0] sm:$0xff]
  %v507 = vld [vmem:[%s5 + $0x1d8] sm:$0xff]
  %v508 = vld [vmem:[%s5 + $0x1e0] sm:$0xff]
  %v509 = vld [vmem:[%s5 + $0x1e8] sm:$0xff]
  %v510 = vld [vmem:[%s5 + $0x1f0] sm:$0xff]
  %v511 = vld [vmem:[%s5 + $0x1f8] sm:$0xff]
  %v512 = vld [vmem:[%s5 + $0x200] sm:$0xff]
  %v513 = vld [vmem:[%s5 + $0x208] sm:$0xff]
  %v514 = vld [vmem:[%s5 + $0x210] sm:$0xff]
  %v515 = vld [vmem:[%s5 + $0x218] sm:$0xff]
  %v516 = vld [vmem:[%s5 + $0x220] sm:$0xff]
  %v517 = vld [vmem:[%s5 + $0x228] sm:$0xff]
  %v518 = vld [vmem:[%s5 + $0x230] sm:$0xff]
  %v519 = vld [vmem:[%s5 + $0x238] sm:$0xff]
  %v520 = vld [vmem:[%s5 + $0x240] sm:$0xff]
  %v521 = vld [vmem:[%s5 + $0x248] sm:$0xff]
  %v522 = vld [vmem:[%s5 + $0x250] sm:$0xff]
  %v523 = vld [vmem:[%s5 + $0x258] sm:$0xff]
  %v524 = vld [vmem:[%s5 + $0x260] sm:$0xff]
  %v525 = vld [vmem:[%s5 + $0x268] sm:$0xff]
  %v526 = vld [vmem:[%s5 + $0x270] sm:$0xff]
  %v527 = vld [vmem:[%s5 + $0x278] sm:$0xff]
  %v528 = vld [vmem:[%s5 + $0x280] sm:$0xff]
  %v529 = vld [vmem:[%s5 + $0x288] sm:$0xff]
  %v530 = vld [vmem:[%s5 + $0x290] sm:$0xff]
  %v531 = vld [vmem:[%s5 + $0x298] sm:$0xff]
  %v532 = vld [vmem:[%s5 + $0x2a0] sm:$0xff]
  %v533 = vld [vmem:[%s5 + $0x2a8] sm:$0xff]
  %v534 = vld [vmem:[%s5 + $0x2b0] sm:$0xff]
  %v535 = vld [vmem:[%s5 + $0x2b8] sm:$0xff]
  %v536 = vld [vmem:[%s5 + $0x2c0] sm:$0xff]
  %v537 = vld [vmem:[%s5 + $0x2c8] sm:$0xff]
  %v538 = vld [vmem:[%s5 + $0x2d0] sm:$0xff]
  %v539 = vld [vmem:[%s5 + $0x2d8] sm:$0xff]
  %v540 = vld [vmem:[%s5 + $0x2e0] sm:$0xff]
  %v541 = vld [vmem:[%s5 + $0x2e8] sm:$0xff]
  %v542 = vld [vmem:[%s5 + $0x2f0] sm:$0xff]
  %v543 = vld [vmem:[%s5 + $0x2f8] sm:$0xff]
  %544 = vmatprep.subr.mxu0 %v449
  %545 = vmatpush1.msra.mxu0 %v448
  %546 = vmatprep.subr.mxu0 %v455
  %547 = vmatpush1.msra.mxu0 %v454
  %548 = vmatprep.subr.mxu0 %v461
  %549 = vmatpush1.msra.mxu0 %v460
  %550 = vmatprep.subr.mxu0 %v467
  %551 = vmatpush1.msra.mxu0 %v466
  %552 = vmatprep.subr.mxu0 %v473
  %553 = vmatpush1.msra.mxu0 %v472
  %554 = vmatprep.subr.mxu0 %v479
  %555 = vmatpush1.msra.mxu0 %v478
  %556 = vmatprep.subr.mxu0 %v485
  %557 = vmatpush1.msra.mxu0 %v484
  %558 = vmatprep.subr.mxu0 %v491
  %559 = vmatpush1.msra.mxu0 %v490
  %560 = vmatprep.subr.mxu0 %v497
  %561 = vmatpush1.msra.mxu0 %v496
  %562 = vmatprep.subr.mxu0 %v503
  %563 = vmatpush1.msra.mxu0 %v502
  %564 = vmatprep.subr.mxu0 %v509
  %565 = vmatpush1.msra.mxu0 %v508
  %566 = vmatprep.subr.mxu0 %v515
  %567 = vmatpush1.msra.mxu0 %v514
  %568 = vmatprep.subr.mxu0 %v521
  %569 = vmatpush1.msra.mxu0 %v520
  %570 = vmatprep.subr.mxu0 %v527
  %571 = vmatpush1.msra.mxu0 %v526
  %572 = vmatprep.subr.mxu0 %v533
  %573 = vmatpush1.msra.mxu0 %v532
  %574 = vmatprep.subr.mxu0 %v539
  %575 = vmatpush1.msra.mxu0 %v538
  %576 = vmatprep.subr.mxu0 0.0
  %577 = vmatpush1.msra.mxu0 0.0
  %578 = vmatprep.subr.mxu0 0.0
  %579 = vmatpush1.msra.mxu0 0.0
  %580 = vmatprep.subr.mxu0 0.0
  %581 = vmatpush1.msra.mxu0 0.0
  %582 = vmatprep.subr.mxu0 0.0
  %583 = vmatpush1.msra.mxu0 0.0
  %584 = vmatprep.subr.mxu0 0.0
  %585 = vmatpush1.msra.mxu0 0.0
  %586 = vmatprep.subr.mxu0 0.0
  %587 = vmatpush1.msra.mxu0 0.0
  %588 = vmatprep.subr.mxu0 0.0
  %589 = vmatpush1.msra.mxu0 0.0
  %590 = vmatprep.subr.mxu0 0.0
  %591 = vmatpush1.msra.mxu0 0.0
  %592 = vmatprep.subr.mxu0 0.0
  %593 = vmatpush1.msra.mxu0 0.0
  %594 = vmatprep.subr.mxu0 0.0
  %595 = vmatpush1.msra.mxu0 0.0
  %596 = vmatprep.subr.mxu0 0.0
  %597 = vmatpush1.msra.mxu0 0.0
  %598 = vmatprep.subr.mxu0 0.0
  %599 = vmatpush1.msra.mxu0 0.0
  %600 = vmatprep.subr.mxu0 0.0
  %601 = vmatpush1.msra.mxu0 0.0
  %602 = vmatprep.subr.mxu0 0.0
  %603 = vmatpush1.msra.mxu0 0.0
  %604 = vmatprep.subr.mxu0 0.0
  %605 = vmatpush1.msra.mxu0 0.0
  %606 = vmatprep.subr.mxu0 0.0
  %607 = vmatpush1.msra.mxu0 0.0
  %608 = vmatprep.mubr.f32.mxu0 0.0
  %609 = vmatmul.mubr.f32.gmra.mrb[0].mxu0 %v447
  %v610 = vpop.f32.mrb[0].mxu0
  %v611 = vadd.f32 0.0, %v610
  %v612 = vpop.f32.mrb[0].mxu0
  %v613 = vadd.f32 0.0, %v612
  %614 = vdwg.mxu0
  %615 = vmatprep.subr.mxu0 %v451
  %616 = vmatpush1.msra.mxu0 %v450
  %617 = vmatprep.subr.mxu0 %v457
  %618 = vmatpush1.msra.mxu0 %v456
  %619 = vmatprep.subr.mxu0 %v463
  %620 = vmatpush1.msra.mxu0 %v462
  %621 = vmatprep.subr.mxu0 %v469
  %622 = vmatpush1.msra.mxu0 %v468
  %623 = vmatprep.subr.mxu0 %v475
  %624 = vmatpush1.msra.mxu0 %v474
  %625 = vmatprep.subr.mxu0 %v481
  %626 = vmatpush1.msra.mxu0 %v480
  %627 = vmatprep.subr.mxu0 %v487
  %628 = vmatpush1.msra.mxu0 %v486
  %629 = vmatprep.subr.mxu0 %v493
  %630 = vmatpush1.msra.mxu0 %v492
  %631 = vmatprep.subr.mxu0 %v499
  %632 = vmatpush1.msra.mxu0 %v498
  %633 = vmatprep.subr.mxu0 %v505
  %634 = vmatpush1.msra.mxu0 %v504
  %635 = vmatprep.subr.mxu0 %v511
  %636 = vmatpush1.msra.mxu0 %v510
  %637 = vmatprep.subr.mxu0 %v517
  %638 = vmatpush1.msra.mxu0 %v516
  %639 = vmatprep.subr.mxu0 %v523
  %640 = vmatpush1.msra.mxu0 %v522
  %641 = vmatprep.subr.mxu0 %v529
  %642 = vmatpush1.msra.mxu0 %v528
  %643 = vmatprep.subr.mxu0 %v535
  %644 = vmatpush1.msra.mxu0 %v534
  %645 = vmatprep.subr.mxu0 %v541
  %646 = vmatpush1.msra.mxu0 %v540
  %647 = vmatprep.subr.mxu0 0.0
  %648 = vmatpush1.msra.mxu0 0.0
  %649 = vmatprep.subr.mxu0 0.0
  %650 = vmatpush1.msra.mxu0 0.0
  %651 = vmatprep.subr.mxu0 0.0
  %652 = vmatpush1.msra.mxu0 0.0
  %653 = vmatprep.subr.mxu0 0.0
  %654 = vmatpush1.msra.mxu0 0.0
  %655 = vmatprep.subr.mxu0 0.0
  %656 = vmatpush1.msra.mxu0 0.0
  %657 = vmatprep.subr.mxu0 0.0
  %658 = vmatpush1.msra.mxu0 0.0
  %659 = vmatprep.subr.mxu0 0.0
  %660 = vmatpush1.msra.mxu0 0.0
  %661 = vmatprep.subr.mxu0 0.0
  %662 = vmatpush1.msra.mxu0 0.0
  %663 = vmatprep.subr.mxu0 0.0
  %664 = vmatpush1.msra.mxu0 0.0
  %665 = vmatprep.subr.mxu0 0.0
  %666 = vmatpush1.msra.mxu0 0.0
  %667 = vmatprep.subr.mxu0 0.0
  %668 = vmatpush1.msra.mxu0 0.0
  %669 = vmatprep.subr.mxu0 0.0
  %670 = vmatpush1.msra.mxu0 0.0
  %671 = vmatprep.subr.mxu0 0.0
  %672 = vmatpush1.msra.mxu0 0.0
  %673 = vmatprep.subr.mxu0 0.0
  %674 = vmatpush1.msra.mxu0 0.0
  %675 = vmatprep.subr.mxu0 0.0
  %676 = vmatpush1.msra.mxu0 0.0
  %677 = vmatprep.subr.mxu0 0.0
  %678 = vmatpush1.msra.mxu0 0.0
  %679 = vmatprep.mubr.f32.mxu0 0.0
  %680 = vmatmul.mubr.f32.gmra.mrb[0].mxu0 %v447
  %v681 = vpop.f32.mrb[0].mxu0
  %v682 = vadd.f32 0.0, %v681
  %v683 = vpop.f32.mrb[0].mxu0
  %v684 = vadd.f32 0.0, %v683
  %685 = vdwg.mxu0
  %686 = vmatprep.subr.mxu0 %v453
  %687 = vmatpush1.msra.mxu0 %v452
  %688 = vmatprep.subr.mxu0 %v459
  %689 = vmatpush1.msra.mxu0 %v458
  %690 = vmatprep.subr.mxu0 %v465
  %691 = vmatpush1.msra.mxu0 %v464
  %692 = vmatprep.subr.mxu0 %v471
  %693 = vmatpush1.msra.mxu0 %v470
  %694 = vmatprep.subr.mxu0 %v477
  %695 = vmatpush1.msra.mxu0 %v476
  %696 = vmatprep.subr.mxu0 %v483
  %697 = vmatpush1.msra.mxu0 %v482
  %698 = vmatprep.subr.mxu0 %v489
  %699 = vmatpush1.msra.mxu0 %v488
  %700 = vmatprep.subr.mxu0 %v495
  %701 = vmatpush1.msra.mxu0 %v494
  %702 = vmatprep.subr.mxu0 %v501
  %703 = vmatpush1.msra.mxu0 %v500
  %704 = vmatprep.subr.mxu0 %v507
  %705 = vmatpush1.msra.mxu0 %v506
  %706 = vmatprep.subr.mxu0 %v513
  %707 = vmatpush1.msra.mxu0 %v512
  %708 = vmatprep.subr.mxu0 %v519
  %709 = vmatpush1.msra.mxu0 %v518
  %710 = vmatprep.subr.mxu0 %v525
  %711 = vmatpush1.msra.mxu0 %v524
  %712 = vmatprep.subr.mxu0 %v531
  %713 = vmatpush1.msra.mxu0 %v530
  %714 = vmatprep.subr.mxu0 %v537
  %715 = vmatpush1.msra.mxu0 %v536
  %716 = vmatprep.subr.mxu0 %v543
  %717 = vmatpush1.msra.mxu0 %v542
  %718 = vmatprep.subr.mxu0 0.0
  %719 = vmatpush1.msra.mxu0 0.0
  %720 = vmatprep.subr.mxu0 0.0
  %721 = vmatpush1.msra.mxu0 0.0
  %722 = vmatprep.subr.mxu0 0.0
  %723 = vmatpush1.msra.mxu0 0.0
  %724 = vmatprep.subr.mxu0 0.0
  %725 = vmatpush1.msra.mxu0 0.0
  %726 = vmatprep.subr.mxu0 0.0
  %727 = vmatpush1.msra.mxu0 0.0
  %728 = vmatprep.subr.mxu0 0.0
  %729 = vmatpush1.msra.mxu0 0.0
  %730 = vmatprep.subr.mxu0 0.0
  %731 = vmatpush1.msra.mxu0 0.0
  %732 = vmatprep.subr.mxu0 0.0
  %733 = vmatpush1.msra.mxu0 0.0
  %734 = vmatprep.subr.mxu0 0.0
  %735 = vmatpush1.msra.mxu0 0.0
  %736 = vmatprep.subr.mxu0 0.0
  %737 = vmatpush1.msra.mxu0 0.0
  %738 = vmatprep.subr.mxu0 0.0
  %739 = vmatpush1.msra.mxu0 0.0
  %740 = vmatprep.subr.mxu0 0.0
  %741 = vmatpush1.msra.mxu0 0.0
  %742 = vmatprep.subr.mxu0 0.0
  %743 = vmatpush1.msra.mxu0 0.0
  %744 = vmatprep.subr.mxu0 0.0
  %745 = vmatpush1.msra.mxu0 0.0
  %746 = vmatprep.subr.mxu0 0.0
  %747 = vmatpush1.msra.mxu0 0.0
  %748 = vmatprep.subr.mxu0 0.0
  %749 = vmatpush1.msra.mxu0 0.0
  %750 = vmatprep.mubr.f32.mxu0 0.0
  %751 = vmatmul.mubr.f32.gmra.mrb[0].mxu0 %v447
  %v752 = vpop.f32.mrb[0].mxu0
  %v753 = vadd.f32 0.0, %v752
  %v754 = vpop.f32.mrb[0].mxu0
  %v755 = vadd.f32 0.0, %v754
  %756 = vdwg.mxu0
  %v757 = vld [vmem:[%s6] sm:$0xff]
  %v758 = vld [vmem:[%s6 + $0x8] sm:$0xff]
  %v759 = vld [vmem:[%s6 + $0x10] sm:$0xff]
  %v760 = vld [vmem:[%s6 + $0x18] sm:$0xff]
  %v761 = vld [vmem:[%s6 + $0x20] sm:$0xff]
  %v762 = vld [vmem:[%s6 + $0x28] sm:$0xff]
  %v763 = vld [vmem:[%s6 + $0x30] sm:$0xff]
  %v764 = vld [vmem:[%s6 + $0x38] sm:$0xff]
  %v765 = vld [vmem:[%s6 + $0x40] sm:$0xff]
  %v766 = vld [vmem:[%s6 + $0x48] sm:$0xff]
  %v767 = vld [vmem:[%s6 + $0x50] sm:$0xff]
  %v768 = vld [vmem:[%s6 + $0x58] sm:$0xff]
  %v769 = vld [vmem:[%s6 + $0x60] sm:$0xff]
  %v770 = vld [vmem:[%s6 + $0x68] sm:$0xff]
  %v771 = vld [vmem:[%s6 + $0x70] sm:$0xff]
  %v772 = vld [vmem:[%s6 + $0x78] sm:$0xff]
  %v773 = vld [vmem:[%s6 + $0x80] sm:$0xff]
  %v774 = vld [vmem:[%s6 + $0x88] sm:$0xff]
  %v775 = vld [vmem:[%s6 + $0x90] sm:$0xff]
  %v776 = vld [vmem:[%s6 + $0x98] sm:$0xff]
  %v777 = vld [vmem:[%s6 + $0xa0] sm:$0xff]
  %v778 = vld [vmem:[%s6 + $0xa8] sm:$0xff]
  %v779 = vld [vmem:[%s6 + $0xb0] sm:$0xff]
  %v780 = vld [vmem:[%s6 + $0xb8] sm:$0xff]
  %v781 = vld [vmem:[%s6 + $0xc0] sm:$0xff]
  %v782 = vld [vmem:[%s6 + $0xc8] sm:$0xff]
  %v783 = vld [vmem:[%s6 + $0xd0] sm:$0xff]
  %v784 = vld [vmem:[%s6 + $0xd8] sm:$0xff]
  %v785 = vld [vmem:[%s6 + $0xe0] sm:$0xff]
  %v786 = vld [vmem:[%s6 + $0xe8] sm:$0xff]
  %v787 = vld [vmem:[%s6 + $0xf0] sm:$0xff]
  %v788 = vld [vmem:[%s6 + $0xf8] sm:$0xff]
  %v789 = vld [vmem:[%s6 + $0x100] sm:$0xff]
  %v790 = vld [vmem:[%s6 + $0x108] sm:$0xff]
  %v791 = vld [vmem:[%s6 + $0x110] sm:$0xff]
  %v792 = vld [vmem:[%s6 + $0x118] sm:$0xff]
  %v793 = vld [vmem:[%s6 + $0x120] sm:$0xff]
  %v794 = vld [vmem:[%s6 + $0x128] sm:$0xff]
  %v795 = vld [vmem:[%s6 + $0x130] sm:$0xff]
  %v796 = vld [vmem:[%s6 + $0x138] sm:$0xff]
  %v797 = vld [vmem:[%s6 + $0x140] sm:$0xff]
  %v798 = vld [vmem:[%s6 + $0x148] sm:$0xff]
  %v799 = vld [vmem:[%s6 + $0x150] sm:$0xff]
  %v800 = vld [vmem:[%s6 + $0x158] sm:$0xff]
  %v801 = vld [vmem:[%s6 + $0x160] sm:$0xff]
  %v802 = vld [vmem:[%s6 + $0x168] sm:$0xff]
  %v803 = vld [vmem:[%s6 + $0x170] sm:$0xff]
  %v804 = vld [vmem:[%s6 + $0x178] sm:$0xff]
  %805 = vmatprep.subr.mxu0 %v758
  %806 = vmatpush1.msra.mxu0 %v757
  %807 = vmatprep.subr.mxu0 %v761
  %808 = vmatpush1.msra.mxu0 %v760
  %809 = vmatprep.subr.mxu0 %v764
  %810 = vmatpush1.msra.mxu0 %v763
  %811 = vmatprep.subr.mxu0 %v767
  %812 = vmatpush1.msra.mxu0 %v766
  %813 = vmatprep.subr.mxu0 %v770
  %814 = vmatpush1.msra.mxu0 %v769
  %815 = vmatprep.subr.mxu0 %v773
  %816 = vmatpush1.msra.mxu0 %v772
  %817 = vmatprep.subr.mxu0 %v776
  %818 = vmatpush1.msra.mxu0 %v775
  %819 = vmatprep.subr.mxu0 %v779
  %820 = vmatpush1.msra.mxu0 %v778
  %821 = vmatprep.subr.mxu0 %v782
  %822 = vmatpush1.msra.mxu0 %v781
  %823 = vmatprep.subr.mxu0 %v785
  %824 = vmatpush1.msra.mxu0 %v784
  %825 = vmatprep.subr.mxu0 %v788
  %826 = vmatpush1.msra.mxu0 %v787
  %827 = vmatprep.subr.mxu0 %v791
  %828 = vmatpush1.msra.mxu0 %v790
  %829 = vmatprep.subr.mxu0 %v794
  %830 = vmatpush1.msra.mxu0 %v793
  %831 = vmatprep.subr.mxu0 %v797
  %832 = vmatpush1.msra.mxu0 %v796
  %833 = vmatprep.subr.mxu0 %v800
  %834 = vmatpush1.msra.mxu0 %v799
  %835 = vmatprep.subr.mxu0 %v803
  %836 = vmatpush1.msra.mxu0 %v802
  %837 = vmatprep.subr.mxu0 0.0
  %838 = vmatpush1.msra.mxu0 0.0
  %839 = vmatprep.subr.mxu0 0.0
  %840 = vmatpush1.msra.mxu0 0.0
  %841 = vmatprep.subr.mxu0 0.0
  %842 = vmatpush1.msra.mxu0 0.0
  %843 = vmatprep.subr.mxu0 0.0
  %844 = vmatpush1.msra.mxu0 0.0
  %845 = vmatprep.subr.mxu0 0.0
  %846 = vmatpush1.msra.mxu0 0.0
  %847 = vmatprep.subr.mxu0 0.0
  %848 = vmatpush1.msra.mxu0 0.0
  %849 = vmatprep.subr.mxu0 0.0
  %850 = vmatpush1.msra.mxu0 0.0
  %851 = vmatprep.subr.mxu0 0.0
  %852 = vmatpush1.msra.mxu0 0.0
  %853 = vmatprep.subr.mxu0 0.0
  %854 = vmatpush1.msra.mxu0 0.0
  %855 = vmatprep.subr.mxu0 0.0
  %856 = vmatpush1.msra.mxu0 0.0
  %857 = vmatprep.subr.mxu0 0.0
  %858 = vmatpush1.msra.mxu0 0.0
  %859 = vmatprep.subr.mxu0 0.0
  %860 = vmatpush1.msra.mxu0 0.0
  %861 = vmatprep.subr.mxu0 0.0
  %862 = vmatpush1.msra.mxu0 0.0
  %863 = vmatprep.subr.mxu0 0.0
  %864 = vmatpush1.msra.mxu0 0.0
  %865 = vmatprep.subr.mxu0 0.0
  %866 = vmatpush1.msra.mxu0 0.0
  %867 = vmatprep.subr.mxu0 0.0
  %868 = vmatpush1.msra.mxu0 0.0
  %869 = vmatprep.mubr.f32.mxu0 0.0
  %870 = vmatmul.mubr.f32.gmra.mrb[0].mxu0 %v423
  %v871 = vpop.f32.mrb[0].mxu0
  %v872 = vadd.f32 0.0, %v871
  %v873 = vpop.f32.mrb[0].mxu0
  %v874 = vadd.f32 0.0, %v873
  %875 = vdwg.mxu0
  %876 = vmatprep.subr.mxu0 0.0
  %877 = vmatpush1.msra.mxu0 %v759
  %878 = vmatprep.subr.mxu0 0.0
  %879 = vmatpush1.msra.mxu0 %v762
  %880 = vmatprep.subr.mxu0 0.0
  %881 = vmatpush1.msra.mxu0 %v765
  %882 = vmatprep.subr.mxu0 0.0
  %883 = vmatpush1.msra.mxu0 %v768
  %884 = vmatprep.subr.mxu0 0.0
  %885 = vmatpush1.msra.mxu0 %v771
  %886 = vmatprep.subr.mxu0 0.0
  %887 = vmatpush1.msra.mxu0 %v774
  %888 = vmatprep.subr.mxu0 0.0
  %889 = vmatpush1.msra.mxu0 %v777
  %890 = vmatprep.subr.mxu0 0.0
  %891 = vmatpush1.msra.mxu0 %v780
  %892 = vmatprep.subr.mxu0 0.0
  %893 = vmatpush1.msra.mxu0 %v783
  %894 = vmatprep.subr.mxu0 0.0
  %895 = vmatpush1.msra.mxu0 %v786
  %896 = vmatprep.subr.mxu0 0.0
  %897 = vmatpush1.msra.mxu0 %v789
  %898 = vmatprep.subr.mxu0 0.0
  %899 = vmatpush1.msra.mxu0 %v792
  %900 = vmatprep.subr.mxu0 0.0
  %901 = vmatpush1.msra.mxu0 %v795
  %902 = vmatprep.subr.mxu0 0.0
  %903 = vmatpush1.msra.mxu0 %v798
  %904 = vmatprep.subr.mxu0 0.0
  %905 = vmatpush1.msra.mxu0 %v801
  %906 = vmatprep.subr.mxu0 0.0
  %907 = vmatpush1.msra.mxu0 %v804
  %908 = vmatprep.subr.mxu0 0.0
  %909 = vmatpush1.msra.mxu0 0.0
  %910 = vmatprep.subr.mxu0 0.0
  %911 = vmatpush1.msra.mxu0 0.0
  %912 = vmatprep.subr.mxu0 0.0
  %913 = vmatpush1.msra.mxu0 0.0
  %914 = vmatprep.subr.mxu0 0.0
  %915 = vmatpush1.msra.mxu0 0.0
  %916 = vmatprep.subr.mxu0 0.0
  %917 = vmatpush1.msra.mxu0 0.0
  %918 = vmatprep.subr.mxu0 0.0
  %919 = vmatpush1.msra.mxu0 0.0
  %920 = vmatprep.subr.mxu0 0.0
  %921 = vmatpush1.msra.mxu0 0.0
  %922 = vmatprep.subr.mxu0 0.0
  %923 = vmatpush1.msra.mxu0 0.0
  %924 = vmatprep.subr.mxu0 0.0
  %925 = vmatpush1.msra.mxu0 0.0
  %926 = vmatprep.subr.mxu0 0.0
  %927 = vmatpush1.msra.mxu0 0.0
  %928 = vmatprep.subr.mxu0 0.0
  %929 = vmatpush1.msra.mxu0 0.0
  %930 = vmatprep.subr.mxu0 0.0
  %931 = vmatpush1.msra.mxu0 0.0
  %932 = vmatprep.subr.mxu0 0.0
  %933 = vmatpush1.msra.mxu0 0.0
  %934 = vmatprep.subr.mxu0 0.0
  %935 = vmatpush1.msra.mxu0 0.0
  %936 = vmatprep.subr.mxu0 0.0
  %937 = vmatpush1.msra.mxu0 0.0
  %938 = vmatprep.subr.mxu0 0.0
  %939 = vmatpush1.msra.mxu0 0.0
  %940 = vmatprep.mubr.f32.mxu0 0.0
  %941 = vmatmul.mubr.f32.gmra.mrb[0].mxu0 %v423
  %v942 = vpop.f32.mrb[0].mxu0
  %v943 = vadd.f32 0.0, %v942
  %v944 = vpop.f32.mrb[0].mxu0
  %945 = vdwg.mxu0
  %v946 = vadd.f32 %v684, %v872
  %v947 = vadd.f32 %v753, %v874
  %v948 = vadd.f32 %v946, %v211
  %v949 = vadd.f32 %v947, %v215
  %v950 = vmul.f32 %v948, 0.5
  %v951 = vmul.f32 %v949, 0.5
  %v952 = vtanh.pop %v950
  %v953 = vtanh.pop %v951
  %v954 = vmul.f32 %v952, 0.5
  %v955 = vmul.f32 %v953, 0.5
  %v956 = vadd.f32 %v954, 0.5
  %v957 = vadd.f32 %v955, 0.5
  %v958 = vadd.f32 %v755, %v223
  %v959 = vadd.f32 %v943, %v230
  %v960 = vmul.f32 %v956, %v959
  %v961 = vadd.f32 %v958, %v960
  %v962 = vtanh.pop %v961
  %v963 = vsub.f32 1.0, %v957
  %v964 = vmul.f32 %v963, %v962
  %v965 = vmul.f32 %v957, %v423
  %v966 = vadd.f32 %v964, %v965
  %967 = vst [vmem:[#allocation3] sm:$0xff] %v966
  %s968 = smul.u32 1, 3
  %s969 = smul.addr %s968, 8
  %s970 = scalar_lea.vmem [#allocation2], %s969
  %v971 = vld [vmem:[%s970] sm:$0xff]
  %v972 = vld [vmem:[%s970 + $0x8] sm:$0xff]
  %v973 = vld [vmem:[%s970 + $0x10] sm:$0xff]
  %v974 = vadd.f32 %v971, %v611
  %v975 = vmul.f32 %v974, 0.5
  %v976 = vtanh.pop %v975
  %v977 = vmul.f32 %v976, 0.5
  %v978 = vadd.f32 %v977, 0.5
  %v979 = vadd.f32 %v972, %v613
  %v980 = vmul.f32 %v979, 0.5
  %v981 = vtanh.pop %v980
  %v982 = vmul.f32 %v981, 0.5
  %v983 = vadd.f32 %v982, 0.5
  %v984 = vadd.f32 %v682, %v204
  %v985 = vmul.f32 %v978, %v984
  %v986 = vadd.f32 %v973, %v985
  %v987 = vtanh.pop %v986
  %v988 = vsub.f32 1.0, %v983
  %v989 = vmul.f32 %v988, %v987
  %v990 = vmul.f32 %v983, %v447
  %v991 = vadd.f32 %v989, %v990
  %v992 = vld [vmem:[%s5] sm:$0xff]
  %v993 = vld [vmem:[%s5 + $0x8] sm:$0xff]
  %v994 = vld [vmem:[%s5 + $0x10] sm:$0xff]
  %v995 = vld [vmem:[%s5 + $0x18] sm:$0xff]
  %v996 = vld [vmem:[%s5 + $0x20] sm:$0xff]
  %v997 = vld [vmem:[%s5 + $0x28] sm:$0xff]
  %v998 = vld [vmem:[%s5 + $0x30] sm:$0xff]
  %v999 = vld [vmem:[%s5 + $0x38] sm:$0xff]
  %v1000 = vld [vmem:[%s5 + $0x40] sm:$0xff]
  %v1001 = vld [vmem:[%s5 + $0x48] sm:$0xff]
  %v1002 = vld [vmem:[%s5 + $0x50] sm:$0xff]
  %v1003 = vld [vmem:[%s5 + $0x58] sm:$0xff]
  %v1004 = vld [vmem:[%s5 + $0x60] sm:$0xff]
  %v1005 = vld [vmem:[%s5 + $0x68] sm:$0xff]
  %v1006 = vld [vmem:[%s5 + $0x70] sm:$0xff]
  %v1007 = vld [vmem:[%s5 + $0x78] sm:$0xff]
  %v1008 = vld [vmem:[%s5 + $0x80] sm:$0xff]
  %v1009 = vld [vmem:[%s5 + $0x88] sm:$0xff]
  %v1010 = vld [vmem:[%s5 + $0x90] sm:$0xff]
  %v1011 = vld [vmem:[%s5 + $0x98] sm:$0xff]
  %v1012 = vld [vmem:[%s5 + $0xa0] sm:$0xff]
  %v1013 = vld [vmem:[%s5 + $0xa8] sm:$0xff]
  %v1014 = vld [vmem:[%s5 + $0xb0] sm:$0xff]
  %v1015 = vld [vmem:[%s5 + $0xb8] sm:$0xff]
  %v1016 = vld [vmem:[%s5 + $0xc0] sm:$0xff]
  %v1017 = vld [vmem:[%s5 + $0xc8] sm:$0xff]
  %v1018 = vld [vmem:[%s5 + $0xd0] sm:$0xff]
  %v1019 = vld [vmem:[%s5 + $0xd8] sm:$0xff]
  %v1020 = vld [vmem:[%s5 + $0xe0] sm:$0xff]
  %v1021 = vld [vmem:[%s5 + $0xe8] sm:$0xff]
  %v1022 = vld [vmem:[%s5 + $0xf0] sm:$0xff]
  %v1023 = vld [vmem:[%s5 + $0xf8] sm:$0xff]
  %v1024 = vld [vmem:[%s5 + $0x100] sm:$0xff]
  %v1025 = vld [vmem:[%s5 + $0x108] sm:$0xff]
  %v1026 = vld [vmem:[%s5 + $0x110] sm:$0xff]
  %v1027 = vld [vmem:[%s5 + $0x118] sm:$0xff]
  %v1028 = vld [vmem:[%s5 + $0x120] sm:$0xff]
  %v1029 = vld [vmem:[%s5 + $0x128] sm:$0xff]
  %v1030 = vld [vmem:[%s5 + $0x130] sm:$0xff]
  %v1031 = vld [vmem:[%s5 + $0x138] sm:$0xff]
  %v1032 = vld [vmem:[%s5 + $0x140] sm:$0xff]
  %v1033 = vld [vmem:[%s5 + $0x148] sm:$0xff]
  %v1034 = vld [vmem:[%s5 + $0x150] sm:$0xff]
  %v1035 = vld [vmem:[%s5 + $0x158] sm:$0xff]
  %v1036 = vld [vmem:[%s5 + $0x160] sm:$0xff]
  %v1037 = vld [vmem:[%s5 + $0x168] sm:$0xff]
  %v1038 = vld [vmem:[%s5 + $0x170] sm:$0xff]
  %v1039 = vld [vmem:[%s5 + $0x178] sm:$0xff]
  %v1040 = vld [vmem:[%s5 + $0x180] sm:$0xff]
  %v1041 = vld [vmem:[%s5 + $0x188] sm:$0xff]
  %v1042 = vld [vmem:[%s5 + $0x190] sm:$0xff]
  %v1043 = vld [vmem:[%s5 + $0x198] sm:$0xff]
  %v1044 = vld [vmem:[%s5 + $0x1a0] sm:$0xff]
  %v1045 = vld [vmem:[%s5 + $0x1a8] sm:$0xff]
  %v1046 = vld [vmem:[%s5 + $0x1b0] sm:$0xff]
  %v1047 = vld [vmem:[%s5 + $0x1b8] sm:$0xff]
  %v1048 = vld [vmem:[%s5 + $0x1c0] sm:$0xff]
  %v1049 = vld [vmem:[%s5 + $0x1c8] sm:$0xff]
  %v1050 = vld [vmem:[%s5 + $0x1d0] sm:$0xff]
  %v1051 = vld [vmem:[%s5 + $0x1d8] sm:$0xff]
  %v1052 = vld [vmem:[%s5 + $0x1e0] sm:$0xff]
  %v1053 = vld [vmem:[%s5 + $0x1e8] sm:$0xff]
  %v1054 = vld [vmem:[%s5 + $0x1f0] sm:$0xff]
  %v1055 = vld [vmem:[%s5 + $0x1f8] sm:$0xff]
  %v1056 = vld [vmem:[%s5 + $0x200] sm:$0xff]
  %v1057 = vld [vmem:[%s5 + $0x208] sm:$0xff]
  %v1058 = vld [vmem:[%s5 + $0x210] sm:$0xff]
  %v1059 = vld [vmem:[%s5 + $0x218] sm:$0xff]
  %v1060 = vld [vmem:[%s5 + $0x220] sm:$0xff]
  %v1061 = vld [vmem:[%s5 + $0x228] sm:$0xff]
  %v1062 = vld [vmem:[%s5 + $0x230] sm:$0xff]
  %v1063 = vld [vmem:[%s5 + $0x238] sm:$0xff]
  %v1064 = vld [vmem:[%s5 + $0x240] sm:$0xff]
  %v1065 = vld [vmem:[%s5 + $0x248] sm:$0xff]
  %v1066 = vld [vmem:[%s5 + $0x250] sm:$0xff]
  %v1067 = vld [vmem:[%s5 + $0x258] sm:$0xff]
  %v1068 = vld [vmem:[%s5 + $0x260] sm:$0xff]
  %v1069 = vld [vmem:[%s5 + $0x268] sm:$0xff]
  %v1070 = vld [vmem:[%s5 + $0x270] sm:$0xff]
  %v1071 = vld [vmem:[%s5 + $0x278] sm:$0xff]
  %v1072 = vld [vmem:[%s5 + $0x280] sm:$0xff]
  %v1073 = vld [vmem:[%s5 + $0x288] sm:$0xff]
  %v1074 = vld [vmem:[%s5 + $0x290] sm:$0xff]
  %v1075 = vld [vmem:[%s5 + $0x298] sm:$0xff]
  %v1076 = vld [vmem:[%s5 + $0x2a0] sm:$0xff]
  %v1077 = vld [vmem:[%s5 + $0x2a8] sm:$0xff]
  %v1078 = vld [vmem:[%s5 + $0x2b0] sm:$0xff]
  %v1079 = vld [vmem:[%s5 + $0x2b8] sm:$0xff]
  %v1080 = vld [vmem:[%s5 + $0x2c0] sm:$0xff]
  %v1081 = vld [vmem:[%s5 + $0x2c8] sm:$0xff]
  %v1082 = vld [vmem:[%s5 + $0x2d0] sm:$0xff]
  %v1083 = vld [vmem:[%s5 + $0x2d8] sm:$0xff]
  %v1084 = vld [vmem:[%s5 + $0x2e0] sm:$0xff]
  %v1085 = vld [vmem:[%s5 + $0x2e8] sm:$0xff]
  %v1086 = vld [vmem:[%s5 + $0x2f0] sm:$0xff]
  %v1087 = vld [vmem:[%s5 + $0x2f8] sm:$0xff]
  %1088 = vmatprep.subr.mxu0 %v993
  %1089 = vmatpush1.msra.mxu0 %v992
  %1090 = vmatprep.subr.mxu0 %v999
  %1091 = vmatpush1.msra.mxu0 %v998
  %1092 = vmatprep.subr.mxu0 %v1005
  %1093 = vmatpush1.msra.mxu0 %v1004
  %1094 = vmatprep.subr.mxu0 %v1011
  %1095 = vmatpush1.msra.mxu0 %v1010
  %1096 = vmatprep.subr.mxu0 %v1017
  %1097 = vmatpush1.msra.mxu0 %v1016
  %1098 = vmatprep.subr.mxu0 %v1023
  %1099 = vmatpush1.msra.mxu0 %v1022
  %1100 = vmatprep.subr.mxu0 %v1029
  %1101 = vmatpush1.msra.mxu0 %v1028
  %1102 = vmatprep.subr.mxu0 %v1035
  %1103 = vmatpush1.msra.mxu0 %v1034
  %1104 = vmatprep.subr.mxu0 %v1041
  %1105 = vmatpush1.msra.mxu0 %v1040
  %1106 = vmatprep.subr.mxu0 %v1047
  %1107 = vmatpush1.msra.mxu0 %v1046
  %1108 = vmatprep.subr.mxu0 %v1053
  %1109 = vmatpush1.msra.mxu0 %v1052
  %1110 = vmatprep.subr.mxu0 %v1059
  %1111 = vmatpush1.msra.mxu0 %v1058
  %1112 = vmatprep.subr.mxu0 %v1065
  %1113 = vmatpush1.msra.mxu0 %v1064
  %1114 = vmatprep.subr.mxu0 %v1071
  %1115 = vmatpush1.msra.mxu0 %v1070
  %1116 = vmatprep.subr.mxu0 %v1077
  %1117 = vmatpush1.msra.mxu0 %v1076
  %1118 = vmatprep.subr.mxu0 %v1083
  %1119 = vmatpush1.msra.mxu0 %v1082
  %1120 = vmatprep.subr.mxu0 0.0
  %1121 = vmatpush1.msra.mxu0 0.0
  %1122 = vmatprep.subr.mxu0 0.0
  %1123 = vmatpush1.msra.mxu0 0.0
  %1124 = vmatprep.subr.mxu0 0.0
  %1125 = vmatpush1.msra.mxu0 0.0
  %1126 = vmatprep.subr.mxu0 0.0
  %1127 = vmatpush1.msra.mxu0 0.0
  %1128 = vmatprep.subr.mxu0 0.0
  %1129 = vmatpush1.msra.mxu0 0.0
  %1130 = vmatprep.subr.mxu0 0.0
  %1131 = vmatpush1.msra.mxu0 0.0
  %1132 = vmatprep.subr.mxu0 0.0
  %1133 = vmatpush1.msra.mxu0 0.0
  %1134 = vmatprep.subr.mxu0 0.0
  %1135 = vmatpush1.msra.mxu0 0.0
  %1136 = vmatprep.subr.mxu0 0.0
  %1137 = vmatpush1.msra.mxu0 0.0
  %1138 = vmatprep.subr.mxu0 0.0
  %1139 = vmatpush1.msra.mxu0 0.0
  %1140 = vmatprep.subr.mxu0 0.0
  %1141 = vmatpush1.msra.mxu0 0.0
  %1142 = vmatprep.subr.mxu0 0.0
  %1143 = vmatpush1.msra.mxu0 0.0
  %1144 = vmatprep.subr.mxu0 0.0
  %1145 = vmatpush1.msra.mxu0 0.0
  %1146 = vmatprep.subr.mxu0 0.0
  %1147 = vmatpush1.msra.mxu0 0.0
  %1148 = vmatprep.subr.mxu0 0.0
  %1149 = vmatpush1.msra.mxu0 0.0
  %1150 = vmatprep.subr.mxu0 0.0
  %1151 = vmatpush1.msra.mxu0 0.0
  %1152 = vmatprep.mubr.f32.mxu0 0.0
  %1153 = vmatmul.mubr.f32.gmra.mrb[0].mxu0 %v991
  %v1154 = vpop.f32.mrb[0].mxu0
  %v1155 = vadd.f32 0.0, %v1154
  %v1156 = vpop.f32.mrb[0].mxu0
  %v1157 = vadd.f32 0.0, %v1156
  %1158 = vdwg.mxu0
  %1159 = vmatprep.subr.mxu0 %v995
  %1160 = vmatpush1.msra.mxu0 %v994
  %1161 = vmatprep.subr.mxu0 %v1001
  %1162 = vmatpush1.msra.mxu0 %v1000
  %1163 = vmatprep.subr.mxu0 %v1007
  %1164 = vmatpush1.msra.mxu0 %v1006
  %1165 = vmatprep.subr.mxu0 %v1013
  %1166 = vmatpush1.msra.mxu0 %v1012
  %1167 = vmatprep.subr.mxu0 %v1019
  %1168 = vmatpush1.msra.mxu0 %v1018
  %1169 = vmatprep.subr.mxu0 %v1025
  %1170 = vmatpush1.msra.mxu0 %v1024
  %1171 = vmatprep.subr.mxu0 %v1031
  %1172 = vmatpush1.msra.mxu0 %v1030
  %1173 = vmatprep.subr.mxu0 %v1037
  %1174 = vmatpush1.msra.mxu0 %v1036
  %1175 = vmatprep.subr.mxu0 %v1043
  %1176 = vmatpush1.msra.mxu0 %v1042
  %1177 = vmatprep.subr.mxu0 %v1049
  %1178 = vmatpush1.msra.mxu0 %v1048
  %1179 = vmatprep.subr.mxu0 %v1055
  %1180 = vmatpush1.msra.mxu0 %v1054
  %1181 = vmatprep.subr.mxu0 %v1061
  %1182 = vmatpush1.msra.mxu0 %v1060
  %1183 = vmatprep.subr.mxu0 %v1067
  %1184 = vmatpush1.msra.mxu0 %v1066
  %1185 = vmatprep.subr.mxu0 %v1073
  %1186 = vmatpush1.msra.mxu0 %v1072
  %1187 = vmatprep.subr.mxu0 %v1079
  %1188 = vmatpush1.msra.mxu0 %v1078
  %1189 = vmatprep.subr.mxu0 %v1085
  %1190 = vmatpush1.msra.mxu0 %v1084
  %1191 = vmatprep.subr.mxu0 0.0
  %1192 = vmatpush1.msra.mxu0 0.0
  %1193 = vmatprep.subr.mxu0 0.0
  %1194 = vmatpush1.msra.mxu0 0.0
  %1195 = vmatprep.subr.mxu0 0.0
  %1196 = vmatpush1.msra.mxu0 0.0
  %1197 = vmatprep.subr.mxu0 0.0
  %1198 = vmatpush1.msra.mxu0 0.0
  %1199 = vmatprep.subr.mxu0 0.0
  %1200 = vmatpush1.msra.mxu0 0.0
  %1201 = vmatprep.subr.mxu0 0.0
  %1202 = vmatpush1.msra.mxu0 0.0
  %1203 = vmatprep.subr.mxu0 0.0
  %1204 = vmatpush1.msra.mxu0 0.0
  %1205 = vmatprep.subr.mxu0 0.0
  %1206 = vmatpush1.msra.mxu0 0.0
  %1207 = vmatprep.subr.mxu0 0.0
  %1208 = vmatpush1.msra.mxu0 0.0
  %1209 = vmatprep.subr.mxu0 0.0
  %1210 = vmatpush1.msra.mxu0 0.0
  %1211 = vmatprep.subr.mxu0 0.0
  %1212 = vmatpush1.msra.mxu0 0.0
  %1213 = vmatprep.subr.mxu0 0.0
  %1214 = vmatpush1.msra.mxu0 0.0
  %1215 = vmatprep.subr.mxu0 0.0
  %1216 = vmatpush1.msra.mxu0 0.0
  %1217 = vmatprep.subr.mxu0 0.0
  %1218 = vmatpush1.msra.mxu0 0.0
  %1219 = vmatprep.subr.mxu0 0.0
  %1220 = vmatpush1.msra.mxu0 0.0
  %1221 = vmatprep.subr.mxu0 0.0
  %1222 = vmatpush1.msra.mxu0 0.0
  %1223 = vmatprep.mubr.f32.mxu0 0.0
  %1224 = vmatmul.mubr.f32.gmra.mrb[0].mxu0 %v991
  %v1225 = vpop.f32.mrb[0].mxu0
  %v1226 = vadd.f32 0.0, %v1225
  %v1227 = vpop.f32.mrb[0].mxu0
  %v1228 = vadd.f32 0.0, %v1227
  %1229 = vdwg.mxu0
  %1230 = vmatprep.subr.mxu0 %v997
  %1231 = vmatpush1.msra.mxu0 %v996
  %1232 = vmatprep.subr.mxu0 %v1003
  %1233 = vmatpush1.msra.mxu0 %v1002
  %1234 = vmatprep.subr.mxu0 %v1009
  %1235 = vmatpush1.msra.mxu0 %v1008
  %1236 = vmatprep.subr.mxu0 %v1015
  %1237 = vmatpush1.msra.mxu0 %v1014
  %1238 = vmatprep.subr.mxu0 %v1021
  %1239 = vmatpush1.msra.mxu0 %v1020
  %1240 = vmatprep.subr.mxu0 %v1027
  %1241 = vmatpush1.msra.mxu0 %v1026
  %1242 = vmatprep.subr.mxu0 %v1033
  %1243 = vmatpush1.msra.mxu0 %v1032
  %1244 = vmatprep.subr.mxu0 %v1039
  %1245 = vmatpush1.msra.mxu0 %v1038
  %1246 = vmatprep.subr.mxu0 %v1045
  %1247 = vmatpush1.msra.mxu0 %v1044
  %1248 = vmatprep.subr.mxu0 %v1051
  %1249 = vmatpush1.msra.mxu0 %v1050
  %1250 = vmatprep.subr.mxu0 %v1057
  %1251 = vmatpush1.msra.mxu0 %v1056
  %1252 = vmatprep.subr.mxu0 %v1063
  %1253 = vmatpush1.msra.mxu0 %v1062
  %1254 = vmatprep.subr.mxu0 %v1069
  %1255 = vmatpush1.msra.mxu0 %v1068
  %1256 = vmatprep.subr.mxu0 %v1075
  %1257 = vmatpush1.msra.mxu0 %v1074
  %1258 = vmatprep.subr.mxu0 %v1081
  %1259 = vmatpush1.msra.mxu0 %v1080
  %1260 = vmatprep.subr.mxu0 %v1087
  %1261 = vmatpush1.msra.mxu0 %v1086
  %1262 = vmatprep.subr.mxu0 0.0
  %1263 = vmatpush1.msra.mxu0 0.0
  %1264 = vmatprep.subr.mxu0 0.0
  %1265 = vmatpush1.msra.mxu0 0.0
  %1266 = vmatprep.subr.mxu0 0.0
  %1267 = vmatpush1.msra.mxu0 0.0
  %1268 = vmatprep.subr.mxu0 0.0
  %1269 = vmatpush1.msra.mxu0 0.0
  %1270 = vmatprep.subr.mxu0 0.0
  %1271 = vmatpush1.msra.mxu0 0.0
  %1272 = vmatprep.subr.mxu0 0.0
  %1273 = vmatpush1.msra.mxu0 0.0
  %1274 = vmatprep.subr.mxu0 0.0
  %1275 = vmatpush1.msra.mxu0 0.0
  %1276 = vmatprep.subr.mxu0 0.0
  %1277 = vmatpush1.msra.mxu0 0.0
  %1278 = vmatprep.subr.mxu0 0.0
  %1279 = vmatpush1.msra.mxu0 0.0
  %1280 = vmatprep.subr.mxu0 0.0
  %1281 = vmatpush1.msra.mxu0 0.0
  %1282 = vmatprep.subr.mxu0 0.0
  %1283 = vmatpush1.msra.mxu0 0.0
  %1284 = vmatprep.subr.mxu0 0.0
  %1285 = vmatpush1.msra.mxu0 0.0
  %1286 = vmatprep.subr.mxu0 0.0
  %1287 = vmatpush1.msra.mxu0 0.0
  %1288 = vmatprep.subr.mxu0 0.0
  %1289 = vmatpush1.msra.mxu0 0.0
  %1290 = vmatprep.subr.mxu0 0.0
  %1291 = vmatpush1.msra.mxu0 0.0
  %1292 = vmatprep.subr.mxu0 0.0
  %1293 = vmatpush1.msra.mxu0 0.0
  %1294 = vmatprep.mubr.f32.mxu0 0.0
  %1295 = vmatmul.mubr.f32.gmra.mrb[0].mxu0 %v991
  %v1296 = vpop.f32.mrb[0].mxu0
  %v1297 = vadd.f32 0.0, %v1296
  %v1298 = vpop.f32.mrb[0].mxu0
  %v1299 = vadd.f32 0.0, %v1298
  %1300 = vdwg.mxu0
  %v1301 = vld [vmem:[%s6] sm:$0xff]
  %v1302 = vld [vmem:[%s6 + $0x8] sm:$0xff]
  %v1303 = vld [vmem:[%s6 + $0x10] sm:$0xff]
  %v1304 = vld [vmem:[%s6 + $0x18] sm:$0xff]
  %v1305 = vld [vmem:[%s6 + $0x20] sm:$0xff]
  %v1306 = vld [vmem:[%s6 + $0x28] sm:$0xff]
  %v1307 = vld [vmem:[%s6 + $0x30] sm:$0xff]
  %v1308 = vld [vmem:[%s6 + $0x38] sm:$0xff]
  %v1309 = vld [vmem:[%s6 + $0x40] sm:$0xff]
  %v1310 = vld [vmem:[%s6 + $0x48] sm:$0xff]
  %v1311 = vld [vmem:[%s6 + $0x50] sm:$0xff]
  %v1312 = vld [vmem:[%s6 + $0x58] sm:$0xff]
  %v1313 = vld [vmem:[%s6 + $0x60] sm:$0xff]
  %v1314 = vld [vmem:[%s6 + $0x68] sm:$0xff]
  %v1315 = vld [vmem:[%s6 + $0x70] sm:$0xff]
  %v1316 = vld [vmem:[%s6 + $0x78] sm:$0xff]
  %v1317 = vld [vmem:[%s6 + $0x80] sm:$0xff]
  %v1318 = vld [vmem:[%s6 + $0x88] sm:$0xff]
  %v1319 = vld [vmem:[%s6 + $0x90] sm:$0xff]
  %v1320 = vld [vmem:[%s6 + $0x98] sm:$0xff]
  %v1321 = vld [vmem:[%s6 + $0xa0] sm:$0xff]
  %v1322 = vld [vmem:[%s6 + $0xa8] sm:$0xff]
  %v1323 = vld [vmem:[%s6 + $0xb0] sm:$0xff]
  %v1324 = vld [vmem:[%s6 + $0xb8] sm:$0xff]
  %v1325 = vld [vmem:[%s6 + $0xc0] sm:$0xff]
  %v1326 = vld [vmem:[%s6 + $0xc8] sm:$0xff]
  %v1327 = vld [vmem:[%s6 + $0xd0] sm:$0xff]
  %v1328 = vld [vmem:[%s6 + $0xd8] sm:$0xff]
  %v1329 = vld [vmem:[%s6 + $0xe0] sm:$0xff]
  %v1330 = vld [vmem:[%s6 + $0xe8] sm:$0xff]
  %v1331 = vld [vmem:[%s6 + $0xf0] sm:$0xff]
  %v1332 = vld [vmem:[%s6 + $0xf8] sm:$0xff]
  %v1333 = vld [vmem:[%s6 + $0x100] sm:$0xff]
  %v1334 = vld [vmem:[%s6 + $0x108] sm:$0xff]
  %v1335 = vld [vmem:[%s6 + $0x110] sm:$0xff]
  %v1336 = vld [vmem:[%s6 + $0x118] sm:$0xff]
  %v1337 = vld [vmem:[%s6 + $0x120] sm:$0xff]
  %v1338 = vld [vmem:[%s6 + $0x128] sm:$0xff]
  %v1339 = vld [vmem:[%s6 + $0x130] sm:$0xff]
  %v1340 = vld [vmem:[%s6 + $0x138] sm:$0xff]
  %v1341 = vld [vmem:[%s6 + $0x140] sm:$0xff]
  %v1342 = vld [vmem:[%s6 + $0x148] sm:$0xff]
  %v1343 = vld [vmem:[%s6 + $0x150] sm:$0xff]
  %v1344 = vld [vmem:[%s6 + $0x158] sm:$0xff]
  %v1345 = vld [vmem:[%s6 + $0x160] sm:$0xff]
  %v1346 = vld [vmem:[%s6 + $0x168] sm:$0xff]
  %v1347 = vld [vmem:[%s6 + $0x170] sm:$0xff]
  %v1348 = vld [vmem:[%s6 + $0x178] sm:$0xff]
  %1349 = vmatprep.subr.mxu0 %v1302
  %1350 = vmatpush1.msra.mxu0 %v1301
  %1351 = vmatprep.subr.mxu0 %v1305
  %1352 = vmatpush1.msra.mxu0 %v1304
  %1353 = vmatprep.subr.mxu0 %v1308
  %1354 = vmatpush1.msra.mxu0 %v1307
  %1355 = vmatprep.subr.mxu0 %v1311
  %1356 = vmatpush1.msra.mxu0 %v1310
  %1357 = vmatprep.subr.mxu0 %v1314
  %1358 = vmatpush1.msra.mxu0 %v1313
  %1359 = vmatprep.subr.mxu0 %v1317
  %1360 = vmatpush1.msra.mxu0 %v1316
  %1361 = vmatprep.subr.mxu0 %v1320
  %1362 = vmatpush1.msra.mxu0 %v1319
  %1363 = vmatprep.subr.mxu0 %v1323
  %1364 = vmatpush1.msra.mxu0 %v1322
  %1365 = vmatprep.subr.mxu0 %v1326
  %1366 = vmatpush1.msra.mxu0 %v1325
  %1367 = vmatprep.subr.mxu0 %v1329
  %1368 = vmatpush1.msra.mxu0 %v1328
  %1369 = vmatprep.subr.mxu0 %v1332
  %1370 = vmatpush1.msra.mxu0 %v1331
  %1371 = vmatprep.subr.mxu0 %v1335
  %1372 = vmatpush1.msra.mxu0 %v1334
  %1373 = vmatprep.subr.mxu0 %v1338
  %1374 = vmatpush1.msra.mxu0 %v1337
  %1375 = vmatprep.subr.mxu0 %v1341
  %1376 = vmatpush1.msra.mxu0 %v1340
  %1377 = vmatprep.subr.mxu0 %v1344
  %1378 = vmatpush1.msra.mxu0 %v1343
  %1379 = vmatprep.subr.mxu0 %v1347
  %1380 = vmatpush1.msra.mxu0 %v1346
  %1381 = vmatprep.subr.mxu0 0.0
  %1382 = vmatpush1.msra.mxu0 0.0
  %1383 = vmatprep.subr.mxu0 0.0
  %1384 = vmatpush1.msra.mxu0 0.0
  %1385 = vmatprep.subr.mxu0 0.0
  %1386 = vmatpush1.msra.mxu0 0.0
  %1387 = vmatprep.subr.mxu0 0.0
  %1388 = vmatpush1.msra.mxu0 0.0
  %1389 = vmatprep.subr.mxu0 0.0
  %1390 = vmatpush1.msra.mxu0 0.0
  %1391 = vmatprep.subr.mxu0 0.0
  %1392 = vmatpush1.msra.mxu0 0.0
  %1393 = vmatprep.subr.mxu0 0.0
  %1394 = vmatpush1.msra.mxu0 0.0
  %1395 = vmatprep.subr.mxu0 0.0
  %1396 = vmatpush1.msra.mxu0 0.0
  %1397 = vmatprep.subr.mxu0 0.0
  %1398 = vmatpush1.msra.mxu0 0.0
  %1399 = vmatprep.subr.mxu0 0.0
  %1400 = vmatpush1.msra.mxu0 0.0
  %1401 = vmatprep.subr.mxu0 0.0
  %1402 = vmatpush1.msra.mxu0 0.0
  %1403 = vmatprep.subr.mxu0 0.0
  %1404 = vmatpush1.msra.mxu0 0.0
  %1405 = vmatprep.subr.mxu0 0.0
  %1406 = vmatpush1.msra.mxu0 0.0
  %1407 = vmatprep.subr.mxu0 0.0
  %1408 = vmatpush1.msra.mxu0 0.0
  %1409 = vmatprep.subr.mxu0 0.0
  %1410 = vmatpush1.msra.mxu0 0.0
  %1411 = vmatprep.subr.mxu0 0.0
  %1412 = vmatpush1.msra.mxu0 0.0
  %1413 = vmatprep.mubr.f32.mxu0 0.0
  %1414 = vmatmul.mubr.f32.gmra.mrb[0].mxu0 %v966
  %v1415 = vpop.f32.mrb[0].mxu0
  %v1416 = vadd.f32 0.0, %v1415
  %v1417 = vpop.f32.mrb[0].mxu0
  %v1418 = vadd.f32 0.0, %v1417
  %1419 = vdwg.mxu0
  %1420 = vmatprep.subr.mxu0 0.0
  %1421 = vmatpush1.msra.mxu0 %v1303
  %1422 = vmatprep.subr.mxu0 0.0
  %1423 = vmatpush1.msra.mxu0 %v1306
  %1424 = vmatprep.subr.mxu0 0.0
  %1425 = vmatpush1.msra.mxu0 %v1309
  %1426 = vmatprep.subr.mxu0 0.0
  %1427 = vmatpush1.msra.mxu0 %v1312
  %1428 = vmatprep.subr.mxu0 0.0
  %1429 = vmatpush1.msra.mxu0 %v1315
  %1430 = vmatprep.subr.mxu0 0.0
  %1431 = vmatpush1.msra.mxu0 %v1318
  %1432 = vmatprep.subr.mxu0 0.0
  %1433 = vmatpush1.msra.mxu0 %v1321
  %1434 = vmatprep.subr.mxu0 0.0
  %1435 = vmatpush1.msra.mxu0 %v1324
  %1436 = vmatprep.subr.mxu0 0.0
  %1437 = vmatpush1.msra.mxu0 %v1327
  %1438 = vmatprep.subr.mxu0 0.0
  %1439 = vmatpush1.msra.mxu0 %v1330
  %1440 = vmatprep.subr.mxu0 0.0
  %1441 = vmatpush1.msra.mxu0 %v1333
  %1442 = vmatprep.subr.mxu0 0.0
  %1443 = vmatpush1.msra.mxu0 %v1336
  %1444 = vmatprep.subr.mxu0 0.0
  %1445 = vmatpush1.msra.mxu0 %v1339
  %1446 = vmatprep.subr.mxu0 0.0
  %1447 = vmatpush1.msra.mxu0 %v1342
  %1448 = vmatprep.subr.mxu0 0.0
  %1449 = vmatpush1.msra.mxu0 %v1345
  %1450 = vmatprep.subr.mxu0 0.0
  %1451 = vmatpush1.msra.mxu0 %v1348
  %1452 = vmatprep.subr.mxu0 0.0
  %1453 = vmatpush1.msra.mxu0 0.0
  %1454 = vmatprep.subr.mxu0 0.0
  %1455 = vmatpush1.msra.mxu0 0.0
  %1456 = vmatprep.subr.mxu0 0.0
  %1457 = vmatpush1.msra.mxu0 0.0
  %1458 = vmatprep.subr.mxu0 0.0
  %1459 = vmatpush1.msra.mxu0 0.0
  %1460 = vmatprep.subr.mxu0 0.0
  %1461 = vmatpush1.msra.mxu0 0.0
  %1462 = vmatprep.subr.mxu0 0.0
  %1463 = vmatpush1.msra.mxu0 0.0
  %1464 = vmatprep.subr.mxu0 0.0
  %1465 = vmatpush1.msra.mxu0 0.0
  %1466 = vmatprep.subr.mxu0 0.0
  %1467 = vmatpush1.msra.mxu0 0.0
  %1468 = vmatprep.subr.mxu0 0.0
  %1469 = vmatpush1.msra.mxu0 0.0
  %1470 = vmatprep.subr.mxu0 0.0
  %1471 = vmatpush1.msra.mxu0 0.0
  %1472 = vmatprep.subr.mxu0 0.0
  %1473 = vmatpush1.msra.mxu0 0.0
  %1474 = vmatprep.subr.mxu0 0.0
  %1475 = vmatpush1.msra.mxu0 0.0
  %1476 = vmatprep.subr.mxu0 0.0
  %1477 = vmatpush1.msra.mxu0 0.0
  %1478 = vmatprep.subr.mxu0 0.0
  %1479 = vmatpush1.msra.mxu0 0.0
  %1480 = vmatprep.subr.mxu0 0.0
  %1481 = vmatpush1.msra.mxu0 0.0
  %1482 = vmatprep.subr.mxu0 0.0
  %1483 = vmatpush1.msra.mxu0 0.0
  %1484 = vmatprep.mubr.f32.mxu0 0.0
  %1485 = vmatmul.mubr.f32.gmra.mrb[0].mxu0 %v966
  %v1486 = vpop.f32.mrb[0].mxu0
  %v1487 = vadd.f32 0.0, %v1486
  %v1488 = vpop.f32.mrb[0].mxu0
  %1489 = vdwg.mxu0
  %v1490 = vadd.f32 %v1228, %v1416
  %v1491 = vadd.f32 %v1297, %v1418
  %v1492 = vadd.f32 %v1490, %v211
  %v1493 = vadd.f32 %v1491, %v215
  %v1494 = vmul.f32 %v1492, 0.5
  %v1495 = vmul.f32 %v1493, 0.5
  %v1496 = vtanh.pop %v1494
  %v1497 = vtanh.pop %v1495
  %v1498 = vmul.f32 %v1496, 0.5
  %v1499 = vmul.f32 %v1497, 0.5
  %v1500 = vadd.f32 %v1498, 0.5
  %v1501 = vadd.f32 %v1499, 0.5
  %v1502 = vadd.f32 %v1299, %v223
  %v1503 = vadd.f32 %v1487, %v230
  %v1504 = vmul.f32 %v1500, %v1503
  %v1505 = vadd.f32 %v1502, %v1504
  %v1506 = vtanh.pop %v1505
  %v1507 = vsub.f32 1.0, %v1501
  %v1508 = vmul.f32 %v1507, %v1506
  %v1509 = vmul.f32 %v1501, %v966
  %v1510 = vadd.f32 %v1508, %v1509
  %s1511 = scalar_lea.vmem [#allocation3], 8
  %1512 = vst [vmem:[%s1511] sm:$0xff] %v1510
  %s1513 = smul.u32 2, 3
  %s1514 = smul.addr %s1513, 8
  %s1515 = scalar_lea.vmem [#allocation2], %s1514
  %v1516 = vld [vmem:[%s1515] sm:$0xff]
  %v1517 = vld [vmem:[%s1515 + $0x8] sm:$0xff]
  %v1518 = vld [vmem:[%s1515 + $0x10] sm:$0xff]
  %v1519 = vadd.f32 %v1516, %v1155
  %v1520 = vmul.f32 %v1519, 0.5
  %v1521 = vtanh.pop %v1520
  %v1522 = vmul.f32 %v1521, 0.5
  %v1523 = vadd.f32 %v1522, 0.5
  %v1524 = vadd.f32 %v1517, %v1157
  %v1525 = vmul.f32 %v1524, 0.5
  %v1526 = vtanh.pop %v1525
  %v1527 = vmul.f32 %v1526, 0.5
  %v1528 = vadd.f32 %v1527, 0.5
  %v1529 = vadd.f32 %v1226, %v204
  %v1530 = vmul.f32 %v1523, %v1529
  %v1531 = vadd.f32 %v1518, %v1530
  %v1532 = vtanh.pop %v1531
  %v1533 = vsub.f32 1.0, %v1528
  %v1534 = vmul.f32 %v1533, %v1532
  %v1535 = vmul.f32 %v1528, %v991
  %v1536 = vadd.f32 %v1534, %v1535
  %v1537 = vld [vmem:[%s5] sm:$0xff]
  %v1538 = vld [vmem:[%s5 + $0x8] sm:$0xff]
  %v1539 = vld [vmem:[%s5 + $0x10] sm:$0xff]
  %v1540 = vld [vmem:[%s5 + $0x18] sm:$0xff]
  %v1541 = vld [vmem:[%s5 + $0x20] sm:$0xff]
  %v1542 = vld [vmem:[%s5 + $0x28] sm:$0xff]
  %v1543 = vld [vmem:[%s5 + $0x30] sm:$0xff]
  %v1544 = vld [vmem:[%s5 + $0x38] sm:$0xff]
  %v1545 = vld [vmem:[%s5 + $0x40] sm:$0xff]
  %v1546 = vld [vmem:[%s5 + $0x48] sm:$0xff]
  %v1547 = vld [vmem:[%s5 + $0x50] sm:$0xff]
  %v1548 = vld [vmem:[%s5 + $0x58] sm:$0xff]
  %v1549 = vld [vmem:[%s5 + $0x60] sm:$0xff]
  %v1550 = vld [vmem:[%s5 + $0x68] sm:$0xff]
  %v1551 = vld [vmem:[%s5 + $0x70] sm:$0xff]
  %v1552 = vld [vmem:[%s5 + $0x78] sm:$0xff]
  %v1553 = vld [vmem:[%s5 + $0x80] sm:$0xff]
  %v1554 = vld [vmem:[%s5 + $0x88] sm:$0xff]
  %v1555 = vld [vmem:[%s5 + $0x90] sm:$0xff]
  %v1556 = vld [vmem:[%s5 + $0x98] sm:$0xff]
  %v1557 = vld [vmem:[%s5 + $0xa0] sm:$0xff]
  %v1558 = vld [vmem:[%s5 + $0xa8] sm:$0xff]
  %v1559 = vld [vmem:[%s5 + $0xb0] sm:$0xff]
  %v1560 = vld [vmem:[%s5 + $0xb8] sm:$0xff]
  %v1561 = vld [vmem:[%s5 + $0xc0] sm:$0xff]
  %v1562 = vld [vmem:[%s5 + $0xc8] sm:$0xff]
  %v1563 = vld [vmem:[%s5 + $0xd0] sm:$0xff]
  %v1564 = vld [vmem:[%s5 + $0xd8] sm:$0xff]
  %v1565 = vld [vmem:[%s5 + $0xe0] sm:$0xff]
  %v1566 = vld [vmem:[%s5 + $0xe8] sm:$0xff]
  %v1567 = vld [vmem:[%s5 + $0xf0] sm:$0xff]
  %v1568 = vld [vmem:[%s5 + $0xf8] sm:$0xff]
  %v1569 = vld [vmem:[%s5 + $0x100] sm:$0xff]
  %v1570 = vld [vmem:[%s5 + $0x108] sm:$0xff]
  %v1571 = vld [vmem:[%s5 + $0x110] sm:$0xff]
  %v1572 = vld [vmem:[%s5 + $0x118] sm:$0xff]
  %v1573 = vld [vmem:[%s5 + $0x120] sm:$0xff]
  %v1574 = vld [vmem:[%s5 + $0x128] sm:$0xff]
  %v1575 = vld [vmem:[%s5 + $0x130] sm:$0xff]
  %v1576 = vld [vmem:[%s5 + $0x138] sm:$0xff]
  %v1577 = vld [vmem:[%s5 + $0x140] sm:$0xff]
  %v1578 = vld [vmem:[%s5 + $0x148] sm:$0xff]
  %v1579 = vld [vmem:[%s5 + $0x150] sm:$0xff]
  %v1580 = vld [vmem:[%s5 + $0x158] sm:$0xff]
  %v1581 = vld [vmem:[%s5 + $0x160] sm:$0xff]
  %v1582 = vld [vmem:[%s5 + $0x168] sm:$0xff]
  %v1583 = vld [vmem:[%s5 + $0x170] sm:$0xff]
  %v1584 = vld [vmem:[%s5 + $0x178] sm:$0xff]
  %v1585 = vld [vmem:[%s5 + $0x180] sm:$0xff]
  %v1586 = vld [vmem:[%s5 + $0x188] sm:$0xff]
  %v1587 = vld [vmem:[%s5 + $0x190] sm:$0xff]
  %v1588 = vld [vmem:[%s5 + $0x198] sm:$0xff]
  %v1589 = vld [vmem:[%s5 + $0x1a0] sm:$0xff]
  %v1590 = vld [vmem:[%s5 + $0x1a8] sm:$0xff]
  %v1591 = vld [vmem:[%s5 + $0x1b0] sm:$0xff]
  %v1592 = vld [vmem:[%s5 + $0x1b8] sm:$0xff]
  %v1593 = vld [vmem:[%s5 + $0x1c0] sm:$0xff]
  %v1594 = vld [vmem:[%s5 + $0x1c8] sm:$0xff]
  %v1595 = vld [vmem:[%s5 + $0x1d0] sm:$0xff]
  %v1596 = vld [vmem:[%s5 + $0x1d8] sm:$0xff]
  %v1597 = vld [vmem:[%s5 + $0x1e0] sm:$0xff]
  %v1598 = vld [vmem:[%s5 + $0x1e8] sm:$0xff]
  %v1599 = vld [vmem:[%s5 + $0x1f0] sm:$0xff]
  %v1600 = vld [vmem:[%s5 + $0x1f8] sm:$0xff]
  %v1601 = vld [vmem:[%s5 + $0x200] sm:$0xff]
  %v1602 = vld [vmem:[%s5 + $0x208] sm:$0xff]
  %v1603 = vld [vmem:[%s5 + $0x210] sm:$0xff]
  %v1604 = vld [vmem:[%s5 + $0x218] sm:$0xff]
  %v1605 = vld [vmem:[%s5 + $0x220] sm:$0xff]
  %v1606 = vld [vmem:[%s5 + $0x228] sm:$0xff]
  %v1607 = vld [vmem:[%s5 + $0x230] sm:$0xff]
  %v1608 = vld [vmem:[%s5 + $0x238] sm:$0xff]
  %v1609 = vld [vmem:[%s5 + $0x240] sm:$0xff]
  %v1610 = vld [vmem:[%s5 + $0x248] sm:$0xff]
  %v1611 = vld [vmem:[%s5 + $0x250] sm:$0xff]
  %v1612 = vld [vmem:[%s5 + $0x258] sm:$0xff]
  %v1613 = vld [vmem:[%s5 + $0x260] sm:$0xff]
  %v1614 = vld [vmem:[%s5 + $0x268] sm:$0xff]
  %v1615 = vld [vmem:[%s5 + $0x270] sm:$0xff]
  %v1616 = vld [vmem:[%s5 + $0x278] sm:$0xff]
  %v1617 = vld [vmem:[%s5 + $0x280] sm:$0xff]
  %v1618 = vld [vmem:[%s5 + $0x288] sm:$0xff]
  %v1619 = vld [vmem:[%s5 + $0x290] sm:$0xff]
  %v1620 = vld [vmem:[%s5 + $0x298] sm:$0xff]
  %v1621 = vld [vmem:[%s5 + $0x2a0] sm:$0xff]
  %v1622 = vld [vmem:[%s5 + $0x2a8] sm:$0xff]
  %v1623 = vld [vmem:[%s5 + $0x2b0] sm:$0xff]
  %v1624 = vld [vmem:[%s5 + $0x2b8] sm:$0xff]
  %v1625 = vld [vmem:[%s5 + $0x2c0] sm:$0xff]
  %v1626 = vld [vmem:[%s5 + $0x2c8] sm:$0xff]
  %v1627 = vld [vmem:[%s5 + $0x2d0] sm:$0xff]
  %v1628 = vld [vmem:[%s5 + $0x2d8] sm:$0xff]
  %v1629 = vld [vmem:[%s5 + $0x2e0] sm:$0xff]
  %v1630 = vld [vmem:[%s5 + $0x2e8] sm:$0xff]
  %v1631 = vld [vmem:[%s5 + $0x2f0] sm:$0xff]
  %v1632 = vld [vmem:[%s5 + $0x2f8] sm:$0xff]
  %1633 = vmatprep.subr.mxu0 %v1538
  %1634 = vmatpush1.msra.mxu0 %v1537
  %1635 = vmatprep.subr.mxu0 %v1544
  %1636 = vmatpush1.msra.mxu0 %v1543
  %1637 = vmatprep.subr.mxu0 %v1550
  %1638 = vmatpush1.msra.mxu0 %v1549
  %1639 = vmatprep.subr.mxu0 %v1556
  %1640 = vmatpush1.msra.mxu0 %v1555
  %1641 = vmatprep.subr.mxu0 %v1562
  %1642 = vmatpush1.msra.mxu0 %v1561
  %1643 = vmatprep.subr.mxu0 %v1568
  %1644 = vmatpush1.msra.mxu0 %v1567
  %1645 = vmatprep.subr.mxu0 %v1574
  %1646 = vmatpush1.msra.mxu0 %v1573
  %1647 = vmatprep.subr.mxu0 %v1580
  %1648 = vmatpush1.msra.mxu0 %v1579
  %1649 = vmatprep.subr.mxu0 %v1586
  %1650 = vmatpush1.msra.mxu0 %v1585
  %1651 = vmatprep.subr.mxu0 %v1592
  %1652 = vmatpush1.msra.mxu0 %v1591
  %1653 = vmatprep.subr.mxu0 %v1598
  %1654 = vmatpush1.msra.mxu0 %v1597
  %1655 = vmatprep.subr.mxu0 %v1604
  %1656 = vmatpush1.msra.mxu0 %v1603
  %1657 = vmatprep.subr.mxu0 %v1610
  %1658 = vmatpush1.msra.mxu0 %v1609
  %1659 = vmatprep.subr.mxu0 %v1616
  %1660 = vmatpush1.msra.mxu0 %v1615
  %1661 = vmatprep.subr.mxu0 %v1622
  %1662 = vmatpush1.msra.mxu0 %v1621
  %1663 = vmatprep.subr.mxu0 %v1628
  %1664 = vmatpush1.msra.mxu0 %v1627
  %1665 = vmatprep.subr.mxu0 0.0
  %1666 = vmatpush1.msra.mxu0 0.0
  %1667 = vmatprep.subr.mxu0 0.0
  %1668 = vmatpush1.msra.mxu0 0.0
  %1669 = vmatprep.subr.mxu0 0.0
  %1670 = vmatpush1.msra.mxu0 0.0
  %1671 = vmatprep.subr.mxu0 0.0
  %1672 = vmatpush1.msra.mxu0 0.0
  %1673 = vmatprep.subr.mxu0 0.0
  %1674 = vmatpush1.msra.mxu0 0.0
  %1675 = vmatprep.subr.mxu0 0.0
  %1676 = vmatpush1.msra.mxu0 0.0
  %1677 = vmatprep.subr.mxu0 0.0
  %1678 = vmatpush1.msra.mxu0 0.0
  %1679 = vmatprep.subr.mxu0 0.0
  %1680 = vmatpush1.msra.mxu0 0.0
  %1681 = vmatprep.subr.mxu0 0.0
  %1682 = vmatpush1.msra.mxu0 0.0
  %1683 = vmatprep.subr.mxu0 0.0
  %1684 = vmatpush1.msra.mxu0 0.0
  %1685 = vmatprep.subr.mxu0 0.0
  %1686 = vmatpush1.msra.mxu0 0.0
  %1687 = vmatprep.subr.mxu0 0.0
  %1688 = vmatpush1.msra.mxu0 0.0
  %1689 = vmatprep.subr.mxu0 0.0
  %1690 = vmatpush1.msra.mxu0 0.0
  %1691 = vmatprep.subr.mxu0 0.0
  %1692 = vmatpush1.msra.mxu0 0.0
  %1693 = vmatprep.subr.mxu0 0.0
  %1694 = vmatpush1.msra.mxu0 0.0
  %1695 = vmatprep.subr.mxu0 0.0
  %1696 = vmatpush1.msra.mxu0 0.0
  %1697 = vmatprep.mubr.f32.mxu0 0.0
  %1698 = vmatmul.mubr.f32.gmra.mrb[0].mxu0 %v1536
  %v1699 = vpop.f32.mrb[0].mxu0
  %v1700 = vadd.f32 0.0, %v1699
  %v1701 = vpop.f32.mrb[0].mxu0
  %v1702 = vadd.f32 0.0, %v1701
  %1703 = vdwg.mxu0
  %1704 = vmatprep.subr.mxu0 %v1540
  %1705 = vmatpush1.msra.mxu0 %v1539
  %1706 = vmatprep.subr.mxu0 %v1546
  %1707 = vmatpush1.msra.mxu0 %v1545
  %1708 = vmatprep.subr.mxu0 %v1552
  %1709 = vmatpush1.msra.mxu0 %v1551
  %1710 = vmatprep.subr.mxu0 %v1558
  %1711 = vmatpush1.msra.mxu0 %v1557
  %1712 = vmatprep.subr.mxu0 %v1564
  %1713 = vmatpush1.msra.mxu0 %v1563
  %1714 = vmatprep.subr.mxu0 %v1570
  %1715 = vmatpush1.msra.mxu0 %v1569
  %1716 = vmatprep.subr.mxu0 %v1576
  %1717 = vmatpush1.msra.mxu0 %v1575
  %1718 = vmatprep.subr.mxu0 %v1582
  %1719 = vmatpush1.msra.mxu0 %v1581
  %1720 = vmatprep.subr.mxu0 %v1588
  %1721 = vmatpush1.msra.mxu0 %v1587
  %1722 = vmatprep.subr.mxu0 %v1594
  %1723 = vmatpush1.msra.mxu0 %v1593
  %1724 = vmatprep.subr.mxu0 %v1600
  %1725 = vmatpush1.msra.mxu0 %v1599
  %1726 = vmatprep.subr.mxu0 %v1606
  %1727 = vmatpush1.msra.mxu0 %v1605
  %1728 = vmatprep.subr.mxu0 %v1612
  %1729 = vmatpush1.msra.mxu0 %v1611
  %1730 = vmatprep.subr.mxu0 %v1618
  %1731 = vmatpush1.msra.mxu0 %v1617
  %1732 = vmatprep.subr.mxu0 %v1624
  %1733 = vmatpush1.msra.mxu0 %v1623
  %1734 = vmatprep.subr.mxu0 %v1630
  %1735 = vmatpush1.msra.mxu0 %v1629
  %1736 = vmatprep.subr.mxu0 0.0
  %1737 = vmatpush1.msra.mxu0 0.0
  %1738 = vmatprep.subr.mxu0 0.0
  %1739 = vmatpush1.msra.mxu0 0.0
  %1740 = vmatprep.subr.mxu0 0.0
  %1741 = vmatpush1.msra.mxu0 0.0
  %1742 = vmatprep.subr.mxu0 0.0
  %1743 = vmatpush1.msra.mxu0 0.0
  %1744 = vmatprep.subr.mxu0 0.0
  %1745 = vmatpush1.msra.mxu0 0.0
  %1746 = vmatprep.subr.mxu0 0.0
  %1747 = vmatpush1.msra.mxu0 0.0
  %1748 = vmatprep.subr.mxu0 0.0
  %1749 = vmatpush1.msra.mxu0 0.0
  %1750 = vmatprep.subr.mxu0 0.0
  %1751 = vmatpush1.msra.mxu0 0.0
  %1752 = vmatprep.subr.mxu0 0.0
  %1753 = vmatpush1.msra.mxu0 0.0
  %1754 = vmatprep.subr.mxu0 0.0
  %1755 = vmatpush1.msra.mxu0 0.0
  %1756 = vmatprep.subr.mxu0 0.0
  %1757 = vmatpush1.msra.mxu0 0.0
  %1758 = vmatprep.subr.mxu0 0.0
  %1759 = vmatpush1.msra.mxu0 0.0
  %1760 = vmatprep.subr.mxu0 0.0
  %1761 = vmatpush1.msra.mxu0 0.0
  %1762 = vmatprep.subr.mxu0 0.0
  %1763 = vmatpush1.msra.mxu0 0.0
  %1764 = vmatprep.subr.mxu0 0.0
  %1765 = vmatpush1.msra.mxu0 0.0
  %1766 = vmatprep.subr.mxu0 0.0
  %1767 = vmatpush1.msra.mxu0 0.0
  %1768 = vmatprep.mubr.f32.mxu0 0.0
  %1769 = vmatmul.mubr.f32.gmra.mrb[0].mxu0 %v1536
  %v1770 = vpop.f32.mrb[0].mxu0
  %v1771 = vadd.f32 0.0, %v1770
  %v1772 = vpop.f32.mrb[0].mxu0
  %v1773 = vadd.f32 0.0, %v1772
  %1774 = vdwg.mxu0
  %1775 = vmatprep.subr.mxu0 %v1542
  %1776 = vmatpush1.msra.mxu0 %v1541
  %1777 = vmatprep.subr.mxu0 %v1548
  %1778 = vmatpush1.msra.mxu0 %v1547
  %1779 = vmatprep.subr.mxu0 %v1554
  %1780 = vmatpush1.msra.mxu0 %v1553
  %1781 = vmatprep.subr.mxu0 %v1560
  %1782 = vmatpush1.msra.mxu0 %v1559
  %1783 = vmatprep.subr.mxu0 %v1566
  %1784 = vmatpush1.msra.mxu0 %v1565
  %1785 = vmatprep.subr.mxu0 %v1572
  %1786 = vmatpush1.msra.mxu0 %v1571
  %1787 = vmatprep.subr.mxu0 %v1578
  %1788 = vmatpush1.msra.mxu0 %v1577
  %1789 = vmatprep.subr.mxu0 %v1584
  %1790 = vmatpush1.msra.mxu0 %v1583
  %1791 = vmatprep.subr.mxu0 %v1590
  %1792 = vmatpush1.msra.mxu0 %v1589
  %1793 = vmatprep.subr.mxu0 %v1596
  %1794 = vmatpush1.msra.mxu0 %v1595
  %1795 = vmatprep.subr.mxu0 %v1602
  %1796 = vmatpush1.msra.mxu0 %v1601
  %1797 = vmatprep.subr.mxu0 %v1608
  %1798 = vmatpush1.msra.mxu0 %v1607
  %1799 = vmatprep.subr.mxu0 %v1614
  %1800 = vmatpush1.msra.mxu0 %v1613
  %1801 = vmatprep.subr.mxu0 %v1620
  %1802 = vmatpush1.msra.mxu0 %v1619
  %1803 = vmatprep.subr.mxu0 %v1626
  %1804 = vmatpush1.msra.mxu0 %v1625
  %1805 = vmatprep.subr.mxu0 %v1632
  %1806 = vmatpush1.msra.mxu0 %v1631
  %1807 = vmatprep.subr.mxu0 0.0
  %1808 = vmatpush1.msra.mxu0 0.0
  %1809 = vmatprep.subr.mxu0 0.0
  %1810 = vmatpush1.msra.mxu0 0.0
  %1811 = vmatprep.subr.mxu0 0.0
  %1812 = vmatpush1.msra.mxu0 0.0
  %1813 = vmatprep.subr.mxu0 0.0
  %1814 = vmatpush1.msra.mxu0 0.0
  %1815 = vmatprep.subr.mxu0 0.0
  %1816 = vmatpush1.msra.mxu0 0.0
  %1817 = vmatprep.subr.mxu0 0.0
  %1818 = vmatpush1.msra.mxu0 0.0
  %1819 = vmatprep.subr.mxu0 0.0
  %1820 = vmatpush1.msra.mxu0 0.0
  %1821 = vmatprep.subr.mxu0 0.0
  %1822 = vmatpush1.msra.mxu0 0.0
  %1823 = vmatprep.subr.mxu0 0.0
  %1824 = vmatpush1.msra.mxu0 0.0
  %1825 = vmatprep.subr.mxu0 0.0
  %1826 = vmatpush1.msra.mxu0 0.0
  %1827 = vmatprep.subr.mxu0 0.0
  %1828 = vmatpush1.msra.mxu0 0.0
  %1829 = vmatprep.subr.mxu0 0.0
  %1830 = vmatpush1.msra.mxu0 0.0
  %1831 = vmatprep.subr.mxu0 0.0
  %1832 = vmatpush1.msra.mxu0 0.0
  %1833 = vmatprep.subr.mxu0 0.0
  %1834 = vmatpush1.msra.mxu0 0.0
  %1835 = vmatprep.subr.mxu0 0.0
  %1836 = vmatpush1.msra.mxu0 0.0
  %1837 = vmatprep.subr.mxu0 0.0
  %1838 = vmatpush1.msra.mxu0 0.0
  %1839 = vmatprep.mubr.f32.mxu0 0.0
  %1840 = vmatmul.mubr.f32.gmra.mrb[0].mxu0 %v1536
  %v1841 = vpop.f32.mrb[0].mxu0
  %v1842 = vadd.f32 0.0, %v1841
  %v1843 = vpop.f32.mrb[0].mxu0
  %v1844 = vadd.f32 0.0, %v1843
  %1845 = vdwg.mxu0
  %v1846 = vld [vmem:[%s6] sm:$0xff]
  %v1847 = vld [vmem:[%s6 + $0x8] sm:$0xff]
  %v1848 = vld [vmem:[%s6 + $0x10] sm:$0xff]
  %v1849 = vld [vmem:[%s6 + $0x18] sm:$0xff]
  %v1850 = vld [vmem:[%s6 + $0x20] sm:$0xff]
  %v1851 = vld [vmem:[%s6 + $0x28] sm:$0xff]
  %v1852 = vld [vmem:[%s6 + $0x30] sm:$0xff]
  %v1853 = vld [vmem:[%s6 + $0x38] sm:$0xff]
  %v1854 = vld [vmem:[%s6 + $0x40] sm:$0xff]
  %v1855 = vld [vmem:[%s6 + $0x48] sm:$0xff]
  %v1856 = vld [vmem:[%s6 + $0x50] sm:$0xff]
  %v1857 = vld [vmem:[%s6 + $0x58] sm:$0xff]
  %v1858 = vld [vmem:[%s6 + $0x60] sm:$0xff]
  %v1859 = vld [vmem:[%s6 + $0x68] sm:$0xff]
  %v1860 = vld [vmem:[%s6 + $0x70] sm:$0xff]
  %v1861 = vld [vmem:[%s6 + $0x78] sm:$0xff]
  %v1862 = vld [vmem:[%s6 + $0x80] sm:$0xff]
  %v1863 = vld [vmem:[%s6 + $0x88] sm:$0xff]
  %v1864 = vld [vmem:[%s6 + $0x90] sm:$0xff]
  %v1865 = vld [vmem:[%s6 + $0x98] sm:$0xff]
  %v1866 = vld [vmem:[%s6 + $0xa0] sm:$0xff]
  %v1867 = vld [vmem:[%s6 + $0xa8] sm:$0xff]
  %v1868 = vld [vmem:[%s6 + $0xb0] sm:$0xff]
  %v1869 = vld [vmem:[%s6 + $0xb8] sm:$0xff]
  %v1870 = vld [vmem:[%s6 + $0xc0] sm:$0xff]
  %v1871 = vld [vmem:[%s6 + $0xc8] sm:$0xff]
  %v1872 = vld [vmem:[%s6 + $0xd0] sm:$0xff]
  %v1873 = vld [vmem:[%s6 + $0xd8] sm:$0xff]
  %v1874 = vld [vmem:[%s6 + $0xe0] sm:$0xff]
  %v1875 = vld [vmem:[%s6 + $0xe8] sm:$0xff]
  %v1876 = vld [vmem:[%s6 + $0xf0] sm:$0xff]
  %v1877 = vld [vmem:[%s6 + $0xf8] sm:$0xff]
  %v1878 = vld [vmem:[%s6 + $0x100] sm:$0xff]
  %v1879 = vld [vmem:[%s6 + $0x108] sm:$0xff]
  %v1880 = vld [vmem:[%s6 + $0x110] sm:$0xff]
  %v1881 = vld [vmem:[%s6 + $0x118] sm:$0xff]
  %v1882 = vld [vmem:[%s6 + $0x120] sm:$0xff]
  %v1883 = vld [vmem:[%s6 + $0x128] sm:$0xff]
  %v1884 = vld [vmem:[%s6 + $0x130] sm:$0xff]
  %v1885 = vld [vmem:[%s6 + $0x138] sm:$0xff]
  %v1886 = vld [vmem:[%s6 + $0x140] sm:$0xff]
  %v1887 = vld [vmem:[%s6 + $0x148] sm:$0xff]
  %v1888 = vld [vmem:[%s6 + $0x150] sm:$0xff]
  %v1889 = vld [vmem:[%s6 + $0x158] sm:$0xff]
  %v1890 = vld [vmem:[%s6 + $0x160] sm:$0xff]
  %v1891 = vld [vmem:[%s6 + $0x168] sm:$0xff]
  %v1892 = vld [vmem:[%s6 + $0x170] sm:$0xff]
  %v1893 = vld [vmem:[%s6 + $0x178] sm:$0xff]
  %1894 = vmatprep.subr.mxu0 %v1847
  %1895 = vmatpush1.msra.mxu0 %v1846
  %1896 = vmatprep.subr.mxu0 %v1850
  %1897 = vmatpush1.msra.mxu0 %v1849
  %1898 = vmatprep.subr.mxu0 %v1853
  %1899 = vmatpush1.msra.mxu0 %v1852
  %1900 = vmatprep.subr.mxu0 %v1856
  %1901 = vmatpush1.msra.mxu0 %v1855
  %1902 = vmatprep.subr.mxu0 %v1859
  %1903 = vmatpush1.msra.mxu0 %v1858
  %1904 = vmatprep.subr.mxu0 %v1862
  %1905 = vmatpush1.msra.mxu0 %v1861
  %1906 = vmatprep.subr.mxu0 %v1865
  %1907 = vmatpush1.msra.mxu0 %v1864
  %1908 = vmatprep.subr.mxu0 %v1868
  %1909 = vmatpush1.msra.mxu0 %v1867
  %1910 = vmatprep.subr.mxu0 %v1871
  %1911 = vmatpush1.msra.mxu0 %v1870
  %1912 = vmatprep.subr.mxu0 %v1874
  %1913 = vmatpush1.msra.mxu0 %v1873
  %1914 = vmatprep.subr.mxu0 %v1877
  %1915 = vmatpush1.msra.mxu0 %v1876
  %1916 = vmatprep.subr.mxu0 %v1880
  %1917 = vmatpush1.msra.mxu0 %v1879
  %1918 = vmatprep.subr.mxu0 %v1883
  %1919 = vmatpush1.msra.mxu0 %v1882
  %1920 = vmatprep.subr.mxu0 %v1886
  %1921 = vmatpush1.msra.mxu0 %v1885
  %1922 = vmatprep.subr.mxu0 %v1889
  %1923 = vmatpush1.msra.mxu0 %v1888
  %1924 = vmatprep.subr.mxu0 %v1892
  %1925 = vmatpush1.msra.mxu0 %v1891
  %1926 = vmatprep.subr.mxu0 0.0
  %1927 = vmatpush1.msra.mxu0 0.0
  %1928 = vmatprep.subr.mxu0 0.0
  %1929 = vmatpush1.msra.mxu0 0.0
  %1930 = vmatprep.subr.mxu0 0.0
  %1931 = vmatpush1.msra.mxu0 0.0
  %1932 = vmatprep.subr.mxu0 0.0
  %1933 = vmatpush1.msra.mxu0 0.0
  %1934 = vmatprep.subr.mxu0 0.0
  %1935 = vmatpush1.msra.mxu0 0.0
  %1936 = vmatprep.subr.mxu0 0.0
  %1937 = vmatpush1.msra.mxu0 0.0
  %1938 = vmatprep.subr.mxu0 0.0
  %1939 = vmatpush1.msra.mxu0 0.0
  %1940 = vmatprep.subr.mxu0 0.0
  %1941 = vmatpush1.msra.mxu0 0.0
  %1942 = vmatprep.subr.mxu0 0.0
  %1943 = vmatpush1.msra.mxu0 0.0
  %1944 = vmatprep.subr.mxu0 0.0
  %1945 = vmatpush1.msra.mxu0 0.0
  %1946 = vmatprep.subr.mxu0 0.0
  %1947 = vmatpush1.msra.mxu0 0.0
  %1948 = vmatprep.subr.mxu0 0.0
  %1949 = vmatpush1.msra.mxu0 0.0
  %1950 = vmatprep.subr.mxu0 0.0
  %1951 = vmatpush1.msra.mxu0 0.0
  %1952 = vmatprep.subr.mxu0 0.0
  %1953 = vmatpush1.msra.mxu0 0.0
  %1954 = vmatprep.subr.mxu0 0.0
  %1955 = vmatpush1.msra.mxu0 0.0
  %1956 = vmatprep.subr.mxu0 0.0
  %1957 = vmatpush1.msra.mxu0 0.0
  %1958 = vmatprep.mubr.f32.mxu0 0.0
  %1959 = vmatmul.mubr.f32.gmra.mrb[0].mxu0 %v1510
  %v1960 = vpop.f32.mrb[0].mxu0
  %v1961 = vadd.f32 0.0, %v1960
  %v1962 = vpop.f32.mrb[0].mxu0
  %v1963 = vadd.f32 0.0, %v1962
  %1964 = vdwg.mxu0
  %1965 = vmatprep.subr.mxu0 0.0
  %1966 = vmatpush1.msra.mxu0 %v1848
  %1967 = vmatprep.subr.mxu0 0.0
  %1968 = vmatpush1.msra.mxu0 %v1851
  %1969 = vmatprep.subr.mxu0 0.0
  %1970 = vmatpush1.msra.mxu0 %v1854
  %1971 = vmatprep.subr.mxu0 0.0
  %1972 = vmatpush1.msra.mxu0 %v1857
  %1973 = vmatprep.subr.mxu0 0.0
  %1974 = vmatpush1.msra.mxu0 %v1860
  %1975 = vmatprep.subr.mxu0 0.0
  %1976 = vmatpush1.msra.mxu0 %v1863
  %1977 = vmatprep.subr.mxu0 0.0
  %1978 = vmatpush1.msra.mxu0 %v1866
  %1979 = vmatprep.subr.mxu0 0.0
  %1980 = vmatpush1.msra.mxu0 %v1869
  %1981 = vmatprep.subr.mxu0 0.0
  %1982 = vmatpush1.msra.mxu0 %v1872
  %1983 = vmatprep.subr.mxu0 0.0
  %1984 = vmatpush1.msra.mxu0 %v1875
  %1985 = vmatprep.subr.mxu0 0.0
  %1986 = vmatpush1.msra.mxu0 %v1878
  %1987 = vmatprep.subr.mxu0 0.0
  %1988 = vmatpush1.msra.mxu0 %v1881
  %1989 = vmatprep.subr.mxu0 0.0
  %1990 = vmatpush1.msra.mxu0 %v1884
  %1991 = vmatprep.subr.mxu0 0.0
  %1992 = vmatpush1.msra.mxu0 %v1887
  %1993 = vmatprep.subr.mxu0 0.0
  %1994 = vmatpush1.msra.mxu0 %v1890
  %1995 = vmatprep.subr.mxu0 0.0
  %1996 = vmatpush1.msra.mxu0 %v1893
  %1997 = vmatprep.subr.mxu0 0.0
  %1998 = vmatpush1.msra.mxu0 0.0
  %1999 = vmatprep.subr.mxu0 0.0
  %2000 = vmatpush1.msra.mxu0 0.0
  %2001 = vmatprep.subr.mxu0 0.0
  %2002 = vmatpush1.msra.mxu0 0.0
  %2003 = vmatprep.subr.mxu0 0.0
  %2004 = vmatpush1.msra.mxu0 0.0
  %2005 = vmatprep.subr.mxu0 0.0
  %2006 = vmatpush1.msra.mxu0 0.0
  %2007 = vmatprep.subr.mxu0 0.0
  %2008 = vmatpush1.msra.mxu0 0.0
  %2009 = vmatprep.subr.mxu0 0.0
  %2010 = vmatpush1.msra.mxu0 0.0
  %2011 = vmatprep.subr.mxu0 0.0
  %2012 = vmatpush1.msra.mxu0 0.0
  %2013 = vmatprep.subr.mxu0 0.0
  %2014 = vmatpush1.msra.mxu0 0.0
  %2015 = vmatprep.subr.mxu0 0.0
  %2016 = vmatpush1.msra.mxu0 0.0
  %2017 = vmatprep.subr.mxu0 0.0
  %2018 = vmatpush1.msra.mxu0 0.0
  %2019 = vmatprep.subr.mxu0 0.0
  %2020 = vmatpush1.msra.mxu0 0.0
  %2021 = vmatprep.subr.mxu0 0.0
  %2022 = vmatpush1.msra.mxu0 0.0
  %2023 = vmatprep.subr.mxu0 0.0
  %2024 = vmatpush1.msra.mxu0 0.0
  %2025 = vmatprep.subr.mxu0 0.0
  %2026 = vmatpush1.msra.mxu0 0.0
  %2027 = vmatprep.subr.mxu0 0.0
  %2028 = vmatpush1.msra.mxu0 0.0
  %2029 = vmatprep.mubr.f32.mxu0 0.0
  %2030 = vmatmul.mubr.f32.gmra.mrb[0].mxu0 %v1510
  %v2031 = vpop.f32.mrb[0].mxu0
  %v2032 = vadd.f32 0.0, %v2031
  %v2033 = vpop.f32.mrb[0].mxu0
  %2034 = vdwg.mxu0
  %v2035 = vadd.f32 %v1773, %v1961
  %v2036 = vadd.f32 %v1842, %v1963
  %v2037 = vadd.f32 %v2035, %v211
  %v2038 = vadd.f32 %v2036, %v215
  %v2039 = vmul.f32 %v2037, 0.5
  %v2040 = vmul.f32 %v2038, 0.5
  %v2041 = vtanh.pop %v2039
  %v2042 = vtanh.pop %v2040
  %v2043 = vmul.f32 %v2041, 0.5
  %v2044 = vmul.f32 %v2042, 0.5
  %v2045 = vadd.f32 %v2043, 0.5
  %v2046 = vadd.f32 %v2044, 0.5
  %v2047 = vadd.f32 %v1844, %v223
  %v2048 = vadd.f32 %v2032, %v230
  %v2049 = vmul.f32 %v2045, %v2048
  %v2050 = vadd.f32 %v2047, %v2049
  %v2051 = vtanh.pop %v2050
  %v2052 = vsub.f32 1.0, %v2046
  %v2053 = vmul.f32 %v2052, %v2051
  %v2054 = vmul.f32 %v2046, %v1510
  %v2055 = vadd.f32 %v2053, %v2054
  %s2056 = scalar_lea.vmem [#allocation3], 16
  %2057 = vst [vmem:[%s2056] sm:$0xff] %v2055
  %s2058 = smul.u32 3, 3
  %s2059 = smul.addr %s2058, 8
  %s2060 = scalar_lea.vmem [#allocation2], %s2059
  %v2061 = vld [vmem:[%s2060] sm:$0xff]
  %v2062 = vld [vmem:[%s2060 + $0x8] sm:$0xff]
  %v2063 = vld [vmem:[%s2060 + $0x10] sm:$0xff]
  %v2064 = vadd.f32 %v2061, %v1700
  %v2065 = vmul.f32 %v2064, 0.5
  %v2066 = vtanh.pop %v2065
  %v2067 = vmul.f32 %v2066, 0.5
  %v2068 = vadd.f32 %v2067, 0.5
  %v2069 = vadd.f32 %v2062, %v1702
  %v2070 = vmul.f32 %v2069, 0.5
  %v2071 = vtanh.pop %v2070
  %v2072 = vmul.f32 %v2071, 0.5
  %v2073 = vadd.f32 %v2072, 0.5
  %v2074 = vadd.f32 %v1771, %v204
  %v2075 = vmul.f32 %v2068, %v2074
  %v2076 = vadd.f32 %v2063, %v2075
  %v2077 = vtanh.pop %v2076
  %v2078 = vsub.f32 1.0, %v2073
  %v2079 = vmul.f32 %v2078, %v2077
  %v2080 = vmul.f32 %v2073, %v1536
  %v2081 = vadd.f32 %v2079, %v2080
  %v2082 = vld [vmem:[%s5] sm:$0xff]
  %v2083 = vld [vmem:[%s5 + $0x8] sm:$0xff]
  %v2084 = vld [vmem:[%s5 + $0x10] sm:$0xff]
  %v2085 = vld [vmem:[%s5 + $0x18] sm:$0xff]
  %v2086 = vld [vmem:[%s5 + $0x20] sm:$0xff]
  %v2087 = vld [vmem:[%s5 + $0x28] sm:$0xff]
  %v2088 = vld [vmem:[%s5 + $0x30] sm:$0xff]
  %v2089 = vld [vmem:[%s5 + $0x38] sm:$0xff]
  %v2090 = vld [vmem:[%s5 + $0x40] sm:$0xff]
  %v2091 = vld [vmem:[%s5 + $0x48] sm:$0xff]
  %v2092 = vld [vmem:[%s5 + $0x50] sm:$0xff]
  %v2093 = vld [vmem:[%s5 + $0x58] sm:$0xff]
  %v2094 = vld [vmem:[%s5 + $0x60] sm:$0xff]
  %v2095 = vld [vmem:[%s5 + $0x68] sm:$0xff]
  %v2096 = vld [vmem:[%s5 + $0x70] sm:$0xff]
  %v2097 = vld [vmem:[%s5 + $0x78] sm:$0xff]
  %v2098 = vld [vmem:[%s5 + $0x80] sm:$0xff]
  %v2099 = vld [vmem:[%s5 + $0x88] sm:$0xff]
  %v2100 = vld [vmem:[%s5 + $0x90] sm:$0xff]
  %v2101 = vld [vmem:[%s5 + $0x98] sm:$0xff]
  %v2102 = vld [vmem:[%s5 + $0xa0] sm:$0xff]
  %v2103 = vld [vmem:[%s5 + $0xa8] sm:$0xff]
  %v2104 = vld [vmem:[%s5 + $0xb0] sm:$0xff]
  %v2105 = vld [vmem:[%s5 + $0xb8] sm:$0xff]
  %v2106 = vld [vmem:[%s5 + $0xc0] sm:$0xff]
  %v2107 = vld [vmem:[%s5 + $0xc8] sm:$0xff]
  %v2108 = vld [vmem:[%s5 + $0xd0] sm:$0xff]
  %v2109 = vld [vmem:[%s5 + $0xd8] sm:$0xff]
  %v2110 = vld [vmem:[%s5 + $0xe0] sm:$0xff]
  %v2111 = vld [vmem:[%s5 + $0xe8] sm:$0xff]
  %v2112 = vld [vmem:[%s5 + $0xf0] sm:$0xff]
  %v2113 = vld [vmem:[%s5 + $0xf8] sm:$0xff]
  %v2114 = vld [vmem:[%s5 + $0x100] sm:$0xff]
  %v2115 = vld [vmem:[%s5 + $0x108] sm:$0xff]
  %v2116 = vld [vmem:[%s5 + $0x110] sm:$0xff]
  %v2117 = vld [vmem:[%s5 + $0x118] sm:$0xff]
  %v2118 = vld [vmem:[%s5 + $0x120] sm:$0xff]
  %v2119 = vld [vmem:[%s5 + $0x128] sm:$0xff]
  %v2120 = vld [vmem:[%s5 + $0x130] sm:$0xff]
  %v2121 = vld [vmem:[%s5 + $0x138] sm:$0xff]
  %v2122 = vld [vmem:[%s5 + $0x140] sm:$0xff]
  %v2123 = vld [vmem:[%s5 + $0x148] sm:$0xff]
  %v2124 = vld [vmem:[%s5 + $0x150] sm:$0xff]
  %v2125 = vld [vmem:[%s5 + $0x158] sm:$0xff]
  %v2126 = vld [vmem:[%s5 + $0x160] sm:$0xff]
  %v2127 = vld [vmem:[%s5 + $0x168] sm:$0xff]
  %v2128 = vld [vmem:[%s5 + $0x170] sm:$0xff]
  %v2129 = vld [vmem:[%s5 + $0x178] sm:$0xff]
  %v2130 = vld [vmem:[%s5 + $0x180] sm:$0xff]
  %v2131 = vld [vmem:[%s5 + $0x188] sm:$0xff]
  %v2132 = vld [vmem:[%s5 + $0x190] sm:$0xff]
  %v2133 = vld [vmem:[%s5 + $0x198] sm:$0xff]
  %v2134 = vld [vmem:[%s5 + $0x1a0] sm:$0xff]
  %v2135 = vld [vmem:[%s5 + $0x1a8] sm:$0xff]
  %v2136 = vld [vmem:[%s5 + $0x1b0] sm:$0xff]
  %v2137 = vld [vmem:[%s5 + $0x1b8] sm:$0xff]
  %v2138 = vld [vmem:[%s5 + $0x1c0] sm:$0xff]
  %v2139 = vld [vmem:[%s5 + $0x1c8] sm:$0xff]
  %v2140 = vld [vmem:[%s5 + $0x1d0] sm:$0xff]
  %v2141 = vld [vmem:[%s5 + $0x1d8] sm:$0xff]
  %v2142 = vld [vmem:[%s5 + $0x1e0] sm:$0xff]
  %v2143 = vld [vmem:[%s5 + $0x1e8] sm:$0xff]
  %v2144 = vld [vmem:[%s5 + $0x1f0] sm:$0xff]
  %v2145 = vld [vmem:[%s5 + $0x1f8] sm:$0xff]
  %v2146 = vld [vmem:[%s5 + $0x200] sm:$0xff]
  %v2147 = vld [vmem:[%s5 + $0x208] sm:$0xff]
  %v2148 = vld [vmem:[%s5 + $0x210] sm:$0xff]
  %v2149 = vld [vmem:[%s5 + $0x218] sm:$0xff]
  %v2150 = vld [vmem:[%s5 + $0x220] sm:$0xff]
  %v2151 = vld [vmem:[%s5 + $0x228] sm:$0xff]
  %v2152 = vld [vmem:[%s5 + $0x230] sm:$0xff]
  %v2153 = vld [vmem:[%s5 + $0x238] sm:$0xff]
  %v2154 = vld [vmem:[%s5 + $0x240] sm:$0xff]
  %v2155 = vld [vmem:[%s5 + $0x248] sm:$0xff]
  %v2156 = vld [vmem:[%s5 + $0x250] sm:$0xff]
  %v2157 = vld [vmem:[%s5 + $0x258] sm:$0xff]
  %v2158 = vld [vmem:[%s5 + $0x260] sm:$0xff]
  %v2159 = vld [vmem:[%s5 + $0x268] sm:$0xff]
  %v2160 = vld [vmem:[%s5 + $0x270] sm:$0xff]
  %v2161 = vld [vmem:[%s5 + $0x278] sm:$0xff]
  %v2162 = vld [vmem:[%s5 + $0x280] sm:$0xff]
  %v2163 = vld [vmem:[%s5 + $0x288] sm:$0xff]
  %v2164 = vld [vmem:[%s5 + $0x290] sm:$0xff]
  %v2165 = vld [vmem:[%s5 + $0x298] sm:$0xff]
  %v2166 = vld [vmem:[%s5 + $0x2a0] sm:$0xff]
  %v2167 = vld [vmem:[%s5 + $0x2a8] sm:$0xff]
  %v2168 = vld [vmem:[%s5 + $0x2b0] sm:$0xff]
  %v2169 = vld [vmem:[%s5 + $0x2b8] sm:$0xff]
  %v2170 = vld [vmem:[%s5 + $0x2c0] sm:$0xff]
  %v2171 = vld [vmem:[%s5 + $0x2c8] sm:$0xff]
  %v2172 = vld [vmem:[%s5 + $0x2d0] sm:$0xff]
  %v2173 = vld [vmem:[%s5 + $0x2d8] sm:$0xff]
  %v2174 = vld [vmem:[%s5 + $0x2e0] sm:$0xff]
  %v2175 = vld [vmem:[%s5 + $0x2e8] sm:$0xff]
  %v2176 = vld [vmem:[%s5 + $0x2f0] sm:$0xff]
  %v2177 = vld [vmem:[%s5 + $0x2f8] sm:$0xff]
  %2178 = vmatprep.subr.mxu0 %v2083
  %2179 = vmatpush1.msra.mxu0 %v2082
  %2180 = vmatprep.subr.mxu0 %v2089
  %2181 = vmatpush1.msra.mxu0 %v2088
  %2182 = vmatprep.subr.mxu0 %v2095
  %2183 = vmatpush1.msra.mxu0 %v2094
  %2184 = vmatprep.subr.mxu0 %v2101
  %2185 = vmatpush1.msra.mxu0 %v2100
  %2186 = vmatprep.subr.mxu0 %v2107
  %2187 = vmatpush1.msra.mxu0 %v2106
  %2188 = vmatprep.subr.mxu0 %v2113
  %2189 = vmatpush1.msra.mxu0 %v2112
  %2190 = vmatprep.subr.mxu0 %v2119
  %2191 = vmatpush1.msra.mxu0 %v2118
  %2192 = vmatprep.subr.mxu0 %v2125
  %2193 = vmatpush1.msra.mxu0 %v2124
  %2194 = vmatprep.subr.mxu0 %v2131
  %2195 = vmatpush1.msra.mxu0 %v2130
  %2196 = vmatprep.subr.mxu0 %v2137
  %2197 = vmatpush1.msra.mxu0 %v2136
  %2198 = vmatprep.subr.mxu0 %v2143
  %2199 = vmatpush1.msra.mxu0 %v2142
  %2200 = vmatprep.subr.mxu0 %v2149
  %2201 = vmatpush1.msra.mxu0 %v2148
  %2202 = vmatprep.subr.mxu0 %v2155
  %2203 = vmatpush1.msra.mxu0 %v2154
  %2204 = vmatprep.subr.mxu0 %v2161
  %2205 = vmatpush1.msra.mxu0 %v2160
  %2206 = vmatprep.subr.mxu0 %v2167
  %2207 = vmatpush1.msra.mxu0 %v2166
  %2208 = vmatprep.subr.mxu0 %v2173
  %2209 = vmatpush1.msra.mxu0 %v2172
  %2210 = vmatprep.subr.mxu0 0.0
  %2211 = vmatpush1.msra.mxu0 0.0
  %2212 = vmatprep.subr.mxu0 0.0
  %2213 = vmatpush1.msra.mxu0 0.0
  %2214 = vmatprep.subr.mxu0 0.0
  %2215 = vmatpush1.msra.mxu0 0.0
  %2216 = vmatprep.subr.mxu0 0.0
  %2217 = vmatpush1.msra.mxu0 0.0
  %2218 = vmatprep.subr.mxu0 0.0
  %2219 = vmatpush1.msra.mxu0 0.0
  %2220 = vmatprep.subr.mxu0 0.0
  %2221 = vmatpush1.msra.mxu0 0.0
  %2222 = vmatprep.subr.mxu0 0.0
  %2223 = vmatpush1.msra.mxu0 0.0
  %2224 = vmatprep.subr.mxu0 0.0
  %2225 = vmatpush1.msra.mxu0 0.0
  %2226 = vmatprep.subr.mxu0 0.0
  %2227 = vmatpush1.msra.mxu0 0.0
  %2228 = vmatprep.subr.mxu0 0.0
  %2229 = vmatpush1.msra.mxu0 0.0
  %2230 = vmatprep.subr.mxu0 0.0
  %2231 = vmatpush1.msra.mxu0 0.0
  %2232 = vmatprep.subr.mxu0 0.0
  %2233 = vmatpush1.msra.mxu0 0.0
  %2234 = vmatprep.subr.mxu0 0.0
  %2235 = vmatpush1.msra.mxu0 0.0
  %2236 = vmatprep.subr.mxu0 0.0
  %2237 = vmatpush1.msra.mxu0 0.0
  %2238 = vmatprep.subr.mxu0 0.0
  %2239 = vmatpush1.msra.mxu0 0.0
  %2240 = vmatprep.subr.mxu0 0.0
  %2241 = vmatpush1.msra.mxu0 0.0
  %2242 = vmatprep.mubr.f32.mxu0 0.0
  %2243 = vmatmul.mubr.f32.gmra.mrb[0].mxu0 %v2081
  %v2244 = vpop.f32.mrb[0].mxu0
  %v2245 = vadd.f32 0.0, %v2244
  %v2246 = vpop.f32.mrb[0].mxu0
  %v2247 = vadd.f32 0.0, %v2246
  %2248 = vdwg.mxu0
  %2249 = vmatprep.subr.mxu0 %v2085
  %2250 = vmatpush1.msra.mxu0 %v2084
  %2251 = vmatprep.subr.mxu0 %v2091
  %2252 = vmatpush1.msra.mxu0 %v2090
  %2253 = vmatprep.subr.mxu0 %v2097
  %2254 = vmatpush1.msra.mxu0 %v2096
  %2255 = vmatprep.subr.mxu0 %v2103
  %2256 = vmatpush1.msra.mxu0 %v2102
  %2257 = vmatprep.subr.mxu0 %v2109
  %2258 = vmatpush1.msra.mxu0 %v2108
  %2259 = vmatprep.subr.mxu0 %v2115
  %2260 = vmatpush1.msra.mxu0 %v2114
  %2261 = vmatprep.subr.mxu0 %v2121
  %2262 = vmatpush1.msra.mxu0 %v2120
  %2263 = vmatprep.subr.mxu0 %v2127
  %2264 = vmatpush1.msra.mxu0 %v2126
  %2265 = vmatprep.subr.mxu0 %v2133
  %2266 = vmatpush1.msra.mxu0 %v2132
  %2267 = vmatprep.subr.mxu0 %v2139
  %2268 = vmatpush1.msra.mxu0 %v2138
  %2269 = vmatprep.subr.mxu0 %v2145
  %2270 = vmatpush1.msra.mxu0 %v2144
  %2271 = vmatprep.subr.mxu0 %v2151
  %2272 = vmatpush1.msra.mxu0 %v2150
  %2273 = vmatprep.subr.mxu0 %v2157
  %2274 = vmatpush1.msra.mxu0 %v2156
  %2275 = vmatprep.subr.mxu0 %v2163
  %2276 = vmatpush1.msra.mxu0 %v2162
  %2277 = vmatprep.subr.mxu0 %v2169
  %2278 = vmatpush1.msra.mxu0 %v2168
  %2279 = vmatprep.subr.mxu0 %v2175
  %2280 = vmatpush1.msra.mxu0 %v2174
  %2281 = vmatprep.subr.mxu0 0.0
  %2282 = vmatpush1.msra.mxu0 0.0
  %2283 = vmatprep.subr.mxu0 0.0
  %2284 = vmatpush1.msra.mxu0 0.0
  %2285 = vmatprep.subr.mxu0 0.0
  %2286 = vmatpush1.msra.mxu0 0.0
  %2287 = vmatprep.subr.mxu0 0.0
  %2288 = vmatpush1.msra.mxu0 0.0
  %2289 = vmatprep.subr.mxu0 0.0
  %2290 = vmatpush1.msra.mxu0 0.0
  %2291 = vmatprep.subr.mxu0 0.0
  %2292 = vmatpush1.msra.mxu0 0.0
  %2293 = vmatprep.subr.mxu0 0.0
  %2294 = vmatpush1.msra.mxu0 0.0
  %2295 = vmatprep.subr.mxu0 0.0
  %2296 = vmatpush1.msra.mxu0 0.0
  %2297 = vmatprep.subr.mxu0 0.0
  %2298 = vmatpush1.msra.mxu0 0.0
  %2299 = vmatprep.subr.mxu0 0.0
  %2300 = vmatpush1.msra.mxu0 0.0
  %2301 = vmatprep.subr.mxu0 0.0
  %2302 = vmatpush1.msra.mxu0 0.0
  %2303 = vmatprep.subr.mxu0 0.0
  %2304 = vmatpush1.msra.mxu0 0.0
  %2305 = vmatprep.subr.mxu0 0.0
  %2306 = vmatpush1.msra.mxu0 0.0
  %2307 = vmatprep.subr.mxu0 0.0
  %2308 = vmatpush1.msra.mxu0 0.0
  %2309 = vmatprep.subr.mxu0 0.0
  %2310 = vmatpush1.msra.mxu0 0.0
  %2311 = vmatprep.subr.mxu0 0.0
  %2312 = vmatpush1.msra.mxu0 0.0
  %2313 = vmatprep.mubr.f32.mxu0 0.0
  %2314 = vmatmul.mubr.f32.gmra.mrb[0].mxu0 %v2081
  %v2315 = vpop.f32.mrb[0].mxu0
  %v2316 = vadd.f32 0.0, %v2315
  %v2317 = vpop.f32.mrb[0].mxu0
  %v2318 = vadd.f32 0.0, %v2317
  %2319 = vdwg.mxu0
  %2320 = vmatprep.subr.mxu0 %v2087
  %2321 = vmatpush1.msra.mxu0 %v2086
  %2322 = vmatprep.subr.mxu0 %v2093
  %2323 = vmatpush1.msra.mxu0 %v2092
  %2324 = vmatprep.subr.mxu0 %v2099
  %2325 = vmatpush1.msra.mxu0 %v2098
  %2326 = vmatprep.subr.mxu0 %v2105
  %2327 = vmatpush1.msra.mxu0 %v2104
  %2328 = vmatprep.subr.mxu0 %v2111
  %2329 = vmatpush1.msra.mxu0 %v2110
  %2330 = vmatprep.subr.mxu0 %v2117
  %2331 = vmatpush1.msra.mxu0 %v2116
  %2332 = vmatprep.subr.mxu0 %v2123
  %2333 = vmatpush1.msra.mxu0 %v2122
  %2334 = vmatprep.subr.mxu0 %v2129
  %2335 = vmatpush1.msra.mxu0 %v2128
  %2336 = vmatprep.subr.mxu0 %v2135
  %2337 = vmatpush1.msra.mxu0 %v2134
  %2338 = vmatprep.subr.mxu0 %v2141
  %2339 = vmatpush1.msra.mxu0 %v2140
  %2340 = vmatprep.subr.mxu0 %v2147
  %2341 = vmatpush1.msra.mxu0 %v2146
  %2342 = vmatprep.subr.mxu0 %v2153
  %2343 = vmatpush1.msra.mxu0 %v2152
  %2344 = vmatprep.subr.mxu0 %v2159
  %2345 = vmatpush1.msra.mxu0 %v2158
  %2346 = vmatprep.subr.mxu0 %v2165
  %2347 = vmatpush1.msra.mxu0 %v2164
  %2348 = vmatprep.subr.mxu0 %v2171
  %2349 = vmatpush1.msra.mxu0 %v2170
  %2350 = vmatprep.subr.mxu0 %v2177
  %2351 = vmatpush1.msra.mxu0 %v2176
  %2352 = vmatprep.subr.mxu0 0.0
  %2353 = vmatpush1.msra.mxu0 0.0
  %2354 = vmatprep.subr.mxu0 0.0
  %2355 = vmatpush1.msra.mxu0 0.0
  %2356 = vmatprep.subr.mxu0 0.0
  %2357 = vmatpush1.msra.mxu0 0.0
  %2358 = vmatprep.subr.mxu0 0.0
  %2359 = vmatpush1.msra.mxu0 0.0
  %2360 = vmatprep.subr.mxu0 0.0
  %2361 = vmatpush1.msra.mxu0 0.0
  %2362 = vmatprep.subr.mxu0 0.0
  %2363 = vmatpush1.msra.mxu0 0.0
  %2364 = vmatprep.subr.mxu0 0.0
  %2365 = vmatpush1.msra.mxu0 0.0
  %2366 = vmatprep.subr.mxu0 0.0
  %2367 = vmatpush1.msra.mxu0 0.0
  %2368 = vmatprep.subr.mxu0 0.0
  %2369 = vmatpush1.msra.mxu0 0.0
  %2370 = vmatprep.subr.mxu0 0.0
  %2371 = vmatpush1.msra.mxu0 0.0
  %2372 = vmatprep.subr.mxu0 0.0
  %2373 = vmatpush1.msra.mxu0 0.0
  %2374 = vmatprep.subr.mxu0 0.0
  %2375 = vmatpush1.msra.mxu0 0.0
  %2376 = vmatprep.subr.mxu0 0.0
  %2377 = vmatpush1.msra.mxu0 0.0
  %2378 = vmatprep.subr.mxu0 0.0
  %2379 = vmatpush1.msra.mxu0 0.0
  %2380 = vmatprep.subr.mxu0 0.0
  %2381 = vmatpush1.msra.mxu0 0.0
  %2382 = vmatprep.subr.mxu0 0.0
  %2383 = vmatpush1.msra.mxu0 0.0
  %2384 = vmatprep.mubr.f32.mxu0 0.0
  %2385 = vmatmul.mubr.f32.gmra.mrb[0].mxu0 %v2081
  %v2386 = vpop.f32.mrb[0].mxu0
  %v2387 = vadd.f32 0.0, %v2386
  %v2388 = vpop.f32.mrb[0].mxu0
  %v2389 = vadd.f32 0.0, %v2388
  %2390 = vdwg.mxu0
  %v2391 = vld [vmem:[%s6] sm:$0xff]
  %v2392 = vld [vmem:[%s6 + $0x8] sm:$0xff]
  %v2393 = vld [vmem:[%s6 + $0x10] sm:$0xff]
  %v2394 = vld [vmem:[%s6 + $0x18] sm:$0xff]
  %v2395 = vld [vmem:[%s6 + $0x20] sm:$0xff]
  %v2396 = vld [vmem:[%s6 + $0x28] sm:$0xff]
  %v2397 = vld [vmem:[%s6 + $0x30] sm:$0xff]
  %v2398 = vld [vmem:[%s6 + $0x38] sm:$0xff]
  %v2399 = vld [vmem:[%s6 + $0x40] sm:$0xff]
  %v2400 = vld [vmem:[%s6 + $0x48] sm:$0xff]
  %v2401 = vld [vmem:[%s6 + $0x50] sm:$0xff]
  %v2402 = vld [vmem:[%s6 + $0x58] sm:$0xff]
  %v2403 = vld [vmem:[%s6 + $0x60] sm:$0xff]
  %v2404 = vld [vmem:[%s6 + $0x68] sm:$0xff]
  %v2405 = vld [vmem:[%s6 + $0x70] sm:$0xff]
  %v2406 = vld [vmem:[%s6 + $0x78] sm:$0xff]
  %v2407 = vld [vmem:[%s6 + $0x80] sm:$0xff]
  %v2408 = vld [vmem:[%s6 + $0x88] sm:$0xff]
  %v2409 = vld [vmem:[%s6 + $0x90] sm:$0xff]
  %v2410 = vld [vmem:[%s6 + $0x98] sm:$0xff]
  %v2411 = vld [vmem:[%s6 + $0xa0] sm:$0xff]
  %v2412 = vld [vmem:[%s6 + $0xa8] sm:$0xff]
  %v2413 = vld [vmem:[%s6 + $0xb0] sm:$0xff]
  %v2414 = vld [vmem:[%s6 + $0xb8] sm:$0xff]
  %v2415 = vld [vmem:[%s6 + $0xc0] sm:$0xff]
  %v2416 = vld [vmem:[%s6 + $0xc8] sm:$0xff]
  %v2417 = vld [vmem:[%s6 + $0xd0] sm:$0xff]
  %v2418 = vld [vmem:[%s6 + $0xd8] sm:$0xff]
  %v2419 = vld [vmem:[%s6 + $0xe0] sm:$0xff]
  %v2420 = vld [vmem:[%s6 + $0xe8] sm:$0xff]
  %v2421 = vld [vmem:[%s6 + $0xf0] sm:$0xff]
  %v2422 = vld [vmem:[%s6 + $0xf8] sm:$0xff]
  %v2423 = vld [vmem:[%s6 + $0x100] sm:$0xff]
  %v2424 = vld [vmem:[%s6 + $0x108] sm:$0xff]
  %v2425 = vld [vmem:[%s6 + $0x110] sm:$0xff]
  %v2426 = vld [vmem:[%s6 + $0x118] sm:$0xff]
  %v2427 = vld [vmem:[%s6 + $0x120] sm:$0xff]
  %v2428 = vld [vmem:[%s6 + $0x128] sm:$0xff]
  %v2429 = vld [vmem:[%s6 + $0x130] sm:$0xff]
  %v2430 = vld [vmem:[%s6 + $0x138] sm:$0xff]
  %v2431 = vld [vmem:[%s6 + $0x140] sm:$0xff]
  %v2432 = vld [vmem:[%s6 + $0x148] sm:$0xff]
  %v2433 = vld [vmem:[%s6 + $0x150] sm:$0xff]
  %v2434 = vld [vmem:[%s6 + $0x158] sm:$0xff]
  %v2435 = vld [vmem:[%s6 + $0x160] sm:$0xff]
  %v2436 = vld [vmem:[%s6 + $0x168] sm:$0xff]
  %v2437 = vld [vmem:[%s6 + $0x170] sm:$0xff]
  %v2438 = vld [vmem:[%s6 + $0x178] sm:$0xff]
  %2439 = vmatprep.subr.mxu0 %v2392
  %2440 = vmatpush1.msra.mxu0 %v2391
  %2441 = vmatprep.subr.mxu0 %v2395
  %2442 = vmatpush1.msra.mxu0 %v2394
  %2443 = vmatprep.subr.mxu0 %v2398
  %2444 = vmatpush1.msra.mxu0 %v2397
  %2445 = vmatprep.subr.mxu0 %v2401
  %2446 = vmatpush1.msra.mxu0 %v2400
  %2447 = vmatprep.subr.mxu0 %v2404
  %2448 = vmatpush1.msra.mxu0 %v2403
  %2449 = vmatprep.subr.mxu0 %v2407
  %2450 = vmatpush1.msra.mxu0 %v2406
  %2451 = vmatprep.subr.mxu0 %v2410
  %2452 = vmatpush1.msra.mxu0 %v2409
  %2453 = vmatprep.subr.mxu0 %v2413
  %2454 = vmatpush1.msra.mxu0 %v2412
  %2455 = vmatprep.subr.mxu0 %v2416
  %2456 = vmatpush1.msra.mxu0 %v2415
  %2457 = vmatprep.subr.mxu0 %v2419
  %2458 = vmatpush1.msra.mxu0 %v2418
  %2459 = vmatprep.subr.mxu0 %v2422
  %2460 = vmatpush1.msra.mxu0 %v2421
  %2461 = vmatprep.subr.mxu0 %v2425
  %2462 = vmatpush1.msra.mxu0 %v2424
  %2463 = vmatprep.subr.mxu0 %v2428
  %2464 = vmatpush1.msra.mxu0 %v2427
  %2465 = vmatprep.subr.mxu0 %v2431
  %2466 = vmatpush1.msra.mxu0 %v2430
  %2467 = vmatprep.subr.mxu0 %v2434
  %2468 = vmatpush1.msra.mxu0 %v2433
  %2469 = vmatprep.subr.mxu0 %v2437
  %2470 = vmatpush1.msra.mxu0 %v2436
  %2471 = vmatprep.subr.mxu0 0.0
  %2472 = vmatpush1.msra.mxu0 0.0
  %2473 = vmatprep.subr.mxu0 0.0
  %2474 = vmatpush1.msra.mxu0 0.0
  %2475 = vmatprep.subr.mxu0 0.0
  %2476 = vmatpush1.msra.mxu0 0.0
  %2477 = vmatprep.subr.mxu0 0.0
  %2478 = vmatpush1.msra.mxu0 0.0
  %2479 = vmatprep.subr.mxu0 0.0
  %2480 = vmatpush1.msra.mxu0 0.0
  %2481 = vmatprep.subr.mxu0 0.0
  %2482 = vmatpush1.msra.mxu0 0.0
  %2483 = vmatprep.subr.mxu0 0.0
  %2484 = vmatpush1.msra.mxu0 0.0
  %2485 = vmatprep.subr.mxu0 0.0
  %2486 = vmatpush1.msra.mxu0 0.0
  %2487 = vmatprep.subr.mxu0 0.0
  %2488 = vmatpush1.msra.mxu0 0.0
  %2489 = vmatprep.subr.mxu0 0.0
  %2490 = vmatpush1.msra.mxu0 0.0
  %2491 = vmatprep.subr.mxu0 0.0
  %2492 = vmatpush1.msra.mxu0 0.0
  %2493 = vmatprep.subr.mxu0 0.0
  %2494 = vmatpush1.msra.mxu0 0.0
  %2495 = vmatprep.subr.mxu0 0.0
  %2496 = vmatpush1.msra.mxu0 0.0
  %2497 = vmatprep.subr.mxu0 0.0
  %2498 = vmatpush1.msra.mxu0 0.0
  %2499 = vmatprep.subr.mxu0 0.0
  %2500 = vmatpush1.msra.mxu0 0.0
  %2501 = vmatprep.subr.mxu0 0.0
  %2502 = vmatpush1.msra.mxu0 0.0
  %2503 = vmatprep.mubr.f32.mxu0 0.0
  %2504 = vmatmul.mubr.f32.gmra.mrb[0].mxu0 %v2055
  %v2505 = vpop.f32.mrb[0].mxu0
  %v2506 = vadd.f32 0.0, %v2505
  %v2507 = vpop.f32.mrb[0].mxu0
  %v2508 = vadd.f32 0.0, %v2507
  %2509 = vdwg.mxu0
  %2510 = vmatprep.subr.mxu0 0.0
  %2511 = vmatpush1.msra.mxu0 %v2393
  %2512 = vmatprep.subr.mxu0 0.0
  %2513 = vmatpush1.msra.mxu0 %v2396
  %2514 = vmatprep.subr.mxu0 0.0
  %2515 = vmatpush1.msra.mxu0 %v2399
  %2516 = vmatprep.subr.mxu0 0.0
  %2517 = vmatpush1.msra.mxu0 %v2402
  %2518 = vmatprep.subr.mxu0 0.0
  %2519 = vmatpush1.msra.mxu0 %v2405
  %2520 = vmatprep.subr.mxu0 0.0
  %2521 = vmatpush1.msra.mxu0 %v2408
  %2522 = vmatprep.subr.mxu0 0.0
  %2523 = vmatpush1.msra.mxu0 %v2411
  %2524 = vmatprep.subr.mxu0 0.0
  %2525 = vmatpush1.msra.mxu0 %v2414
  %2526 = vmatprep.subr.mxu0 0.0
  %2527 = vmatpush1.msra.mxu0 %v2417
  %2528 = vmatprep.subr.mxu0 0.0
  %2529 = vmatpush1.msra.mxu0 %v2420
  %2530 = vmatprep.subr.mxu0 0.0
  %2531 = vmatpush1.msra.mxu0 %v2423
  %2532 = vmatprep.subr.mxu0 0.0
  %2533 = vmatpush1.msra.mxu0 %v2426
  %2534 = vmatprep.subr.mxu0 0.0
  %2535 = vmatpush1.msra.mxu0 %v2429
  %2536 = vmatprep.subr.mxu0 0.0
  %2537 = vmatpush1.msra.mxu0 %v2432
  %2538 = vmatprep.subr.mxu0 0.0
  %2539 = vmatpush1.msra.mxu0 %v2435
  %2540 = vmatprep.subr.mxu0 0.0
  %2541 = vmatpush1.msra.mxu0 %v2438
  %2542 = vmatprep.subr.mxu0 0.0
  %2543 = vmatpush1.msra.mxu0 0.0
  %2544 = vmatprep.subr.mxu0 0.0
  %2545 = vmatpush1.msra.mxu0 0.0
  %2546 = vmatprep.subr.mxu0 0.0
  %2547 = vmatpush1.msra.mxu0 0.0
  %2548 = vmatprep.subr.mxu0 0.0
  %2549 = vmatpush1.msra.mxu0 0.0
  %2550 = vmatprep.subr.mxu0 0.0
  %2551 = vmatpush1.msra.mxu0 0.0
  %2552 = vmatprep.subr.mxu0 0.0
  %2553 = vmatpush1.msra.mxu0 0.0
  %2554 = vmatprep.subr.mxu0 0.0
  %2555 = vmatpush1.msra.mxu0 0.0
  %2556 = vmatprep.subr.mxu0 0.0
  %2557 = vmatpush1.msra.mxu0 0.0
  %2558 = vmatprep.subr.mxu0 0.0
  %2559 = vmatpush1.msra.mxu0 0.0
  %2560 = vmatprep.subr.mxu0 0.0
  %2561 = vmatpush1.msra.mxu0 0.0
  %2562 = vmatprep.subr.mxu0 0.0
  %2563 = vmatpush1.msra.mxu0 0.0
  %2564 = vmatprep.subr.mxu0 0.0
  %2565 = vmatpush1.msra.mxu0 0.0
  %2566 = vmatprep.subr.mxu0 0.0
  %2567 = vmatpush1.msra.mxu0 0.0
  %2568 = vmatprep.subr.mxu0 0.0
  %2569 = vmatpush1.msra.mxu0 0.0
  %2570 = vmatprep.subr.mxu0 0.0
  %2571 = vmatpush1.msra.mxu0 0.0
  %2572 = vmatprep.subr.mxu0 0.0
  %2573 = vmatpush1.msra.mxu0 0.0
  %2574 = vmatprep.mubr.f32.mxu0 0.0
  %2575 = vmatmul.mubr.f32.gmra.mrb[0].mxu0 %v2055
  %v2576 = vpop.f32.mrb[0].mxu0
  %v2577 = vadd.f32 0.0, %v2576
  %v2578 = vpop.f32.mrb[0].mxu0
  %2579 = vdwg.mxu0
  %v2580 = vadd.f32 %v2318, %v2506
  %v2581 = vadd.f32 %v2387, %v2508
  %v2582 = vadd.f32 %v2580, %v211
  %v2583 = vadd.f32 %v2581, %v215
  %v2584 = vmul.f32 %v2582, 0.5
  %v2585 = vmul.f32 %v2583, 0.5
  %v2586 = vtanh.pop %v2584
  %v2587 = vtanh.pop %v2585
  %v2588 = vmul.f32 %v2586, 0.5
  %v2589 = vmul.f32 %v2587, 0.5
  %v2590 = vadd.f32 %v2588, 0.5
  %v2591 = vadd.f32 %v2589, 0.5
  %v2592 = vadd.f32 %v2389, %v223
  %v2593 = vadd.f32 %v2577, %v230
  %v2594 = vmul.f32 %v2590, %v2593
  %v2595 = vadd.f32 %v2592, %v2594
  %v2596 = vtanh.pop %v2595
  %v2597 = vsub.f32 1.0, %v2591
  %v2598 = vmul.f32 %v2597, %v2596
  %v2599 = vmul.f32 %v2591, %v2055
  %v2600 = vadd.f32 %v2598, %v2599
  %s2601 = scalar_lea.vmem [#allocation3], 24
  %2602 = vst [vmem:[%s2601] sm:$0xff] %v2600
  %s2603 = smul.u32 4, 3
  %s2604 = smul.addr %s2603, 8
  %s2605 = scalar_lea.vmem [#allocation2], %s2604
  %v2606 = vld [vmem:[%s2605] sm:$0xff]
  %v2607 = vld [vmem:[%s2605 + $0x8] sm:$0xff]
  %v2608 = vld [vmem:[%s2605 + $0x10] sm:$0xff]
  %v2609 = vadd.f32 %v2606, %v2245
  %v2610 = vmul.f32 %v2609, 0.5
  %v2611 = vtanh.pop %v2610
  %v2612 = vmul.f32 %v2611, 0.5
  %v2613 = vadd.f32 %v2612, 0.5
  %v2614 = vadd.f32 %v2607, %v2247
  %v2615 = vmul.f32 %v2614, 0.5
  %v2616 = vtanh.pop %v2615
  %v2617 = vmul.f32 %v2616, 0.5
  %v2618 = vadd.f32 %v2617, 0.5
  %v2619 = vadd.f32 %v2316, %v204
  %v2620 = vmul.f32 %v2613, %v2619
  %v2621 = vadd.f32 %v2608, %v2620
  %v2622 = vtanh.pop %v2621
  %v2623 = vsub.f32 1.0, %v2618
  %v2624 = vmul.f32 %v2623, %v2622
  %v2625 = vmul.f32 %v2618, %v2081
  %v2626 = vadd.f32 %v2624, %v2625
  %v2627 = vld [vmem:[%s5] sm:$0xff]
  %v2628 = vld [vmem:[%s5 + $0x8] sm:$0xff]
  %v2629 = vld [vmem:[%s5 + $0x10] sm:$0xff]
  %v2630 = vld [vmem:[%s5 + $0x18] sm:$0xff]
  %v2631 = vld [vmem:[%s5 + $0x20] sm:$0xff]
  %v2632 = vld [vmem:[%s5 + $0x28] sm:$0xff]
  %v2633 = vld [vmem:[%s5 + $0x30] sm:$0xff]
  %v2634 = vld [vmem:[%s5 + $0x38] sm:$0xff]
  %v2635 = vld [vmem:[%s5 + $0x40] sm:$0xff]
  %v2636 = vld [vmem:[%s5 + $0x48] sm:$0xff]
  %v2637 = vld [vmem:[%s5 + $0x50] sm:$0xff]
  %v2638 = vld [vmem:[%s5 + $0x58] sm:$0xff]
  %v2639 = vld [vmem:[%s5 + $0x60] sm:$0xff]
  %v2640 = vld [vmem:[%s5 + $0x68] sm:$0xff]
  %v2641 = vld [vmem:[%s5 + $0x70] sm:$0xff]
  %v2642 = vld [vmem:[%s5 + $0x78] sm:$0xff]
  %v2643 = vld [vmem:[%s5 + $0x80] sm:$0xff]
  %v2644 = vld [vmem:[%s5 + $0x88] sm:$0xff]
  %v2645 = vld [vmem:[%s5 + $0x90] sm:$0xff]
  %v2646 = vld [vmem:[%s5 + $0x98] sm:$0xff]
  %v2647 = vld [vmem:[%s5 + $0xa0] sm:$0xff]
  %v2648 = vld [vmem:[%s5 + $0xa8] sm:$0xff]
  %v2649 = vld [vmem:[%s5 + $0xb0] sm:$0xff]
  %v2650 = vld [vmem:[%s5 + $0xb8] sm:$0xff]
  %v2651 = vld [vmem:[%s5 + $0xc0] sm:$0xff]
  %v2652 = vld [vmem:[%s5 + $0xc8] sm:$0xff]
  %v2653 = vld [vmem:[%s5 + $0xd0] sm:$0xff]
  %v2654 = vld [vmem:[%s5 + $0xd8] sm:$0xff]
  %v2655 = vld [vmem:[%s5 + $0xe0] sm:$0xff]
  %v2656 = vld [vmem:[%s5 + $0xe8] sm:$0xff]
  %v2657 = vld [vmem:[%s5 + $0xf0] sm:$0xff]
  %v2658 = vld [vmem:[%s5 + $0xf8] sm:$0xff]
  %v2659 = vld [vmem:[%s5 + $0x100] sm:$0xff]
  %v2660 = vld [vmem:[%s5 + $0x108] sm:$0xff]
  %v2661 = vld [vmem:[%s5 + $0x110] sm:$0xff]
  %v2662 = vld [vmem:[%s5 + $0x118] sm:$0xff]
  %v2663 = vld [vmem:[%s5 + $0x120] sm:$0xff]
  %v2664 = vld [vmem:[%s5 + $0x128] sm:$0xff]
  %v2665 = vld [vmem:[%s5 + $0x130] sm:$0xff]
  %v2666 = vld [vmem:[%s5 + $0x138] sm:$0xff]
  %v2667 = vld [vmem:[%s5 + $0x140] sm:$0xff]
  %v2668 = vld [vmem:[%s5 + $0x148] sm:$0xff]
  %v2669 = vld [vmem:[%s5 + $0x150] sm:$0xff]
  %v2670 = vld [vmem:[%s5 + $0x158] sm:$0xff]
  %v2671 = vld [vmem:[%s5 + $0x160] sm:$0xff]
  %v2672 = vld [vmem:[%s5 + $0x168] sm:$0xff]
  %v2673 = vld [vmem:[%s5 + $0x170] sm:$0xff]
  %v2674 = vld [vmem:[%s5 + $0x178] sm:$0xff]
  %v2675 = vld [vmem:[%s5 + $0x180] sm:$0xff]
  %v2676 = vld [vmem:[%s5 + $0x188] sm:$0xff]
  %v2677 = vld [vmem:[%s5 + $0x190] sm:$0xff]
  %v2678 = vld [vmem:[%s5 + $0x198] sm:$0xff]
  %v2679 = vld [vmem:[%s5 + $0x1a0] sm:$0xff]
  %v2680 = vld [vmem:[%s5 + $0x1a8] sm:$0xff]
  %v2681 = vld [vmem:[%s5 + $0x1b0] sm:$0xff]
  %v2682 = vld [vmem:[%s5 + $0x1b8] sm:$0xff]
  %v2683 = vld [vmem:[%s5 + $0x1c0] sm:$0xff]
  %v2684 = vld [vmem:[%s5 + $0x1c8] sm:$0xff]
  %v2685 = vld [vmem:[%s5 + $0x1d0] sm:$0xff]
  %v2686 = vld [vmem:[%s5 + $0x1d8] sm:$0xff]
  %v2687 = vld [vmem:[%s5 + $0x1e0] sm:$0xff]
  %v2688 = vld [vmem:[%s5 + $0x1e8] sm:$0xff]
  %v2689 = vld [vmem:[%s5 + $0x1f0] sm:$0xff]
  %v2690 = vld [vmem:[%s5 + $0x1f8] sm:$0xff]
  %v2691 = vld [vmem:[%s5 + $0x200] sm:$0xff]
  %v2692 = vld [vmem:[%s5 + $0x208] sm:$0xff]
  %v2693 = vld [vmem:[%s5 + $0x210] sm:$0xff]
  %v2694 = vld [vmem:[%s5 + $0x218] sm:$0xff]
  %v2695 = vld [vmem:[%s5 + $0x220] sm:$0xff]
  %v2696 = vld [vmem:[%s5 + $0x228] sm:$0xff]
  %v2697 = vld [vmem:[%s5 + $0x230] sm:$0xff]
  %v2698 = vld [vmem:[%s5 + $0x238] sm:$0xff]
  %v2699 = vld [vmem:[%s5 + $0x240] sm:$0xff]
  %v2700 = vld [vmem:[%s5 + $0x248] sm:$0xff]
  %v2701 = vld [vmem:[%s5 + $0x250] sm:$0xff]
  %v2702 = vld [vmem:[%s5 + $0x258] sm:$0xff]
  %v2703 = vld [vmem:[%s5 + $0x260] sm:$0xff]
  %v2704 = vld [vmem:[%s5 + $0x268] sm:$0xff]
  %v2705 = vld [vmem:[%s5 + $0x270] sm:$0xff]
  %v2706 = vld [vmem:[%s5 + $0x278] sm:$0xff]
  %v2707 = vld [vmem:[%s5 + $0x280] sm:$0xff]
  %v2708 = vld [vmem:[%s5 + $0x288] sm:$0xff]
  %v2709 = vld [vmem:[%s5 + $0x290] sm:$0xff]
  %v2710 = vld [vmem:[%s5 + $0x298] sm:$0xff]
  %v2711 = vld [vmem:[%s5 + $0x2a0] sm:$0xff]
  %v2712 = vld [vmem:[%s5 + $0x2a8] sm:$0xff]
  %v2713 = vld [vmem:[%s5 + $0x2b0] sm:$0xff]
  %v2714 = vld [vmem:[%s5 + $0x2b8] sm:$0xff]
  %v2715 = vld [vmem:[%s5 + $0x2c0] sm:$0xff]
  %v2716 = vld [vmem:[%s5 + $0x2c8] sm:$0xff]
  %v2717 = vld [vmem:[%s5 + $0x2d0] sm:$0xff]
  %v2718 = vld [vmem:[%s5 + $0x2d8] sm:$0xff]
  %v2719 = vld [vmem:[%s5 + $0x2e0] sm:$0xff]
  %v2720 = vld [vmem:[%s5 + $0x2e8] sm:$0xff]
  %v2721 = vld [vmem:[%s5 + $0x2f0] sm:$0xff]
  %v2722 = vld [vmem:[%s5 + $0x2f8] sm:$0xff]
  %2723 = vmatprep.subr.mxu0 %v2628
  %2724 = vmatpush1.msra.mxu0 %v2627
  %2725 = vmatprep.subr.mxu0 %v2634
  %2726 = vmatpush1.msra.mxu0 %v2633
  %2727 = vmatprep.subr.mxu0 %v2640
  %2728 = vmatpush1.msra.mxu0 %v2639
  %2729 = vmatprep.subr.mxu0 %v2646
  %2730 = vmatpush1.msra.mxu0 %v2645
  %2731 = vmatprep.subr.mxu0 %v2652
  %2732 = vmatpush1.msra.mxu0 %v2651
  %2733 = vmatprep.subr.mxu0 %v2658
  %2734 = vmatpush1.msra.mxu0 %v2657
  %2735 = vmatprep.subr.mxu0 %v2664
  %2736 = vmatpush1.msra.mxu0 %v2663
  %2737 = vmatprep.subr.mxu0 %v2670
  %2738 = vmatpush1.msra.mxu0 %v2669
  %2739 = vmatprep.subr.mxu0 %v2676
  %2740 = vmatpush1.msra.mxu0 %v2675
  %2741 = vmatprep.subr.mxu0 %v2682
  %2742 = vmatpush1.msra.mxu0 %v2681
  %2743 = vmatprep.subr.mxu0 %v2688
  %2744 = vmatpush1.msra.mxu0 %v2687
  %2745 = vmatprep.subr.mxu0 %v2694
  %2746 = vmatpush1.msra.mxu0 %v2693
  %2747 = vmatprep.subr.mxu0 %v2700
  %2748 = vmatpush1.msra.mxu0 %v2699
  %2749 = vmatprep.subr.mxu0 %v2706
  %2750 = vmatpush1.msra.mxu0 %v2705
  %2751 = vmatprep.subr.mxu0 %v2712
  %2752 = vmatpush1.msra.mxu0 %v2711
  %2753 = vmatprep.subr.mxu0 %v2718
  %2754 = vmatpush1.msra.mxu0 %v2717
  %2755 = vmatprep.subr.mxu0 0.0
  %2756 = vmatpush1.msra.mxu0 0.0
  %2757 = vmatprep.subr.mxu0 0.0
  %2758 = vmatpush1.msra.mxu0 0.0
  %2759 = vmatprep.subr.mxu0 0.0
  %2760 = vmatpush1.msra.mxu0 0.0
  %2761 = vmatprep.subr.mxu0 0.0
  %2762 = vmatpush1.msra.mxu0 0.0
  %2763 = vmatprep.subr.mxu0 0.0
  %2764 = vmatpush1.msra.mxu0 0.0
  %2765 = vmatprep.subr.mxu0 0.0
  %2766 = vmatpush1.msra.mxu0 0.0
  %2767 = vmatprep.subr.mxu0 0.0
  %2768 = vmatpush1.msra.mxu0 0.0
  %2769 = vmatprep.subr.mxu0 0.0
  %2770 = vmatpush1.msra.mxu0 0.0
  %2771 = vmatprep.subr.mxu0 0.0
  %2772 = vmatpush1.msra.mxu0 0.0
  %2773 = vmatprep.subr.mxu0 0.0
  %2774 = vmatpush1.msra.mxu0 0.0
  %2775 = vmatprep.subr.mxu0 0.0
  %2776 = vmatpush1.msra.mxu0 0.0
  %2777 = vmatprep.subr.mxu0 0.0
  %2778 = vmatpush1.msra.mxu0 0.0
  %2779 = vmatprep.subr.mxu0 0.0
  %2780 = vmatpush1.msra.mxu0 0.0
  %2781 = vmatprep.subr.mxu0 0.0
  %2782 = vmatpush1.msra.mxu0 0.0
  %2783 = vmatprep.subr.mxu0 0.0
  %2784 = vmatpush1.msra.mxu0 0.0
  %2785 = vmatprep.subr.mxu0 0.0
  %2786 = vmatpush1.msra.mxu0 0.0
  %2787 = vmatprep.mubr.f32.mxu0 0.0
  %2788 = vmatmul.mubr.f32.gmra.mrb[0].mxu0 %v2626
  %v2789 = vpop.f32.mrb[0].mxu0
  %v2790 = vadd.f32 0.0, %v2789
  %v2791 = vpop.f32.mrb[0].mxu0
  %v2792 = vadd.f32 0.0, %v2791
  %2793 = vdwg.mxu0
  %2794 = vmatprep.subr.mxu0 %v2630
  %2795 = vmatpush1.msra.mxu0 %v2629
  %2796 = vmatprep.subr.mxu0 %v2636
  %2797 = vmatpush1.msra.mxu0 %v2635
  %2798 = vmatprep.subr.mxu0 %v2642
  %2799 = vmatpush1.msra.mxu0 %v2641
  %2800 = vmatprep.subr.mxu0 %v2648
  %2801 = vmatpush1.msra.mxu0 %v2647
  %2802 = vmatprep.subr.mxu0 %v2654
  %2803 = vmatpush1.msra.mxu0 %v2653
  %2804 = vmatprep.subr.mxu0 %v2660
  %2805 = vmatpush1.msra.mxu0 %v2659
  %2806 = vmatprep.subr.mxu0 %v2666
  %2807 = vmatpush1.msra.mxu0 %v2665
  %2808 = vmatprep.subr.mxu0 %v2672
  %2809 = vmatpush1.msra.mxu0 %v2671
  %2810 = vmatprep.subr.mxu0 %v2678
  %2811 = vmatpush1.msra.mxu0 %v2677
  %2812 = vmatprep.subr.mxu0 %v2684
  %2813 = vmatpush1.msra.mxu0 %v2683
  %2814 = vmatprep.subr.mxu0 %v2690
  %2815 = vmatpush1.msra.mxu0 %v2689
  %2816 = vmatprep.subr.mxu0 %v2696
  %2817 = vmatpush1.msra.mxu0 %v2695
  %2818 = vmatprep.subr.mxu0 %v2702
  %2819 = vmatpush1.msra.mxu0 %v2701
  %2820 = vmatprep.subr.mxu0 %v2708
  %2821 = vmatpush1.msra.mxu0 %v2707
  %2822 = vmatprep.subr.mxu0 %v2714
  %2823 = vmatpush1.msra.mxu0 %v2713
  %2824 = vmatprep.subr.mxu0 %v2720
  %2825 = vmatpush1.msra.mxu0 %v2719
  %2826 = vmatprep.subr.mxu0 0.0
  %2827 = vmatpush1.msra.mxu0 0.0
  %2828 = vmatprep.subr.mxu0 0.0
  %2829 = vmatpush1.msra.mxu0 0.0
  %2830 = vmatprep.subr.mxu0 0.0
  %2831 = vmatpush1.msra.mxu0 0.0
  %2832 = vmatprep.subr.mxu0 0.0
  %2833 = vmatpush1.msra.mxu0 0.0
  %2834 = vmatprep.subr.mxu0 0.0
  %2835 = vmatpush1.msra.mxu0 0.0
  %2836 = vmatprep.subr.mxu0 0.0
  %2837 = vmatpush1.msra.mxu0 0.0
  %2838 = vmatprep.subr.mxu0 0.0
  %2839 = vmatpush1.msra.mxu0 0.0
  %2840 = vmatprep.subr.mxu0 0.0
  %2841 = vmatpush1.msra.mxu0 0.0
  %2842 = vmatprep.subr.mxu0 0.0
  %2843 = vmatpush1.msra.mxu0 0.0
  %2844 = vmatprep.subr.mxu0 0.0
  %2845 = vmatpush1.msra.mxu0 0.0
  %2846 = vmatprep.subr.mxu0 0.0
  %2847 = vmatpush1.msra.mxu0 0.0
  %2848 = vmatprep.subr.mxu0 0.0
  %2849 = vmatpush1.msra.mxu0 0.0
  %2850 = vmatprep.subr.mxu0 0.0
  %2851 = vmatpush1.msra.mxu0 0.0
  %2852 = vmatprep.subr.mxu0 0.0
  %2853 = vmatpush1.msra.mxu0 0.0
  %2854 = vmatprep.subr.mxu0 0.0
  %2855 = vmatpush1.msra.mxu0 0.0
  %2856 = vmatprep.subr.mxu0 0.0
  %2857 = vmatpush1.msra.mxu0 0.0
  %2858 = vmatprep.mubr.f32.mxu0 0.0
  %2859 = vmatmul.mubr.f32.gmra.mrb[0].mxu0 %v2626
  %v2860 = vpop.f32.mrb[0].mxu0
  %v2861 = vadd.f32 0.0, %v2860
  %v2862 = vpop.f32.mrb[0].mxu0
  %v2863 = vadd.f32 0.0, %v2862
  %2864 = vdwg.mxu0
  %2865 = vmatprep.subr.mxu0 %v2632
  %2866 = vmatpush1.msra.mxu0 %v2631
  %2867 = vmatprep.subr.mxu0 %v2638
  %2868 = vmatpush1.msra.mxu0 %v2637
  %2869 = vmatprep.subr.mxu0 %v2644
  %2870 = vmatpush1.msra.mxu0 %v2643
  %2871 = vmatprep.subr.mxu0 %v2650
  %2872 = vmatpush1.msra.mxu0 %v2649
  %2873 = vmatprep.subr.mxu0 %v2656
  %2874 = vmatpush1.msra.mxu0 %v2655
  %2875 = vmatprep.subr.mxu0 %v2662
  %2876 = vmatpush1.msra.mxu0 %v2661
  %2877 = vmatprep.subr.mxu0 %v2668
  %2878 = vmatpush1.msra.mxu0 %v2667
  %2879 = vmatprep.subr.mxu0 %v2674
  %2880 = vmatpush1.msra.mxu0 %v2673
  %2881 = vmatprep.subr.mxu0 %v2680
  %2882 = vmatpush1.msra.mxu0 %v2679
  %2883 = vmatprep.subr.mxu0 %v2686
  %2884 = vmatpush1.msra.mxu0 %v2685
  %2885 = vmatprep.subr.mxu0 %v2692
  %2886 = vmatpush1.msra.mxu0 %v2691
  %2887 = vmatprep.subr.mxu0 %v2698
  %2888 = vmatpush1.msra.mxu0 %v2697
  %2889 = vmatprep.subr.mxu0 %v2704
  %2890 = vmatpush1.msra.mxu0 %v2703
  %2891 = vmatprep.subr.mxu0 %v2710
  %2892 = vmatpush1.msra.mxu0 %v2709
  %2893 = vmatprep.subr.mxu0 %v2716
  %2894 = vmatpush1.msra.mxu0 %v2715
  %2895 = vmatprep.subr.mxu0 %v2722
  %2896 = vmatpush1.msra.mxu0 %v2721
  %2897 = vmatprep.subr.mxu0 0.0
  %2898 = vmatpush1.msra.mxu0 0.0
  %2899 = vmatprep.subr.mxu0 0.0
  %2900 = vmatpush1.msra.mxu0 0.0
  %2901 = vmatprep.subr.mxu0 0.0
  %2902 = vmatpush1.msra.mxu0 0.0
  %2903 = vmatprep.subr.mxu0 0.0
  %2904 = vmatpush1.msra.mxu0 0.0
  %2905 = vmatprep.subr.mxu0 0.0
  %2906 = vmatpush1.msra.mxu0 0.0
  %2907 = vmatprep.subr.mxu0 0.0
  %2908 = vmatpush1.msra.mxu0 0.0
  %2909 = vmatprep.subr.mxu0 0.0
  %2910 = vmatpush1.msra.mxu0 0.0
  %2911 = vmatprep.subr.mxu0 0.0
  %2912 = vmatpush1.msra.mxu0 0.0
  %2913 = vmatprep.subr.mxu0 0.0
  %2914 = vmatpush1.msra.mxu0 0.0
  %2915 = vmatprep.subr.mxu0 0.0
  %2916 = vmatpush1.msra.mxu0 0.0
  %2917 = vmatprep.subr.mxu0 0.0
  %2918 = vmatpush1.msra.mxu0 0.0
  %2919 = vmatprep.subr.mxu0 0.0
  %2920 = vmatpush1.msra.mxu0 0.0
  %2921 = vmatprep.subr.mxu0 0.0
  %2922 = vmatpush1.msra.mxu0 0.0
  %2923 = vmatprep.subr.mxu0 0.0
  %2924 = vmatpush1.msra.mxu0 0.0
  %2925 = vmatprep.subr.mxu0 0.0
  %2926 = vmatpush1.msra.mxu0 0.0
  %2927 = vmatprep.subr.mxu0 0.0
  %2928 = vmatpush1.msra.mxu0 0.0
  %2929 = vmatprep.mubr.f32.mxu0 0.0
  %2930 = vmatmul.mubr.f32.gmra.mrb[0].mxu0 %v2626
  %v2931 = vpop.f32.mrb[0].mxu0
  %v2932 = vadd.f32 0.0, %v2931
  %v2933 = vpop.f32.mrb[0].mxu0
  %v2934 = vadd.f32 0.0, %v2933
  %2935 = vdwg.mxu0
  %v2936 = vld [vmem:[%s6] sm:$0xff]
  %v2937 = vld [vmem:[%s6 + $0x8] sm:$0xff]
  %v2938 = vld [vmem:[%s6 + $0x10] sm:$0xff]
  %v2939 = vld [vmem:[%s6 + $0x18] sm:$0xff]
  %v2940 = vld [vmem:[%s6 + $0x20] sm:$0xff]
  %v2941 = vld [vmem:[%s6 + $0x28] sm:$0xff]
  %v2942 = vld [vmem:[%s6 + $0x30] sm:$0xff]
  %v2943 = vld [vmem:[%s6 + $0x38] sm:$0xff]
  %v2944 = vld [vmem:[%s6 + $0x40] sm:$0xff]
  %v2945 = vld [vmem:[%s6 + $0x48] sm:$0xff]
  %v2946 = vld [vmem:[%s6 + $0x50] sm:$0xff]
  %v2947 = vld [vmem:[%s6 + $0x58] sm:$0xff]
  %v2948 = vld [vmem:[%s6 + $0x60] sm:$0xff]
  %v2949 = vld [vmem:[%s6 + $0x68] sm:$0xff]
  %v2950 = vld [vmem:[%s6 + $0x70] sm:$0xff]
  %v2951 = vld [vmem:[%s6 + $0x78] sm:$0xff]
  %v2952 = vld [vmem:[%s6 + $0x80] sm:$0xff]
  %v2953 = vld [vmem:[%s6 + $0x88] sm:$0xff]
  %v2954 = vld [vmem:[%s6 + $0x90] sm:$0xff]
  %v2955 = vld [vmem:[%s6 + $0x98] sm:$0xff]
  %v2956 = vld [vmem:[%s6 + $0xa0] sm:$0xff]
  %v2957 = vld [vmem:[%s6 + $0xa8] sm:$0xff]
  %v2958 = vld [vmem:[%s6 + $0xb0] sm:$0xff]
  %v2959 = vld [vmem:[%s6 + $0xb8] sm:$0xff]
  %v2960 = vld [vmem:[%s6 + $0xc0] sm:$0xff]
  %v2961 = vld [vmem:[%s6 + $0xc8] sm:$0xff]
  %v2962 = vld [vmem:[%s6 + $0xd0] sm:$0xff]
  %v2963 = vld [vmem:[%s6 + $0xd8] sm:$0xff]
  %v2964 = vld [vmem:[%s6 + $0xe0] sm:$0xff]
  %v2965 = vld [vmem:[%s6 + $0xe8] sm:$0xff]
  %v2966 = vld [vmem:[%s6 + $0xf0] sm:$0xff]
  %v2967 = vld [vmem:[%s6 + $0xf8] sm:$0xff]
  %v2968 = vld [vmem:[%s6 + $0x100] sm:$0xff]
  %v2969 = vld [vmem:[%s6 + $0x108] sm:$0xff]
  %v2970 = vld [vmem:[%s6 + $0x110] sm:$0xff]
  %v2971 = vld [vmem:[%s6 + $0x118] sm:$0xff]
  %v2972 = vld [vmem:[%s6 + $0x120] sm:$0xff]
  %v2973 = vld [vmem:[%s6 + $0x128] sm:$0xff]
  %v2974 = vld [vmem:[%s6 + $0x130] sm:$0xff]
  %v2975 = vld [vmem:[%s6 + $0x138] sm:$0xff]
  %v2976 = vld [vmem:[%s6 + $0x140] sm:$0xff]
  %v2977 = vld [vmem:[%s6 + $0x148] sm:$0xff]
  %v2978 = vld [vmem:[%s6 + $0x150] sm:$0xff]
  %v2979 = vld [vmem:[%s6 + $0x158] sm:$0xff]
  %v2980 = vld [vmem:[%s6 + $0x160] sm:$0xff]
  %v2981 = vld [vmem:[%s6 + $0x168] sm:$0xff]
  %v2982 = vld [vmem:[%s6 + $0x170] sm:$0xff]
  %v2983 = vld [vmem:[%s6 + $0x178] sm:$0xff]
  %2984 = vmatprep.subr.mxu0 %v2937
  %2985 = vmatpush1.msra.mxu0 %v2936
  %2986 = vmatprep.subr.mxu0 %v2940
  %2987 = vmatpush1.msra.mxu0 %v2939
  %2988 = vmatprep.subr.mxu0 %v2943
  %2989 = vmatpush1.msra.mxu0 %v2942
  %2990 = vmatprep.subr.mxu0 %v2946
  %2991 = vmatpush1.msra.mxu0 %v2945
  %2992 = vmatprep.subr.mxu0 %v2949
  %2993 = vmatpush1.msra.mxu0 %v2948
  %2994 = vmatprep.subr.mxu0 %v2952
  %2995 = vmatpush1.msra.mxu0 %v2951
  %2996 = vmatprep.subr.mxu0 %v2955
  %2997 = vmatpush1.msra.mxu0 %v2954
  %2998 = vmatprep.subr.mxu0 %v2958
  %2999 = vmatpush1.msra.mxu0 %v2957
  %3000 = vmatprep.subr.mxu0 %v2961
  %3001 = vmatpush1.msra.mxu0 %v2960
  %3002 = vmatprep.subr.mxu0 %v2964
  %3003 = vmatpush1.msra.mxu0 %v2963
  %3004 = vmatprep.subr.mxu0 %v2967
  %3005 = vmatpush1.msra.mxu0 %v2966
  %3006 = vmatprep.subr.mxu0 %v2970
  %3007 = vmatpush1.msra.mxu0 %v2969
  %3008 = vmatprep.subr.mxu0 %v2973
  %3009 = vmatpush1.msra.mxu0 %v2972
  %3010 = vmatprep.subr.mxu0 %v2976
  %3011 = vmatpush1.msra.mxu0 %v2975
  %3012 = vmatprep.subr.mxu0 %v2979
  %3013 = vmatpush1.msra.mxu0 %v2978
  %3014 = vmatprep.subr.mxu0 %v2982
  %3015 = vmatpush1.msra.mxu0 %v2981
  %3016 = vmatprep.subr.mxu0 0.0
  %3017 = vmatpush1.msra.mxu0 0.0
  %3018 = vmatprep.subr.mxu0 0.0
  %3019 = vmatpush1.msra.mxu0 0.0
  %3020 = vmatprep.subr.mxu0 0.0
  %3021 = vmatpush1.msra.mxu0 0.0
  %3022 = vmatprep.subr.mxu0 0.0
  %3023 = vmatpush1.msra.mxu0 0.0
  %3024 = vmatprep.subr.mxu0 0.0
  %3025 = vmatpush1.msra.mxu0 0.0
  %3026 = vmatprep.subr.mxu0 0.0
  %3027 = vmatpush1.msra.mxu0 0.0
  %3028 = vmatprep.subr.mxu0 0.0
  %3029 = vmatpush1.msra.mxu0 0.0
  %3030 = vmatprep.subr.mxu0 0.0
  %3031 = vmatpush1.msra.mxu0 0.0
  %3032 = vmatprep.subr.mxu0 0.0
  %3033 = vmatpush1.msra.mxu0 0.0
  %3034 = vmatprep.subr.mxu0 0.0
  %3035 = vmatpush1.msra.mxu0 0.0
  %3036 = vmatprep.subr.mxu0 0.0
  %3037 = vmatpush1.msra.mxu0 0.0
  %3038 = vmatprep.subr.mxu0 0.0
  %3039 = vmatpush1.msra.mxu0 0.0
  %3040 = vmatprep.subr.mxu0 0.0
  %3041 = vmatpush1.msra.mxu0 0.0
  %3042 = vmatprep.subr.mxu0 0.0
  %3043 = vmatpush1.msra.mxu0 0.0
  %3044 = vmatprep.subr.mxu0 0.0
  %3045 = vmatpush1.msra.mxu0 0.0
  %3046 = vmatprep.subr.mxu0 0.0
  %3047 = vmatpush1.msra.mxu0 0.0
  %3048 = vmatprep.mubr.f32.mxu0 0.0
  %3049 = vmatmul.mubr.f32.gmra.mrb[0].mxu0 %v2600
  %v3050 = vpop.f32.mrb[0].mxu0
  %v3051 = vadd.f32 0.0, %v3050
  %v3052 = vpop.f32.mrb[0].mxu0
  %v3053 = vadd.f32 0.0, %v3052
  %3054 = vdwg.mxu0
  %3055 = vmatprep.subr.mxu0 0.0
  %3056 = vmatpush1.msra.mxu0 %v2938
  %3057 = vmatprep.subr.mxu0 0.0
  %3058 = vmatpush1.msra.mxu0 %v2941
  %3059 = vmatprep.subr.mxu0 0.0
  %3060 = vmatpush1.msra.mxu0 %v2944
  %3061 = vmatprep.subr.mxu0 0.0
  %3062 = vmatpush1.msra.mxu0 %v2947
  %3063 = vmatprep.subr.mxu0 0.0
  %3064 = vmatpush1.msra.mxu0 %v2950
  %3065 = vmatprep.subr.mxu0 0.0
  %3066 = vmatpush1.msra.mxu0 %v2953
  %3067 = vmatprep.subr.mxu0 0.0
  %3068 = vmatpush1.msra.mxu0 %v2956
  %3069 = vmatprep.subr.mxu0 0.0
  %3070 = vmatpush1.msra.mxu0 %v2959
  %3071 = vmatprep.subr.mxu0 0.0
  %3072 = vmatpush1.msra.mxu0 %v2962
  %3073 = vmatprep.subr.mxu0 0.0
  %3074 = vmatpush1.msra.mxu0 %v2965
  %3075 = vmatprep.subr.mxu0 0.0
  %3076 = vmatpush1.msra.mxu0 %v2968
  %3077 = vmatprep.subr.mxu0 0.0
  %3078 = vmatpush1.msra.mxu0 %v2971
  %3079 = vmatprep.subr.mxu0 0.0
  %3080 = vmatpush1.msra.mxu0 %v2974
  %3081 = vmatprep.subr.mxu0 0.0
  %3082 = vmatpush1.msra.mxu0 %v2977
  %3083 = vmatprep.subr.mxu0 0.0
  %3084 = vmatpush1.msra.mxu0 %v2980
  %3085 = vmatprep.subr.mxu0 0.0
  %3086 = vmatpush1.msra.mxu0 %v2983
  %3087 = vmatprep.subr.mxu0 0.0
  %3088 = vmatpush1.msra.mxu0 0.0
  %3089 = vmatprep.subr.mxu0 0.0
  %3090 = vmatpush1.msra.mxu0 0.0
  %3091 = vmatprep.subr.mxu0 0.0
  %3092 = vmatpush1.msra.mxu0 0.0
  %3093 = vmatprep.subr.mxu0 0.0
  %3094 = vmatpush1.msra.mxu0 0.0
  %3095 = vmatprep.subr.mxu0 0.0
  %3096 = vmatpush1.msra.mxu0 0.0
  %3097 = vmatprep.subr.mxu0 0.0
  %3098 = vmatpush1.msra.mxu0 0.0
  %3099 = vmatprep.subr.mxu0 0.0
  %3100 = vmatpush1.msra.mxu0 0.0
  %3101 = vmatprep.subr.mxu0 0.0
  %3102 = vmatpush1.msra.mxu0 0.0
  %3103 = vmatprep.subr.mxu0 0.0
  %3104 = vmatpush1.msra.mxu0 0.0
  %3105 = vmatprep.subr.mxu0 0.0
  %3106 = vmatpush1.msra.mxu0 0.0
  %3107 = vmatprep.subr.mxu0 0.0
  %3108 = vmatpush1.msra.mxu0 0.0
  %3109 = vmatprep.subr.mxu0 0.0
  %3110 = vmatpush1.msra.mxu0 0.0
  %3111 = vmatprep.subr.mxu0 0.0
  %3112 = vmatpush1.msra.mxu0 0.0
  %3113 = vmatprep.subr.mxu0 0.0
  %3114 = vmatpush1.msra.mxu0 0.0
  %3115 = vmatprep.subr.mxu0 0.0
  %3116 = vmatpush1.msra.mxu0 0.0
  %3117 = vmatprep.subr.mxu0 0.0
  %3118 = vmatpush1.msra.mxu0 0.0
  %3119 = vmatprep.mubr.f32.mxu0 0.0
  %3120 = vmatmul.mubr.f32.gmra.mrb[0].mxu0 %v2600
  %v3121 = vpop.f32.mrb[0].mxu0
  %v3122 = vadd.f32 0.0, %v3121
  %v3123 = vpop.f32.mrb[0].mxu0
  %3124 = vdwg.mxu0
  %v3125 = vadd.f32 %v2863, %v3051
  %v3126 = vadd.f32 %v2932, %v3053
  %v3127 = vadd.f32 %v3125, %v211
  %v3128 = vadd.f32 %v3126, %v215
  %v3129 = vmul.f32 %v3127, 0.5
  %v3130 = vmul.f32 %v3128, 0.5
  %v3131 = vtanh.pop %v3129
  %v3132 = vtanh.pop %v3130
  %v3133 = vmul.f32 %v3131, 0.5
  %v3134 = vmul.f32 %v3132, 0.5
  %v3135 = vadd.f32 %v3133, 0.5
  %v3136 = vadd.f32 %v3134, 0.5
  %v3137 = vadd.f32 %v2934, %v223
  %v3138 = vadd.f32 %v3122, %v230
  %v3139 = vmul.f32 %v3135, %v3138
  %v3140 = vadd.f32 %v3137, %v3139
  %v3141 = vtanh.pop %v3140
  %v3142 = vsub.f32 1.0, %v3136
  %v3143 = vmul.f32 %v3142, %v3141
  %v3144 = vmul.f32 %v3136, %v2600
  %v3145 = vadd.f32 %v3143, %v3144
  %s3146 = scalar_lea.vmem [#allocation3], 32
  %3147 = vst [vmem:[%s3146] sm:$0xff] %v3145
  %s3148 = smul.u32 5, 3
  %s3149 = smul.addr %s3148, 8
  %s3150 = scalar_lea.vmem [#allocation2], %s3149
  %v3151 = vld [vmem:[%s3150] sm:$0xff]
  %v3152 = vld [vmem:[%s3150 + $0x8] sm:$0xff]
  %v3153 = vld [vmem:[%s3150 + $0x10] sm:$0xff]
  %v3154 = vadd.f32 %v3151, %v2790
  %v3155 = vmul.f32 %v3154, 0.5
  %v3156 = vtanh.pop %v3155
  %v3157 = vmul.f32 %v3156, 0.5
  %v3158 = vadd.f32 %v3157, 0.5
  %v3159 = vadd.f32 %v3152, %v2792
  %v3160 = vmul.f32 %v3159, 0.5
  %v3161 = vtanh.pop %v3160
  %v3162 = vmul.f32 %v3161, 0.5
  %v3163 = vadd.f32 %v3162, 0.5
  %v3164 = vadd.f32 %v2861, %v204
  %v3165 = vmul.f32 %v3158, %v3164
  %v3166 = vadd.f32 %v3153, %v3165
  %v3167 = vtanh.pop %v3166
  %v3168 = vsub.f32 1.0, %v3163
  %v3169 = vmul.f32 %v3168, %v3167
  %v3170 = vmul.f32 %v3163, %v2626
  %v3171 = vadd.f32 %v3169, %v3170
  %v3172 = vld [vmem:[%s5] sm:$0xff]
  %v3173 = vld [vmem:[%s5 + $0x8] sm:$0xff]
  %v3174 = vld [vmem:[%s5 + $0x10] sm:$0xff]
  %v3175 = vld [vmem:[%s5 + $0x18] sm:$0xff]
  %v3176 = vld [vmem:[%s5 + $0x20] sm:$0xff]
  %v3177 = vld [vmem:[%s5 + $0x28] sm:$0xff]
  %v3178 = vld [vmem:[%s5 + $0x30] sm:$0xff]
  %v3179 = vld [vmem:[%s5 + $0x38] sm:$0xff]
  %v3180 = vld [vmem:[%s5 + $0x40] sm:$0xff]
  %v3181 = vld [vmem:[%s5 + $0x48] sm:$0xff]
  %v3182 = vld [vmem:[%s5 + $0x50] sm:$0xff]
  %v3183 = vld [vmem:[%s5 + $0x58] sm:$0xff]
  %v3184 = vld [vmem:[%s5 + $0x60] sm:$0xff]
  %v3185 = vld [vmem:[%s5 + $0x68] sm:$0xff]
  %v3186 = vld [vmem:[%s5 + $0x70] sm:$0xff]
  %v3187 = vld [vmem:[%s5 + $0x78] sm:$0xff]
  %v3188 = vld [vmem:[%s5 + $0x80] sm:$0xff]
  %v3189 = vld [vmem:[%s5 + $0x88] sm:$0xff]
  %v3190 = vld [vmem:[%s5 + $0x90] sm:$0xff]
  %v3191 = vld [vmem:[%s5 + $0x98] sm:$0xff]
  %v3192 = vld [vmem:[%s5 + $0xa0] sm:$0xff]
  %v3193 = vld [vmem:[%s5 + $0xa8] sm:$0xff]
  %v3194 = vld [vmem:[%s5 + $0xb0] sm:$0xff]
  %v3195 = vld [vmem:[%s5 + $0xb8] sm:$0xff]
  %v3196 = vld [vmem:[%s5 + $0xc0] sm:$0xff]
  %v3197 = vld [vmem:[%s5 + $0xc8] sm:$0xff]
  %v3198 = vld [vmem:[%s5 + $0xd0] sm:$0xff]
  %v3199 = vld [vmem:[%s5 + $0xd8] sm:$0xff]
  %v3200 = vld [vmem:[%s5 + $0xe0] sm:$0xff]
  %v3201 = vld [vmem:[%s5 + $0xe8] sm:$0xff]
  %v3202 = vld [vmem:[%s5 + $0xf0] sm:$0xff]
  %v3203 = vld [vmem:[%s5 + $0xf8] sm:$0xff]
  %v3204 = vld [vmem:[%s5 + $0x100] sm:$0xff]
  %v3205 = vld [vmem:[%s5 + $0x108] sm:$0xff]
  %v3206 = vld [vmem:[%s5 + $0x110] sm:$0xff]
  %v3207 = vld [vmem:[%s5 + $0x118] sm:$0xff]
  %v3208 = vld [vmem:[%s5 + $0x120] sm:$0xff]
  %v3209 = vld [vmem:[%s5 + $0x128] sm:$0xff]
  %v3210 = vld [vmem:[%s5 + $0x130] sm:$0xff]
  %v3211 = vld [vmem:[%s5 + $0x138] sm:$0xff]
  %v3212 = vld [vmem:[%s5 + $0x140] sm:$0xff]
  %v3213 = vld [vmem:[%s5 + $0x148] sm:$0xff]
  %v3214 = vld [vmem:[%s5 + $0x150] sm:$0xff]
  %v3215 = vld [vmem:[%s5 + $0x158] sm:$0xff]
  %v3216 = vld [vmem:[%s5 + $0x160] sm:$0xff]
  %v3217 = vld [vmem:[%s5 + $0x168] sm:$0xff]
  %v3218 = vld [vmem:[%s5 + $0x170] sm:$0xff]
  %v3219 = vld [vmem:[%s5 + $0x178] sm:$0xff]
  %v3220 = vld [vmem:[%s5 + $0x180] sm:$0xff]
  %v3221 = vld [vmem:[%s5 + $0x188] sm:$0xff]
  %v3222 = vld [vmem:[%s5 + $0x190] sm:$0xff]
  %v3223 = vld [vmem:[%s5 + $0x198] sm:$0xff]
  %v3224 = vld [vmem:[%s5 + $0x1a0] sm:$0xff]
  %v3225 = vld [vmem:[%s5 + $0x1a8] sm:$0xff]
  %v3226 = vld [vmem:[%s5 + $0x1b0] sm:$0xff]
  %v3227 = vld [vmem:[%s5 + $0x1b8] sm:$0xff]
  %v3228 = vld [vmem:[%s5 + $0x1c0] sm:$0xff]
  %v3229 = vld [vmem:[%s5 + $0x1c8] sm:$0xff]
  %v3230 = vld [vmem:[%s5 + $0x1d0] sm:$0xff]
  %v3231 = vld [vmem:[%s5 + $0x1d8] sm:$0xff]
  %v3232 = vld [vmem:[%s5 + $0x1e0] sm:$0xff]
  %v3233 = vld [vmem:[%s5 + $0x1e8] sm:$0xff]
  %v3234 = vld [vmem:[%s5 + $0x1f0] sm:$0xff]
  %v3235 = vld [vmem:[%s5 + $0x1f8] sm:$0xff]
  %v3236 = vld [vmem:[%s5 + $0x200] sm:$0xff]
  %v3237 = vld [vmem:[%s5 + $0x208] sm:$0xff]
  %v3238 = vld [vmem:[%s5 + $0x210] sm:$0xff]
  %v3239 = vld [vmem:[%s5 + $0x218] sm:$0xff]
  %v3240 = vld [vmem:[%s5 + $0x220] sm:$0xff]
  %v3241 = vld [vmem:[%s5 + $0x228] sm:$0xff]
  %v3242 = vld [vmem:[%s5 + $0x230] sm:$0xff]
  %v3243 = vld [vmem:[%s5 + $0x238] sm:$0xff]
  %v3244 = vld [vmem:[%s5 + $0x240] sm:$0xff]
  %v3245 = vld [vmem:[%s5 + $0x248] sm:$0xff]
  %v3246 = vld [vmem:[%s5 + $0x250] sm:$0xff]
  %v3247 = vld [vmem:[%s5 + $0x258] sm:$0xff]
  %v3248 = vld [vmem:[%s5 + $0x260] sm:$0xff]
  %v3249 = vld [vmem:[%s5 + $0x268] sm:$0xff]
  %v3250 = vld [vmem:[%s5 + $0x270] sm:$0xff]
  %v3251 = vld [vmem:[%s5 + $0x278] sm:$0xff]
  %v3252 = vld [vmem:[%s5 + $0x280] sm:$0xff]
  %v3253 = vld [vmem:[%s5 + $0x288] sm:$0xff]
  %v3254 = vld [vmem:[%s5 + $0x290] sm:$0xff]
  %v3255 = vld [vmem:[%s5 + $0x298] sm:$0xff]
  %v3256 = vld [vmem:[%s5 + $0x2a0] sm:$0xff]
  %v3257 = vld [vmem:[%s5 + $0x2a8] sm:$0xff]
  %v3258 = vld [vmem:[%s5 + $0x2b0] sm:$0xff]
  %v3259 = vld [vmem:[%s5 + $0x2b8] sm:$0xff]
  %v3260 = vld [vmem:[%s5 + $0x2c0] sm:$0xff]
  %v3261 = vld [vmem:[%s5 + $0x2c8] sm:$0xff]
  %v3262 = vld [vmem:[%s5 + $0x2d0] sm:$0xff]
  %v3263 = vld [vmem:[%s5 + $0x2d8] sm:$0xff]
  %v3264 = vld [vmem:[%s5 + $0x2e0] sm:$0xff]
  %v3265 = vld [vmem:[%s5 + $0x2e8] sm:$0xff]
  %v3266 = vld [vmem:[%s5 + $0x2f0] sm:$0xff]
  %v3267 = vld [vmem:[%s5 + $0x2f8] sm:$0xff]
  %3268 = vmatprep.subr.mxu0 %v3173
  %3269 = vmatpush1.msra.mxu0 %v3172
  %3270 = vmatprep.subr.mxu0 %v3179
  %3271 = vmatpush1.msra.mxu0 %v3178
  %3272 = vmatprep.subr.mxu0 %v3185
  %3273 = vmatpush1.msra.mxu0 %v3184
  %3274 = vmatprep.subr.mxu0 %v3191
  %3275 = vmatpush1.msra.mxu0 %v3190
  %3276 = vmatprep.subr.mxu0 %v3197
  %3277 = vmatpush1.msra.mxu0 %v3196
  %3278 = vmatprep.subr.mxu0 %v3203
  %3279 = vmatpush1.msra.mxu0 %v3202
  %3280 = vmatprep.subr.mxu0 %v3209
  %3281 = vmatpush1.msra.mxu0 %v3208
  %3282 = vmatprep.subr.mxu0 %v3215
  %3283 = vmatpush1.msra.mxu0 %v3214
  %3284 = vmatprep.subr.mxu0 %v3221
  %3285 = vmatpush1.msra.mxu0 %v3220
  %3286 = vmatprep.subr.mxu0 %v3227
  %3287 = vmatpush1.msra.mxu0 %v3226
  %3288 = vmatprep.subr.mxu0 %v3233
  %3289 = vmatpush1.msra.mxu0 %v3232
  %3290 = vmatprep.subr.mxu0 %v3239
  %3291 = vmatpush1.msra.mxu0 %v3238
  %3292 = vmatprep.subr.mxu0 %v3245
  %3293 = vmatpush1.msra.mxu0 %v3244
  %3294 = vmatprep.subr.mxu0 %v3251
  %3295 = vmatpush1.msra.mxu0 %v3250
  %3296 = vmatprep.subr.mxu0 %v3257
  %3297 = vmatpush1.msra.mxu0 %v3256
  %3298 = vmatprep.subr.mxu0 %v3263
  %3299 = vmatpush1.msra.mxu0 %v3262
  %3300 = vmatprep.subr.mxu0 0.0
  %3301 = vmatpush1.msra.mxu0 0.0
  %3302 = vmatprep.subr.mxu0 0.0
  %3303 = vmatpush1.msra.mxu0 0.0
  %3304 = vmatprep.subr.mxu0 0.0
  %3305 = vmatpush1.msra.mxu0 0.0
  %3306 = vmatprep.subr.mxu0 0.0
  %3307 = vmatpush1.msra.mxu0 0.0
  %3308 = vmatprep.subr.mxu0 0.0
  %3309 = vmatpush1.msra.mxu0 0.0
  %3310 = vmatprep.subr.mxu0 0.0
  %3311 = vmatpush1.msra.mxu0 0.0
  %3312 = vmatprep.subr.mxu0 0.0
  %3313 = vmatpush1.msra.mxu0 0.0
  %3314 = vmatprep.subr.mxu0 0.0
  %3315 = vmatpush1.msra.mxu0 0.0
  %3316 = vmatprep.subr.mxu0 0.0
  %3317 = vmatpush1.msra.mxu0 0.0
  %3318 = vmatprep.subr.mxu0 0.0
  %3319 = vmatpush1.msra.mxu0 0.0
  %3320 = vmatprep.subr.mxu0 0.0
  %3321 = vmatpush1.msra.mxu0 0.0
  %3322 = vmatprep.subr.mxu0 0.0
  %3323 = vmatpush1.msra.mxu0 0.0
  %3324 = vmatprep.subr.mxu0 0.0
  %3325 = vmatpush1.msra.mxu0 0.0
  %3326 = vmatprep.subr.mxu0 0.0
  %3327 = vmatpush1.msra.mxu0 0.0
  %3328 = vmatprep.subr.mxu0 0.0
  %3329 = vmatpush1.msra.mxu0 0.0
  %3330 = vmatprep.subr.mxu0 0.0
  %3331 = vmatpush1.msra.mxu0 0.0
  %3332 = vmatprep.mubr.f32.mxu0 0.0
  %3333 = vmatmul.mubr.f32.gmra.mrb[0].mxu0 %v3171
  %v3334 = vpop.f32.mrb[0].mxu0
  %v3335 = vadd.f32 0.0, %v3334
  %v3336 = vpop.f32.mrb[0].mxu0
  %v3337 = vadd.f32 0.0, %v3336
  %3338 = vdwg.mxu0
  %3339 = vmatprep.subr.mxu0 %v3175
  %3340 = vmatpush1.msra.mxu0 %v3174
  %3341 = vmatprep.subr.mxu0 %v3181
  %3342 = vmatpush1.msra.mxu0 %v3180
  %3343 = vmatprep.subr.mxu0 %v3187
  %3344 = vmatpush1.msra.mxu0 %v3186
  %3345 = vmatprep.subr.mxu0 %v3193
  %3346 = vmatpush1.msra.mxu0 %v3192
  %3347 = vmatprep.subr.mxu0 %v3199
  %3348 = vmatpush1.msra.mxu0 %v3198
  %3349 = vmatprep.subr.mxu0 %v3205
  %3350 = vmatpush1.msra.mxu0 %v3204
  %3351 = vmatprep.subr.mxu0 %v3211
  %3352 = vmatpush1.msra.mxu0 %v3210
  %3353 = vmatprep.subr.mxu0 %v3217
  %3354 = vmatpush1.msra.mxu0 %v3216
  %3355 = vmatprep.subr.mxu0 %v3223
  %3356 = vmatpush1.msra.mxu0 %v3222
  %3357 = vmatprep.subr.mxu0 %v3229
  %3358 = vmatpush1.msra.mxu0 %v3228
  %3359 = vmatprep.subr.mxu0 %v3235
  %3360 = vmatpush1.msra.mxu0 %v3234
  %3361 = vmatprep.subr.mxu0 %v3241
  %3362 = vmatpush1.msra.mxu0 %v3240
  %3363 = vmatprep.subr.mxu0 %v3247
  %3364 = vmatpush1.msra.mxu0 %v3246
  %3365 = vmatprep.subr.mxu0 %v3253
  %3366 = vmatpush1.msra.mxu0 %v3252
  %3367 = vmatprep.subr.mxu0 %v3259
  %3368 = vmatpush1.msra.mxu0 %v3258
  %3369 = vmatprep.subr.mxu0 %v3265
  %3370 = vmatpush1.msra.mxu0 %v3264
  %3371 = vmatprep.subr.mxu0 0.0
  %3372 = vmatpush1.msra.mxu0 0.0
  %3373 = vmatprep.subr.mxu0 0.0
  %3374 = vmatpush1.msra.mxu0 0.0
  %3375 = vmatprep.subr.mxu0 0.0
  %3376 = vmatpush1.msra.mxu0 0.0
  %3377 = vmatprep.subr.mxu0 0.0
  %3378 = vmatpush1.msra.mxu0 0.0
  %3379 = vmatprep.subr.mxu0 0.0
  %3380 = vmatpush1.msra.mxu0 0.0
  %3381 = vmatprep.subr.mxu0 0.0
  %3382 = vmatpush1.msra.mxu0 0.0
  %3383 = vmatprep.subr.mxu0 0.0
  %3384 = vmatpush1.msra.mxu0 0.0
  %3385 = vmatprep.subr.mxu0 0.0
  %3386 = vmatpush1.msra.mxu0 0.0
  %3387 = vmatprep.subr.mxu0 0.0
  %3388 = vmatpush1.msra.mxu0 0.0
  %3389 = vmatprep.subr.mxu0 0.0
  %3390 = vmatpush1.msra.mxu0 0.0
  %3391 = vmatprep.subr.mxu0 0.0
  %3392 = vmatpush1.msra.mxu0 0.0
  %3393 = vmatprep.subr.mxu0 0.0
  %3394 = vmatpush1.msra.mxu0 0.0
  %3395 = vmatprep.subr.mxu0 0.0
  %3396 = vmatpush1.msra.mxu0 0.0
  %3397 = vmatprep.subr.mxu0 0.0
  %3398 = vmatpush1.msra.mxu0 0.0
  %3399 = vmatprep.subr.mxu0 0.0
  %3400 = vmatpush1.msra.mxu0 0.0
  %3401 = vmatprep.subr.mxu0 0.0
  %3402 = vmatpush1.msra.mxu0 0.0
  %3403 = vmatprep.mubr.f32.mxu0 0.0
  %3404 = vmatmul.mubr.f32.gmra.mrb[0].mxu0 %v3171
  %v3405 = vpop.f32.mrb[0].mxu0
  %v3406 = vadd.f32 0.0, %v3405
  %v3407 = vpop.f32.mrb[0].mxu0
  %v3408 = vadd.f32 0.0, %v3407
  %3409 = vdwg.mxu0
  %3410 = vmatprep.subr.mxu0 %v3177
  %3411 = vmatpush1.msra.mxu0 %v3176
  %3412 = vmatprep.subr.mxu0 %v3183
  %3413 = vmatpush1.msra.mxu0 %v3182
  %3414 = vmatprep.subr.mxu0 %v3189
  %3415 = vmatpush1.msra.mxu0 %v3188
  %3416 = vmatprep.subr.mxu0 %v3195
  %3417 = vmatpush1.msra.mxu0 %v3194
  %3418 = vmatprep.subr.mxu0 %v3201
  %3419 = vmatpush1.msra.mxu0 %v3200
  %3420 = vmatprep.subr.mxu0 %v3207
  %3421 = vmatpush1.msra.mxu0 %v3206
  %3422 = vmatprep.subr.mxu0 %v3213
  %3423 = vmatpush1.msra.mxu0 %v3212
  %3424 = vmatprep.subr.mxu0 %v3219
  %3425 = vmatpush1.msra.mxu0 %v3218
  %3426 = vmatprep.subr.mxu0 %v3225
  %3427 = vmatpush1.msra.mxu0 %v3224
  %3428 = vmatprep.subr.mxu0 %v3231
  %3429 = vmatpush1.msra.mxu0 %v3230
  %3430 = vmatprep.subr.mxu0 %v3237
  %3431 = vmatpush1.msra.mxu0 %v3236
  %3432 = vmatprep.subr.mxu0 %v3243
  %3433 = vmatpush1.msra.mxu0 %v3242
  %3434 = vmatprep.subr.mxu0 %v3249
  %3435 = vmatpush1.msra.mxu0 %v3248
  %3436 = vmatprep.subr.mxu0 %v3255
  %3437 = vmatpush1.msra.mxu0 %v3254
  %3438 = vmatprep.subr.mxu0 %v3261
  %3439 = vmatpush1.msra.mxu0 %v3260
  %3440 = vmatprep.subr.mxu0 %v3267
  %3441 = vmatpush1.msra.mxu0 %v3266
  %3442 = vmatprep.subr.mxu0 0.0
  %3443 = vmatpush1.msra.mxu0 0.0
  %3444 = vmatprep.subr.mxu0 0.0
  %3445 = vmatpush1.msra.mxu0 0.0
  %3446 = vmatprep.subr.mxu0 0.0
  %3447 = vmatpush1.msra.mxu0 0.0
  %3448 = vmatprep.subr.mxu0 0.0
  %3449 = vmatpush1.msra.mxu0 0.0
  %3450 = vmatprep.subr.mxu0 0.0
  %3451 = vmatpush1.msra.mxu0 0.0
  %3452 = vmatprep.subr.mxu0 0.0
  %3453 = vmatpush1.msra.mxu0 0.0
  %3454 = vmatprep.subr.mxu0 0.0
  %3455 = vmatpush1.msra.mxu0 0.0
  %3456 = vmatprep.subr.mxu0 0.0
  %3457 = vmatpush1.msra.mxu0 0.0
  %3458 = vmatprep.subr.mxu0 0.0
  %3459 = vmatpush1.msra.mxu0 0.0
  %3460 = vmatprep.subr.mxu0 0.0
  %3461 = vmatpush1.msra.mxu0 0.0
  %3462 = vmatprep.subr.mxu0 0.0
  %3463 = vmatpush1.msra.mxu0 0.0
  %3464 = vmatprep.subr.mxu0 0.0
  %3465 = vmatpush1.msra.mxu0 0.0
  %3466 = vmatprep.subr.mxu0 0.0
  %3467 = vmatpush1.msra.mxu0 0.0
  %3468 = vmatprep.subr.mxu0 0.0
  %3469 = vmatpush1.msra.mxu0 0.0
  %3470 = vmatprep.subr.mxu0 0.0
  %3471 = vmatpush1.msra.mxu0 0.0
  %3472 = vmatprep.subr.mxu0 0.0
  %3473 = vmatpush1.msra.mxu0 0.0
  %3474 = vmatprep.mubr.f32.mxu0 0.0
  %3475 = vmatmul.mubr.f32.gmra.mrb[0].mxu0 %v3171
  %v3476 = vpop.f32.mrb[0].mxu0
  %v3477 = vadd.f32 0.0, %v3476
  %v3478 = vpop.f32.mrb[0].mxu0
  %v3479 = vadd.f32 0.0, %v3478
  %3480 = vdwg.mxu0
  %v3481 = vld [vmem:[%s6] sm:$0xff]
  %v3482 = vld [vmem:[%s6 + $0x8] sm:$0xff]
  %v3483 = vld [vmem:[%s6 + $0x10] sm:$0xff]
  %v3484 = vld [vmem:[%s6 + $0x18] sm:$0xff]
  %v3485 = vld [vmem:[%s6 + $0x20] sm:$0xff]
  %v3486 = vld [vmem:[%s6 + $0x28] sm:$0xff]
  %v3487 = vld [vmem:[%s6 + $0x30] sm:$0xff]
  %v3488 = vld [vmem:[%s6 + $0x38] sm:$0xff]
  %v3489 = vld [vmem:[%s6 + $0x40] sm:$0xff]
  %v3490 = vld [vmem:[%s6 + $0x48] sm:$0xff]
  %v3491 = vld [vmem:[%s6 + $0x50] sm:$0xff]
  %v3492 = vld [vmem:[%s6 + $0x58] sm:$0xff]
  %v3493 = vld [vmem:[%s6 + $0x60] sm:$0xff]
  %v3494 = vld [vmem:[%s6 + $0x68] sm:$0xff]
  %v3495 = vld [vmem:[%s6 + $0x70] sm:$0xff]
  %v3496 = vld [vmem:[%s6 + $0x78] sm:$0xff]
  %v3497 = vld [vmem:[%s6 + $0x80] sm:$0xff]
  %v3498 = vld [vmem:[%s6 + $0x88] sm:$0xff]
  %v3499 = vld [vmem:[%s6 + $0x90] sm:$0xff]
  %v3500 = vld [vmem:[%s6 + $0x98] sm:$0xff]
  %v3501 = vld [vmem:[%s6 + $0xa0] sm:$0xff]
  %v3502 = vld [vmem:[%s6 + $0xa8] sm:$0xff]
  %v3503 = vld [vmem:[%s6 + $0xb0] sm:$0xff]
  %v3504 = vld [vmem:[%s6 + $0xb8] sm:$0xff]
  %v3505 = vld [vmem:[%s6 + $0xc0] sm:$0xff]
  %v3506 = vld [vmem:[%s6 + $0xc8] sm:$0xff]
  %v3507 = vld [vmem:[%s6 + $0xd0] sm:$0xff]
  %v3508 = vld [vmem:[%s6 + $0xd8] sm:$0xff]
  %v3509 = vld [vmem:[%s6 + $0xe0] sm:$0xff]
  %v3510 = vld [vmem:[%s6 + $0xe8] sm:$0xff]
  %v3511 = vld [vmem:[%s6 + $0xf0] sm:$0xff]
  %v3512 = vld [vmem:[%s6 + $0xf8] sm:$0xff]
  %v3513 = vld [vmem:[%s6 + $0x100] sm:$0xff]
  %v3514 = vld [vmem:[%s6 + $0x108] sm:$0xff]
  %v3515 = vld [vmem:[%s6 + $0x110] sm:$0xff]
  %v3516 = vld [vmem:[%s6 + $0x118] sm:$0xff]
  %v3517 = vld [vmem:[%s6 + $0x120] sm:$0xff]
  %v3518 = vld [vmem:[%s6 + $0x128] sm:$0xff]
  %v3519 = vld [vmem:[%s6 + $0x130] sm:$0xff]
  %v3520 = vld [vmem:[%s6 + $0x138] sm:$0xff]
  %v3521 = vld [vmem:[%s6 + $0x140] sm:$0xff]
  %v3522 = vld [vmem:[%s6 + $0x148] sm:$0xff]
  %v3523 = vld [vmem:[%s6 + $0x150] sm:$0xff]
  %v3524 = vld [vmem:[%s6 + $0x158] sm:$0xff]
  %v3525 = vld [vmem:[%s6 + $0x160] sm:$0xff]
  %v3526 = vld [vmem:[%s6 + $0x168] sm:$0xff]
  %v3527 = vld [vmem:[%s6 + $0x170] sm:$0xff]
  %v3528 = vld [vmem:[%s6 + $0x178] sm:$0xff]
  %3529 = vmatprep.subr.mxu0 %v3482
  %3530 = vmatpush1.msra.mxu0 %v3481
  %3531 = vmatprep.subr.mxu0 %v3485
  %3532 = vmatpush1.msra.mxu0 %v3484
  %3533 = vmatprep.subr.mxu0 %v3488
  %3534 = vmatpush1.msra.mxu0 %v3487
  %3535 = vmatprep.subr.mxu0 %v3491
  %3536 = vmatpush1.msra.mxu0 %v3490
  %3537 = vmatprep.subr.mxu0 %v3494
  %3538 = vmatpush1.msra.mxu0 %v3493
  %3539 = vmatprep.subr.mxu0 %v3497
  %3540 = vmatpush1.msra.mxu0 %v3496
  %3541 = vmatprep.subr.mxu0 %v3500
  %3542 = vmatpush1.msra.mxu0 %v3499
  %3543 = vmatprep.subr.mxu0 %v3503
  %3544 = vmatpush1.msra.mxu0 %v3502
  %3545 = vmatprep.subr.mxu0 %v3506
  %3546 = vmatpush1.msra.mxu0 %v3505
  %3547 = vmatprep.subr.mxu0 %v3509
  %3548 = vmatpush1.msra.mxu0 %v3508
  %3549 = vmatprep.subr.mxu0 %v3512
  %3550 = vmatpush1.msra.mxu0 %v3511
  %3551 = vmatprep.subr.mxu0 %v3515
  %3552 = vmatpush1.msra.mxu0 %v3514
  %3553 = vmatprep.subr.mxu0 %v3518
  %3554 = vmatpush1.msra.mxu0 %v3517
  %3555 = vmatprep.subr.mxu0 %v3521
  %3556 = vmatpush1.msra.mxu0 %v3520
  %3557 = vmatprep.subr.mxu0 %v3524
  %3558 = vmatpush1.msra.mxu0 %v3523
  %3559 = vmatprep.subr.mxu0 %v3527
  %3560 = vmatpush1.msra.mxu0 %v3526
  %3561 = vmatprep.subr.mxu0 0.0
  %3562 = vmatpush1.msra.mxu0 0.0
  %3563 = vmatprep.subr.mxu0 0.0
  %3564 = vmatpush1.msra.mxu0 0.0
  %3565 = vmatprep.subr.mxu0 0.0
  %3566 = vmatpush1.msra.mxu0 0.0
  %3567 = vmatprep.subr.mxu0 0.0
  %3568 = vmatpush1.msra.mxu0 0.0
  %3569 = vmatprep.subr.mxu0 0.0
  %3570 = vmatpush1.msra.mxu0 0.0
  %3571 = vmatprep.subr.mxu0 0.0
  %3572 = vmatpush1.msra.mxu0 0.0
  %3573 = vmatprep.subr.mxu0 0.0
  %3574 = vmatpush1.msra.mxu0 0.0
  %3575 = vmatprep.subr.mxu0 0.0
  %3576 = vmatpush1.msra.mxu0 0.0
  %3577 = vmatprep.subr.mxu0 0.0
  %3578 = vmatpush1.msra.mxu0 0.0
  %3579 = vmatprep.subr.mxu0 0.0
  %3580 = vmatpush1.msra.mxu0 0.0
  %3581 = vmatprep.subr.mxu0 0.0
  %3582 = vmatpush1.msra.mxu0 0.0
  %3583 = vmatprep.subr.mxu0 0.0
  %3584 = vmatpush1.msra.mxu0 0.0
  %3585 = vmatprep.subr.mxu0 0.0
  %3586 = vmatpush1.msra.mxu0 0.0
  %3587 = vmatprep.subr.mxu0 0.0
  %3588 = vmatpush1.msra.mxu0 0.0
  %3589 = vmatprep.subr.mxu0 0.0
  %3590 = vmatpush1.msra.mxu0 0.0
  %3591 = vmatprep.subr.mxu0 0.0
  %3592 = vmatpush1.msra.mxu0 0.0
  %3593 = vmatprep.mubr.f32.mxu0 0.0
  %3594 = vmatmul.mubr.f32.gmra.mrb[0].mxu0 %v3145
  %v3595 = vpop.f32.mrb[0].mxu0
  %v3596 = vadd.f32 0.0, %v3595
  %v3597 = vpop.f32.mrb[0].mxu0
  %v3598 = vadd.f32 0.0, %v3597
  %3599 = vdwg.mxu0
  %3600 = vmatprep.subr.mxu0 0.0
  %3601 = vmatpush1.msra.mxu0 %v3483
  %3602 = vmatprep.subr.mxu0 0.0
  %3603 = vmatpush1.msra.mxu0 %v3486
  %3604 = vmatprep.subr.mxu0 0.0
  %3605 = vmatpush1.msra.mxu0 %v3489
  %3606 = vmatprep.subr.mxu0 0.0
  %3607 = vmatpush1.msra.mxu0 %v3492
  %3608 = vmatprep.subr.mxu0 0.0
  %3609 = vmatpush1.msra.mxu0 %v3495
  %3610 = vmatprep.subr.mxu0 0.0
  %3611 = vmatpush1.msra.mxu0 %v3498
  %3612 = vmatprep.subr.mxu0 0.0
  %3613 = vmatpush1.msra.mxu0 %v3501
  %3614 = vmatprep.subr.mxu0 0.0
  %3615 = vmatpush1.msra.mxu0 %v3504
  %3616 = vmatprep.subr.mxu0 0.0
  %3617 = vmatpush1.msra.mxu0 %v3507
  %3618 = vmatprep.subr.mxu0 0.0
  %3619 = vmatpush1.msra.mxu0 %v3510
  %3620 = vmatprep.subr.mxu0 0.0
  %3621 = vmatpush1.msra.mxu0 %v3513
  %3622 = vmatprep.subr.mxu0 0.0
  %3623 = vmatpush1.msra.mxu0 %v3516
  %3624 = vmatprep.subr.mxu0 0.0
  %3625 = vmatpush1.msra.mxu0 %v3519
  %3626 = vmatprep.subr.mxu0 0.0
  %3627 = vmatpush1.msra.mxu0 %v3522
  %3628 = vmatprep.subr.mxu0 0.0
  %3629 = vmatpush1.msra.mxu0 %v3525
  %3630 = vmatprep.subr.mxu0 0.0
  %3631 = vmatpush1.msra.mxu0 %v3528
  %3632 = vmatprep.subr.mxu0 0.0
  %3633 = vmatpush1.msra.mxu0 0.0
  %3634 = vmatprep.subr.mxu0 0.0
  %3635 = vmatpush1.msra.mxu0 0.0
  %3636 = vmatprep.subr.mxu0 0.0
  %3637 = vmatpush1.msra.mxu0 0.0
  %3638 = vmatprep.subr.mxu0 0.0
  %3639 = vmatpush1.msra.mxu0 0.0
  %3640 = vmatprep.subr.mxu0 0.0
  %3641 = vmatpush1.msra.mxu0 0.0
  %3642 = vmatprep.subr.mxu0 0.0
  %3643 = vmatpush1.msra.mxu0 0.0
  %3644 = vmatprep.subr.mxu0 0.0
  %3645 = vmatpush1.msra.mxu0 0.0
  %3646 = vmatprep.subr.mxu0 0.0
  %3647 = vmatpush1.msra.mxu0 0.0
  %3648 = vmatprep.subr.mxu0 0.0
  %3649 = vmatpush1.msra.mxu0 0.0
  %3650 = vmatprep.subr.mxu0 0.0
  %3651 = vmatpush1.msra.mxu0 0.0
  %3652 = vmatprep.subr.mxu0 0.0
  %3653 = vmatpush1.msra.mxu0 0.0
  %3654 = vmatprep.subr.mxu0 0.0
  %3655 = vmatpush1.msra.mxu0 0.0
  %3656 = vmatprep.subr.mxu0 0.0
  %3657 = vmatpush1.msra.mxu0 0.0
  %3658 = vmatprep.subr.mxu0 0.0
  %3659 = vmatpush1.msra.mxu0 0.0
  %3660 = vmatprep.subr.mxu0 0.0
  %3661 = vmatpush1.msra.mxu0 0.0
  %3662 = vmatprep.subr.mxu0 0.0
  %3663 = vmatpush1.msra.mxu0 0.0
  %3664 = vmatprep.mubr.f32.mxu0 0.0
  %3665 = vmatmul.mubr.f32.gmra.mrb[0].mxu0 %v3145
  %v3666 = vpop.f32.mrb[0].mxu0
  %v3667 = vadd.f32 0.0, %v3666
  %v3668 = vpop.f32.mrb[0].mxu0
  %3669 = vdwg.mxu0
  %v3670 = vadd.f32 %v3408, %v3596
  %v3671 = vadd.f32 %v3477, %v3598
  %v3672 = vadd.f32 %v3670, %v211
  %v3673 = vadd.f32 %v3671, %v215
  %v3674 = vmul.f32 %v3672, 0.5
  %v3675 = vmul.f32 %v3673, 0.5
  %v3676 = vtanh.pop %v3674
  %v3677 = vtanh.pop %v3675
  %v3678 = vmul.f32 %v3676, 0.5
  %v3679 = vmul.f32 %v3677, 0.5
  %v3680 = vadd.f32 %v3678, 0.5
  %v3681 = vadd.f32 %v3679, 0.5
  %v3682 = vadd.f32 %v3479, %v223
  %v3683 = vadd.f32 %v3667, %v230
  %v3684 = vmul.f32 %v3680, %v3683
  %v3685 = vadd.f32 %v3682, %v3684
  %v3686 = vtanh.pop %v3685
  %v3687 = vsub.f32 1.0, %v3681
  %v3688 = vmul.f32 %v3687, %v3686
  %v3689 = vmul.f32 %v3681, %v3145
  %v3690 = vadd.f32 %v3688, %v3689
  %s3691 = scalar_lea.vmem [#allocation3], 40
  %3692 = vst [vmem:[%s3691] sm:$0xff] %v3690
  %s3693 = smul.u32 6, 3
  %s3694 = smul.addr %s3693, 8
  %s3695 = scalar_lea.vmem [#allocation2], %s3694
  %v3696 = vld [vmem:[%s3695] sm:$0xff]
  %v3697 = vld [vmem:[%s3695 + $0x8] sm:$0xff]
  %v3698 = vld [vmem:[%s3695 + $0x10] sm:$0xff]
  %v3699 = vadd.f32 %v3696, %v3335
  %v3700 = vmul.f32 %v3699, 0.5
  %v3701 = vtanh.pop %v3700
  %v3702 = vmul.f32 %v3701, 0.5
  %v3703 = vadd.f32 %v3702, 0.5
  %v3704 = vadd.f32 %v3697, %v3337
  %v3705 = vmul.f32 %v3704, 0.5
  %v3706 = vtanh.pop %v3705
  %v3707 = vmul.f32 %v3706, 0.5
  %v3708 = vadd.f32 %v3707, 0.5
  %v3709 = vadd.f32 %v3406, %v204
  %v3710 = vmul.f32 %v3703, %v3709
  %v3711 = vadd.f32 %v3698, %v3710
  %v3712 = vtanh.pop %v3711
  %v3713 = vsub.f32 1.0, %v3708
  %v3714 = vmul.f32 %v3713, %v3712
  %v3715 = vmul.f32 %v3708, %v3171
  %v3716 = vadd.f32 %v3714, %v3715
  %v3717 = vld [vmem:[%s5] sm:$0xff]
  %v3718 = vld [vmem:[%s5 + $0x8] sm:$0xff]
  %v3719 = vld [vmem:[%s5 + $0x10] sm:$0xff]
  %v3720 = vld [vmem:[%s5 + $0x18] sm:$0xff]
  %v3721 = vld [vmem:[%s5 + $0x20] sm:$0xff]
  %v3722 = vld [vmem:[%s5 + $0x28] sm:$0xff]
  %v3723 = vld [vmem:[%s5 + $0x30] sm:$0xff]
  %v3724 = vld [vmem:[%s5 + $0x38] sm:$0xff]
  %v3725 = vld [vmem:[%s5 + $0x40] sm:$0xff]
  %v3726 = vld [vmem:[%s5 + $0x48] sm:$0xff]
  %v3727 = vld [vmem:[%s5 + $0x50] sm:$0xff]
  %v3728 = vld [vmem:[%s5 + $0x58] sm:$0xff]
  %v3729 = vld [vmem:[%s5 + $0x60] sm:$0xff]
  %v3730 = vld [vmem:[%s5 + $0x68] sm:$0xff]
  %v3731 = vld [vmem:[%s5 + $0x70] sm:$0xff]
  %v3732 = vld [vmem:[%s5 + $0x78] sm:$0xff]
  %v3733 = vld [vmem:[%s5 + $0x80] sm:$0xff]
  %v3734 = vld [vmem:[%s5 + $0x88] sm:$0xff]
  %v3735 = vld [vmem:[%s5 + $0x90] sm:$0xff]
  %v3736 = vld [vmem:[%s5 + $0x98] sm:$0xff]
  %v3737 = vld [vmem:[%s5 + $0xa0] sm:$0xff]
  %v3738 = vld [vmem:[%s5 + $0xa8] sm:$0xff]
  %v3739 = vld [vmem:[%s5 + $0xb0] sm:$0xff]
  %v3740 = vld [vmem:[%s5 + $0xb8] sm:$0xff]
  %v3741 = vld [vmem:[%s5 + $0xc0] sm:$0xff]
  %v3742 = vld [vmem:[%s5 + $0xc8] sm:$0xff]
  %v3743 = vld [vmem:[%s5 + $0xd0] sm:$0xff]
  %v3744 = vld [vmem:[%s5 + $0xd8] sm:$0xff]
  %v3745 = vld [vmem:[%s5 + $0xe0] sm:$0xff]
  %v3746 = vld [vmem:[%s5 + $0xe8] sm:$0xff]
  %v3747 = vld [vmem:[%s5 + $0xf0] sm:$0xff]
  %v3748 = vld [vmem:[%s5 + $0xf8] sm:$0xff]
  %v3749 = vld [vmem:[%s5 + $0x100] sm:$0xff]
  %v3750 = vld [vmem:[%s5 + $0x108] sm:$0xff]
  %v3751 = vld [vmem:[%s5 + $0x110] sm:$0xff]
  %v3752 = vld [vmem:[%s5 + $0x118] sm:$0xff]
  %v3753 = vld [vmem:[%s5 + $0x120] sm:$0xff]
  %v3754 = vld [vmem:[%s5 + $0x128] sm:$0xff]
  %v3755 = vld [vmem:[%s5 + $0x130] sm:$0xff]
  %v3756 = vld [vmem:[%s5 + $0x138] sm:$0xff]
  %v3757 = vld [vmem:[%s5 + $0x140] sm:$0xff]
  %v3758 = vld [vmem:[%s5 + $0x148] sm:$0xff]
  %v3759 = vld [vmem:[%s5 + $0x150] sm:$0xff]
  %v3760 = vld [vmem:[%s5 + $0x158] sm:$0xff]
  %v3761 = vld [vmem:[%s5 + $0x160] sm:$0xff]
  %v3762 = vld [vmem:[%s5 + $0x168] sm:$0xff]
  %v3763 = vld [vmem:[%s5 + $0x170] sm:$0xff]
  %v3764 = vld [vmem:[%s5 + $0x178] sm:$0xff]
  %v3765 = vld [vmem:[%s5 + $0x180] sm:$0xff]
  %v3766 = vld [vmem:[%s5 + $0x188] sm:$0xff]
  %v3767 = vld [vmem:[%s5 + $0x190] sm:$0xff]
  %v3768 = vld [vmem:[%s5 + $0x198] sm:$0xff]
  %v3769 = vld [vmem:[%s5 + $0x1a0] sm:$0xff]
  %v3770 = vld [vmem:[%s5 + $0x1a8] sm:$0xff]
  %v3771 = vld [vmem:[%s5 + $0x1b0] sm:$0xff]
  %v3772 = vld [vmem:[%s5 + $0x1b8] sm:$0xff]
  %v3773 = vld [vmem:[%s5 + $0x1c0] sm:$0xff]
  %v3774 = vld [vmem:[%s5 + $0x1c8] sm:$0xff]
  %v3775 = vld [vmem:[%s5 + $0x1d0] sm:$0xff]
  %v3776 = vld [vmem:[%s5 + $0x1d8] sm:$0xff]
  %v3777 = vld [vmem:[%s5 + $0x1e0] sm:$0xff]
  %v3778 = vld [vmem:[%s5 + $0x1e8] sm:$0xff]
  %v3779 = vld [vmem:[%s5 + $0x1f0] sm:$0xff]
  %v3780 = vld [vmem:[%s5 + $0x1f8] sm:$0xff]
  %v3781 = vld [vmem:[%s5 + $0x200] sm:$0xff]
  %v3782 = vld [vmem:[%s5 + $0x208] sm:$0xff]
  %v3783 = vld [vmem:[%s5 + $0x210] sm:$0xff]
  %v3784 = vld [vmem:[%s5 + $0x218] sm:$0xff]
  %v3785 = vld [vmem:[%s5 + $0x220] sm:$0xff]
  %v3786 = vld [vmem:[%s5 + $0x228] sm:$0xff]
  %v3787 = vld [vmem:[%s5 + $0x230] sm:$0xff]
  %v3788 = vld [vmem:[%s5 + $0x238] sm:$0xff]
  %v3789 = vld [vmem:[%s5 + $0x240] sm:$0xff]
  %v3790 = vld [vmem:[%s5 + $0x248] sm:$0xff]
  %v3791 = vld [vmem:[%s5 + $0x250] sm:$0xff]
  %v3792 = vld [vmem:[%s5 + $0x258] sm:$0xff]
  %v3793 = vld [vmem:[%s5 + $0x260] sm:$0xff]
  %v3794 = vld [vmem:[%s5 + $0x268] sm:$0xff]
  %v3795 = vld [vmem:[%s5 + $0x270] sm:$0xff]
  %v3796 = vld [vmem:[%s5 + $0x278] sm:$0xff]
  %v3797 = vld [vmem:[%s5 + $0x280] sm:$0xff]
  %v3798 = vld [vmem:[%s5 + $0x288] sm:$0xff]
  %v3799 = vld [vmem:[%s5 + $0x290] sm:$0xff]
  %v3800 = vld [vmem:[%s5 + $0x298] sm:$0xff]
  %v3801 = vld [vmem:[%s5 + $0x2a0] sm:$0xff]
  %v3802 = vld [vmem:[%s5 + $0x2a8] sm:$0xff]
  %v3803 = vld [vmem:[%s5 + $0x2b0] sm:$0xff]
  %v3804 = vld [vmem:[%s5 + $0x2b8] sm:$0xff]
  %v3805 = vld [vmem:[%s5 + $0x2c0] sm:$0xff]
  %v3806 = vld [vmem:[%s5 + $0x2c8] sm:$0xff]
  %v3807 = vld [vmem:[%s5 + $0x2d0] sm:$0xff]
  %v3808 = vld [vmem:[%s5 + $0x2d8] sm:$0xff]
  %v3809 = vld [vmem:[%s5 + $0x2e0] sm:$0xff]
  %v3810 = vld [vmem:[%s5 + $0x2e8] sm:$0xff]
  %v3811 = vld [vmem:[%s5 + $0x2f0] sm:$0xff]
  %v3812 = vld [vmem:[%s5 + $0x2f8] sm:$0xff]
  %3813 = vmatprep.subr.mxu0 %v3718
  %3814 = vmatpush1.msra.mxu0 %v3717
  %3815 = vmatprep.subr.mxu0 %v3724
  %3816 = vmatpush1.msra.mxu0 %v3723
  %3817 = vmatprep.subr.mxu0 %v3730
  %3818 = vmatpush1.msra.mxu0 %v3729
  %3819 = vmatprep.subr.mxu0 %v3736
  %3820 = vmatpush1.msra.mxu0 %v3735
  %3821 = vmatprep.subr.mxu0 %v3742
  %3822 = vmatpush1.msra.mxu0 %v3741
  %3823 = vmatprep.subr.mxu0 %v3748
  %3824 = vmatpush1.msra.mxu0 %v3747
  %3825 = vmatprep.subr.mxu0 %v3754
  %3826 = vmatpush1.msra.mxu0 %v3753
  %3827 = vmatprep.subr.mxu0 %v3760
  %3828 = vmatpush1.msra.mxu0 %v3759
  %3829 = vmatprep.subr.mxu0 %v3766
  %3830 = vmatpush1.msra.mxu0 %v3765
  %3831 = vmatprep.subr.mxu0 %v3772
  %3832 = vmatpush1.msra.mxu0 %v3771
  %3833 = vmatprep.subr.mxu0 %v3778
  %3834 = vmatpush1.msra.mxu0 %v3777
  %3835 = vmatprep.subr.mxu0 %v3784
  %3836 = vmatpush1.msra.mxu0 %v3783
  %3837 = vmatprep.subr.mxu0 %v3790
  %3838 = vmatpush1.msra.mxu0 %v3789
  %3839 = vmatprep.subr.mxu0 %v3796
  %3840 = vmatpush1.msra.mxu0 %v3795
  %3841 = vmatprep.subr.mxu0 %v3802
  %3842 = vmatpush1.msra.mxu0 %v3801
  %3843 = vmatprep.subr.mxu0 %v3808
  %3844 = vmatpush1.msra.mxu0 %v3807
  %3845 = vmatprep.subr.mxu0 0.0
  %3846 = vmatpush1.msra.mxu0 0.0
  %3847 = vmatprep.subr.mxu0 0.0
  %3848 = vmatpush1.msra.mxu0 0.0
  %3849 = vmatprep.subr.mxu0 0.0
  %3850 = vmatpush1.msra.mxu0 0.0
  %3851 = vmatprep.subr.mxu0 0.0
  %3852 = vmatpush1.msra.mxu0 0.0
  %3853 = vmatprep.subr.mxu0 0.0
  %3854 = vmatpush1.msra.mxu0 0.0
  %3855 = vmatprep.subr.mxu0 0.0
  %3856 = vmatpush1.msra.mxu0 0.0
  %3857 = vmatprep.subr.mxu0 0.0
  %3858 = vmatpush1.msra.mxu0 0.0
  %3859 = vmatprep.subr.mxu0 0.0
  %3860 = vmatpush1.msra.mxu0 0.0
  %3861 = vmatprep.subr.mxu0 0.0
  %3862 = vmatpush1.msra.mxu0 0.0
  %3863 = vmatprep.subr.mxu0 0.0
  %3864 = vmatpush1.msra.mxu0 0.0
  %3865 = vmatprep.subr.mxu0 0.0
  %3866 = vmatpush1.msra.mxu0 0.0
  %3867 = vmatprep.subr.mxu0 0.0
  %3868 = vmatpush1.msra.mxu0 0.0
  %3869 = vmatprep.subr.mxu0 0.0
  %3870 = vmatpush1.msra.mxu0 0.0
  %3871 = vmatprep.subr.mxu0 0.0
  %3872 = vmatpush1.msra.mxu0 0.0
  %3873 = vmatprep.subr.mxu0 0.0
  %3874 = vmatpush1.msra.mxu0 0.0
  %3875 = vmatprep.subr.mxu0 0.0
  %3876 = vmatpush1.msra.mxu0 0.0
  %3877 = vmatprep.mubr.f32.mxu0 0.0
  %3878 = vmatmul.mubr.f32.gmra.mrb[0].mxu0 %v3716
  %v3879 = vpop.f32.mrb[0].mxu0
  %v3880 = vadd.f32 0.0, %v3879
  %v3881 = vpop.f32.mrb[0].mxu0
  %v3882 = vadd.f32 0.0, %v3881
  %3883 = vdwg.mxu0
  %3884 = vmatprep.subr.mxu0 %v3720
  %3885 = vmatpush1.msra.mxu0 %v3719
  %3886 = vmatprep.subr.mxu0 %v3726
  %3887 = vmatpush1.msra.mxu0 %v3725
  %3888 = vmatprep.subr.mxu0 %v3732
  %3889 = vmatpush1.msra.mxu0 %v3731
  %3890 = vmatprep.subr.mxu0 %v3738
  %3891 = vmatpush1.msra.mxu0 %v3737
  %3892 = vmatprep.subr.mxu0 %v3744
  %3893 = vmatpush1.msra.mxu0 %v3743
  %3894 = vmatprep.subr.mxu0 %v3750
  %3895 = vmatpush1.msra.mxu0 %v3749
  %3896 = vmatprep.subr.mxu0 %v3756
  %3897 = vmatpush1.msra.mxu0 %v3755
  %3898 = vmatprep.subr.mxu0 %v3762
  %3899 = vmatpush1.msra.mxu0 %v3761
  %3900 = vmatprep.subr.mxu0 %v3768
  %3901 = vmatpush1.msra.mxu0 %v3767
  %3902 = vmatprep.subr.mxu0 %v3774
  %3903 = vmatpush1.msra.mxu0 %v3773
  %3904 = vmatprep.subr.mxu0 %v3780
  %3905 = vmatpush1.msra.mxu0 %v3779
  %3906 = vmatprep.subr.mxu0 %v3786
  %3907 = vmatpush1.msra.mxu0 %v3785
  %3908 = vmatprep.subr.mxu0 %v3792
  %3909 = vmatpush1.msra.mxu0 %v3791
  %3910 = vmatprep.subr.mxu0 %v3798
  %3911 = vmatpush1.msra.mxu0 %v3797
  %3912 = vmatprep.subr.mxu0 %v3804
  %3913 = vmatpush1.msra.mxu0 %v3803
  %3914 = vmatprep.subr.mxu0 %v3810
  %3915 = vmatpush1.msra.mxu0 %v3809
  %3916 = vmatprep.subr.mxu0 0.0
  %3917 = vmatpush1.msra.mxu0 0.0
  %3918 = vmatprep.subr.mxu0 0.0
  %3919 = vmatpush1.msra.mxu0 0.0
  %3920 = vmatprep.subr.mxu0 0.0
  %3921 = vmatpush1.msra.mxu0 0.0
  %3922 = vmatprep.subr.mxu0 0.0
  %3923 = vmatpush1.msra.mxu0 0.0
  %3924 = vmatprep.subr.mxu0 0.0
  %3925 = vmatpush1.msra.mxu0 0.0
  %3926 = vmatprep.subr.mxu0 0.0
  %3927 = vmatpush1.msra.mxu0 0.0
  %3928 = vmatprep.subr.mxu0 0.0
  %3929 = vmatpush1.msra.mxu0 0.0
  %3930 = vmatprep.subr.mxu0 0.0
  %3931 = vmatpush1.msra.mxu0 0.0
  %3932 = vmatprep.subr.mxu0 0.0
  %3933 = vmatpush1.msra.mxu0 0.0
  %3934 = vmatprep.subr.mxu0 0.0
  %3935 = vmatpush1.msra.mxu0 0.0
  %3936 = vmatprep.subr.mxu0 0.0
  %3937 = vmatpush1.msra.mxu0 0.0
  %3938 = vmatprep.subr.mxu0 0.0
  %3939 = vmatpush1.msra.mxu0 0.0
  %3940 = vmatprep.subr.mxu0 0.0
  %3941 = vmatpush1.msra.mxu0 0.0
  %3942 = vmatprep.subr.mxu0 0.0
  %3943 = vmatpush1.msra.mxu0 0.0
  %3944 = vmatprep.subr.mxu0 0.0
  %3945 = vmatpush1.msra.mxu0 0.0
  %3946 = vmatprep.subr.mxu0 0.0
  %3947 = vmatpush1.msra.mxu0 0.0
  %3948 = vmatprep.mubr.f32.mxu0 0.0
  %3949 = vmatmul.mubr.f32.gmra.mrb[0].mxu0 %v3716
  %v3950 = vpop.f32.mrb[0].mxu0
  %v3951 = vadd.f32 0.0, %v3950
  %v3952 = vpop.f32.mrb[0].mxu0
  %v3953 = vadd.f32 0.0, %v3952
  %3954 = vdwg.mxu0
  %3955 = vmatprep.subr.mxu0 %v3722
  %3956 = vmatpush1.msra.mxu0 %v3721
  %3957 = vmatprep.subr.mxu0 %v3728
  %3958 = vmatpush1.msra.mxu0 %v3727
  %3959 = vmatprep.subr.mxu0 %v3734
  %3960 = vmatpush1.msra.mxu0 %v3733
  %3961 = vmatprep.subr.mxu0 %v3740
  %3962 = vmatpush1.msra.mxu0 %v3739
  %3963 = vmatprep.subr.mxu0 %v3746
  %3964 = vmatpush1.msra.mxu0 %v3745
  %3965 = vmatprep.subr.mxu0 %v3752
  %3966 = vmatpush1.msra.mxu0 %v3751
  %3967 = vmatprep.subr.mxu0 %v3758
  %3968 = vmatpush1.msra.mxu0 %v3757
  %3969 = vmatprep.subr.mxu0 %v3764
  %3970 = vmatpush1.msra.mxu0 %v3763
  %3971 = vmatprep.subr.mxu0 %v3770
  %3972 = vmatpush1.msra.mxu0 %v3769
  %3973 = vmatprep.subr.mxu0 %v3776
  %3974 = vmatpush1.msra.mxu0 %v3775
  %3975 = vmatprep.subr.mxu0 %v3782
  %3976 = vmatpush1.msra.mxu0 %v3781
  %3977 = vmatprep.subr.mxu0 %v3788
  %3978 = vmatpush1.msra.mxu0 %v3787
  %3979 = vmatprep.subr.mxu0 %v3794
  %3980 = vmatpush1.msra.mxu0 %v3793
  %3981 = vmatprep.subr.mxu0 %v3800
  %3982 = vmatpush1.msra.mxu0 %v3799
  %3983 = vmatprep.subr.mxu0 %v3806
  %3984 = vmatpush1.msra.mxu0 %v3805
  %3985 = vmatprep.subr.mxu0 %v3812
  %3986 = vmatpush1.msra.mxu0 %v3811
  %3987 = vmatprep.subr.mxu0 0.0
  %3988 = vmatpush1.msra.mxu0 0.0
  %3989 = vmatprep.subr.mxu0 0.0
  %3990 = vmatpush1.msra.mxu0 0.0
  %3991 = vmatprep.subr.mxu0 0.0
  %3992 = vmatpush1.msra.mxu0 0.0
  %3993 = vmatprep.subr.mxu0 0.0
  %3994 = vmatpush1.msra.mxu0 0.0
  %3995 = vmatprep.subr.mxu0 0.0
  %3996 = vmatpush1.msra.mxu0 0.0
  %3997 = vmatprep.subr.mxu0 0.0
  %3998 = vmatpush1.msra.mxu0 0.0
  %3999 = vmatprep.subr.mxu0 0.0
  %4000 = vmatpush1.msra.mxu0 0.0
  %4001 = vmatprep.subr.mxu0 0.0
  %4002 = vmatpush1.msra.mxu0 0.0
  %4003 = vmatprep.subr.mxu0 0.0
  %4004 = vmatpush1.msra.mxu0 0.0
  %4005 = vmatprep.subr.mxu0 0.0
  %4006 = vmatpush1.msra.mxu0 0.0
  %4007 = vmatprep.subr.mxu0 0.0
  %4008 = vmatpush1.msra.mxu0 0.0
  %4009 = vmatprep.subr.mxu0 0.0
  %4010 = vmatpush1.msra.mxu0 0.0
  %4011 = vmatprep.subr.mxu0 0.0
  %4012 = vmatpush1.msra.mxu0 0.0
  %4013 = vmatprep.subr.mxu0 0.0
  %4014 = vmatpush1.msra.mxu0 0.0
  %4015 = vmatprep.subr.mxu0 0.0
  %4016 = vmatpush1.msra.mxu0 0.0
  %4017 = vmatprep.subr.mxu0 0.0
  %4018 = vmatpush1.msra.mxu0 0.0
  %4019 = vmatprep.mubr.f32.mxu0 0.0
  %4020 = vmatmul.mubr.f32.gmra.mrb[0].mxu0 %v3716
  %v4021 = vpop.f32.mrb[0].mxu0
  %v4022 = vadd.f32 0.0, %v4021
  %v4023 = vpop.f32.mrb[0].mxu0
  %v4024 = vadd.f32 0.0, %v4023
  %4025 = vdwg.mxu0
  %v4026 = vld [vmem:[%s6] sm:$0xff]
  %v4027 = vld [vmem:[%s6 + $0x8] sm:$0xff]
  %v4028 = vld [vmem:[%s6 + $0x10] sm:$0xff]
  %v4029 = vld [vmem:[%s6 + $0x18] sm:$0xff]
  %v4030 = vld [vmem:[%s6 + $0x20] sm:$0xff]
  %v4031 = vld [vmem:[%s6 + $0x28] sm:$0xff]
  %v4032 = vld [vmem:[%s6 + $0x30] sm:$0xff]
  %v4033 = vld [vmem:[%s6 + $0x38] sm:$0xff]
  %v4034 = vld [vmem:[%s6 + $0x40] sm:$0xff]
  %v4035 = vld [vmem:[%s6 + $0x48] sm:$0xff]
  %v4036 = vld [vmem:[%s6 + $0x50] sm:$0xff]
  %v4037 = vld [vmem:[%s6 + $0x58] sm:$0xff]
  %v4038 = vld [vmem:[%s6 + $0x60] sm:$0xff]
  %v4039 = vld [vmem:[%s6 + $0x68] sm:$0xff]
  %v4040 = vld [vmem:[%s6 + $0x70] sm:$0xff]
  %v4041 = vld [vmem:[%s6 + $0x78] sm:$0xff]
  %v4042 = vld [vmem:[%s6 + $0x80] sm:$0xff]
  %v4043 = vld [vmem:[%s6 + $0x88] sm:$0xff]
  %v4044 = vld [vmem:[%s6 + $0x90] sm:$0xff]
  %v4045 = vld [vmem:[%s6 + $0x98] sm:$0xff]
  %v4046 = vld [vmem:[%s6 + $0xa0] sm:$0xff]
  %v4047 = vld [vmem:[%s6 + $0xa8] sm:$0xff]
  %v4048 = vld [vmem:[%s6 + $0xb0] sm:$0xff]
  %v4049 = vld [vmem:[%s6 + $0xb8] sm:$0xff]
  %v4050 = vld [vmem:[%s6 + $0xc0] sm:$0xff]
  %v4051 = vld [vmem:[%s6 + $0xc8] sm:$0xff]
  %v4052 = vld [vmem:[%s6 + $0xd0] sm:$0xff]
  %v4053 = vld [vmem:[%s6 + $0xd8] sm:$0xff]
  %v4054 = vld [vmem:[%s6 + $0xe0] sm:$0xff]
  %v4055 = vld [vmem:[%s6 + $0xe8] sm:$0xff]
  %v4056 = vld [vmem:[%s6 + $0xf0] sm:$0xff]
  %v4057 = vld [vmem:[%s6 + $0xf8] sm:$0xff]
  %v4058 = vld [vmem:[%s6 + $0x100] sm:$0xff]
  %v4059 = vld [vmem:[%s6 + $0x108] sm:$0xff]
  %v4060 = vld [vmem:[%s6 + $0x110] sm:$0xff]
  %v4061 = vld [vmem:[%s6 + $0x118] sm:$0xff]
  %v4062 = vld [vmem:[%s6 + $0x120] sm:$0xff]
  %v4063 = vld [vmem:[%s6 + $0x128] sm:$0xff]
  %v4064 = vld [vmem:[%s6 + $0x130] sm:$0xff]
  %v4065 = vld [vmem:[%s6 + $0x138] sm:$0xff]
  %v4066 = vld [vmem:[%s6 + $0x140] sm:$0xff]
  %v4067 = vld [vmem:[%s6 + $0x148] sm:$0xff]
  %v4068 = vld [vmem:[%s6 + $0x150] sm:$0xff]
  %v4069 = vld [vmem:[%s6 + $0x158] sm:$0xff]
  %v4070 = vld [vmem:[%s6 + $0x160] sm:$0xff]
  %v4071 = vld [vmem:[%s6 + $0x168] sm:$0xff]
  %v4072 = vld [vmem:[%s6 + $0x170] sm:$0xff]
  %v4073 = vld [vmem:[%s6 + $0x178] sm:$0xff]
  %4074 = vmatprep.subr.mxu0 %v4027
  %4075 = vmatpush1.msra.mxu0 %v4026
  %4076 = vmatprep.subr.mxu0 %v4030
  %4077 = vmatpush1.msra.mxu0 %v4029
  %4078 = vmatprep.subr.mxu0 %v4033
  %4079 = vmatpush1.msra.mxu0 %v4032
  %4080 = vmatprep.subr.mxu0 %v4036
  %4081 = vmatpush1.msra.mxu0 %v4035
  %4082 = vmatprep.subr.mxu0 %v4039
  %4083 = vmatpush1.msra.mxu0 %v4038
  %4084 = vmatprep.subr.mxu0 %v4042
  %4085 = vmatpush1.msra.mxu0 %v4041
  %4086 = vmatprep.subr.mxu0 %v4045
  %4087 = vmatpush1.msra.mxu0 %v4044
  %4088 = vmatprep.subr.mxu0 %v4048
  %4089 = vmatpush1.msra.mxu0 %v4047
  %4090 = vmatprep.subr.mxu0 %v4051
  %4091 = vmatpush1.msra.mxu0 %v4050
  %4092 = vmatprep.subr.mxu0 %v4054
  %4093 = vmatpush1.msra.mxu0 %v4053
  %4094 = vmatprep.subr.mxu0 %v4057
  %4095 = vmatpush1.msra.mxu0 %v4056
  %4096 = vmatprep.subr.mxu0 %v4060
  %4097 = vmatpush1.msra.mxu0 %v4059
  %4098 = vmatprep.subr.mxu0 %v4063
  %4099 = vmatpush1.msra.mxu0 %v4062
  %4100 = vmatprep.subr.mxu0 %v4066
  %4101 = vmatpush1.msra.mxu0 %v4065
  %4102 = vmatprep.subr.mxu0 %v4069
  %4103 = vmatpush1.msra.mxu0 %v4068
  %4104 = vmatprep.subr.mxu0 %v4072
  %4105 = vmatpush1.msra.mxu0 %v4071
  %4106 = vmatprep.subr.mxu0 0.0
  %4107 = vmatpush1.msra.mxu0 0.0
  %4108 = vmatprep.subr.mxu0 0.0
  %4109 = vmatpush1.msra.mxu0 0.0
  %4110 = vmatprep.subr.mxu0 0.0
  %4111 = vmatpush1.msra.mxu0 0.0
  %4112 = vmatprep.subr.mxu0 0.0
  %4113 = vmatpush1.msra.mxu0 0.0
  %4114 = vmatprep.subr.mxu0 0.0
  %4115 = vmatpush1.msra.mxu0 0.0
  %4116 = vmatprep.subr.mxu0 0.0
  %4117 = vmatpush1.msra.mxu0 0.0
  %4118 = vmatprep.subr.mxu0 0.0
  %4119 = vmatpush1.msra.mxu0 0.0
  %4120 = vmatprep.subr.mxu0 0.0
  %4121 = vmatpush1.msra.mxu0 0.0
  %4122 = vmatprep.subr.mxu0 0.0
  %4123 = vmatpush1.msra.mxu0 0.0
  %4124 = vmatprep.subr.mxu0 0.0
  %4125 = vmatpush1.msra.mxu0 0.0
  %4126 = vmatprep.subr.mxu0 0.0
  %4127 = vmatpush1.msra.mxu0 0.0
  %4128 = vmatprep.subr.mxu0 0.0
  %4129 = vmatpush1.msra.mxu0 0.0
  %4130 = vmatprep.subr.mxu0 0.0
  %4131 = vmatpush1.msra.mxu0 0.0
  %4132 = vmatprep.subr.mxu0 0.0
  %4133 = vmatpush1.msra.mxu0 0.0
  %4134 = vmatprep.subr.mxu0 0.0
  %4135 = vmatpush1.msra.mxu0 0.0
  %4136 = vmatprep.subr.mxu0 0.0
  %4137 = vmatpush1.msra.mxu0 0.0
  %4138 = vmatprep.mubr.f32.mxu0 0.0
  %4139 = vmatmul.mubr.f32.gmra.mrb[0].mxu0 %v3690
  %v4140 = vpop.f32.mrb[0].mxu0
  %v4141 = vadd.f32 0.0, %v4140
  %v4142 = vpop.f32.mrb[0].mxu0
  %v4143 = vadd.f32 0.0, %v4142
  %4144 = vdwg.mxu0
  %4145 = vmatprep.subr.mxu0 0.0
  %4146 = vmatpush1.msra.mxu0 %v4028
  %4147 = vmatprep.subr.mxu0 0.0
  %4148 = vmatpush1.msra.mxu0 %v4031
  %4149 = vmatprep.subr.mxu0 0.0
  %4150 = vmatpush1.msra.mxu0 %v4034
  %4151 = vmatprep.subr.mxu0 0.0
  %4152 = vmatpush1.msra.mxu0 %v4037
  %4153 = vmatprep.subr.mxu0 0.0
  %4154 = vmatpush1.msra.mxu0 %v4040
  %4155 = vmatprep.subr.mxu0 0.0
  %4156 = vmatpush1.msra.mxu0 %v4043
  %4157 = vmatprep.subr.mxu0 0.0
  %4158 = vmatpush1.msra.mxu0 %v4046
  %4159 = vmatprep.subr.mxu0 0.0
  %4160 = vmatpush1.msra.mxu0 %v4049
  %4161 = vmatprep.subr.mxu0 0.0
  %4162 = vmatpush1.msra.mxu0 %v4052
  %4163 = vmatprep.subr.mxu0 0.0
  %4164 = vmatpush1.msra.mxu0 %v4055
  %4165 = vmatprep.subr.mxu0 0.0
  %4166 = vmatpush1.msra.mxu0 %v4058
  %4167 = vmatprep.subr.mxu0 0.0
  %4168 = vmatpush1.msra.mxu0 %v4061
  %4169 = vmatprep.subr.mxu0 0.0
  %4170 = vmatpush1.msra.mxu0 %v4064
  %4171 = vmatprep.subr.mxu0 0.0
  %4172 = vmatpush1.msra.mxu0 %v4067
  %4173 = vmatprep.subr.mxu0 0.0
  %4174 = vmatpush1.msra.mxu0 %v4070
  %4175 = vmatprep.subr.mxu0 0.0
  %4176 = vmatpush1.msra.mxu0 %v4073
  %4177 = vmatprep.subr.mxu0 0.0
  %4178 = vmatpush1.msra.mxu0 0.0
  %4179 = vmatprep.subr.mxu0 0.0
  %4180 = vmatpush1.msra.mxu0 0.0
  %4181 = vmatprep.subr.mxu0 0.0
  %4182 = vmatpush1.msra.mxu0 0.0
  %4183 = vmatprep.subr.mxu0 0.0
  %4184 = vmatpush1.msra.mxu0 0.0
  %4185 = vmatprep.subr.mxu0 0.0
  %4186 = vmatpush1.msra.mxu0 0.0
  %4187 = vmatprep.subr.mxu0 0.0
  %4188 = vmatpush1.msra.mxu0 0.0
  %4189 = vmatprep.subr.mxu0 0.0
  %4190 = vmatpush1.msra.mxu0 0.0
  %4191 = vmatprep.subr.mxu0 0.0
  %4192 = vmatpush1.msra.mxu0 0.0
  %4193 = vmatprep.subr.mxu0 0.0
  %4194 = vmatpush1.msra.mxu0 0.0
  %4195 = vmatprep.subr.mxu0 0.0
  %4196 = vmatpush1.msra.mxu0 0.0
  %4197 = vmatprep.subr.mxu0 0.0
  %4198 = vmatpush1.msra.mxu0 0.0
  %4199 = vmatprep.subr.mxu0 0.0
  %4200 = vmatpush1.msra.mxu0 0.0
  %4201 = vmatprep.subr.mxu0 0.0
  %4202 = vmatpush1.msra.mxu0 0.0
  %4203 = vmatprep.subr.mxu0 0.0
  %4204 = vmatpush1.msra.mxu0 0.0
  %4205 = vmatprep.subr.mxu0 0.0
  %4206 = vmatpush1.msra.mxu0 0.0
  %4207 = vmatprep.subr.mxu0 0.0
  %4208 = vmatpush1.msra.mxu0 0.0
  %4209 = vmatprep.mubr.f32.mxu0 0.0
  %4210 = vmatmul.mubr.f32.gmra.mrb[0].mxu0 %v3690
  %v4211 = vpop.f32.mrb[0].mxu0
  %v4212 = vadd.f32 0.0, %v4211
  %v4213 = vpop.f32.mrb[0].mxu0
  %4214 = vdwg.mxu0
  %v4215 = vadd.f32 %v3953, %v4141
  %v4216 = vadd.f32 %v4022, %v4143
  %v4217 = vadd.f32 %v4215, %v211
  %v4218 = vadd.f32 %v4216, %v215
  %v4219 = vmul.f32 %v4217, 0.5
  %v4220 = vmul.f32 %v4218, 0.5
  %v4221 = vtanh.pop %v4219
  %v4222 = vtanh.pop %v4220
  %v4223 = vmul.f32 %v4221, 0.5
  %v4224 = vmul.f32 %v4222, 0.5
  %v4225 = vadd.f32 %v4223, 0.5
  %v4226 = vadd.f32 %v4224, 0.5
  %v4227 = vadd.f32 %v4024, %v223
  %v4228 = vadd.f32 %v4212, %v230
  %v4229 = vmul.f32 %v4225, %v4228
  %v4230 = vadd.f32 %v4227, %v4229
  %v4231 = vtanh.pop %v4230
  %v4232 = vsub.f32 1.0, %v4226
  %v4233 = vmul.f32 %v4232, %v4231
  %v4234 = vmul.f32 %v4226, %v3690
  %v4235 = vadd.f32 %v4233, %v4234
  %s4236 = scalar_lea.vmem [#allocation3], 48
  %4237 = vst [vmem:[%s4236] sm:$0xff] %v4235
  %s4238 = smul.u32 7, 3
  %s4239 = smul.addr %s4238, 8
  %s4240 = scalar_lea.vmem [#allocation2], %s4239
  %v4241 = vld [vmem:[%s4240] sm:$0xff]
  %v4242 = vld [vmem:[%s4240 + $0x8] sm:$0xff]
  %v4243 = vld [vmem:[%s4240 + $0x10] sm:$0xff]
  %v4244 = vadd.f32 %v4241, %v3880
  %v4245 = vmul.f32 %v4244, 0.5
  %v4246 = vtanh.pop %v4245
  %v4247 = vmul.f32 %v4246, 0.5
  %v4248 = vadd.f32 %v4247, 0.5
  %v4249 = vadd.f32 %v4242, %v3882
  %v4250 = vmul.f32 %v4249, 0.5
  %v4251 = vtanh.pop %v4250
  %v4252 = vmul.f32 %v4251, 0.5
  %v4253 = vadd.f32 %v4252, 0.5
  %v4254 = vadd.f32 %v3951, %v204
  %v4255 = vmul.f32 %v4248, %v4254
  %v4256 = vadd.f32 %v4243, %v4255
  %v4257 = vtanh.pop %v4256
  %v4258 = vsub.f32 1.0, %v4253
  %v4259 = vmul.f32 %v4258, %v4257
  %v4260 = vmul.f32 %v4253, %v3716
  %v4261 = vadd.f32 %v4259, %v4260
  %v4262 = vld [vmem:[%s5 + $0x10] sm:$0xff]
  %v4263 = vld [vmem:[%s5 + $0x18] sm:$0xff]
  %v4264 = vld [vmem:[%s5 + $0x20] sm:$0xff]
  %v4265 = vld [vmem:[%s5 + $0x28] sm:$0xff]
  %v4266 = vld [vmem:[%s5 + $0x40] sm:$0xff]
  %v4267 = vld [vmem:[%s5 + $0x48] sm:$0xff]
  %v4268 = vld [vmem:[%s5 + $0x50] sm:$0xff]
  %v4269 = vld [vmem:[%s5 + $0x58] sm:$0xff]
  %v4270 = vld [vmem:[%s5 + $0x70] sm:$0xff]
  %v4271 = vld [vmem:[%s5 + $0x78] sm:$0xff]
  %v4272 = vld [vmem:[%s5 + $0x80] sm:$0xff]
  %v4273 = vld [vmem:[%s5 + $0x88] sm:$0xff]
  %v4274 = vld [vmem:[%s5 + $0xa0] sm:$0xff]
  %v4275 = vld [vmem:[%s5 + $0xa8] sm:$0xff]
  %v4276 = vld [vmem:[%s5 + $0xb0] sm:$0xff]
  %v4277 = vld [vmem:[%s5 + $0xb8] sm:$0xff]
  %v4278 = vld [vmem:[%s5 + $0xd0] sm:$0xff]
  %v4279 = vld [vmem:[%s5 + $0xd8] sm:$0xff]
  %v4280 = vld [vmem:[%s5 + $0xe0] sm:$0xff]
  %v4281 = vld [vmem:[%s5 + $0xe8] sm:$0xff]
  %v4282 = vld [vmem:[%s5 + $0x100] sm:$0xff]
  %v4283 = vld [vmem:[%s5 + $0x108] sm:$0xff]
  %v4284 = vld [vmem:[%s5 + $0x110] sm:$0xff]
  %v4285 = vld [vmem:[%s5 + $0x118] sm:$0xff]
  %v4286 = vld [vmem:[%s5 + $0x130] sm:$0xff]
  %v4287 = vld [vmem:[%s5 + $0x138] sm:$0xff]
  %v4288 = vld [vmem:[%s5 + $0x140] sm:$0xff]
  %v4289 = vld [vmem:[%s5 + $0x148] sm:$0xff]
  %v4290 = vld [vmem:[%s5 + $0x160] sm:$0xff]
  %v4291 = vld [vmem:[%s5 + $0x168] sm:$0xff]
  %v4292 = vld [vmem:[%s5 + $0x170] sm:$0xff]
  %v4293 = vld [vmem:[%s5 + $0x178] sm:$0xff]
  %v4294 = vld [vmem:[%s5 + $0x190] sm:$0xff]
  %v4295 = vld [vmem:[%s5 + $0x198] sm:$0xff]
  %v4296 = vld [vmem:[%s5 + $0x1a0] sm:$0xff]
  %v4297 = vld [vmem:[%s5 + $0x1a8] sm:$0xff]
  %v4298 = vld [vmem:[%s5 + $0x1c0] sm:$0xff]
  %v4299 = vld [vmem:[%s5 + $0x1c8] sm:$0xff]
  %v4300 = vld [vmem:[%s5 + $0x1d0] sm:$0xff]
  %v4301 = vld [vmem:[%s5 + $0x1d8] sm:$0xff]
  %v4302 = vld [vmem:[%s5 + $0x1f0] sm:$0xff]
  %v4303 = vld [vmem:[%s5 + $0x1f8] sm:$0xff]
  %v4304 = vld [vmem:[%s5 + $0x200] sm:$0xff]
  %v4305 = vld [vmem:[%s5 + $0x208] sm:$0xff]
  %v4306 = vld [vmem:[%s5 + $0x220] sm:$0xff]
  %v4307 = vld [vmem:[%s5 + $0x228] sm:$0xff]
  %v4308 = vld [vmem:[%s5 + $0x230] sm:$0xff]
  %v4309 = vld [vmem:[%s5 + $0x238] sm:$0xff]
  %v4310 = vld [vmem:[%s5 + $0x250] sm:$0xff]
  %v4311 = vld [vmem:[%s5 + $0x258] sm:$0xff]
  %v4312 = vld [vmem:[%s5 + $0x260] sm:$0xff]
  %v4313 = vld [vmem:[%s5 + $0x268] sm:$0xff]
  %v4314 = vld [vmem:[%s5 + $0x280] sm:$0xff]
  %v4315 = vld [vmem:[%s5 + $0x288] sm:$0xff]
  %v4316 = vld [vmem:[%s5 + $0x290] sm:$0xff]
  %v4317 = vld [vmem:[%s5 + $0x298] sm:$0xff]
  %v4318 = vld [vmem:[%s5 + $0x2b0] sm:$0xff]
  %v4319 = vld [vmem:[%s5 + $0x2b8] sm:$0xff]
  %v4320 = vld [vmem:[%s5 + $0x2c0] sm:$0xff]
  %v4321 = vld [vmem:[%s5 + $0x2c8] sm:$0xff]
  %v4322 = vld [vmem:[%s5 + $0x2e0] sm:$0xff]
  %v4323 = vld [vmem:[%s5 + $0x2e8] sm:$0xff]
  %v4324 = vld [vmem:[%s5 + $0x2f0] sm:$0xff]
  %v4325 = vld [vmem:[%s5 + $0x2f8] sm:$0xff]
  %4326 = vmatprep.subr.mxu0 %v4263
  %4327 = vmatpush1.msra.mxu0 %v4262
  %4328 = vmatprep.subr.mxu0 %v4267
  %4329 = vmatpush1.msra.mxu0 %v4266
  %4330 = vmatprep.subr.mxu0 %v4271
  %4331 = vmatpush1.msra.mxu0 %v4270
  %4332 = vmatprep.subr.mxu0 %v4275
  %4333 = vmatpush1.msra.mxu0 %v4274
  %4334 = vmatprep.subr.mxu0 %v4279
  %4335 = vmatpush1.msra.mxu0 %v4278
  %4336 = vmatprep.subr.mxu0 %v4283
  %4337 = vmatpush1.msra.mxu0 %v4282
  %4338 = vmatprep.subr.mxu0 %v4287
  %4339 = vmatpush1.msra.mxu0 %v4286
  %4340 = vmatprep.subr.mxu0 %v4291
  %4341 = vmatpush1.msra.mxu0 %v4290
  %4342 = vmatprep.subr.mxu0 %v4295
  %4343 = vmatpush1.msra.mxu0 %v4294
  %4344 = vmatprep.subr.mxu0 %v4299
  %4345 = vmatpush1.msra.mxu0 %v4298
  %4346 = vmatprep.subr.mxu0 %v4303
  %4347 = vmatpush1.msra.mxu0 %v4302
  %4348 = vmatprep.subr.mxu0 %v4307
  %4349 = vmatpush1.msra.mxu0 %v4306
  %4350 = vmatprep.subr.mxu0 %v4311
  %4351 = vmatpush1.msra.mxu0 %v4310
  %4352 = vmatprep.subr.mxu0 %v4315
  %4353 = vmatpush1.msra.mxu0 %v4314
  %4354 = vmatprep.subr.mxu0 %v4319
  %4355 = vmatpush1.msra.mxu0 %v4318
  %4356 = vmatprep.subr.mxu0 %v4323
  %4357 = vmatpush1.msra.mxu0 %v4322
  %4358 = vmatprep.subr.mxu0 0.0
  %4359 = vmatpush1.msra.mxu0 0.0
  %4360 = vmatprep.subr.mxu0 0.0
  %4361 = vmatpush1.msra.mxu0 0.0
  %4362 = vmatprep.subr.mxu0 0.0
  %4363 = vmatpush1.msra.mxu0 0.0
  %4364 = vmatprep.subr.mxu0 0.0
  %4365 = vmatpush1.msra.mxu0 0.0
  %4366 = vmatprep.subr.mxu0 0.0
  %4367 = vmatpush1.msra.mxu0 0.0
  %4368 = vmatprep.subr.mxu0 0.0
  %4369 = vmatpush1.msra.mxu0 0.0
  %4370 = vmatprep.subr.mxu0 0.0
  %4371 = vmatpush1.msra.mxu0 0.0
  %4372 = vmatprep.subr.mxu0 0.0
  %4373 = vmatpush1.msra.mxu0 0.0
  %4374 = vmatprep.subr.mxu0 0.0
  %4375 = vmatpush1.msra.mxu0 0.0
  %4376 = vmatprep.subr.mxu0 0.0
  %4377 = vmatpush1.msra.mxu0 0.0
  %4378 = vmatprep.subr.mxu0 0.0
  %4379 = vmatpush1.msra.mxu0 0.0
  %4380 = vmatprep.subr.mxu0 0.0
  %4381 = vmatpush1.msra.mxu0 0.0
  %4382 = vmatprep.subr.mxu0 0.0
  %4383 = vmatpush1.msra.mxu0 0.0
  %4384 = vmatprep.subr.mxu0 0.0
  %4385 = vmatpush1.msra.mxu0 0.0
  %4386 = vmatprep.subr.mxu0 0.0
  %4387 = vmatpush1.msra.mxu0 0.0
  %4388 = vmatprep.subr.mxu0 0.0
  %4389 = vmatpush1.msra.mxu0 0.0
  %4390 = vmatprep.mubr.f32.mxu0 0.0
  %4391 = vmatmul.mubr.f32.gmra.mrb[0].mxu0 %v4261
  %v4392 = vpop.f32.mrb[0].mxu0
  %v4393 = vpop.f32.mrb[0].mxu0
  %v4394 = vadd.f32 0.0, %v4393
  %4395 = vdwg.mxu0
  %4396 = vmatprep.subr.mxu0 %v4265
  %4397 = vmatpush1.msra.mxu0 %v4264
  %4398 = vmatprep.subr.mxu0 %v4269
  %4399 = vmatpush1.msra.mxu0 %v4268
  %4400 = vmatprep.subr.mxu0 %v4273
  %4401 = vmatpush1.msra.mxu0 %v4272
  %4402 = vmatprep.subr.mxu0 %v4277
  %4403 = vmatpush1.msra.mxu0 %v4276
  %4404 = vmatprep.subr.mxu0 %v4281
  %4405 = vmatpush1.msra.mxu0 %v4280
  %4406 = vmatprep.subr.mxu0 %v4285
  %4407 = vmatpush1.msra.mxu0 %v4284
  %4408 = vmatprep.subr.mxu0 %v4289
  %4409 = vmatpush1.msra.mxu0 %v4288
  %4410 = vmatprep.subr.mxu0 %v4293
  %4411 = vmatpush1.msra.mxu0 %v4292
  %4412 = vmatprep.subr.mxu0 %v4297
  %4413 = vmatpush1.msra.mxu0 %v4296
  %4414 = vmatprep.subr.mxu0 %v4301
  %4415 = vmatpush1.msra.mxu0 %v4300
  %4416 = vmatprep.subr.mxu0 %v4305
  %4417 = vmatpush1.msra.mxu0 %v4304
  %4418 = vmatprep.subr.mxu0 %v4309
  %4419 = vmatpush1.msra.mxu0 %v4308
  %4420 = vmatprep.subr.mxu0 %v4313
  %4421 = vmatpush1.msra.mxu0 %v4312
  %4422 = vmatprep.subr.mxu0 %v4317
  %4423 = vmatpush1.msra.mxu0 %v4316
  %4424 = vmatprep.subr.mxu0 %v4321
  %4425 = vmatpush1.msra.mxu0 %v4320
  %4426 = vmatprep.subr.mxu0 %v4325
  %4427 = vmatpush1.msra.mxu0 %v4324
  %4428 = vmatprep.subr.mxu0 0.0
  %4429 = vmatpush1.msra.mxu0 0.0
  %4430 = vmatprep.subr.mxu0 0.0
  %4431 = vmatpush1.msra.mxu0 0.0
  %4432 = vmatprep.subr.mxu0 0.0
  %4433 = vmatpush1.msra.mxu0 0.0
  %4434 = vmatprep.subr.mxu0 0.0
  %4435 = vmatpush1.msra.mxu0 0.0
  %4436 = vmatprep.subr.mxu0 0.0
  %4437 = vmatpush1.msra.mxu0 0.0
  %4438 = vmatprep.subr.mxu0 0.0
  %4439 = vmatpush1.msra.mxu0 0.0
  %4440 = vmatprep.subr.mxu0 0.0
  %4441 = vmatpush1.msra.mxu0 0.0
  %4442 = vmatprep.subr.mxu0 0.0
  %4443 = vmatpush1.msra.mxu0 0.0
  %4444 = vmatprep.subr.mxu0 0.0
  %4445 = vmatpush1.msra.mxu0 0.0
  %4446 = vmatprep.subr.mxu0 0.0
  %4447 = vmatpush1.msra.mxu0 0.0
  %4448 = vmatprep.subr.mxu0 0.0
  %4449 = vmatpush1.msra.mxu0 0.0
  %4450 = vmatprep.subr.mxu0 0.0
  %4451 = vmatpush1.msra.mxu0 0.0
  %4452 = vmatprep.subr.mxu0 0.0
  %4453 = vmatpush1.msra.mxu0 0.0
  %4454 = vmatprep.subr.mxu0 0.0
  %4455 = vmatpush1.msra.mxu0 0.0
  %4456 = vmatprep.subr.mxu0 0.0
  %4457 = vmatpush1.msra.mxu0 0.0
  %4458 = vmatprep.subr.mxu0 0.0
  %4459 = vmatpush1.msra.mxu0 0.0
  %4460 = vmatprep.mubr.f32.mxu0 0.0
  %4461 = vmatmul.mubr.f32.gmra.mrb[0].mxu0 %v4261
  %v4462 = vpop.f32.mrb[0].mxu0
  %v4463 = vadd.f32 0.0, %v4462
  %v4464 = vpop.f32.mrb[0].mxu0
  %v4465 = vadd.f32 0.0, %v4464
  %4466 = vdwg.mxu0
  %v4467 = vld [vmem:[%s6] sm:$0xff]
  %v4468 = vld [vmem:[%s6 + $0x8] sm:$0xff]
  %v4469 = vld [vmem:[%s6 + $0x10] sm:$0xff]
  %v4470 = vld [vmem:[%s6 + $0x18] sm:$0xff]
  %v4471 = vld [vmem:[%s6 + $0x20] sm:$0xff]
  %v4472 = vld [vmem:[%s6 + $0x28] sm:$0xff]
  %v4473 = vld [vmem:[%s6 + $0x30] sm:$0xff]
  %v4474 = vld [vmem:[%s6 + $0x38] sm:$0xff]
  %v4475 = vld [vmem:[%s6 + $0x40] sm:$0xff]
  %v4476 = vld [vmem:[%s6 + $0x48] sm:$0xff]
  %v4477 = vld [vmem:[%s6 + $0x50] sm:$0xff]
  %v4478 = vld [vmem:[%s6 + $0x58] sm:$0xff]
  %v4479 = vld [vmem:[%s6 + $0x60] sm:$0xff]
  %v4480 = vld [vmem:[%s6 + $0x68] sm:$0xff]
  %v4481 = vld [vmem:[%s6 + $0x70] sm:$0xff]
  %v4482 = vld [vmem:[%s6 + $0x78] sm:$0xff]
  %v4483 = vld [vmem:[%s6 + $0x80] sm:$0xff]
  %v4484 = vld [vmem:[%s6 + $0x88] sm:$0xff]
  %v4485 = vld [vmem:[%s6 + $0x90] sm:$0xff]
  %v4486 = vld [vmem:[%s6 + $0x98] sm:$0xff]
  %v4487 = vld [vmem:[%s6 + $0xa0] sm:$0xff]
  %v4488 = vld [vmem:[%s6 + $0xa8] sm:$0xff]
  %v4489 = vld [vmem:[%s6 + $0xb0] sm:$0xff]
  %v4490 = vld [vmem:[%s6 + $0xb8] sm:$0xff]
  %v4491 = vld [vmem:[%s6 + $0xc0] sm:$0xff]
  %v4492 = vld [vmem:[%s6 + $0xc8] sm:$0xff]
  %v4493 = vld [vmem:[%s6 + $0xd0] sm:$0xff]
  %v4494 = vld [vmem:[%s6 + $0xd8] sm:$0xff]
  %v4495 = vld [vmem:[%s6 + $0xe0] sm:$0xff]
  %v4496 = vld [vmem:[%s6 + $0xe8] sm:$0xff]
  %v4497 = vld [vmem:[%s6 + $0xf0] sm:$0xff]
  %v4498 = vld [vmem:[%s6 + $0xf8] sm:$0xff]
  %v4499 = vld [vmem:[%s6 + $0x100] sm:$0xff]
  %v4500 = vld [vmem:[%s6 + $0x108] sm:$0xff]
  %v4501 = vld [vmem:[%s6 + $0x110] sm:$0xff]
  %v4502 = vld [vmem:[%s6 + $0x118] sm:$0xff]
  %v4503 = vld [vmem:[%s6 + $0x120] sm:$0xff]
  %v4504 = vld [vmem:[%s6 + $0x128] sm:$0xff]
  %v4505 = vld [vmem:[%s6 + $0x130] sm:$0xff]
  %v4506 = vld [vmem:[%s6 + $0x138] sm:$0xff]
  %v4507 = vld [vmem:[%s6 + $0x140] sm:$0xff]
  %v4508 = vld [vmem:[%s6 + $0x148] sm:$0xff]
  %v4509 = vld [vmem:[%s6 + $0x150] sm:$0xff]
  %v4510 = vld [vmem:[%s6 + $0x158] sm:$0xff]
  %v4511 = vld [vmem:[%s6 + $0x160] sm:$0xff]
  %v4512 = vld [vmem:[%s6 + $0x168] sm:$0xff]
  %v4513 = vld [vmem:[%s6 + $0x170] sm:$0xff]
  %v4514 = vld [vmem:[%s6 + $0x178] sm:$0xff]
  %4515 = vmatprep.subr.mxu0 %v4468
  %4516 = vmatpush1.msra.mxu0 %v4467
  %4517 = vmatprep.subr.mxu0 %v4471
  %4518 = vmatpush1.msra.mxu0 %v4470
  %4519 = vmatprep.subr.mxu0 %v4474
  %4520 = vmatpush1.msra.mxu0 %v4473
  %4521 = vmatprep.subr.mxu0 %v4477
  %4522 = vmatpush1.msra.mxu0 %v4476
  %4523 = vmatprep.subr.mxu0 %v4480
  %4524 = vmatpush1.msra.mxu0 %v4479
  %4525 = vmatprep.subr.mxu0 %v4483
  %4526 = vmatpush1.msra.mxu0 %v4482
  %4527 = vmatprep.subr.mxu0 %v4486
  %4528 = vmatpush1.msra.mxu0 %v4485
  %4529 = vmatprep.subr.mxu0 %v4489
  %4530 = vmatpush1.msra.mxu0 %v4488
  %4531 = vmatprep.subr.mxu0 %v4492
  %4532 = vmatpush1.msra.mxu0 %v4491
  %4533 = vmatprep.subr.mxu0 %v4495
  %4534 = vmatpush1.msra.mxu0 %v4494
  %4535 = vmatprep.subr.mxu0 %v4498
  %4536 = vmatpush1.msra.mxu0 %v4497
  %4537 = vmatprep.subr.mxu0 %v4501
  %4538 = vmatpush1.msra.mxu0 %v4500
  %4539 = vmatprep.subr.mxu0 %v4504
  %4540 = vmatpush1.msra.mxu0 %v4503
  %4541 = vmatprep.subr.mxu0 %v4507
  %4542 = vmatpush1.msra.mxu0 %v4506
  %4543 = vmatprep.subr.mxu0 %v4510
  %4544 = vmatpush1.msra.mxu0 %v4509
  %4545 = vmatprep.subr.mxu0 %v4513
  %4546 = vmatpush1.msra.mxu0 %v4512
  %4547 = vmatprep.subr.mxu0 0.0
  %4548 = vmatpush1.msra.mxu0 0.0
  %4549 = vmatprep.subr.mxu0 0.0
  %4550 = vmatpush1.msra.mxu0 0.0
  %4551 = vmatprep.subr.mxu0 0.0
  %4552 = vmatpush1.msra.mxu0 0.0
  %4553 = vmatprep.subr.mxu0 0.0
  %4554 = vmatpush1.msra.mxu0 0.0
  %4555 = vmatprep.subr.mxu0 0.0
  %4556 = vmatpush1.msra.mxu0 0.0
  %4557 = vmatprep.subr.mxu0 0.0
  %4558 = vmatpush1.msra.mxu0 0.0
  %4559 = vmatprep.subr.mxu0 0.0
  %4560 = vmatpush1.msra.mxu0 0.0
  %4561 = vmatprep.subr.mxu0 0.0
  %4562 = vmatpush1.msra.mxu0 0.0
  %4563 = vmatprep.subr.mxu0 0.0
  %4564 = vmatpush1.msra.mxu0 0.0
  %4565 = vmatprep.subr.mxu0 0.0
  %4566 = vmatpush1.msra.mxu0 0.0
  %4567 = vmatprep.subr.mxu0 0.0
  %4568 = vmatpush1.msra.mxu0 0.0
  %4569 = vmatprep.subr.mxu0 0.0
  %4570 = vmatpush1.msra.mxu0 0.0
  %4571 = vmatprep.subr.mxu0 0.0
  %4572 = vmatpush1.msra.mxu0 0.0
  %4573 = vmatprep.subr.mxu0 0.0
  %4574 = vmatpush1.msra.mxu0 0.0
  %4575 = vmatprep.subr.mxu0 0.0
  %4576 = vmatpush1.msra.mxu0 0.0
  %4577 = vmatprep.subr.mxu0 0.0
  %4578 = vmatpush1.msra.mxu0 0.0
  %4579 = vmatprep.mubr.f32.mxu0 0.0
  %4580 = vmatmul.mubr.f32.gmra.mrb[0].mxu0 %v4235
  %v4581 = vpop.f32.mrb[0].mxu0
  %v4582 = vadd.f32 0.0, %v4581
  %v4583 = vpop.f32.mrb[0].mxu0
  %v4584 = vadd.f32 0.0, %v4583
  %4585 = vdwg.mxu0
  %4586 = vmatprep.subr.mxu0 0.0
  %4587 = vmatpush1.msra.mxu0 %v4469
  %4588 = vmatprep.subr.mxu0 0.0
  %4589 = vmatpush1.msra.mxu0 %v4472
  %4590 = vmatprep.subr.mxu0 0.0
  %4591 = vmatpush1.msra.mxu0 %v4475
  %4592 = vmatprep.subr.mxu0 0.0
  %4593 = vmatpush1.msra.mxu0 %v4478
  %4594 = vmatprep.subr.mxu0 0.0
  %4595 = vmatpush1.msra.mxu0 %v4481
  %4596 = vmatprep.subr.mxu0 0.0
  %4597 = vmatpush1.msra.mxu0 %v4484
  %4598 = vmatprep.subr.mxu0 0.0
  %4599 = vmatpush1.msra.mxu0 %v4487
  %4600 = vmatprep.subr.mxu0 0.0
  %4601 = vmatpush1.msra.mxu0 %v4490
  %4602 = vmatprep.subr.mxu0 0.0
  %4603 = vmatpush1.msra.mxu0 %v4493
  %4604 = vmatprep.subr.mxu0 0.0
  %4605 = vmatpush1.msra.mxu0 %v4496
  %4606 = vmatprep.subr.mxu0 0.0
  %4607 = vmatpush1.msra.mxu0 %v4499
  %4608 = vmatprep.subr.mxu0 0.0
  %4609 = vmatpush1.msra.mxu0 %v4502
  %4610 = vmatprep.subr.mxu0 0.0
  %4611 = vmatpush1.msra.mxu0 %v4505
  %4612 = vmatprep.subr.mxu0 0.0
  %4613 = vmatpush1.msra.mxu0 %v4508
  %4614 = vmatprep.subr.mxu0 0.0
  %4615 = vmatpush1.msra.mxu0 %v4511
  %4616 = vmatprep.subr.mxu0 0.0
  %4617 = vmatpush1.msra.mxu0 %v4514
  %4618 = vmatprep.subr.mxu0 0.0
  %4619 = vmatpush1.msra.mxu0 0.0
  %4620 = vmatprep.subr.mxu0 0.0
  %4621 = vmatpush1.msra.mxu0 0.0
  %4622 = vmatprep.subr.mxu0 0.0
  %4623 = vmatpush1.msra.mxu0 0.0
  %4624 = vmatprep.subr.mxu0 0.0
  %4625 = vmatpush1.msra.mxu0 0.0
  %4626 = vmatprep.subr.mxu0 0.0
  %4627 = vmatpush1.msra.mxu0 0.0
  %4628 = vmatprep.subr.mxu0 0.0
  %4629 = vmatpush1.msra.mxu0 0.0
  %4630 = vmatprep.subr.mxu0 0.0
  %4631 = vmatpush1.msra.mxu0 0.0
  %4632 = vmatprep.subr.mxu0 0.0
  %4633 = vmatpush1.msra.mxu0 0.0
  %4634 = vmatprep.subr.mxu0 0.0
  %4635 = vmatpush1.msra.mxu0 0.0
  %4636 = vmatprep.subr.mxu0 0.0
  %4637 = vmatpush1.msra.mxu0 0.0
  %4638 = vmatprep.subr.mxu0 0.0
  %4639 = vmatpush1.msra.mxu0 0.0
  %4640 = vmatprep.subr.mxu0 0.0
  %4641 = vmatpush1.msra.mxu0 0.0
  %4642 = vmatprep.subr.mxu0 0.0
  %4643 = vmatpush1.msra.mxu0 0.0
  %4644 = vmatprep.subr.mxu0 0.0
  %4645 = vmatpush1.msra.mxu0 0.0
  %4646 = vmatprep.subr.mxu0 0.0
  %4647 = vmatpush1.msra.mxu0 0.0
  %4648 = vmatprep.subr.mxu0 0.0
  %4649 = vmatpush1.msra.mxu0 0.0
  %4650 = vmatprep.mubr.f32.mxu0 0.0
  %4651 = vmatmul.mubr.f32.gmra.mrb[0].mxu0 %v4235
  %v4652 = vpop.f32.mrb[0].mxu0
  %v4653 = vadd.f32 0.0, %v4652
  %v4654 = vpop.f32.mrb[0].mxu0
  %4655 = vdwg.mxu0
  %v4656 = vadd.f32 %v4394, %v4582
  %v4657 = vadd.f32 %v4463, %v4584
  %v4658 = vadd.f32 %v4656, %v211
  %v4659 = vadd.f32 %v4657, %v215
  %v4660 = vmul.f32 %v4658, 0.5
  %v4661 = vmul.f32 %v4659, 0.5
  %v4662 = vtanh.pop %v4660
  %v4663 = vtanh.pop %v4661
  %v4664 = vmul.f32 %v4662, 0.5
  %v4665 = vmul.f32 %v4663, 0.5
  %v4666 = vadd.f32 %v4664, 0.5
  %v4667 = vadd.f32 %v4665, 0.5
  %v4668 = vadd.f32 %v4465, %v223
  %v4669 = vadd.f32 %v4653, %v230
  %v4670 = vmul.f32 %v4666, %v4669
  %v4671 = vadd.f32 %v4668, %v4670
  %v4672 = vtanh.pop %v4671
  %v4673 = vsub.f32 1.0, %v4667
  %v4674 = vmul.f32 %v4673, %v4672
  %v4675 = vmul.f32 %v4667, %v4235
  %v4676 = vadd.f32 %v4674, %v4675
  %s4677 = scalar_lea.vmem [#allocation3], 56
  %4678 = vst [vmem:[%s4677] sm:$0xff] %v4676
  %4679 = vst [vmem:[%s13] sm:$0xff] %v4261
  %s4680 = scalar_lea.vmem %s13, 8
  %4681 = vst [vmem:[%s4680] sm:$0xff] %v4676
  %v4682 = vld [vmem:[#allocation3] sm:$0xff]
  %v4683 = vld [vmem:[#allocation3 + $0x8] sm:$0xff]
  %v4684 = vld [vmem:[#allocation3 + $0x10] sm:$0xff]
  %v4685 = vld [vmem:[#allocation3 + $0x18] sm:$0xff]
  %v4686 = vld [vmem:[#allocation3 + $0x20] sm:$0xff]
  %v4687 = vld [vmem:[#allocation3 + $0x28] sm:$0xff]
  %v4688 = vld [vmem:[#allocation3 + $0x30] sm:$0xff]
  %v4689 = vld [vmem:[#allocation3 + $0x38] sm:$0xff]
  %v4690 = vld [vmem:[%s10] sm:$0xff]
  %v4691 = vld [vmem:[%s10 + $0x8] sm:$0xff]
  %v4692 = vld [vmem:[%s10 + $0x10] sm:$0xff]
  %v4693 = vld [vmem:[%s10 + $0x18] sm:$0xff]
  %v4694 = vld [vmem:[%s10 + $0x20] sm:$0xff]
  %v4695 = vld [vmem:[%s10 + $0x28] sm:$0xff]
  %v4696 = vld [vmem:[%s10 + $0x30] sm:$0xff]
  %v4697 = vld [vmem:[%s10 + $0x38] sm:$0xff]
  %v4698 = vld [vmem:[%s10 + $0x40] sm:$0xff]
  %v4699 = vld [vmem:[%s10 + $0x48] sm:$0xff]
  %v4700 = vld [vmem:[%s10 + $0x50] sm:$0xff]
  %v4701 = vld [vmem:[%s10 + $0x58] sm:$0xff]
  %v4702 = vld [vmem:[%s10 + $0x60] sm:$0xff]
  %v4703 = vld [vmem:[%s10 + $0x68] sm:$0xff]
  %v4704 = vld [vmem:[%s10 + $0x70] sm:$0xff]
  %v4705 = vld [vmem:[%s10 + $0x78] sm:$0xff]
  %v4706 = vld [vmem:[#allocation4] sm:$0x1]
  %v4708 = vlaneseq
  %v4709 = vshrl.u32 %v4708, 7
  %v4710 = vsub.s32 0, %v4709
  %v4711 = vrot.slane %v4706, %v4710
  %4713 = vmatprep.subr.mxu0 0.0
  %4714 = vmatpush1.msra.mxu0 %v4690
  %4715 = vmatprep.subr.mxu0 0.0
  %4716 = vmatpush1.msra.mxu0 %v4691
  %4717 = vmatprep.subr.mxu0 0.0
  %4718 = vmatpush1.msra.mxu0 %v4692
  %4719 = vmatprep.subr.mxu0 0.0
  %4720 = vmatpush1.msra.mxu0 %v4693
  %4721 = vmatprep.subr.mxu0 0.0
  %4722 = vmatpush1.msra.mxu0 %v4694
  %4723 = vmatprep.subr.mxu0 0.0
  %4724 = vmatpush1.msra.mxu0 %v4695
  %4725 = vmatprep.subr.mxu0 0.0
  %4726 = vmatpush1.msra.mxu0 %v4696
  %4727 = vmatprep.subr.mxu0 0.0
  %4728 = vmatpush1.msra.mxu0 %v4697
  %4729 = vmatprep.subr.mxu0 0.0
  %4730 = vmatpush1.msra.mxu0 %v4698
  %4731 = vmatprep.subr.mxu0 0.0
  %4732 = vmatpush1.msra.mxu0 %v4699
  %4733 = vmatprep.subr.mxu0 0.0
  %4734 = vmatpush1.msra.mxu0 %v4700
  %4735 = vmatprep.subr.mxu0 0.0
  %4736 = vmatpush1.msra.mxu0 %v4701
  %4737 = vmatprep.subr.mxu0 0.0
  %4738 = vmatpush1.msra.mxu0 %v4702
  %4739 = vmatprep.subr.mxu0 0.0
  %4740 = vmatpush1.msra.mxu0 %v4703
  %4741 = vmatprep.subr.mxu0 0.0
  %4742 = vmatpush1.msra.mxu0 %v4704
  %4743 = vmatprep.subr.mxu0 0.0
  %4744 = vmatpush1.msra.mxu0 %v4705
  %4745 = vmatprep.subr.mxu0 0.0
  %4746 = vmatpush1.msra.mxu0 0.0
  %4747 = vmatprep.subr.mxu0 0.0
  %4748 = vmatpush1.msra.mxu0 0.0
  %4749 = vmatprep.subr.mxu0 0.0
  %4750 = vmatpush1.msra.mxu0 0.0
  %4751 = vmatprep.subr.mxu0 0.0
  %4752 = vmatpush1.msra.mxu0 0.0
  %4753 = vmatprep.subr.mxu0 0.0
  %4754 = vmatpush1.msra.mxu0 0.0
  %4755 = vmatprep.subr.mxu0 0.0
  %4756 = vmatpush1.msra.mxu0 0.0
  %4757 = vmatprep.subr.mxu0 0.0
  %4758 = vmatpush1.msra.mxu0 0.0
  %4759 = vmatprep.subr.mxu0 0.0
  %4760 = vmatpush1.msra.mxu0 0.0
  %4761 = vmatprep.subr.mxu0 0.0
  %4762 = vmatpush1.msra.mxu0 0.0
  %4763 = vmatprep.subr.mxu0 0.0
  %4764 = vmatpush1.msra.mxu0 0.0
  %4765 = vmatprep.subr.mxu0 0.0
  %4766 = vmatpush1.msra.mxu0 0.0
  %4767 = vmatprep.subr.mxu0 0.0
  %4768 = vmatpush1.msra.mxu0 0.0
  %4769 = vmatprep.subr.mxu0 0.0
  %4770 = vmatpush1.msra.mxu0 0.0
  %4771 = vmatprep.subr.mxu0 0.0
  %4772 = vmatpush1.msra.mxu0 0.0
  %4773 = vmatprep.subr.mxu0 0.0
  %4774 = vmatpush1.msra.mxu0 0.0
  %4775 = vmatprep.subr.mxu0 0.0
  %4776 = vmatpush1.msra.mxu0 0.0
  %4777 = vmatprep.mubr.f32.mxu0 0.0
  %4778 = vmatmul.mubr.f32.gmra.mrb[0].mxu0 %v4682
  %v4779 = vpop.f32.mrb[0].mxu0
  %v4780 = vadd.f32 %v4711, %v4779
  %v4781 = vpop.f32.mrb[0].mxu0
  %4782 = vmatprep.mubr.f32.mxu0 0.0
  %4783 = vmatmul.mubr.f32.gmra.mrb[0].mxu0 %v4683
  %v4784 = vpop.f32.mrb[0].mxu0
  %v4785 = vadd.f32 %v4711, %v4784
  %v4786 = vpop.f32.mrb[0].mxu0
  %4787 = vmatprep.mubr.f32.mxu0 0.0
  %4788 = vmatmul.mubr.f32.gmra.mrb[0].mxu0 %v4684
  %v4789 = vpop.f32.mrb[0].mxu0
  %v4790 = vadd.f32 %v4711, %v4789
  %v4791 = vpop.f32.mrb[0].mxu0
  %4792 = vmatprep.mubr.f32.mxu0 0.0
  %4793 = vmatmul.mubr.f32.gmra.mrb[0].mxu0 %v4685
  %v4794 = vpop.f32.mrb[0].mxu0
  %v4795 = vadd.f32 %v4711, %v4794
  %v4796 = vpop.f32.mrb[0].mxu0
  %4797 = vmatprep.mubr.f32.mxu0 0.0
  %4798 = vmatmul.mubr.f32.gmra.mrb[0].mxu0 %v4686
  %v4799 = vpop.f32.mrb[0].mxu0
  %v4800 = vadd.f32 %v4711, %v4799
  %v4801 = vpop.f32.mrb[0].mxu0
  %4802 = vmatprep.mubr.f32.mxu0 0.0
  %4803 = vmatmul.mubr.f32.gmra.mrb[0].mxu0 %v4687
  %v4804 = vpop.f32.mrb[0].mxu0
  %v4805 = vadd.f32 %v4711, %v4804
  %v4806 = vpop.f32.mrb[0].mxu0
  %4807 = vmatprep.mubr.f32.mxu0 0.0
  %4808 = vmatmul.mubr.f32.gmra.mrb[0].mxu0 %v4688
  %v4809 = vpop.f32.mrb[0].mxu0
  %v4810 = vadd.f32 %v4711, %v4809
  %v4811 = vpop.f32.mrb[0].mxu0
  %4812 = vmatprep.mubr.f32.mxu0 0.0
  %4813 = vmatmul.mubr.f32.gmra.mrb[0].mxu0 %v4689
  %v4814 = vpop.f32.mrb[0].mxu0
  %v4815 = vadd.f32 %v4711, %v4814
  %v4816 = vpop.f32.mrb[0].mxu0
  %4817 = vdwg.mxu0
  %v4818 = vmul.f32 %v4780, 0.5
  %v4819 = vmul.f32 %v4785, 0.5
  %v4820 = vmul.f32 %v4790, 0.5
  %v4821 = vmul.f32 %v4795, 0.5
  %v4822 = vmul.f32 %v4800, 0.5
  %v4823 = vmul.f32 %v4805, 0.5
  %v4824 = vmul.f32 %v4810, 0.5
  %v4825 = vmul.f32 %v4815, 0.5
  %v4826 = vtanh.pop %v4818
  %v4827 = vtanh.pop %v4819
  %v4828 = vtanh.pop %v4820
  %v4829 = vtanh.pop %v4821
  %v4830 = vtanh.pop %v4822
  %v4831 = vtanh.pop %v4823
  %v4832 = vtanh.pop %v4824
  %v4833 = vtanh.pop %v4825
  %v4834 = vmul.f32 %v4826, 0.5
  %v4835 = vmul.f32 %v4827, 0.5
  %v4836 = vmul.f32 %v4828, 0.5
  %v4837 = vmul.f32 %v4829, 0.5
  %v4838 = vmul.f32 %v4830, 0.5
  %v4839 = vmul.f32 %v4831, 0.5
  %v4840 = vmul.f32 %v4832, 0.5
  %v4841 = vmul.f32 %v4833, 0.5
  %v4842 = vadd.f32 %v4834, 0.5
  %v4843 = vadd.f32 %v4835, 0.5
  %v4844 = vadd.f32 %v4836, 0.5
  %v4845 = vadd.f32 %v4837, 0.5
  %v4846 = vadd.f32 %v4838, 0.5
  %v4847 = vadd.f32 %v4839, 0.5
  %v4848 = vadd.f32 %v4840, 0.5
  %v4849 = vadd.f32 %v4841, 0.5
  %vm4850 = vcmask 7168
  %4851 = vst.msk [vmem:[%s12] sm:$0xff] %vm4850, %v4842
  %4852 = vst.msk [vmem:[%s12 + $0x8] sm:$0xff] %vm4850, %v4843
  %4853 = vst.msk [vmem:[%s12 + $0x10] sm:$0xff] %vm4850, %v4844
  %4854 = vst.msk [vmem:[%s12 + $0x18] sm:$0xff] %vm4850, %v4845
  %4855 = vst.msk [vmem:[%s12 + $0x20] sm:$0xff] %vm4850, %v4846
  %4856 = vst.msk [vmem:[%s12 + $0x28] sm:$0xff] %vm4850, %v4847
  %4857 = vst.msk [vmem:[%s12 + $0x30] sm:$0xff] %vm4850, %v4848
  %4858 = vst.msk [vmem:[%s12 + $0x38] sm:$0xff] %vm4850, %v4849
  // Predicated region
  $region50: #{rnn_forward.1} parent=0 // pred_check
    _
  $region51: #{rnn_forward.1} parent=0 // pred_check_branch
    %4860 = sbr.rel (0) target = $region53
  $region52: #{rnn_forward.1} parent=0 // pred_region
    _
  $region53: #{rnn_forward.1} parent=0 // pred_fallthru
    _
  // Predicated region
  $region54: #{rnn_forward.1} parent=0 // pred_check
    _
  $region55: #{rnn_forward.1} parent=0 // pred_check_branch
    %4862 = sbr.rel (0) target = $region57
  $region56: #{rnn_forward.1} parent=0 // pred_region
    _
  $region57: #{rnn_forward.1} parent=0 // pred_fallthru
    _
  // Predicated region
  $region58: #{rnn_forward.1} parent=0 // pred_check
    _
  $region59: #{rnn_forward.1} parent=0 // pred_check_branch
    %4864 = sbr.rel (0) target = $region61
  $region60: #{rnn_forward.1} parent=0 // pred_region
    _
  $region61: #{rnn_forward.1} parent=0 // pred_fallthru
    _
  // Predicated region
  $region62: #{rnn_forward.1} parent=0 // pred_check
    _
  $region63: #{rnn_forward.1} parent=0 // pred_check_branch
    %4866 = sbr.rel (0) target = $region65
  $region64: #{rnn_forward.1} parent=0 // pred_region
    _
  $region65: #{rnn_forward.1} parent=0 // pred_fallthru
    _

</llo_original>
